<compile_context>
chip_gen: v7x
topology: tpu7x:2x2x1
jax: 0.10.0
libtpu: 0.0.40
codegen_flags: <defaults>
</compile_context>

<pallas_src>
import functools

import jax
import jax.numpy as jnp
import numpy as np
from jax.experimental import pallas as pl
from jax.experimental.pallas import tpu as pltpu

_EPS = 1e-5
_LANE = 128


def _round_up(x, m):
    return (x + m - 1) // m * m


def _vmem_limit_bytes():
    """Generation-aware scoped-VMEM limit (v7x has 64 MiB physical)."""
    try:
        cap = int(pltpu.get_tpu_info().vmem_capacity_bytes)
        return max(32 * 1024 * 1024, (cap * 3) // 4)
    except Exception:
        pass
    try:
        kind = jax.devices()[0].device_kind.lower()
    except Exception:
        kind = ""
    if "v7" in kind:
        return 48 * 1024 * 1024
    return 96 * 1024 * 1024


# ----------------------------------------------------------------------------
# Fused BuildingBlock kernel (per batch element)
# ----------------------------------------------------------------------------
def _block_kernel_factory(H, W, Cin_p, Cout_p, Cm, stride, has_ds):
    Hp, Wp = H + 2, W + 2                       # input + 1-px halo
    Ho = (H - 1) // stride + 1
    Wo = (W - 1) // stride + 1
    Hm, Wm = Ho + 2, Wo + 2                     # conv1 output + 1-px halo

    def conv3x3_acc(src, cin, ho, wo, w_ref, s):
        """3x3 conv as 9 accumulating MXU matmuls (bf16 x bf16 -> f32)."""
        # TODO(synk): for stride == 2 de-interleave even/odd rows/cols once
        #             instead of nine strided sublane slices.
        acc = None
        for kh in range(3):
            for kw in range(3):
                patch = src[kh:kh + (ho - 1) * s + 1:s,
                            kw:kw + (wo - 1) * s + 1:s, :]        # (ho, wo, cin)
                d = jnp.dot(patch.reshape(ho * wo, cin), w_ref[kh * 3 + kw],
                            preferred_element_type=jnp.float32)
                acc = d if acc is None else acc + d
        return acc                                               # (ho*wo, Cout)

    def kernel(x_ref, w1_ref, sh1_ref, w2_ref, sh2_ref, o_ref, xpad, mid):
        bf = jnp.bfloat16
        # Zero ONLY the 1-px halo frame (scratch is uninitialised and persists
        # across grid steps).  Interiors are fully overwritten below and the
        # padded lanes are zero by construction (wrapper channel padding,
        # zero-padded weight columns / shifts).
        xpad[0] = jnp.zeros((Wp, Cin_p), bf)
        xpad[Hp - 1] = jnp.zeros((Wp, Cin_p), bf)
        xpad[:, 0:1, :] = jnp.zeros((Hp, 1, Cin_p), bf)
        xpad[:, Wp - 1:Wp, :] = jnp.zeros((Hp, 1, Cin_p), bf)
        mid[0] = jnp.zeros((Wm, Cout_p), bf)
        mid[Hm - 1] = jnp.zeros((Wm, Cout_p), bf)
        mid[:, 0:1, :] = jnp.zeros((Hm, 1, Cout_p), bf)
        mid[:, Wm - 1:Wm, :] = jnp.zeros((Hm, 1, Cout_p), bf)

        # Stage 0: lane-dense (channel-padded, bf16) input -> halo scratch.
        x = x_ref[0]                                             # (H, W, Cin_p)
        xpad[1:H + 1, 1:W + 1, :] = x

        # Stage 1: conv1 (+ folded BN1) and, when present, the downsample conv
        # (+ folded BNd) fused along the output lanes.  One pass of 9
        # accumulating matmuls over the shared LHS.
        acc1 = conv3x3_acc(xpad[...], Cin_p, Ho, Wo, w1_ref, stride)
        z1 = jnp.maximum(acc1 + sh1_ref[...], 0.0)               # (Ho*Wo, Cm) f32

        # conv1 output stays in VMEM (no HBM round trip).
        mid[1:Ho + 1, 1:Wo + 1, :] = (
            z1[:, :Cout_p].astype(bf).reshape(Ho, Wo, Cout_p))

        # Stage 2: conv2 + bias on the VMEM-resident conv1 output.
        acc2 = conv3x3_acc(mid[...], Cout_p, Ho, Wo, w2_ref, 1)
        y2 = acc2 + sh2_ref[...]                                 # (Ho*Wo, Cout_p)

        # Stage 3: identity branch.
        if has_ds:
            ident = z1[:, Cout_p:]        # relu(BNd(conv_ds(x))) from fused matmul
        else:
            # Cin == Cout, stride == 1; read the lane-dense staged input.
            ident = x.reshape(H * W, Cin_p).astype(jnp.float32)

        # Stage 4: residual add + final ReLU; lane-dense store (padded lanes).
        out = jnp.maximum(y2 + ident, 0.0)
        o_ref[0] = out.reshape(Ho, Wo, Cout_p).astype(o_ref.dtype)

    return kernel, (Ho, Wo)


# ----------------------------------------------------------------------------
# Parameter preparation (BN folding + lane padding + conv1/ds fusion)
# ----------------------------------------------------------------------------
def prepare_block_params(params, in_ch, out_ch):
    cin_p = _round_up(in_ch, _LANE)
    cout_p = _round_up(out_ch, _LANE)
    has_ds = in_ch != out_ch

    def fold(w, bias, gamma, beta, mean, var):
        scale = gamma / jnp.sqrt(var + _EPS)                  # (Cout,)
        return w * scale[None, None, None, :], beta + (bias - mean) * scale

    def pad_w(w_hwio, ci_p, co_p):
        ci, co = w_hwio.shape[2], w_hwio.shape[3]
        return jnp.pad(w_hwio, ((0, 0), (0, 0), (0, ci_p - ci), (0, co_p - co)))

    def pad_v(v, co_p):
        return jnp.pad(v, (0, co_p - v.shape[0]))

    w1, sh1 = fold(params["conv1_w"], params["conv1_b"], params["bn1_gamma"],
                   params["bn1_beta"], params["bn1_mean"], params["bn1_var"])
    w1 = pad_w(w1, cin_p, cout_p)
    sh1 = pad_v(sh1, cout_p)
    if has_ds:
        wd, shd = fold(params["ds_w"], params["ds_b"], params["bnd_gamma"],
                       params["bnd_beta"], params["bnd_mean"], params["bnd_var"])
        # Fuse the two convs that share the same LHS along the output lanes.
        w1 = jnp.concatenate([w1, pad_w(wd, cin_p, cout_p)], axis=-1)
        sh1 = jnp.concatenate([sh1, pad_v(shd, cout_p)], axis=-1)
    cm = w1.shape[-1]

    w2 = pad_w(params["conv2_w"], cout_p, cout_p)
    sh2 = pad_v(params["conv2_b"], cout_p)

    return {
        "w1": w1.reshape(9, cin_p, cm).astype(jnp.bfloat16),
        "sh1": sh1.reshape(1, cm).astype(jnp.float32),
        "w2": w2.reshape(9, cout_p, cout_p).astype(jnp.bfloat16),
        "sh2": sh2.reshape(1, cout_p).astype(jnp.float32),
    }


# ----------------------------------------------------------------------------
# Public forward (accepts PyTorch-style NCHW)
# ----------------------------------------------------------------------------
@functools.partial(jax.jit, static_argnames=("in_ch", "out_ch", "stride"))
def building_block_forward(x_nchw, prep, *, in_ch, out_ch, stride=1):
    has_ds = in_ch != out_ch
    if not has_ds and stride != 1:
        raise ValueError("identity path requires stride == 1 when in_ch == out_ch")

    cin_p = _round_up(in_ch, _LANE)
    cout_p = _round_up(out_ch, _LANE)
    cm = 2 * cout_p if has_ds else cout_p

    # Single NCHW -> NHWC conversion, lane-dense channel padding, bf16 cast.
    x = jnp.transpose(x_nchw, (0, 2, 3, 1))
    x = jnp.pad(x, ((0, 0), (0, 0), (0, 0), (0, cin_p - in_ch))).astype(jnp.bfloat16)
    N, H, W, _ = x.shape

    kernel, (Ho, Wo) = _block_kernel_factory(
        H, W, cin_p, cout_p, cm, stride, has_ds)

    # TODO(synk): add an H-tile grid axis with a 2-row halo (also marked
    #             "parallel") for large ResNet images / N=1 inference.
    y = pl.pallas_call(
        kernel,
        out_shape=jax.ShapeDtypeStruct((N, Ho, Wo, cout_p), jnp.bfloat16),
        grid=(N,),
        in_specs=[
            pl.BlockSpec((1, H, W, cin_p), lambda n: (n, 0, 0, 0)),
            pl.BlockSpec((9, cin_p, cm), lambda n: (0, 0, 0)),
            pl.BlockSpec((1, cm), lambda n: (0, 0)),
            pl.BlockSpec((9, cout_p, cout_p), lambda n: (0, 0, 0)),
            pl.BlockSpec((1, cout_p), lambda n: (0, 0)),
        ],
        out_specs=pl.BlockSpec((1, Ho, Wo, cout_p), lambda n: (n, 0, 0, 0)),
        scratch_shapes=[
            pltpu.VMEM((H + 2, W + 2, cin_p), jnp.bfloat16),      # halo-padded x
            pltpu.VMEM((Ho + 2, Wo + 2, cout_p), jnp.bfloat16),   # halo-padded conv1
        ],
        compiler_params=pltpu.CompilerParams(
            dimension_semantics=("parallel",),                    # batch independent
            vmem_limit_bytes=_vmem_limit_bytes()),
    )(x, prep["w1"], prep["sh1"], prep["w2"], prep["sh2"])

    # Slice real channels / restore NCHW and input dtype in the wrapper
    # (the kernel writeback stays lane-dense).
    y = y[..., :out_ch].astype(x_nchw.dtype)
    return jnp.transpose(y, (0, 3, 1, 2))


# ----------------------------------------------------------------------------
# Deterministic synthetic parameters
# ----------------------------------------------------------------------------
def init_building_block(key, in_ch, out_ch):
    ks = jax.random.split(key, 16)
    p = {}
    p["conv1_w"] = 0.1 * jax.random.normal(ks[0], (3, 3, in_ch, out_ch), jnp.float32)
    p["conv1_b"] = 0.1 * jax.random.normal(ks[1], (out_ch,), jnp.float32)
    p["bn1_gamma"] = 1.0 + 0.1 * jax.random.normal(ks[2], (out_ch,), jnp.float32)
    p["bn1_beta"] = 0.1 * jax.random.normal(ks[3], (out_ch,), jnp.float32)
    p["bn1_mean"] = 0.1 * jax.random.normal(ks[4], (out_ch,), jnp.float32)
    p["bn1_var"] = 0.5 + jnp.abs(jax.random.normal(ks[5], (out_ch,), jnp.float32))

    p["conv2_w"] = 0.1 * jax.random.normal(ks[6], (3, 3, out_ch, out_ch), jnp.float32)
    p["conv2_b"] = 0.1 * jax.random.normal(ks[7], (out_ch,), jnp.float32)

    if in_ch != out_ch:
        p["ds_w"] = 0.1 * jax.random.normal(ks[8], (3, 3, in_ch, out_ch), jnp.float32)
        p["ds_b"] = 0.1 * jax.random.normal(ks[9], (out_ch,), jnp.float32)
        p["bnd_gamma"] = 1.0 + 0.1 * jax.random.normal(ks[10], (out_ch,), jnp.float32)
        p["bnd_beta"] = 0.1 * jax.random.normal(ks[11], (out_ch,), jnp.float32)
        p["bnd_mean"] = 0.1 * jax.random.normal(ks[12], (out_ch,), jnp.float32)
        p["bnd_var"] = 0.5 + jnp.abs(jax.random.normal(ks[13], (out_ch,), jnp.float32))
    return p


# ----------------------------------------------------------------------------
# Pure-JAX reference (for correctness check, f32)
# ----------------------------------------------------------------------------
def _ref_conv(x_nhwc, w_hwio, b, stride):
    y = jax.lax.conv_general_dilated(
        x_nhwc, w_hwio, window_strides=(stride, stride),
        padding=((1, 1), (1, 1)),
        dimension_numbers=("NHWC", "HWIO", "NHWC"))
    return y + b


def ref_forward(x_nchw, p, *, in_ch, out_ch, stride=1):
    x = jnp.transpose(x_nchw, (0, 2, 3, 1))

    def bn(y, g, b, m, v):
        return g * (y - m) / jnp.sqrt(v + _EPS) + b

    out = _ref_conv(x, p["conv1_w"], p["conv1_b"], stride)
    out = jnp.maximum(bn(out, p["bn1_gamma"], p["bn1_beta"],
                         p["bn1_mean"], p["bn1_var"]), 0.0)
    out = _ref_conv(out, p["conv2_w"], p["conv2_b"], 1)
    if in_ch != out_ch:
        ident = _ref_conv(x, p["ds_w"], p["ds_b"], stride)
        ident = jnp.maximum(bn(ident, p["bnd_gamma"], p["bnd_beta"],
                               p["bnd_mean"], p["bnd_var"]), 0.0)
    else:
        ident = x
    y = jnp.maximum(out + ident, 0.0)
    return jnp.transpose(y, (0, 3, 1, 2))


if __name__ == "__main__":
    key = jax.random.PRNGKey(0)
    k_x, k_p1, k_p2 = jax.random.split(key, 3)

    # bf16 operands with f32 accumulation -> relaxed tolerance vs f32 reference.
    RTOL = ATOL = 5e-2

    # Case 1: channel expansion (downsample branch active), stride 1.
    N, Cin, Cout, H, W = 2, 4, 8, 16, 16
    x = jax.random.normal(k_x, (N, Cin, H, W), jnp.float32)
    params = init_building_block(k_p1, Cin, Cout)
    prep = prepare_block_params(params, Cin, Cout)
    y = jax.block_until_ready(
        building_block_forward(x, prep, in_ch=Cin, out_ch=Cout, stride=1))
    y_ref = ref_forward(x, params, in_ch=Cin, out_ch=Cout, stride=1)
    np.testing.assert_allclose(np.asarray(y), np.asarray(y_ref),
                               rtol=RTOL, atol=ATOL)

    # Case 2: identity passthrough (in_ch == out_ch), stride 1.
    x2 = jax.random.normal(k_x, (N, Cout, H, W), jnp.float32)
    params2 = init_building_block(k_p2, Cout, Cout)
    prep2 = prepare_block_params(params2, Cout, Cout)
    y2 = jax.block_until_ready(
        building_block_forward(x2, prep2, in_ch=Cout, out_ch=Cout, stride=1))
    y2_ref = ref_forward(x2, params2, in_ch=Cout, out_ch=Cout, stride=1)
    np.testing.assert_allclose(np.asarray(y2), np.asarray(y2_ref),
                               rtol=RTOL, atol=ATOL)

    print("KERNEL_OK")
</pallas_src>

<mosaic_0001>
module attributes {stable_mosaic.version = 11 : i64} {
  func.func @kernel(%arg0: i32, %arg1: memref<1x16x16x128xbf16, #tpu.memory_space<vmem>>, %arg2: memref<9x128x256xbf16, #tpu.memory_space<vmem>>, %arg3: memref<1x256xf32, #tpu.memory_space<vmem>>, %arg4: memref<9x128x128xbf16, #tpu.memory_space<vmem>>, %arg5: memref<1x128xf32, #tpu.memory_space<vmem>>, %arg6: memref<1x16x16x128xbf16, #tpu.memory_space<vmem>>, %arg7: memref<18x18x128xbf16, #tpu.memory_space<vmem>>, %arg8: memref<18x18x128xbf16, #tpu.memory_space<vmem>>) attributes {dimension_semantics = [#tpu.dimension_semantics<parallel>], iteration_bounds = array<i64: 2>, scalar_prefetch = 0 : i64, scratch_operands = 2 : i64, tpu.core_type = #tpu.core_type<tc>, window_params = [{transform_indices = @transform_0, window_bounds = array<i64: 1, 16, 16, 128>}, {pipeline_mode = #tpu.pipeline_mode<synchronous>, transform_indices = @transform_1, window_bounds = array<i64: 9, 128, 256>}, {pipeline_mode = #tpu.pipeline_mode<synchronous>, transform_indices = @transform_2, window_bounds = array<i64: 1, 256>}, {pipeline_mode = #tpu.pipeline_mode<synchronous>, transform_indices = @transform_3, window_bounds = array<i64: 9, 128, 128>}, {pipeline_mode = #tpu.pipeline_mode<synchronous>, transform_indices = @transform_4, window_bounds = array<i64: 1, 128>}, {transform_indices = @transform_5, window_bounds = array<i64: 1, 16, 16, 128>}]} {
    %cst = arith.constant 0.000000e+00 : bf16
    %0 = vector.broadcast %cst : bf16 to vector<18x128xbf16>
    %c0 = arith.constant 0 : index
    %c0_0 = arith.constant 0 : index
    %c0_1 = arith.constant 0 : index
    %1 = vector.load %arg7[%c0, %c0_0, %c0_1] : memref<18x18x128xbf16, #tpu.memory_space<vmem>>, vector<1x18x128xbf16>
    %2 = vector.shape_cast %1 : vector<1x18x128xbf16> to vector<18x128xbf16>
    %3 = vector.shape_cast %0 : vector<18x128xbf16> to vector<1x18x128xbf16>
    tpu.vector_store %arg7[%c0, %c0_0, %c0_1], %3 {strides = array<i32>} : memref<18x18x128xbf16, #tpu.memory_space<vmem>>, vector<1x18x128xbf16>,
    %cst_2 = arith.constant 0.000000e+00 : bf16
    %4 = vector.broadcast %cst_2 : bf16 to vector<18x128xbf16>
    %c17 = arith.constant 17 : index
    %c0_3 = arith.constant 0 : index
    %c0_4 = arith.constant 0 : index
    %5 = vector.load %arg7[%c17, %c0_3, %c0_4] : memref<18x18x128xbf16, #tpu.memory_space<vmem>>, vector<1x18x128xbf16>
    %6 = vector.shape_cast %5 : vector<1x18x128xbf16> to vector<18x128xbf16>
    %7 = vector.shape_cast %4 : vector<18x128xbf16> to vector<1x18x128xbf16>
    tpu.vector_store %arg7[%c17, %c0_3, %c0_4], %7 {strides = array<i32>} : memref<18x18x128xbf16, #tpu.memory_space<vmem>>, vector<1x18x128xbf16>,
    %cst_5 = arith.constant 0.000000e+00 : bf16
    %8 = vector.broadcast %cst_5 : bf16 to vector<18x1x128xbf16>
    %c0_6 = arith.constant 0 : index
    %c0_7 = arith.constant 0 : index
    %c0_8 = arith.constant 0 : index
    %9 = vector.load %arg7[%c0_6, %c0_7, %c0_8] : memref<18x18x128xbf16, #tpu.memory_space<vmem>>, vector<18x1x128xbf16>
    tpu.vector_store %arg7[%c0_6, %c0_7, %c0_8], %8 {strides = array<i32>} : memref<18x18x128xbf16, #tpu.memory_space<vmem>>, vector<18x1x128xbf16>,
    %cst_9 = arith.constant 0.000000e+00 : bf16
    %10 = vector.broadcast %cst_9 : bf16 to vector<18x1x128xbf16>
    %c0_10 = arith.constant 0 : index
    %c17_11 = arith.constant 17 : index
    %c0_12 = arith.constant 0 : index
    %11 = vector.load %arg7[%c0_10, %c17_11, %c0_12] : memref<18x18x128xbf16, #tpu.memory_space<vmem>>, vector<18x1x128xbf16>
    tpu.vector_store %arg7[%c0_10, %c17_11, %c0_12], %10 {strides = array<i32>} : memref<18x18x128xbf16, #tpu.memory_space<vmem>>, vector<18x1x128xbf16>,
    %cst_13 = arith.constant 0.000000e+00 : bf16
    %12 = vector.broadcast %cst_13 : bf16 to vector<18x128xbf16>
    %c0_14 = arith.constant 0 : index
    %c0_15 = arith.constant 0 : index
    %c0_16 = arith.constant 0 : index
    %13 = vector.load %arg8[%c0_14, %c0_15, %c0_16] : memref<18x18x128xbf16, #tpu.memory_space<vmem>>, vector<1x18x128xbf16>
    %14 = vector.shape_cast %13 : vector<1x18x128xbf16> to vector<18x128xbf16>
    %15 = vector.shape_cast %12 : vector<18x128xbf16> to vector<1x18x128xbf16>
    tpu.vector_store %arg8[%c0_14, %c0_15, %c0_16], %15 {strides = array<i32>} : memref<18x18x128xbf16, #tpu.memory_space<vmem>>, vector<1x18x128xbf16>,
    %cst_17 = arith.constant 0.000000e+00 : bf16
    %16 = vector.broadcast %cst_17 : bf16 to vector<18x128xbf16>
    %c17_18 = arith.constant 17 : index
    %c0_19 = arith.constant 0 : index
    %c0_20 = arith.constant 0 : index
    %17 = vector.load %arg8[%c17_18, %c0_19, %c0_20] : memref<18x18x128xbf16, #tpu.memory_space<vmem>>, vector<1x18x128xbf16>
    %18 = vector.shape_cast %17 : vector<1x18x128xbf16> to vector<18x128xbf16>
    %19 = vector.shape_cast %16 : vector<18x128xbf16> to vector<1x18x128xbf16>
    tpu.vector_store %arg8[%c17_18, %c0_19, %c0_20], %19 {strides = array<i32>} : memref<18x18x128xbf16, #tpu.memory_space<vmem>>, vector<1x18x128xbf16>,
    %cst_21 = arith.constant 0.000000e+00 : bf16
    %20 = vector.broadcast %cst_21 : bf16 to vector<18x1x128xbf16>
    %c0_22 = arith.constant 0 : index
    %c0_23 = arith.constant 0 : index
    %c0_24 = arith.constant 0 : index
    %21 = vector.load %arg8[%c0_22, %c0_23, %c0_24] : memref<18x18x128xbf16, #tpu.memory_space<vmem>>, vector<18x1x128xbf16>
    tpu.vector_store %arg8[%c0_22, %c0_23, %c0_24], %20 {strides = array<i32>} : memref<18x18x128xbf16, #tpu.memory_space<vmem>>, vector<18x1x128xbf16>,
    %cst_25 = arith.constant 0.000000e+00 : bf16
    %22 = vector.broadcast %cst_25 : bf16 to vector<18x1x128xbf16>
    %c0_26 = arith.constant 0 : index
    %c17_27 = arith.constant 17 : index
    %c0_28 = arith.constant 0 : index
    %23 = vector.load %arg8[%c0_26, %c17_27, %c0_28] : memref<18x18x128xbf16, #tpu.memory_space<vmem>>, vector<18x1x128xbf16>
    tpu.vector_store %arg8[%c0_26, %c17_27, %c0_28], %22 {strides = array<i32>} : memref<18x18x128xbf16, #tpu.memory_space<vmem>>, vector<18x1x128xbf16>,
    %c0_29 = arith.constant 0 : index
    %c0_30 = arith.constant 0 : index
    %c0_31 = arith.constant 0 : index
    %c0_32 = arith.constant 0 : index
    %24 = vector.load %arg1[%c0_29, %c0_30, %c0_31, %c0_32] : memref<1x16x16x128xbf16, #tpu.memory_space<vmem>>, vector<1x16x16x128xbf16>
    %25 = vector.shape_cast %24 : vector<1x16x16x128xbf16> to vector<16x16x128xbf16>
    %c1 = arith.constant 1 : index
    %c1_33 = arith.constant 1 : index
    %c0_34 = arith.constant 0 : index
    %26 = vector.load %arg7[%c1, %c1_33, %c0_34] : memref<18x18x128xbf16, #tpu.memory_space<vmem>>, vector<16x16x128xbf16>
    tpu.vector_store %arg7[%c1, %c1_33, %c0_34], %25 {strides = array<i32>} : memref<18x18x128xbf16, #tpu.memory_space<vmem>>, vector<16x16x128xbf16>,
    %c0_35 = arith.constant 0 : index
    %c0_36 = arith.constant 0 : index
    %c0_37 = arith.constant 0 : index
    %27 = vector.load %arg7[%c0_35, %c0_36, %c0_37] : memref<18x18x128xbf16, #tpu.memory_space<vmem>>, vector<18x18x128xbf16>
    %28 = vector.extract_strided_slice %27 {offsets = [0, 0, 0], sizes = [16, 16, 128], strides = [1, 1, 1]} : vector<18x18x128xbf16> to vector<16x16x128xbf16>
    %29 = vector.shape_cast %28 : vector<16x16x128xbf16> to vector<256x128xbf16>
    %c0_38 = arith.constant 0 : index
    %c0_39 = arith.constant 0 : index
    %c0_40 = arith.constant 0 : index
    %30 = vector.load %arg2[%c0_38, %c0_39, %c0_40] : memref<9x128x256xbf16, #tpu.memory_space<vmem>>, vector<1x128x256xbf16>
    %31 = vector.shape_cast %30 : vector<1x128x256xbf16> to vector<128x256xbf16>
    %cst_41 = arith.constant dense<0.000000e+00> : vector<256x256xf32>
    %32 = tpu.matmul %29, %31, %cst_41 {dimension_numbers = #tpu.dot_dimension_numbers<[1], [0], [0], [1], [0, 0, 1, 1], [], []>} : vector<256x128xbf16>, vector<128x256xbf16>, vector<256x256xf32> -> vector<256x256xf32>
    %33 = vector.extract_strided_slice %27 {offsets = [0, 1, 0], sizes = [16, 16, 128], strides = [1, 1, 1]} : vector<18x18x128xbf16> to vector<16x16x128xbf16>
    %34 = vector.shape_cast %33 : vector<16x16x128xbf16> to vector<256x128xbf16>
    %c1_42 = arith.constant 1 : index
    %c0_43 = arith.constant 0 : index
    %c0_44 = arith.constant 0 : index
    %35 = vector.load %arg2[%c1_42, %c0_43, %c0_44] : memref<9x128x256xbf16, #tpu.memory_space<vmem>>, vector<1x128x256xbf16>
    %36 = vector.shape_cast %35 : vector<1x128x256xbf16> to vector<128x256xbf16>
    %cst_45 = arith.constant dense<0.000000e+00> : vector<256x256xf32>
    %37 = tpu.matmul %34, %36, %cst_45 {dimension_numbers = #tpu.dot_dimension_numbers<[1], [0], [0], [1], [0, 0, 1, 1], [], []>} : vector<256x128xbf16>, vector<128x256xbf16>, vector<256x256xf32> -> vector<256x256xf32>
    %38 = arith.addf %32, %37 : vector<256x256xf32>
    %39 = vector.extract_strided_slice %27 {offsets = [0, 2, 0], sizes = [16, 16, 128], strides = [1, 1, 1]} : vector<18x18x128xbf16> to vector<16x16x128xbf16>
    %40 = vector.shape_cast %39 : vector<16x16x128xbf16> to vector<256x128xbf16>
    %c2 = arith.constant 2 : index
    %c0_46 = arith.constant 0 : index
    %c0_47 = arith.constant 0 : index
    %41 = vector.load %arg2[%c2, %c0_46, %c0_47] : memref<9x128x256xbf16, #tpu.memory_space<vmem>>, vector<1x128x256xbf16>
    %42 = vector.shape_cast %41 : vector<1x128x256xbf16> to vector<128x256xbf16>
    %cst_48 = arith.constant dense<0.000000e+00> : vector<256x256xf32>
    %43 = tpu.matmul %40, %42, %cst_48 {dimension_numbers = #tpu.dot_dimension_numbers<[1], [0], [0], [1], [0, 0, 1, 1], [], []>} : vector<256x128xbf16>, vector<128x256xbf16>, vector<256x256xf32> -> vector<256x256xf32>
    %44 = arith.addf %38, %43 : vector<256x256xf32>
    %45 = vector.extract_strided_slice %27 {offsets = [1, 0, 0], sizes = [16, 16, 128], strides = [1, 1, 1]} : vector<18x18x128xbf16> to vector<16x16x128xbf16>
    %46 = vector.shape_cast %45 : vector<16x16x128xbf16> to vector<256x128xbf16>
    %c3 = arith.constant 3 : index
    %c0_49 = arith.constant 0 : index
    %c0_50 = arith.constant 0 : index
    %47 = vector.load %arg2[%c3, %c0_49, %c0_50] : memref<9x128x256xbf16, #tpu.memory_space<vmem>>, vector<1x128x256xbf16>
    %48 = vector.shape_cast %47 : vector<1x128x256xbf16> to vector<128x256xbf16>
    %cst_51 = arith.constant dense<0.000000e+00> : vector<256x256xf32>
    %49 = tpu.matmul %46, %48, %cst_51 {dimension_numbers = #tpu.dot_dimension_numbers<[1], [0], [0], [1], [0, 0, 1, 1], [], []>} : vector<256x128xbf16>, vector<128x256xbf16>, vector<256x256xf32> -> vector<256x256xf32>
    %50 = arith.addf %44, %49 : vector<256x256xf32>
    %51 = vector.extract_strided_slice %27 {offsets = [1, 1, 0], sizes = [16, 16, 128], strides = [1, 1, 1]} : vector<18x18x128xbf16> to vector<16x16x128xbf16>
    %52 = vector.shape_cast %51 : vector<16x16x128xbf16> to vector<256x128xbf16>
    %c4 = arith.constant 4 : index
    %c0_52 = arith.constant 0 : index
    %c0_53 = arith.constant 0 : index
    %53 = vector.load %arg2[%c4, %c0_52, %c0_53] : memref<9x128x256xbf16, #tpu.memory_space<vmem>>, vector<1x128x256xbf16>
    %54 = vector.shape_cast %53 : vector<1x128x256xbf16> to vector<128x256xbf16>
    %cst_54 = arith.constant dense<0.000000e+00> : vector<256x256xf32>
    %55 = tpu.matmul %52, %54, %cst_54 {dimension_numbers = #tpu.dot_dimension_numbers<[1], [0], [0], [1], [0, 0, 1, 1], [], []>} : vector<256x128xbf16>, vector<128x256xbf16>, vector<256x256xf32> -> vector<256x256xf32>
    %56 = arith.addf %50, %55 : vector<256x256xf32>
    %57 = vector.extract_strided_slice %27 {offsets = [1, 2, 0], sizes = [16, 16, 128], strides = [1, 1, 1]} : vector<18x18x128xbf16> to vector<16x16x128xbf16>
    %58 = vector.shape_cast %57 : vector<16x16x128xbf16> to vector<256x128xbf16>
    %c5 = arith.constant 5 : index
    %c0_55 = arith.constant 0 : index
    %c0_56 = arith.constant 0 : index
    %59 = vector.load %arg2[%c5, %c0_55, %c0_56] : memref<9x128x256xbf16, #tpu.memory_space<vmem>>, vector<1x128x256xbf16>
    %60 = vector.shape_cast %59 : vector<1x128x256xbf16> to vector<128x256xbf16>
    %cst_57 = arith.constant dense<0.000000e+00> : vector<256x256xf32>
    %61 = tpu.matmul %58, %60, %cst_57 {dimension_numbers = #tpu.dot_dimension_numbers<[1], [0], [0], [1], [0, 0, 1, 1], [], []>} : vector<256x128xbf16>, vector<128x256xbf16>, vector<256x256xf32> -> vector<256x256xf32>
    %62 = arith.addf %56, %61 : vector<256x256xf32>
    %63 = vector.extract_strided_slice %27 {offsets = [2, 0, 0], sizes = [16, 16, 128], strides = [1, 1, 1]} : vector<18x18x128xbf16> to vector<16x16x128xbf16>
    %64 = vector.shape_cast %63 : vector<16x16x128xbf16> to vector<256x128xbf16>
    %c6 = arith.constant 6 : index
    %c0_58 = arith.constant 0 : index
    %c0_59 = arith.constant 0 : index
    %65 = vector.load %arg2[%c6, %c0_58, %c0_59] : memref<9x128x256xbf16, #tpu.memory_space<vmem>>, vector<1x128x256xbf16>
    %66 = vector.shape_cast %65 : vector<1x128x256xbf16> to vector<128x256xbf16>
    %cst_60 = arith.constant dense<0.000000e+00> : vector<256x256xf32>
    %67 = tpu.matmul %64, %66, %cst_60 {dimension_numbers = #tpu.dot_dimension_numbers<[1], [0], [0], [1], [0, 0, 1, 1], [], []>} : vector<256x128xbf16>, vector<128x256xbf16>, vector<256x256xf32> -> vector<256x256xf32>
    %68 = arith.addf %62, %67 : vector<256x256xf32>
    %69 = vector.extract_strided_slice %27 {offsets = [2, 1, 0], sizes = [16, 16, 128], strides = [1, 1, 1]} : vector<18x18x128xbf16> to vector<16x16x128xbf16>
    %70 = vector.shape_cast %69 : vector<16x16x128xbf16> to vector<256x128xbf16>
    %c7 = arith.constant 7 : index
    %c0_61 = arith.constant 0 : index
    %c0_62 = arith.constant 0 : index
    %71 = vector.load %arg2[%c7, %c0_61, %c0_62] : memref<9x128x256xbf16, #tpu.memory_space<vmem>>, vector<1x128x256xbf16>
    %72 = vector.shape_cast %71 : vector<1x128x256xbf16> to vector<128x256xbf16>
    %cst_63 = arith.constant dense<0.000000e+00> : vector<256x256xf32>
    %73 = tpu.matmul %70, %72, %cst_63 {dimension_numbers = #tpu.dot_dimension_numbers<[1], [0], [0], [1], [0, 0, 1, 1], [], []>} : vector<256x128xbf16>, vector<128x256xbf16>, vector<256x256xf32> -> vector<256x256xf32>
    %74 = arith.addf %68, %73 : vector<256x256xf32>
    %75 = vector.extract_strided_slice %27 {offsets = [2, 2, 0], sizes = [16, 16, 128], strides = [1, 1, 1]} : vector<18x18x128xbf16> to vector<16x16x128xbf16>
    %76 = vector.shape_cast %75 : vector<16x16x128xbf16> to vector<256x128xbf16>
    %c8 = arith.constant 8 : index
    %c0_64 = arith.constant 0 : index
    %c0_65 = arith.constant 0 : index
    %77 = vector.load %arg2[%c8, %c0_64, %c0_65] : memref<9x128x256xbf16, #tpu.memory_space<vmem>>, vector<1x128x256xbf16>
    %78 = vector.shape_cast %77 : vector<1x128x256xbf16> to vector<128x256xbf16>
    %cst_66 = arith.constant dense<0.000000e+00> : vector<256x256xf32>
    %79 = tpu.matmul %76, %78, %cst_66 {dimension_numbers = #tpu.dot_dimension_numbers<[1], [0], [0], [1], [0, 0, 1, 1], [], []>} : vector<256x128xbf16>, vector<128x256xbf16>, vector<256x256xf32> -> vector<256x256xf32>
    %80 = arith.addf %74, %79 : vector<256x256xf32>
    %c0_67 = arith.constant 0 : index
    %c0_68 = arith.constant 0 : index
    %81 = vector.load %arg3[%c0_67, %c0_68] : memref<1x256xf32, #tpu.memory_space<vmem>>, vector<1x256xf32>
    %82 = vector.broadcast %81 : vector<1x256xf32> to vector<256x256xf32>
    %83 = arith.addf %80, %82 : vector<256x256xf32>
    %cst_69 = arith.constant 0.000000e+00 : f32
    %84 = vector.broadcast %cst_69 : f32 to vector<256x256xf32>
    %85 = arith.maximumf %83, %84 : vector<256x256xf32>
    %86 = vector.extract_strided_slice %85 {offsets = [0, 0], sizes = [256, 128], strides = [1, 1]} : vector<256x256xf32> to vector<256x128xf32>
    %87 = arith.truncf %86 : vector<256x128xf32> to vector<256x128xbf16>
    %88 = vector.shape_cast %87 : vector<256x128xbf16> to vector<16x16x128xbf16>
    %c1_70 = arith.constant 1 : index
    %c1_71 = arith.constant 1 : index
    %c0_72 = arith.constant 0 : index
    %89 = vector.load %arg8[%c1_70, %c1_71, %c0_72] : memref<18x18x128xbf16, #tpu.memory_space<vmem>>, vector<16x16x128xbf16>
    tpu.vector_store %arg8[%c1_70, %c1_71, %c0_72], %88 {strides = array<i32>} : memref<18x18x128xbf16, #tpu.memory_space<vmem>>, vector<16x16x128xbf16>,
    %c0_73 = arith.constant 0 : index
    %c0_74 = arith.constant 0 : index
    %c0_75 = arith.constant 0 : index
    %90 = vector.load %arg8[%c0_73, %c0_74, %c0_75] : memref<18x18x128xbf16, #tpu.memory_space<vmem>>, vector<18x18x128xbf16>
    %91 = vector.extract_strided_slice %90 {offsets = [0, 0, 0], sizes = [16, 16, 128], strides = [1, 1, 1]} : vector<18x18x128xbf16> to vector<16x16x128xbf16>
    %92 = vector.shape_cast %91 : vector<16x16x128xbf16> to vector<256x128xbf16>
    %c0_76 = arith.constant 0 : index
    %c0_77 = arith.constant 0 : index
    %c0_78 = arith.constant 0 : index
    %93 = vector.load %arg4[%c0_76, %c0_77, %c0_78] : memref<9x128x128xbf16, #tpu.memory_space<vmem>>, vector<1x128x128xbf16>
    %94 = vector.shape_cast %93 : vector<1x128x128xbf16> to vector<128x128xbf16>
    %cst_79 = arith.constant dense<0.000000e+00> : vector<256x128xf32>
    %95 = tpu.matmul %92, %94, %cst_79 {dimension_numbers = #tpu.dot_dimension_numbers<[1], [0], [0], [1], [0, 0, 1, 1], [], []>} : vector<256x128xbf16>, vector<128x128xbf16>, vector<256x128xf32> -> vector<256x128xf32>
    %96 = vector.extract_strided_slice %90 {offsets = [0, 1, 0], sizes = [16, 16, 128], strides = [1, 1, 1]} : vector<18x18x128xbf16> to vector<16x16x128xbf16>
    %97 = vector.shape_cast %96 : vector<16x16x128xbf16> to vector<256x128xbf16>
    %c1_80 = arith.constant 1 : index
    %c0_81 = arith.constant 0 : index
    %c0_82 = arith.constant 0 : index
    %98 = vector.load %arg4[%c1_80, %c0_81, %c0_82] : memref<9x128x128xbf16, #tpu.memory_space<vmem>>, vector<1x128x128xbf16>
    %99 = vector.shape_cast %98 : vector<1x128x128xbf16> to vector<128x128xbf16>
    %cst_83 = arith.constant dense<0.000000e+00> : vector<256x128xf32>
    %100 = tpu.matmul %97, %99, %cst_83 {dimension_numbers = #tpu.dot_dimension_numbers<[1], [0], [0], [1], [0, 0, 1, 1], [], []>} : vector<256x128xbf16>, vector<128x128xbf16>, vector<256x128xf32> -> vector<256x128xf32>
    %101 = arith.addf %95, %100 : vector<256x128xf32>
    %102 = vector.extract_strided_slice %90 {offsets = [0, 2, 0], sizes = [16, 16, 128], strides = [1, 1, 1]} : vector<18x18x128xbf16> to vector<16x16x128xbf16>
    %103 = vector.shape_cast %102 : vector<16x16x128xbf16> to vector<256x128xbf16>
    %c2_84 = arith.constant 2 : index
    %c0_85 = arith.constant 0 : index
    %c0_86 = arith.constant 0 : index
    %104 = vector.load %arg4[%c2_84, %c0_85, %c0_86] : memref<9x128x128xbf16, #tpu.memory_space<vmem>>, vector<1x128x128xbf16>
    %105 = vector.shape_cast %104 : vector<1x128x128xbf16> to vector<128x128xbf16>
    %cst_87 = arith.constant dense<0.000000e+00> : vector<256x128xf32>
    %106 = tpu.matmul %103, %105, %cst_87 {dimension_numbers = #tpu.dot_dimension_numbers<[1], [0], [0], [1], [0, 0, 1, 1], [], []>} : vector<256x128xbf16>, vector<128x128xbf16>, vector<256x128xf32> -> vector<256x128xf32>
    %107 = arith.addf %101, %106 : vector<256x128xf32>
    %108 = vector.extract_strided_slice %90 {offsets = [1, 0, 0], sizes = [16, 16, 128], strides = [1, 1, 1]} : vector<18x18x128xbf16> to vector<16x16x128xbf16>
    %109 = vector.shape_cast %108 : vector<16x16x128xbf16> to vector<256x128xbf16>
    %c3_88 = arith.constant 3 : index
    %c0_89 = arith.constant 0 : index
    %c0_90 = arith.constant 0 : index
    %110 = vector.load %arg4[%c3_88, %c0_89, %c0_90] : memref<9x128x128xbf16, #tpu.memory_space<vmem>>, vector<1x128x128xbf16>
    %111 = vector.shape_cast %110 : vector<1x128x128xbf16> to vector<128x128xbf16>
    %cst_91 = arith.constant dense<0.000000e+00> : vector<256x128xf32>
    %112 = tpu.matmul %109, %111, %cst_91 {dimension_numbers = #tpu.dot_dimension_numbers<[1], [0], [0], [1], [0, 0, 1, 1], [], []>} : vector<256x128xbf16>, vector<128x128xbf16>, vector<256x128xf32> -> vector<256x128xf32>
    %113 = arith.addf %107, %112 : vector<256x128xf32>
    %114 = vector.extract_strided_slice %90 {offsets = [1, 1, 0], sizes = [16, 16, 128], strides = [1, 1, 1]} : vector<18x18x128xbf16> to vector<16x16x128xbf16>
    %115 = vector.shape_cast %114 : vector<16x16x128xbf16> to vector<256x128xbf16>
    %c4_92 = arith.constant 4 : index
    %c0_93 = arith.constant 0 : index
    %c0_94 = arith.constant 0 : index
    %116 = vector.load %arg4[%c4_92, %c0_93, %c0_94] : memref<9x128x128xbf16, #tpu.memory_space<vmem>>, vector<1x128x128xbf16>
    %117 = vector.shape_cast %116 : vector<1x128x128xbf16> to vector<128x128xbf16>
    %cst_95 = arith.constant dense<0.000000e+00> : vector<256x128xf32>
    %118 = tpu.matmul %115, %117, %cst_95 {dimension_numbers = #tpu.dot_dimension_numbers<[1], [0], [0], [1], [0, 0, 1, 1], [], []>} : vector<256x128xbf16>, vector<128x128xbf16>, vector<256x128xf32> -> vector<256x128xf32>
    %119 = arith.addf %113, %118 : vector<256x128xf32>
    %120 = vector.extract_strided_slice %90 {offsets = [1, 2, 0], sizes = [16, 16, 128], strides = [1, 1, 1]} : vector<18x18x128xbf16> to vector<16x16x128xbf16>
    %121 = vector.shape_cast %120 : vector<16x16x128xbf16> to vector<256x128xbf16>
    %c5_96 = arith.constant 5 : index
    %c0_97 = arith.constant 0 : index
    %c0_98 = arith.constant 0 : index
    %122 = vector.load %arg4[%c5_96, %c0_97, %c0_98] : memref<9x128x128xbf16, #tpu.memory_space<vmem>>, vector<1x128x128xbf16>
    %123 = vector.shape_cast %122 : vector<1x128x128xbf16> to vector<128x128xbf16>
    %cst_99 = arith.constant dense<0.000000e+00> : vector<256x128xf32>
    %124 = tpu.matmul %121, %123, %cst_99 {dimension_numbers = #tpu.dot_dimension_numbers<[1], [0], [0], [1], [0, 0, 1, 1], [], []>} : vector<256x128xbf16>, vector<128x128xbf16>, vector<256x128xf32> -> vector<256x128xf32>
    %125 = arith.addf %119, %124 : vector<256x128xf32>
    %126 = vector.extract_strided_slice %90 {offsets = [2, 0, 0], sizes = [16, 16, 128], strides = [1, 1, 1]} : vector<18x18x128xbf16> to vector<16x16x128xbf16>
    %127 = vector.shape_cast %126 : vector<16x16x128xbf16> to vector<256x128xbf16>
    %c6_100 = arith.constant 6 : index
    %c0_101 = arith.constant 0 : index
    %c0_102 = arith.constant 0 : index
    %128 = vector.load %arg4[%c6_100, %c0_101, %c0_102] : memref<9x128x128xbf16, #tpu.memory_space<vmem>>, vector<1x128x128xbf16>
    %129 = vector.shape_cast %128 : vector<1x128x128xbf16> to vector<128x128xbf16>
    %cst_103 = arith.constant dense<0.000000e+00> : vector<256x128xf32>
    %130 = tpu.matmul %127, %129, %cst_103 {dimension_numbers = #tpu.dot_dimension_numbers<[1], [0], [0], [1], [0, 0, 1, 1], [], []>} : vector<256x128xbf16>, vector<128x128xbf16>, vector<256x128xf32> -> vector<256x128xf32>
    %131 = arith.addf %125, %130 : vector<256x128xf32>
    %132 = vector.extract_strided_slice %90 {offsets = [2, 1, 0], sizes = [16, 16, 128], strides = [1, 1, 1]} : vector<18x18x128xbf16> to vector<16x16x128xbf16>
    %133 = vector.shape_cast %132 : vector<16x16x128xbf16> to vector<256x128xbf16>
    %c7_104 = arith.constant 7 : index
    %c0_105 = arith.constant 0 : index
    %c0_106 = arith.constant 0 : index
    %134 = vector.load %arg4[%c7_104, %c0_105, %c0_106] : memref<9x128x128xbf16, #tpu.memory_space<vmem>>, vector<1x128x128xbf16>
    %135 = vector.shape_cast %134 : vector<1x128x128xbf16> to vector<128x128xbf16>
    %cst_107 = arith.constant dense<0.000000e+00> : vector<256x128xf32>
    %136 = tpu.matmul %133, %135, %cst_107 {dimension_numbers = #tpu.dot_dimension_numbers<[1], [0], [0], [1], [0, 0, 1, 1], [], []>} : vector<256x128xbf16>, vector<128x128xbf16>, vector<256x128xf32> -> vector<256x128xf32>
    %137 = arith.addf %131, %136 : vector<256x128xf32>
    %138 = vector.extract_strided_slice %90 {offsets = [2, 2, 0], sizes = [16, 16, 128], strides = [1, 1, 1]} : vector<18x18x128xbf16> to vector<16x16x128xbf16>
    %139 = vector.shape_cast %138 : vector<16x16x128xbf16> to vector<256x128xbf16>
    %c8_108 = arith.constant 8 : index
    %c0_109 = arith.constant 0 : index
    %c0_110 = arith.constant 0 : index
    %140 = vector.load %arg4[%c8_108, %c0_109, %c0_110] : memref<9x128x128xbf16, #tpu.memory_space<vmem>>, vector<1x128x128xbf16>
    %141 = vector.shape_cast %140 : vector<1x128x128xbf16> to vector<128x128xbf16>
    %cst_111 = arith.constant dense<0.000000e+00> : vector<256x128xf32>
    %142 = tpu.matmul %139, %141, %cst_111 {dimension_numbers = #tpu.dot_dimension_numbers<[1], [0], [0], [1], [0, 0, 1, 1], [], []>} : vector<256x128xbf16>, vector<128x128xbf16>, vector<256x128xf32> -> vector<256x128xf32>
    %143 = arith.addf %137, %142 : vector<256x128xf32>
    %c0_112 = arith.constant 0 : index
    %c0_113 = arith.constant 0 : index
    %144 = vector.load %arg5[%c0_112, %c0_113] : memref<1x128xf32, #tpu.memory_space<vmem>>, vector<1x128xf32>
    %145 = vector.broadcast %144 : vector<1x128xf32> to vector<256x128xf32>
    %146 = arith.addf %143, %145 : vector<256x128xf32>
    %147 = vector.extract_strided_slice %85 {offsets = [0, 128], sizes = [256, 128], strides = [1, 1]} : vector<256x256xf32> to vector<256x128xf32>
    %148 = arith.addf %146, %147 : vector<256x128xf32>
    %cst_114 = arith.constant 0.000000e+00 : f32
    %149 = vector.broadcast %cst_114 : f32 to vector<256x128xf32>
    %150 = arith.maximumf %148, %149 : vector<256x128xf32>
    %151 = vector.shape_cast %150 : vector<256x128xf32> to vector<16x16x128xf32>
    %152 = arith.truncf %151 : vector<16x16x128xf32> to vector<16x16x128xbf16>
    %c0_115 = arith.constant 0 : index
    %c0_116 = arith.constant 0 : index
    %c0_117 = arith.constant 0 : index
    %c0_118 = arith.constant 0 : index
    %153 = vector.load %arg6[%c0_115, %c0_116, %c0_117, %c0_118] : memref<1x16x16x128xbf16, #tpu.memory_space<vmem>>, vector<1x16x16x128xbf16>
    %154 = vector.shape_cast %153 : vector<1x16x16x128xbf16> to vector<16x16x128xbf16>
    %155 = vector.shape_cast %152 : vector<16x16x128xbf16> to vector<1x16x16x128xbf16>
    tpu.vector_store %arg6[%c0_115, %c0_116, %c0_117, %c0_118], %155 {strides = array<i32>} : memref<1x16x16x128xbf16, #tpu.memory_space<vmem>>, vector<1x16x16x128xbf16>,
    return
  }
  func.func @transform_0(%arg0: i32) -> (i32, i32, i32, i32) {
    %c0_i32 = arith.constant 0 : i32
    %c0_i32_0 = arith.constant 0 : i32
    %c0_i32_1 = arith.constant 0 : i32
    %c0_i32_2 = arith.constant 0 : i32
    return %arg0, %c0_i32, %c0_i32_0, %c0_i32_1 : i32, i32, i32, i32
  }
  func.func @transform_1(%arg0: i32) -> (i32, i32, i32) {
    %c0_i32 = arith.constant 0 : i32
    %c0_i32_0 = arith.constant 0 : i32
    %c0_i32_1 = arith.constant 0 : i32
    %c0_i32_2 = arith.constant 0 : i32
    return %c0_i32, %c0_i32_0, %c0_i32_1 : i32, i32, i32
  }
  func.func @transform_2(%arg0: i32) -> (i32, i32) {
    %c0_i32 = arith.constant 0 : i32
    %c0_i32_0 = arith.constant 0 : i32
    %c0_i32_1 = arith.constant 0 : i32
    return %c0_i32, %c0_i32_0 : i32, i32
  }
  func.func @transform_3(%arg0: i32) -> (i32, i32, i32) {
    %c0_i32 = arith.constant 0 : i32
    %c0_i32_0 = arith.constant 0 : i32
    %c0_i32_1 = arith.constant 0 : i32
    %c0_i32_2 = arith.constant 0 : i32
    return %c0_i32, %c0_i32_0, %c0_i32_1 : i32, i32, i32
  }
  func.func @transform_4(%arg0: i32) -> (i32, i32) {
    %c0_i32 = arith.constant 0 : i32
    %c0_i32_0 = arith.constant 0 : i32
    %c0_i32_1 = arith.constant 0 : i32
    return %c0_i32, %c0_i32_0 : i32, i32
  }
  func.func @transform_5(%arg0: i32) -> (i32, i32, i32, i32) {
    %c0_i32 = arith.constant 0 : i32
    %c0_i32_0 = arith.constant 0 : i32
    %c0_i32_1 = arith.constant 0 : i32
    %c0_i32_2 = arith.constant 0 : i32
    return %arg0, %c0_i32, %c0_i32_0, %c0_i32_1 : i32, i32, i32, i32
  }
}

</mosaic_0001>

<llo_original>
// kernel: building_block_forward.1
$region0: #{building_block_forward.1}
  #allocation0 [shape = 'u32[]', space=smem, size = 0x4, offset = 0x4, fixed_abs, tag = 'smem constant byte address 0x4 - core index']
  #allocation1 [shape = 'u32[144,128]{1,0:T(1,128)}', space=vmem, size = 0x12000, scoped, tag = 'internal scratch']
  #allocation2 [shape = 'bf16[18,18,128]{2,1,0:T(8,128)(2,1)}', space=vmem, size = 0x1b000, scoped, tag = 'scratch operand']
  #allocation3 [shape = 'bf16[18,18,128]{2,1,0:T(8,128)(2,1)}', space=vmem, size = 0x1b000, scoped, tag = 'scratch operand']
  %s0 = inlined_call_operand.hbm [shape: bf16[2,16,16,128], index: 0, kind: input, shape index: {}]
  %s1 = inlined_call_operand.hbm [shape: bf16[9,128,256], index: 1, kind: input, shape index: {}]
  %s2 = inlined_call_operand.hbm [shape: f32[1,256], index: 2, kind: input, shape index: {}]
  %s3 = inlined_call_operand.hbm [shape: bf16[9,128,128], index: 3, kind: input, shape index: {}]
  %s4 = inlined_call_operand.hbm [shape: f32[1,128], index: 4, kind: input, shape index: {}]
  %s5 = inlined_call_operand.hbm [shape: bf16[2,16,16,128], index: 5, kind: output, shape index: {}]
  %s6 = sld [smem:[#allocation0]]
  $region73: #{building_block_forward.1} parent=0
    _
  %s8 = ssub.s32 1, %s6
  %s9 = scalar_select 0, %s8, %s6
  $region1: #{building_block_forward.1} parent=0
    #allocation4 [shape = 'u8[131072]{0}', space=vmem, size = 0x20000, scoped, tag = 'input window, operand 0']
    #allocation5 [shape = 's32[2]{0}', space=sflag, size = 0x8, scoped, tag = 'scoped memory for building_block_forward.1']
    #allocation6 [shape = 's32[2]{0}', space=sflag, size = 0x8, scoped, tag = 'scoped memory for building_block_forward.1']
    #allocation7 [shape = 'u8[589824]{0}', space=vmem, size = 0x90000, scoped, tag = 'input window, operand 1, single buffered']
    #allocation8 [shape = 's32[1]{0}', space=sflag, size = 0x4, scoped, tag = 'scoped memory for building_block_forward.1']
    #allocation9 [shape = 'u8[1024]{0}', space=vmem, size = 0x400, scoped, tag = 'input window, operand 2, single buffered']
    #allocation10 [shape = 'u8[294912]{0}', space=vmem, size = 0x48000, scoped, tag = 'input window, operand 3, single buffered']
    #allocation11 [shape = 's32[1]{0}', space=sflag, size = 0x4, scoped, tag = 'scoped memory for building_block_forward.1']
    #allocation12 [shape = 'u8[512]{0}', space=vmem, size = 0x400, scoped, tag = 'input window, operand 4, single buffered']
    #allocation13 [shape = 'u8[131072]{0}', space=vmem, size = 0x20000, scoped, tag = 'output window, operand 0']
    %10 = vsyncpa [#allocation5], 0
    %s11 = scalar_lea.sflag [#allocation5], 1
    %12 = vsyncpa %s11, 0
    %13 = vsyncpa [#allocation8], 0
    %14 = vsyncpa [#allocation11], 0
    %15 = vsyncpa [#allocation6], 0
    %s16 = scalar_lea.sflag [#allocation6], 1
    %17 = vsyncpa %s16, 0
    loop: start=0, step=1, limit=4
    $region2: #{building_block_forward.1} parent=1 // loop_pre_header
      _
    $region3: #{building_block_forward.1} parent=1 // loop_header
      %s19 = sphi 0, %s23
      %p20 = scmp.ge.s32.totalorder %s19, 4
      %s29 = sphi 0, %s31
      %s32 = sphi 0, %s29
      %s33 = sphi 0, %s32
      %s49 = sphi 0, %s33
      %s53 = sphi 0, %s53
      %s55 = sphi 0, %s53
      %s56 = sphi 0, %s55
      %s70 = sphi 0, %s56
      %s74 = sphi 0, %s74
      %s76 = sphi 0, %s74
      %s77 = sphi 0, %s76
      %s91 = sphi 0, %s77
      %s95 = sphi 0, %s95
      %s97 = sphi 0, %s95
      %s98 = sphi 0, %s97
      %s112 = sphi 0, %s98
      %s116 = sphi 0, %s116
      %s118 = sphi 0, %s116
      %s119 = sphi 0, %s118
      %s133 = sphi 0, %s119
      %s139 = sphi 0, %s141
      %s142 = sphi 0, %s139
      %s143 = sphi 0, %s142
      %s159 = sphi 0, %s143
    $region4: #{building_block_forward.1} parent=1 // loop_header_branch
      %22 = sbr.rel (%p20) target = $region8
    $region5: #{building_block_forward.1} parent=1 // loop_body
      %s24 = ssub.s32 %s19, 1
      %s25 = ssub.s32 %s19, 2
      %s26 = sadd.s32 %s19, 1
      %s27 = ssub.s32 %s19, %s26
      %p28 = scmp.eq.s32.totalorder %s27, 0
      %s30 = sadd.s32 %s29, 1
      %s31 = scalar_select %p28, %s29, %s30
      %p34 = pneg %p28
      %p35 = scmp.eq.s32.totalorder %s19, 1
      %p36 = por %p34, %p35
      %p37 = scmp.ne.s32.totalorder %s29, %s32
      %p38 = scmp.eq.s32.totalorder %s19, 0
      %p39 = por %p37, %p38
      %p40 = scmp.ne.s32.totalorder %s29, %s32
      %p41 = scmp.eq.s32.totalorder %s24, 1
      %p42 = por %p40, %p41
      %p43 = scmp.ne.s32.totalorder %s32, %s33
      %p44 = scmp.eq.s32.totalorder %s24, 0
      %p45 = por %p43, %p44
      %p46 = scmp.ne.s32.totalorder %s32, %s33
      %p47 = scmp.eq.s32.totalorder %s25, 1
      %p48 = por %p46, %p47
      %p50 = scmp.ne.s32.totalorder %s33, %s49
      %p51 = scmp.eq.s32.totalorder %s25, 0
      %p52 = por %p50, %p51
      %s54 = sadd.s32 %s53, 1
      %p57 = scmp.eq.s32.totalorder %s19, 1
      %p58 = scmp.ne.s32.totalorder %s53, %s55
      %p59 = scmp.eq.s32.totalorder %s19, 0
      %p60 = por %p58, %p59
      %p61 = scmp.ne.s32.totalorder %s53, %s55
      %p62 = scmp.eq.s32.totalorder %s24, 1
      %p63 = por %p61, %p62
      %p64 = scmp.ne.s32.totalorder %s55, %s56
      %p65 = scmp.eq.s32.totalorder %s24, 0
      %p66 = por %p64, %p65
      %p67 = scmp.ne.s32.totalorder %s55, %s56
      %p68 = scmp.eq.s32.totalorder %s25, 1
      %p69 = por %p67, %p68
      %p71 = scmp.ne.s32.totalorder %s56, %s70
      %p72 = scmp.eq.s32.totalorder %s25, 0
      %p73 = por %p71, %p72
      %s75 = sadd.s32 %s74, 1
      %p78 = scmp.eq.s32.totalorder %s19, 1
      %p79 = scmp.ne.s32.totalorder %s74, %s76
      %p80 = scmp.eq.s32.totalorder %s19, 0
      %p81 = por %p79, %p80
      %p82 = scmp.ne.s32.totalorder %s74, %s76
      %p83 = scmp.eq.s32.totalorder %s24, 1
      %p84 = por %p82, %p83
      %p85 = scmp.ne.s32.totalorder %s76, %s77
      %p86 = scmp.eq.s32.totalorder %s24, 0
      %p87 = por %p85, %p86
      %p88 = scmp.ne.s32.totalorder %s76, %s77
      %p89 = scmp.eq.s32.totalorder %s25, 1
      %p90 = por %p88, %p89
      %p92 = scmp.ne.s32.totalorder %s77, %s91
      %p93 = scmp.eq.s32.totalorder %s25, 0
      %p94 = por %p92, %p93
      %s96 = sadd.s32 %s95, 1
      %p99 = scmp.eq.s32.totalorder %s19, 1
      %p100 = scmp.ne.s32.totalorder %s95, %s97
      %p101 = scmp.eq.s32.totalorder %s19, 0
      %p102 = por %p100, %p101
      %p103 = scmp.ne.s32.totalorder %s95, %s97
      %p104 = scmp.eq.s32.totalorder %s24, 1
      %p105 = por %p103, %p104
      %p106 = scmp.ne.s32.totalorder %s97, %s98
      %p107 = scmp.eq.s32.totalorder %s24, 0
      %p108 = por %p106, %p107
      %p109 = scmp.ne.s32.totalorder %s97, %s98
      %p110 = scmp.eq.s32.totalorder %s25, 1
      %p111 = por %p109, %p110
      %p113 = scmp.ne.s32.totalorder %s98, %s112
      %p114 = scmp.eq.s32.totalorder %s25, 0
      %p115 = por %p113, %p114
      %s117 = sadd.s32 %s116, 1
      %p120 = scmp.eq.s32.totalorder %s19, 1
      %p121 = scmp.ne.s32.totalorder %s116, %s118
      %p122 = scmp.eq.s32.totalorder %s19, 0
      %p123 = por %p121, %p122
      %p124 = scmp.ne.s32.totalorder %s116, %s118
      %p125 = scmp.eq.s32.totalorder %s24, 1
      %p126 = por %p124, %p125
      %p127 = scmp.ne.s32.totalorder %s118, %s119
      %p128 = scmp.eq.s32.totalorder %s24, 0
      %p129 = por %p127, %p128
      %p130 = scmp.ne.s32.totalorder %s118, %s119
      %p131 = scmp.eq.s32.totalorder %s25, 1
      %p132 = por %p130, %p131
      %p134 = scmp.ne.s32.totalorder %s119, %s133
      %p135 = scmp.eq.s32.totalorder %s25, 0
      %p136 = por %p134, %p135
      %s137 = ssub.s32 %s19, %s26
      %p138 = scmp.eq.s32.totalorder %s137, 0
      %s140 = sadd.s32 %s139, 1
      %s141 = scalar_select %p138, %s139, %s140
      %p144 = pneg %p138
      %p145 = scmp.eq.s32.totalorder %s19, 1
      %p146 = por %p144, %p145
      %p147 = scmp.ne.s32.totalorder %s139, %s142
      %p148 = scmp.eq.s32.totalorder %s19, 0
      %p149 = por %p147, %p148
      %p150 = scmp.ne.s32.totalorder %s139, %s142
      %p151 = scmp.eq.s32.totalorder %s24, 1
      %p152 = por %p150, %p151
      %p153 = scmp.ne.s32.totalorder %s142, %s143
      %p154 = scmp.eq.s32.totalorder %s24, 0
      %p155 = por %p153, %p154
      %p156 = scmp.ne.s32.totalorder %s142, %s143
      %p157 = scmp.eq.s32.totalorder %s25, 1
      %p158 = por %p156, %p157
      %p160 = scmp.ne.s32.totalorder %s143, %s159
      %p161 = scmp.eq.s32.totalorder %s25, 0
      %p162 = por %p160, %p161
      %p163 = scmp.le.s32.totalorder 1, %s19
      %p164 = scmp.lt.s32.totalorder %s19, 3
      %p165 = pnand %p163, %p164
      %p166 = pneg %p165
      // Predicated region
      $region9: #{building_block_forward.1} parent=5 // pred_check
        _
      $region10: #{building_block_forward.1} parent=5 // pred_check_branch
        %168 = sbr.rel (%p165) target = $region12
      $region11: #{building_block_forward.1} parent=5 // pred_region
        %s169 = ssub.s32 %s19, 1
        // Predicated region
        $region13: #{building_block_forward.1} parent=11 // pred_check
          %p170 = pneg %p66
        $region14: #{building_block_forward.1} parent=11 // pred_check_branch
          %172 = sbr.rel (%p170) target = $region16
        $region15: #{building_block_forward.1} parent=11 // pred_region
          %s174 = ssub.s32 18432, 18432
          %175 = vsyncadd [#allocation8], %s174
          %s176 = sshll.u32 [#allocation7], 4
          %s177 = int_to_ptr.vmem [resolvable:$true] %s176
          %182 = dma.hbm_to_vmem [thread:$0]  %s1, 18432, %s177, [#allocation8], 128, 128, 8
        $region16: #{building_block_forward.1} parent=11 // pred_fallthru
          _
        // Predicated region
        $region17: #{building_block_forward.1} parent=11 // pred_check
          %p183 = pneg %p87
        $region18: #{building_block_forward.1} parent=11 // pred_check_branch
          %185 = sbr.rel (%p183) target = $region20
        $region19: #{building_block_forward.1} parent=11 // pred_region
          %s187 = ssub.s32 32, 32
          %188 = vsyncadd [#allocation8], %s187
          %s190 = sshll.u32 [#allocation9], 4
          %s191 = int_to_ptr.vmem [resolvable:$true] %s190
          %193 = dma.hbm_to_vmem [thread:$0]  %s2, 32, %s191, [#allocation8]
        $region20: #{building_block_forward.1} parent=11 // pred_fallthru
          _
        // Predicated region
        $region21: #{building_block_forward.1} parent=11 // pred_check
          %p194 = pneg %p108
        $region22: #{building_block_forward.1} parent=11 // pred_check_branch
          %196 = sbr.rel (%p194) target = $region24
        $region23: #{building_block_forward.1} parent=11 // pred_region
          %s198 = ssub.s32 9216, 9216
          %199 = vsyncadd [#allocation11], %s198
          %s200 = sshll.u32 [#allocation10], 4
          %s201 = int_to_ptr.vmem [resolvable:$true] %s200
          %206 = dma.hbm_to_vmem [thread:$0]  %s3, 9216, %s201, [#allocation11], 64, 64, 4
        $region24: #{building_block_forward.1} parent=11 // pred_fallthru
          _
        // Predicated region
        $region25: #{building_block_forward.1} parent=11 // pred_check
          %p207 = pneg %p129
        $region26: #{building_block_forward.1} parent=11 // pred_check_branch
          %209 = sbr.rel (%p207) target = $region28
        $region27: #{building_block_forward.1} parent=11 // pred_region
          %s211 = ssub.s32 16, 16
          %212 = vsyncadd [#allocation11], %s211
          %s214 = sshll.u32 [#allocation12], 4
          %s215 = int_to_ptr.vmem [resolvable:$true] %s214
          %217 = dma.hbm_to_vmem [thread:$0]  %s4, 16, %s215, [#allocation11]
        $region28: #{building_block_forward.1} parent=11 // pred_fallthru
          _
      $region12: #{building_block_forward.1} parent=5 // pred_fallthru
        _
      %p218 = scmp.lt.s32.totalorder %s19, 2
      // Predicated region
      $region29: #{building_block_forward.1} parent=5 // pred_check
        %p219 = pneg %p218
      $region30: #{building_block_forward.1} parent=5 // pred_check_branch
        %221 = sbr.rel (%p219) target = $region32
      $region31: #{building_block_forward.1} parent=5 // pred_region
        // Predicated region
        $region33: #{building_block_forward.1} parent=31 // pred_check
          %p222 = pneg %p39
        $region34: #{building_block_forward.1} parent=31 // pred_check_branch
          %224 = sbr.rel (%p222) target = $region36
        $region35: #{building_block_forward.1} parent=31 // pred_region
          %s225 = sand.u32 %s29, 1
          %s226 = scalar_lea.sflag [#allocation5], %s225
          %s227 = sand.u32 %s29, 1
          %s228 = smul.addr %s227, 128
          %s229 = scalar_lea.vmem [#allocation4], %s228
          %s231 = ssub.s32 2048, 2048
          %232 = vsyncadd %s226, %s231
          %s233 = smul.addr %s19, 32
          %s234 = smul.addr %s233, 64
          %s235 = scalar_lea.hbm %s0, %s234
          %s236 = sshll.u32 %s229, 4
          %s237 = int_to_ptr.vmem [resolvable:$true] %s236
          %242 = dma.hbm_to_vmem [thread:$0]  %s235, 2048, %s237, %s226, 64, 64, 4
        $region36: #{building_block_forward.1} parent=31 // pred_fallthru
          _
      $region32: #{building_block_forward.1} parent=5 // pred_fallthru
        _
      %p243 = scmp.le.s32.totalorder 1, %s19
      %p244 = scmp.lt.s32.totalorder %s19, 3
      %p245 = pnand %p243, %p244
      %p246 = pneg %p245
      // Predicated region
      $region37: #{building_block_forward.1} parent=5 // pred_check
        _
      $region38: #{building_block_forward.1} parent=5 // pred_check_branch
        %248 = sbr.rel (%p245) target = $region40
      $region39: #{building_block_forward.1} parent=5 // pred_region
        %s249 = ssub.s32 %s19, 1
        %s250 = sand.u32 %s32, 1
        %s251 = scalar_lea.sflag [#allocation5], %s250
        %s252 = sand.u32 %s32, 1
        %s253 = smul.addr %s252, 128
        %s254 = scalar_lea.vmem [#allocation4], %s253
        // Predicated region
        $region41: #{building_block_forward.1} parent=39 // pred_check
          %p255 = pneg %p45
        $region42: #{building_block_forward.1} parent=39 // pred_check_branch
          %257 = sbr.rel (%p255) target = $region44
        $region43: #{building_block_forward.1} parent=39 // pred_region
          %258 = dma.done %s251, 2048
        $region44: #{building_block_forward.1} parent=39 // pred_fallthru
          _
        // Predicated region
        $region45: #{building_block_forward.1} parent=39 // pred_check
          %p259 = pneg %p66
        $region46: #{building_block_forward.1} parent=39 // pred_check_branch
          %261 = sbr.rel (%p259) target = $region48
        $region47: #{building_block_forward.1} parent=39 // pred_region
          %262 = dma.done [#allocation8], 18432
        $region48: #{building_block_forward.1} parent=39 // pred_fallthru
          _
        // Predicated region
        $region49: #{building_block_forward.1} parent=39 // pred_check
          %p263 = pneg %p87
        $region50: #{building_block_forward.1} parent=39 // pred_check_branch
          %265 = sbr.rel (%p263) target = $region52
        $region51: #{building_block_forward.1} parent=39 // pred_region
          %266 = dma.done [#allocation8], 32
        $region52: #{building_block_forward.1} parent=39 // pred_fallthru
          _
        // Predicated region
        $region53: #{building_block_forward.1} parent=39 // pred_check
          %p267 = pneg %p108
        $region54: #{building_block_forward.1} parent=39 // pred_check_branch
          %269 = sbr.rel (%p267) target = $region56
        $region55: #{building_block_forward.1} parent=39 // pred_region
          %270 = dma.done [#allocation11], 9216
        $region56: #{building_block_forward.1} parent=39 // pred_fallthru
          _
        // Predicated region
        $region57: #{building_block_forward.1} parent=39 // pred_check
          %p271 = pneg %p129
        $region58: #{building_block_forward.1} parent=39 // pred_check_branch
          %273 = sbr.rel (%p271) target = $region60
        $region59: #{building_block_forward.1} parent=39 // pred_region
          %274 = dma.done [#allocation11], 16
        $region60: #{building_block_forward.1} parent=39 // pred_fallthru
          _
        %s275 = sand.u32 %s32, 1
        %s276 = scalar_lea.sflag [#allocation5], %s275
        %s277 = sand.u32 %s32, 1
        %s278 = smul.addr %s277, 128
        %s279 = scalar_lea.vmem [#allocation4], %s278
        %p280 = pneg %p45
        %p281 = pneg %p42
        %p282 = pneg %p66
        %p283 = pneg %p63
        %p284 = pneg %p87
        %p285 = pneg %p84
        %p286 = pneg %p108
        %p287 = pneg %p105
        %p288 = pneg %p129
        %p289 = pneg %p126
        %p290 = pneg %p155
        %p291 = pneg %p152
        %s292 = sand.u32 %s142, 1
        %s293 = scalar_lea.sflag [#allocation6], %s292
        %s294 = sand.u32 %s142, 1
        %s295 = smul.addr %s294, 128
        %s296 = scalar_lea.vmem [#allocation13], %s295
        %298 = vst [vmem:[#allocation2] sm:$0xf] 0
        %299 = vst [vmem:[#allocation2 + $0x4] sm:$0xf] 0
        %300 = vst [vmem:[#allocation2 + $0x8] sm:$0x1] 0
        %s301 = scalar_lea.vmem [#allocation2], 204
        %302 = vst [vmem:[%s301] sm:$0xf] 0
        %303 = vst [vmem:[%s301 + $0x4] sm:$0xf] 0
        %304 = vst [vmem:[%s301 + $0x8] sm:$0x1] 0
        %vm305 = vcmask 1040384
        %vm306 = vsmask.f32 256
        %vm307 = vmand %vm305, %vm306
        %v308 = vld [vmem:[#allocation2] sm:$0x1]
        %v309 = vsel %vm307, 0, %v308
        %310 = vst [vmem:[#allocation2] sm:$0x1] %v309
        %v311 = vld [vmem:[#allocation2 + $0xc] sm:$0x1]
        %v312 = vsel %vm307, 0, %v311
        %313 = vst [vmem:[#allocation2 + $0xc] sm:$0x1] %v312
        %v314 = vld [vmem:[#allocation2 + $0x18] sm:$0x1]
        %v315 = vsel %vm307, 0, %v314
        %316 = vst [vmem:[#allocation2 + $0x18] sm:$0x1] %v315
        %v317 = vld [vmem:[#allocation2 + $0x24] sm:$0x1]
        %v318 = vsel %vm307, 0, %v317
        %319 = vst [vmem:[#allocation2 + $0x24] sm:$0x1] %v318
        %v320 = vld [vmem:[#allocation2 + $0x30] sm:$0x1]
        %v321 = vsel %vm307, 0, %v320
        %322 = vst [vmem:[#allocation2 + $0x30] sm:$0x1] %v321
        %v323 = vld [vmem:[#allocation2 + $0x3c] sm:$0x1]
        %v324 = vsel %vm307, 0, %v323
        %325 = vst [vmem:[#allocation2 + $0x3c] sm:$0x1] %v324
        %v326 = vld [vmem:[#allocation2 + $0x48] sm:$0x1]
        %v327 = vsel %vm307, 0, %v326
        %328 = vst [vmem:[#allocation2 + $0x48] sm:$0x1] %v327
        %v329 = vld [vmem:[#allocation2 + $0x54] sm:$0x1]
        %v330 = vsel %vm307, 0, %v329
        %331 = vst [vmem:[#allocation2 + $0x54] sm:$0x1] %v330
        %v332 = vld [vmem:[#allocation2 + $0x60] sm:$0x1]
        %v333 = vsel %vm307, 0, %v332
        %334 = vst [vmem:[#allocation2 + $0x60] sm:$0x1] %v333
        %v335 = vld [vmem:[#allocation2 + $0x6c] sm:$0x1]
        %v336 = vsel %vm307, 0, %v335
        %337 = vst [vmem:[#allocation2 + $0x6c] sm:$0x1] %v336
        %v338 = vld [vmem:[#allocation2 + $0x78] sm:$0x1]
        %v339 = vsel %vm307, 0, %v338
        %340 = vst [vmem:[#allocation2 + $0x78] sm:$0x1] %v339
        %v341 = vld [vmem:[#allocation2 + $0x84] sm:$0x1]
        %v342 = vsel %vm307, 0, %v341
        %343 = vst [vmem:[#allocation2 + $0x84] sm:$0x1] %v342
        %v344 = vld [vmem:[#allocation2 + $0x90] sm:$0x1]
        %v345 = vsel %vm307, 0, %v344
        %346 = vst [vmem:[#allocation2 + $0x90] sm:$0x1] %v345
        %v347 = vld [vmem:[#allocation2 + $0x9c] sm:$0x1]
        %v348 = vsel %vm307, 0, %v347
        %349 = vst [vmem:[#allocation2 + $0x9c] sm:$0x1] %v348
        %v350 = vld [vmem:[#allocation2 + $0xa8] sm:$0x1]
        %v351 = vsel %vm307, 0, %v350
        %352 = vst [vmem:[#allocation2 + $0xa8] sm:$0x1] %v351
        %v353 = vld [vmem:[#allocation2 + $0xb4] sm:$0x1]
        %v354 = vsel %vm307, 0, %v353
        %355 = vst [vmem:[#allocation2 + $0xb4] sm:$0x1] %v354
        %v356 = vld [vmem:[#allocation2 + $0xc0] sm:$0x1]
        %v357 = vsel %vm307, 0, %v356
        %358 = vst [vmem:[#allocation2 + $0xc0] sm:$0x1] %v357
        %v359 = vld [vmem:[#allocation2 + $0xcc] sm:$0x1]
        %v360 = vsel %vm307, 0, %v359
        %361 = vst [vmem:[#allocation2 + $0xcc] sm:$0x1] %v360
        %vm362 = vsmask.f32 7938
        %vm363 = vmand %vm305, %vm362
        %v364 = vld [vmem:[#allocation2 + $0x8] sm:$0x1]
        %v365 = vsel %vm363, 0, %v364
        %366 = vst [vmem:[#allocation2 + $0x8] sm:$0x1] %v365
        %v367 = vld [vmem:[#allocation2 + $0x14] sm:$0x1]
        %v368 = vsel %vm363, 0, %v367
        %369 = vst [vmem:[#allocation2 + $0x14] sm:$0x1] %v368
        %v370 = vld [vmem:[#allocation2 + $0x20] sm:$0x1]
        %v371 = vsel %vm363, 0, %v370
        %372 = vst [vmem:[#allocation2 + $0x20] sm:$0x1] %v371
        %v373 = vld [vmem:[#allocation2 + $0x2c] sm:$0x1]
        %v374 = vsel %vm363, 0, %v373
        %375 = vst [vmem:[#allocation2 + $0x2c] sm:$0x1] %v374
        %v376 = vld [vmem:[#allocation2 + $0x38] sm:$0x1]
        %v377 = vsel %vm363, 0, %v376
        %378 = vst [vmem:[#allocation2 + $0x38] sm:$0x1] %v377
        %v379 = vld [vmem:[#allocation2 + $0x44] sm:$0x1]
        %v380 = vsel %vm363, 0, %v379
        %381 = vst [vmem:[#allocation2 + $0x44] sm:$0x1] %v380
        %v382 = vld [vmem:[#allocation2 + $0x50] sm:$0x1]
        %v383 = vsel %vm363, 0, %v382
        %384 = vst [vmem:[#allocation2 + $0x50] sm:$0x1] %v383
        %v385 = vld [vmem:[#allocation2 + $0x5c] sm:$0x1]
        %v386 = vsel %vm363, 0, %v385
        %387 = vst [vmem:[#allocation2 + $0x5c] sm:$0x1] %v386
        %v388 = vld [vmem:[#allocation2 + $0x68] sm:$0x1]
        %v389 = vsel %vm363, 0, %v388
        %390 = vst [vmem:[#allocation2 + $0x68] sm:$0x1] %v389
        %v391 = vld [vmem:[#allocation2 + $0x74] sm:$0x1]
        %v392 = vsel %vm363, 0, %v391
        %393 = vst [vmem:[#allocation2 + $0x74] sm:$0x1] %v392
        %v394 = vld [vmem:[#allocation2 + $0x80] sm:$0x1]
        %v395 = vsel %vm363, 0, %v394
        %396 = vst [vmem:[#allocation2 + $0x80] sm:$0x1] %v395
        %v397 = vld [vmem:[#allocation2 + $0x8c] sm:$0x1]
        %v398 = vsel %vm363, 0, %v397
        %399 = vst [vmem:[#allocation2 + $0x8c] sm:$0x1] %v398
        %v400 = vld [vmem:[#allocation2 + $0x98] sm:$0x1]
        %v401 = vsel %vm363, 0, %v400
        %402 = vst [vmem:[#allocation2 + $0x98] sm:$0x1] %v401
        %v403 = vld [vmem:[#allocation2 + $0xa4] sm:$0x1]
        %v404 = vsel %vm363, 0, %v403
        %405 = vst [vmem:[#allocation2 + $0xa4] sm:$0x1] %v404
        %v406 = vld [vmem:[#allocation2 + $0xb0] sm:$0x1]
        %v407 = vsel %vm363, 0, %v406
        %408 = vst [vmem:[#allocation2 + $0xb0] sm:$0x1] %v407
        %v409 = vld [vmem:[#allocation2 + $0xbc] sm:$0x1]
        %v410 = vsel %vm363, 0, %v409
        %411 = vst [vmem:[#allocation2 + $0xbc] sm:$0x1] %v410
        %v412 = vld [vmem:[#allocation2 + $0xc8] sm:$0x1]
        %v413 = vsel %vm363, 0, %v412
        %414 = vst [vmem:[#allocation2 + $0xc8] sm:$0x1] %v413
        %v415 = vld [vmem:[#allocation2 + $0xd4] sm:$0x1]
        %v416 = vsel %vm363, 0, %v415
        %417 = vst [vmem:[#allocation2 + $0xd4] sm:$0x1] %v416
        %418 = vst [vmem:[#allocation3] sm:$0xf] 0
        %419 = vst [vmem:[#allocation3 + $0x4] sm:$0xf] 0
        %420 = vst [vmem:[#allocation3 + $0x8] sm:$0x1] 0
        %s421 = scalar_lea.vmem [#allocation3], 204
        %422 = vst [vmem:[%s421] sm:$0xf] 0
        %423 = vst [vmem:[%s421 + $0x4] sm:$0xf] 0
        %424 = vst [vmem:[%s421 + $0x8] sm:$0x1] 0
        %v425 = vld [vmem:[#allocation3] sm:$0x1]
        %v426 = vsel %vm307, 0, %v425
        %427 = vst [vmem:[#allocation3] sm:$0x1] %v426
        %v428 = vld [vmem:[#allocation3 + $0xc] sm:$0x1]
        %v429 = vsel %vm307, 0, %v428
        %430 = vst [vmem:[#allocation3 + $0xc] sm:$0x1] %v429
        %v431 = vld [vmem:[#allocation3 + $0x18] sm:$0x1]
        %v432 = vsel %vm307, 0, %v431
        %433 = vst [vmem:[#allocation3 + $0x18] sm:$0x1] %v432
        %v434 = vld [vmem:[#allocation3 + $0x24] sm:$0x1]
        %v435 = vsel %vm307, 0, %v434
        %436 = vst [vmem:[#allocation3 + $0x24] sm:$0x1] %v435
        %v437 = vld [vmem:[#allocation3 + $0x30] sm:$0x1]
        %v438 = vsel %vm307, 0, %v437
        %439 = vst [vmem:[#allocation3 + $0x30] sm:$0x1] %v438
        %v440 = vld [vmem:[#allocation3 + $0x3c] sm:$0x1]
        %v441 = vsel %vm307, 0, %v440
        %442 = vst [vmem:[#allocation3 + $0x3c] sm:$0x1] %v441
        %v443 = vld [vmem:[#allocation3 + $0x48] sm:$0x1]
        %v444 = vsel %vm307, 0, %v443
        %445 = vst [vmem:[#allocation3 + $0x48] sm:$0x1] %v444
        %v446 = vld [vmem:[#allocation3 + $0x54] sm:$0x1]
        %v447 = vsel %vm307, 0, %v446
        %448 = vst [vmem:[#allocation3 + $0x54] sm:$0x1] %v447
        %v449 = vld [vmem:[#allocation3 + $0x60] sm:$0x1]
        %v450 = vsel %vm307, 0, %v449
        %451 = vst [vmem:[#allocation3 + $0x60] sm:$0x1] %v450
        %v452 = vld [vmem:[#allocation3 + $0x6c] sm:$0x1]
        %v453 = vsel %vm307, 0, %v452
        %454 = vst [vmem:[#allocation3 + $0x6c] sm:$0x1] %v453
        %v455 = vld [vmem:[#allocation3 + $0x78] sm:$0x1]
        %v456 = vsel %vm307, 0, %v455
        %457 = vst [vmem:[#allocation3 + $0x78] sm:$0x1] %v456
        %v458 = vld [vmem:[#allocation3 + $0x84] sm:$0x1]
        %v459 = vsel %vm307, 0, %v458
        %460 = vst [vmem:[#allocation3 + $0x84] sm:$0x1] %v459
        %v461 = vld [vmem:[#allocation3 + $0x90] sm:$0x1]
        %v462 = vsel %vm307, 0, %v461
        %463 = vst [vmem:[#allocation3 + $0x90] sm:$0x1] %v462
        %v464 = vld [vmem:[#allocation3 + $0x9c] sm:$0x1]
        %v465 = vsel %vm307, 0, %v464
        %466 = vst [vmem:[#allocation3 + $0x9c] sm:$0x1] %v465
        %v467 = vld [vmem:[#allocation3 + $0xa8] sm:$0x1]
        %v468 = vsel %vm307, 0, %v467
        %469 = vst [vmem:[#allocation3 + $0xa8] sm:$0x1] %v468
        %v470 = vld [vmem:[#allocation3 + $0xb4] sm:$0x1]
        %v471 = vsel %vm307, 0, %v470
        %472 = vst [vmem:[#allocation3 + $0xb4] sm:$0x1] %v471
        %v473 = vld [vmem:[#allocation3 + $0xc0] sm:$0x1]
        %v474 = vsel %vm307, 0, %v473
        %475 = vst [vmem:[#allocation3 + $0xc0] sm:$0x1] %v474
        %v476 = vld [vmem:[#allocation3 + $0xcc] sm:$0x1]
        %v477 = vsel %vm307, 0, %v476
        %478 = vst [vmem:[#allocation3 + $0xcc] sm:$0x1] %v477
        %v479 = vld [vmem:[#allocation3 + $0x8] sm:$0x1]
        %v480 = vsel %vm363, 0, %v479
        %481 = vst [vmem:[#allocation3 + $0x8] sm:$0x1] %v480
        %v482 = vld [vmem:[#allocation3 + $0x14] sm:$0x1]
        %v483 = vsel %vm363, 0, %v482
        %484 = vst [vmem:[#allocation3 + $0x14] sm:$0x1] %v483
        %v485 = vld [vmem:[#allocation3 + $0x20] sm:$0x1]
        %v486 = vsel %vm363, 0, %v485
        %487 = vst [vmem:[#allocation3 + $0x20] sm:$0x1] %v486
        %v488 = vld [vmem:[#allocation3 + $0x2c] sm:$0x1]
        %v489 = vsel %vm363, 0, %v488
        %490 = vst [vmem:[#allocation3 + $0x2c] sm:$0x1] %v489
        %v491 = vld [vmem:[#allocation3 + $0x38] sm:$0x1]
        %v492 = vsel %vm363, 0, %v491
        %493 = vst [vmem:[#allocation3 + $0x38] sm:$0x1] %v492
        %v494 = vld [vmem:[#allocation3 + $0x44] sm:$0x1]
        %v495 = vsel %vm363, 0, %v494
        %496 = vst [vmem:[#allocation3 + $0x44] sm:$0x1] %v495
        %v497 = vld [vmem:[#allocation3 + $0x50] sm:$0x1]
        %v498 = vsel %vm363, 0, %v497
        %499 = vst [vmem:[#allocation3 + $0x50] sm:$0x1] %v498
        %v500 = vld [vmem:[#allocation3 + $0x5c] sm:$0x1]
        %v501 = vsel %vm363, 0, %v500
        %502 = vst [vmem:[#allocation3 + $0x5c] sm:$0x1] %v501
        %v503 = vld [vmem:[#allocation3 + $0x68] sm:$0x1]
        %v504 = vsel %vm363, 0, %v503
        %505 = vst [vmem:[#allocation3 + $0x68] sm:$0x1] %v504
        %v506 = vld [vmem:[#allocation3 + $0x74] sm:$0x1]
        %v507 = vsel %vm363, 0, %v506
        %508 = vst [vmem:[#allocation3 + $0x74] sm:$0x1] %v507
        %v509 = vld [vmem:[#allocation3 + $0x80] sm:$0x1]
        %v510 = vsel %vm363, 0, %v509
        %511 = vst [vmem:[#allocation3 + $0x80] sm:$0x1] %v510
        %v512 = vld [vmem:[#allocation3 + $0x8c] sm:$0x1]
        %v513 = vsel %vm363, 0, %v512
        %514 = vst [vmem:[#allocation3 + $0x8c] sm:$0x1] %v513
        %v515 = vld [vmem:[#allocation3 + $0x98] sm:$0x1]
        %v516 = vsel %vm363, 0, %v515
        %517 = vst [vmem:[#allocation3 + $0x98] sm:$0x1] %v516
        %v518 = vld [vmem:[#allocation3 + $0xa4] sm:$0x1]
        %v519 = vsel %vm363, 0, %v518
        %520 = vst [vmem:[#allocation3 + $0xa4] sm:$0x1] %v519
        %v521 = vld [vmem:[#allocation3 + $0xb0] sm:$0x1]
        %v522 = vsel %vm363, 0, %v521
        %523 = vst [vmem:[#allocation3 + $0xb0] sm:$0x1] %v522
        %v524 = vld [vmem:[#allocation3 + $0xbc] sm:$0x1]
        %v525 = vsel %vm363, 0, %v524
        %526 = vst [vmem:[#allocation3 + $0xbc] sm:$0x1] %v525
        %v527 = vld [vmem:[#allocation3 + $0xc8] sm:$0x1]
        %v528 = vsel %vm363, 0, %v527
        %529 = vst [vmem:[#allocation3 + $0xc8] sm:$0x1] %v528
        %v530 = vld [vmem:[#allocation3 + $0xd4] sm:$0x1]
        %v531 = vsel %vm363, 0, %v530
        %532 = vst [vmem:[#allocation3 + $0xd4] sm:$0x1] %v531
        %v533 = vld [vmem:[%s254] sm:$0xf]
        %v534 = vld [vmem:[%s254 + $0x4] sm:$0xf]
        %v535 = vld [vmem:[%s254 + $0x8] sm:$0xf]
        %v536 = vld [vmem:[%s254 + $0xc] sm:$0xf]
        %v537 = vld [vmem:[%s254 + $0x10] sm:$0xf]
        %v538 = vld [vmem:[%s254 + $0x14] sm:$0xf]
        %v539 = vld [vmem:[%s254 + $0x18] sm:$0xf]
        %v540 = vld [vmem:[%s254 + $0x1c] sm:$0xf]
        %v541 = vld [vmem:[%s254 + $0x20] sm:$0xf]
        %v542 = vld [vmem:[%s254 + $0x24] sm:$0xf]
        %v543 = vld [vmem:[%s254 + $0x28] sm:$0xf]
        %v544 = vld [vmem:[%s254 + $0x2c] sm:$0xf]
        %v545 = vld [vmem:[%s254 + $0x30] sm:$0xf]
        %v546 = vld [vmem:[%s254 + $0x34] sm:$0xf]
        %v547 = vld [vmem:[%s254 + $0x38] sm:$0xf]
        %v548 = vld [vmem:[%s254 + $0x3c] sm:$0xf]
        %v549 = vld [vmem:[%s254 + $0x40] sm:$0xf]
        %v550 = vld [vmem:[%s254 + $0x44] sm:$0xf]
        %v551 = vld [vmem:[%s254 + $0x48] sm:$0xf]
        %v552 = vld [vmem:[%s254 + $0x4c] sm:$0xf]
        %v553 = vld [vmem:[%s254 + $0x50] sm:$0xf]
        %v554 = vld [vmem:[%s254 + $0x54] sm:$0xf]
        %v555 = vld [vmem:[%s254 + $0x58] sm:$0xf]
        %v556 = vld [vmem:[%s254 + $0x5c] sm:$0xf]
        %v557 = vld [vmem:[%s254 + $0x60] sm:$0xf]
        %v558 = vld [vmem:[%s254 + $0x64] sm:$0xf]
        %v559 = vld [vmem:[%s254 + $0x68] sm:$0xf]
        %v560 = vld [vmem:[%s254 + $0x6c] sm:$0xf]
        %v561 = vld [vmem:[%s254 + $0x70] sm:$0xf]
        %v562 = vld [vmem:[%s254 + $0x74] sm:$0xf]
        %v563 = vld [vmem:[%s254 + $0x78] sm:$0xf]
        %v564 = vld [vmem:[%s254 + $0x7c] sm:$0xf]
        %vm565 = vsmask.f32 4368
        %vm566 = vmor %vm306, %vm565
        %v568 = vshrl.u32 %v533, 16
        %v570 = vrot.slane %v568, 7
        %v571 = vshll.u32 %v533, 16
        %v573 = vor.u32 %v570, %v571
        %v574 = vrot.slane %v570, 4
        %v576 = vshrl.u32 %v534, 16
        %v578 = vrot.slane %v576, 7
        %v579 = vshll.u32 %v534, 16
        %v581 = vor.u32 %v578, %v579
        %v582 = vsel %vm566, %v574, %v581
        %v583 = vrot.slane %v578, 4
        %v585 = vshrl.u32 %v535, 16
        %v587 = vrot.slane %v585, 7
        %v588 = vshll.u32 %v535, 16
        %v590 = vor.u32 %v587, %v588
        %v591 = vrot.slane %v587, 4
        %v593 = vshrl.u32 %v536, 16
        %v595 = vrot.slane %v593, 7
        %v596 = vshll.u32 %v536, 16
        %v598 = vor.u32 %v595, %v596
        %v599 = vsel %vm566, %v591, %v598
        %v600 = vrot.slane %v595, 4
        %v602 = vshrl.u32 %v537, 16
        %v604 = vrot.slane %v602, 7
        %v605 = vshll.u32 %v537, 16
        %v607 = vor.u32 %v604, %v605
        %v608 = vrot.slane %v604, 4
        %v610 = vshrl.u32 %v538, 16
        %v612 = vrot.slane %v610, 7
        %v613 = vshll.u32 %v538, 16
        %v615 = vor.u32 %v612, %v613
        %v616 = vsel %vm566, %v608, %v615
        %v617 = vrot.slane %v612, 4
        %v619 = vshrl.u32 %v539, 16
        %v621 = vrot.slane %v619, 7
        %v622 = vshll.u32 %v539, 16
        %v624 = vor.u32 %v621, %v622
        %v625 = vrot.slane %v621, 4
        %v627 = vshrl.u32 %v540, 16
        %v629 = vrot.slane %v627, 7
        %v630 = vshll.u32 %v540, 16
        %v632 = vor.u32 %v629, %v630
        %v633 = vsel %vm566, %v625, %v632
        %v634 = vrot.slane %v629, 4
        %v636 = vshrl.u32 %v541, 16
        %v638 = vrot.slane %v636, 7
        %v639 = vshll.u32 %v541, 16
        %v641 = vor.u32 %v638, %v639
        %v642 = vrot.slane %v638, 4
        %v644 = vshrl.u32 %v542, 16
        %v646 = vrot.slane %v644, 7
        %v647 = vshll.u32 %v542, 16
        %v649 = vor.u32 %v646, %v647
        %v650 = vsel %vm566, %v642, %v649
        %v651 = vrot.slane %v646, 4
        %v653 = vshrl.u32 %v543, 16
        %v655 = vrot.slane %v653, 7
        %v656 = vshll.u32 %v543, 16
        %v658 = vor.u32 %v655, %v656
        %v659 = vrot.slane %v655, 4
        %v661 = vshrl.u32 %v544, 16
        %v663 = vrot.slane %v661, 7
        %v664 = vshll.u32 %v544, 16
        %v666 = vor.u32 %v663, %v664
        %v667 = vsel %vm566, %v659, %v666
        %v668 = vrot.slane %v663, 4
        %v670 = vshrl.u32 %v545, 16
        %v672 = vrot.slane %v670, 7
        %v673 = vshll.u32 %v545, 16
        %v675 = vor.u32 %v672, %v673
        %v676 = vrot.slane %v672, 4
        %v678 = vshrl.u32 %v546, 16
        %v680 = vrot.slane %v678, 7
        %v681 = vshll.u32 %v546, 16
        %v683 = vor.u32 %v680, %v681
        %v684 = vsel %vm566, %v676, %v683
        %v685 = vrot.slane %v680, 4
        %v687 = vshrl.u32 %v547, 16
        %v689 = vrot.slane %v687, 7
        %v690 = vshll.u32 %v547, 16
        %v692 = vor.u32 %v689, %v690
        %v693 = vrot.slane %v689, 4
        %v695 = vshrl.u32 %v548, 16
        %v697 = vrot.slane %v695, 7
        %v698 = vshll.u32 %v548, 16
        %v700 = vor.u32 %v697, %v698
        %v701 = vsel %vm566, %v693, %v700
        %v702 = vrot.slane %v697, 4
        %v704 = vshrl.u32 %v549, 16
        %v706 = vrot.slane %v704, 7
        %v707 = vshll.u32 %v549, 16
        %v709 = vor.u32 %v706, %v707
        %v710 = vrot.slane %v706, 4
        %v712 = vshrl.u32 %v550, 16
        %v714 = vrot.slane %v712, 7
        %v715 = vshll.u32 %v550, 16
        %v717 = vor.u32 %v714, %v715
        %v718 = vsel %vm566, %v710, %v717
        %v719 = vrot.slane %v714, 4
        %v721 = vshrl.u32 %v551, 16
        %v723 = vrot.slane %v721, 7
        %v724 = vshll.u32 %v551, 16
        %v726 = vor.u32 %v723, %v724
        %v727 = vrot.slane %v723, 4
        %v729 = vshrl.u32 %v552, 16
        %v731 = vrot.slane %v729, 7
        %v732 = vshll.u32 %v552, 16
        %v734 = vor.u32 %v731, %v732
        %v735 = vsel %vm566, %v727, %v734
        %v736 = vrot.slane %v731, 4
        %v738 = vshrl.u32 %v553, 16
        %v740 = vrot.slane %v738, 7
        %v741 = vshll.u32 %v553, 16
        %v743 = vor.u32 %v740, %v741
        %v744 = vrot.slane %v740, 4
        %v746 = vshrl.u32 %v554, 16
        %v748 = vrot.slane %v746, 7
        %v749 = vshll.u32 %v554, 16
        %v751 = vor.u32 %v748, %v749
        %v752 = vsel %vm566, %v744, %v751
        %v753 = vrot.slane %v748, 4
        %v755 = vshrl.u32 %v555, 16
        %v757 = vrot.slane %v755, 7
        %v758 = vshll.u32 %v555, 16
        %v760 = vor.u32 %v757, %v758
        %v761 = vrot.slane %v757, 4
        %v763 = vshrl.u32 %v556, 16
        %v765 = vrot.slane %v763, 7
        %v766 = vshll.u32 %v556, 16
        %v768 = vor.u32 %v765, %v766
        %v769 = vsel %vm566, %v761, %v768
        %v770 = vrot.slane %v765, 4
        %v772 = vshrl.u32 %v557, 16
        %v774 = vrot.slane %v772, 7
        %v775 = vshll.u32 %v557, 16
        %v777 = vor.u32 %v774, %v775
        %v778 = vrot.slane %v774, 4
        %v780 = vshrl.u32 %v558, 16
        %v782 = vrot.slane %v780, 7
        %v783 = vshll.u32 %v558, 16
        %v785 = vor.u32 %v782, %v783
        %v786 = vsel %vm566, %v778, %v785
        %v787 = vrot.slane %v782, 4
        %v789 = vshrl.u32 %v559, 16
        %v791 = vrot.slane %v789, 7
        %v792 = vshll.u32 %v559, 16
        %v794 = vor.u32 %v791, %v792
        %v795 = vrot.slane %v791, 4
        %v797 = vshrl.u32 %v560, 16
        %v799 = vrot.slane %v797, 7
        %v800 = vshll.u32 %v560, 16
        %v802 = vor.u32 %v799, %v800
        %v803 = vsel %vm566, %v795, %v802
        %v804 = vrot.slane %v799, 4
        %v806 = vshrl.u32 %v561, 16
        %v808 = vrot.slane %v806, 7
        %v809 = vshll.u32 %v561, 16
        %v811 = vor.u32 %v808, %v809
        %v812 = vrot.slane %v808, 4
        %v814 = vshrl.u32 %v562, 16
        %v816 = vrot.slane %v814, 7
        %v817 = vshll.u32 %v562, 16
        %v819 = vor.u32 %v816, %v817
        %v820 = vsel %vm566, %v812, %v819
        %v821 = vrot.slane %v816, 4
        %v823 = vshrl.u32 %v563, 16
        %v825 = vrot.slane %v823, 7
        %v826 = vshll.u32 %v563, 16
        %v828 = vor.u32 %v825, %v826
        %v829 = vrot.slane %v825, 4
        %v831 = vshrl.u32 %v564, 16
        %v833 = vrot.slane %v831, 7
        %v834 = vshll.u32 %v564, 16
        %v836 = vor.u32 %v833, %v834
        %v837 = vsel %vm566, %v829, %v836
        %v838 = vrot.slane %v833, 4
        %s887 = scalar_lea.vmem [#allocation2], 12
        %vm888 = vcmask 1043456
        %vm889 = vmand %vm888, %vm362
        %v890 = vld [vmem:[%s887] sm:$0xf]
        %v891 = vsel %vm889, %v573, %v890
        %892 = vst [vmem:[%s887] sm:$0xf] %v891
        %893 = vst [vmem:[%s887 + $0x4] sm:$0xf] %v582
        %v894 = vld [vmem:[%s887 + $0x8] sm:$0x1]
        %v895 = vsel %vm307, %v583, %v894
        %896 = vst [vmem:[%s887 + $0x8] sm:$0x1] %v895
        %v897 = vld [vmem:[%s887 + $0xc] sm:$0xf]
        %v898 = vsel %vm889, %v590, %v897
        %899 = vst [vmem:[%s887 + $0xc] sm:$0xf] %v898
        %900 = vst [vmem:[%s887 + $0x10] sm:$0xf] %v599
        %v901 = vld [vmem:[%s887 + $0x14] sm:$0x1]
        %v902 = vsel %vm307, %v600, %v901
        %903 = vst [vmem:[%s887 + $0x14] sm:$0x1] %v902
        %v904 = vld [vmem:[%s887 + $0x18] sm:$0xf]
        %v905 = vsel %vm889, %v607, %v904
        %906 = vst [vmem:[%s887 + $0x18] sm:$0xf] %v905
        %907 = vst [vmem:[%s887 + $0x1c] sm:$0xf] %v616
        %v908 = vld [vmem:[%s887 + $0x20] sm:$0x1]
        %v909 = vsel %vm307, %v617, %v908
        %910 = vst [vmem:[%s887 + $0x20] sm:$0x1] %v909
        %v911 = vld [vmem:[%s887 + $0x24] sm:$0xf]
        %v912 = vsel %vm889, %v624, %v911
        %913 = vst [vmem:[%s887 + $0x24] sm:$0xf] %v912
        %914 = vst [vmem:[%s887 + $0x28] sm:$0xf] %v633
        %v915 = vld [vmem:[%s887 + $0x2c] sm:$0x1]
        %v916 = vsel %vm307, %v634, %v915
        %917 = vst [vmem:[%s887 + $0x2c] sm:$0x1] %v916
        %v918 = vld [vmem:[%s887 + $0x30] sm:$0xf]
        %v919 = vsel %vm889, %v641, %v918
        %920 = vst [vmem:[%s887 + $0x30] sm:$0xf] %v919
        %921 = vst [vmem:[%s887 + $0x34] sm:$0xf] %v650
        %v922 = vld [vmem:[%s887 + $0x38] sm:$0x1]
        %v923 = vsel %vm307, %v651, %v922
        %924 = vst [vmem:[%s887 + $0x38] sm:$0x1] %v923
        %v925 = vld [vmem:[%s887 + $0x3c] sm:$0xf]
        %v926 = vsel %vm889, %v658, %v925
        %927 = vst [vmem:[%s887 + $0x3c] sm:$0xf] %v926
        %928 = vst [vmem:[%s887 + $0x40] sm:$0xf] %v667
        %v929 = vld [vmem:[%s887 + $0x44] sm:$0x1]
        %v930 = vsel %vm307, %v668, %v929
        %931 = vst [vmem:[%s887 + $0x44] sm:$0x1] %v930
        %v932 = vld [vmem:[%s887 + $0x48] sm:$0xf]
        %v933 = vsel %vm889, %v675, %v932
        %934 = vst [vmem:[%s887 + $0x48] sm:$0xf] %v933
        %935 = vst [vmem:[%s887 + $0x4c] sm:$0xf] %v684
        %v936 = vld [vmem:[%s887 + $0x50] sm:$0x1]
        %v937 = vsel %vm307, %v685, %v936
        %938 = vst [vmem:[%s887 + $0x50] sm:$0x1] %v937
        %v939 = vld [vmem:[%s887 + $0x54] sm:$0xf]
        %v940 = vsel %vm889, %v692, %v939
        %941 = vst [vmem:[%s887 + $0x54] sm:$0xf] %v940
        %942 = vst [vmem:[%s887 + $0x58] sm:$0xf] %v701
        %v943 = vld [vmem:[%s887 + $0x5c] sm:$0x1]
        %v944 = vsel %vm307, %v702, %v943
        %945 = vst [vmem:[%s887 + $0x5c] sm:$0x1] %v944
        %v946 = vld [vmem:[%s887 + $0x60] sm:$0xf]
        %v947 = vsel %vm889, %v709, %v946
        %948 = vst [vmem:[%s887 + $0x60] sm:$0xf] %v947
        %949 = vst [vmem:[%s887 + $0x64] sm:$0xf] %v718
        %v950 = vld [vmem:[%s887 + $0x68] sm:$0x1]
        %v951 = vsel %vm307, %v719, %v950
        %952 = vst [vmem:[%s887 + $0x68] sm:$0x1] %v951
        %v953 = vld [vmem:[%s887 + $0x6c] sm:$0xf]
        %v954 = vsel %vm889, %v726, %v953
        %955 = vst [vmem:[%s887 + $0x6c] sm:$0xf] %v954
        %956 = vst [vmem:[%s887 + $0x70] sm:$0xf] %v735
        %v957 = vld [vmem:[%s887 + $0x74] sm:$0x1]
        %v958 = vsel %vm307, %v736, %v957
        %959 = vst [vmem:[%s887 + $0x74] sm:$0x1] %v958
        %v960 = vld [vmem:[%s887 + $0x78] sm:$0xf]
        %v961 = vsel %vm889, %v743, %v960
        %962 = vst [vmem:[%s887 + $0x78] sm:$0xf] %v961
        %963 = vst [vmem:[%s887 + $0x7c] sm:$0xf] %v752
        %v964 = vld [vmem:[%s887 + $0x80] sm:$0x1]
        %v965 = vsel %vm307, %v753, %v964
        %966 = vst [vmem:[%s887 + $0x80] sm:$0x1] %v965
        %v967 = vld [vmem:[%s887 + $0x84] sm:$0xf]
        %v968 = vsel %vm889, %v760, %v967
        %969 = vst [vmem:[%s887 + $0x84] sm:$0xf] %v968
        %970 = vst [vmem:[%s887 + $0x88] sm:$0xf] %v769
        %v971 = vld [vmem:[%s887 + $0x8c] sm:$0x1]
        %v972 = vsel %vm307, %v770, %v971
        %973 = vst [vmem:[%s887 + $0x8c] sm:$0x1] %v972
        %v974 = vld [vmem:[%s887 + $0x90] sm:$0xf]
        %v975 = vsel %vm889, %v777, %v974
        %976 = vst [vmem:[%s887 + $0x90] sm:$0xf] %v975
        %977 = vst [vmem:[%s887 + $0x94] sm:$0xf] %v786
        %v978 = vld [vmem:[%s887 + $0x98] sm:$0x1]
        %v979 = vsel %vm307, %v787, %v978
        %980 = vst [vmem:[%s887 + $0x98] sm:$0x1] %v979
        %v981 = vld [vmem:[%s887 + $0x9c] sm:$0xf]
        %v982 = vsel %vm889, %v794, %v981
        %983 = vst [vmem:[%s887 + $0x9c] sm:$0xf] %v982
        %984 = vst [vmem:[%s887 + $0xa0] sm:$0xf] %v803
        %v985 = vld [vmem:[%s887 + $0xa4] sm:$0x1]
        %v986 = vsel %vm307, %v804, %v985
        %987 = vst [vmem:[%s887 + $0xa4] sm:$0x1] %v986
        %v988 = vld [vmem:[%s887 + $0xa8] sm:$0xf]
        %v989 = vsel %vm889, %v811, %v988
        %990 = vst [vmem:[%s887 + $0xa8] sm:$0xf] %v989
        %991 = vst [vmem:[%s887 + $0xac] sm:$0xf] %v820
        %v992 = vld [vmem:[%s887 + $0xb0] sm:$0x1]
        %v993 = vsel %vm307, %v821, %v992
        %994 = vst [vmem:[%s887 + $0xb0] sm:$0x1] %v993
        %v995 = vld [vmem:[%s887 + $0xb4] sm:$0xf]
        %v996 = vsel %vm889, %v828, %v995
        %997 = vst [vmem:[%s887 + $0xb4] sm:$0xf] %v996
        %998 = vst [vmem:[%s887 + $0xb8] sm:$0xf] %v837
        %v999 = vld [vmem:[%s887 + $0xbc] sm:$0x1]
        %v1000 = vsel %vm307, %v838, %v999
        %1001 = vst [vmem:[%s887 + $0xbc] sm:$0x1] %v1000
        %v1002 = vld [vmem:[#allocation2] sm:$0xf]
        %v1003 = vld [vmem:[#allocation2 + $0x4] sm:$0xf]
        %v1004 = vld [vmem:[#allocation2 + $0x8] sm:$0x1]
        %v1005 = vld [vmem:[#allocation2 + $0xc] sm:$0xf]
        %v1006 = vld [vmem:[#allocation2 + $0x10] sm:$0xf]
        %v1007 = vld [vmem:[#allocation2 + $0x14] sm:$0x1]
        %v1008 = vld [vmem:[#allocation2 + $0x18] sm:$0xf]
        %v1009 = vld [vmem:[#allocation2 + $0x1c] sm:$0xf]
        %v1010 = vld [vmem:[#allocation2 + $0x20] sm:$0x1]
        %v1011 = vld [vmem:[#allocation2 + $0x24] sm:$0xf]
        %v1012 = vld [vmem:[#allocation2 + $0x28] sm:$0xf]
        %v1013 = vld [vmem:[#allocation2 + $0x2c] sm:$0x1]
        %v1014 = vld [vmem:[#allocation2 + $0x30] sm:$0xf]
        %v1015 = vld [vmem:[#allocation2 + $0x34] sm:$0xf]
        %v1016 = vld [vmem:[#allocation2 + $0x38] sm:$0x1]
        %v1017 = vld [vmem:[#allocation2 + $0x3c] sm:$0xf]
        %v1018 = vld [vmem:[#allocation2 + $0x40] sm:$0xf]
        %v1019 = vld [vmem:[#allocation2 + $0x44] sm:$0x1]
        %v1020 = vld [vmem:[#allocation2 + $0x48] sm:$0xf]
        %v1021 = vld [vmem:[#allocation2 + $0x4c] sm:$0xf]
        %v1022 = vld [vmem:[#allocation2 + $0x50] sm:$0x1]
        %v1023 = vld [vmem:[#allocation2 + $0x54] sm:$0xf]
        %v1024 = vld [vmem:[#allocation2 + $0x58] sm:$0xf]
        %v1025 = vld [vmem:[#allocation2 + $0x5c] sm:$0x1]
        %v1026 = vld [vmem:[#allocation2 + $0x60] sm:$0xf]
        %v1027 = vld [vmem:[#allocation2 + $0x64] sm:$0xf]
        %v1028 = vld [vmem:[#allocation2 + $0x68] sm:$0x1]
        %v1029 = vld [vmem:[#allocation2 + $0x6c] sm:$0xf]
        %v1030 = vld [vmem:[#allocation2 + $0x70] sm:$0xf]
        %v1031 = vld [vmem:[#allocation2 + $0x74] sm:$0x1]
        %v1032 = vld [vmem:[#allocation2 + $0x78] sm:$0xf]
        %v1033 = vld [vmem:[#allocation2 + $0x7c] sm:$0xf]
        %v1034 = vld [vmem:[#allocation2 + $0x80] sm:$0x1]
        %v1035 = vld [vmem:[#allocation2 + $0x84] sm:$0xf]
        %v1036 = vld [vmem:[#allocation2 + $0x88] sm:$0xf]
        %v1037 = vld [vmem:[#allocation2 + $0x8c] sm:$0x1]
        %v1038 = vld [vmem:[#allocation2 + $0x90] sm:$0xf]
        %v1039 = vld [vmem:[#allocation2 + $0x94] sm:$0xf]
        %v1040 = vld [vmem:[#allocation2 + $0x98] sm:$0x1]
        %v1041 = vld [vmem:[#allocation2 + $0x9c] sm:$0xf]
        %v1042 = vld [vmem:[#allocation2 + $0xa0] sm:$0xf]
        %v1043 = vld [vmem:[#allocation2 + $0xa4] sm:$0x1]
        %v1044 = vld [vmem:[#allocation2 + $0xa8] sm:$0xf]
        %v1045 = vld [vmem:[#allocation2 + $0xac] sm:$0xf]
        %v1046 = vld [vmem:[#allocation2 + $0xb0] sm:$0x1]
        %v1047 = vld [vmem:[#allocation2 + $0xb4] sm:$0xf]
        %v1048 = vld [vmem:[#allocation2 + $0xb8] sm:$0xf]
        %v1049 = vld [vmem:[#allocation2 + $0xbc] sm:$0x1]
        %v1050 = vld [vmem:[#allocation2 + $0xc0] sm:$0xf]
        %v1051 = vld [vmem:[#allocation2 + $0xc4] sm:$0xf]
        %v1052 = vld [vmem:[#allocation2 + $0xc8] sm:$0x1]
        %v1053 = vld [vmem:[#allocation2 + $0xcc] sm:$0xf]
        %v1054 = vld [vmem:[#allocation2 + $0xd0] sm:$0xf]
        %v1055 = vld [vmem:[#allocation2 + $0xd4] sm:$0x1]
        %v1056 = vld [vmem:[#allocation7] sm:$0xff]
        %v1057 = vld [vmem:[#allocation7 + $0x8] sm:$0xff]
        %v1058 = vld [vmem:[#allocation7 + $0x10] sm:$0xff]
        %v1059 = vld [vmem:[#allocation7 + $0x18] sm:$0xff]
        %v1060 = vld [vmem:[#allocation7 + $0x20] sm:$0xff]
        %v1061 = vld [vmem:[#allocation7 + $0x28] sm:$0xff]
        %v1062 = vld [vmem:[#allocation7 + $0x30] sm:$0xff]
        %v1063 = vld [vmem:[#allocation7 + $0x38] sm:$0xff]
        %v1064 = vld [vmem:[#allocation7 + $0x40] sm:$0xff]
        %v1065 = vld [vmem:[#allocation7 + $0x48] sm:$0xff]
        %v1066 = vld [vmem:[#allocation7 + $0x50] sm:$0xff]
        %v1067 = vld [vmem:[#allocation7 + $0x58] sm:$0xff]
        %v1068 = vld [vmem:[#allocation7 + $0x60] sm:$0xff]
        %v1069 = vld [vmem:[#allocation7 + $0x68] sm:$0xff]
        %v1070 = vld [vmem:[#allocation7 + $0x70] sm:$0xff]
        %v1071 = vld [vmem:[#allocation7 + $0x78] sm:$0xff]
        %vm1072 = vsmask.f32 3328
        %vm1073 = vsmask.f32 7440
        %vm1074 = vmor %vm1072, %vm1073
        %v1076 = vshrl.u32 %v1002, 16
        %v1078 = vrot.slane %v1076, 4
        %v1079 = vshll.u32 %v1002, 16
        %v1081 = vrot.slane %v1079, 5
        %v1082 = vor.u32 %v1078, %v1081
        %v1083 = vrot.slane %v1082, 4
        %v1085 = vshll.u32 %v1003, 16
        %v1087 = vrot.slane %v1085, 5
        %v1088 = vsel %vm1074, %v1083, %v1087
        %v1089 = vshrl.u32 %v1003, 16
        %v1091 = vrot.slane %v1089, 4
        %v1092 = vor.u32 %v1091, %v1087
        %v1093 = vrot.slane %v1092, 4
        %v1095 = vshll.u32 %v1004, 16
        %v1097 = vrot.slane %v1095, 5
        %v1098 = vsel %vm1074, %v1093, %v1097
        %v1100 = vshrl.u32 %v1005, 16
        %v1102 = vrot.slane %v1100, 4
        %v1103 = vshll.u32 %v1005, 16
        %v1105 = vrot.slane %v1103, 5
        %v1106 = vor.u32 %v1102, %v1105
        %v1107 = vrot.slane %v1106, 4
        %v1109 = vshll.u32 %v1006, 16
        %v1111 = vrot.slane %v1109, 5
        %v1112 = vsel %vm1074, %v1107, %v1111
        %v1113 = vshrl.u32 %v1006, 16
        %v1115 = vrot.slane %v1113, 4
        %v1116 = vor.u32 %v1115, %v1111
        %v1117 = vrot.slane %v1116, 4
        %v1119 = vshll.u32 %v1007, 16
        %v1121 = vrot.slane %v1119, 5
        %v1122 = vsel %vm1074, %v1117, %v1121
        %v1124 = vshrl.u32 %v1008, 16
        %v1126 = vrot.slane %v1124, 4
        %v1127 = vshll.u32 %v1008, 16
        %v1129 = vrot.slane %v1127, 5
        %v1130 = vor.u32 %v1126, %v1129
        %v1131 = vrot.slane %v1130, 4
        %v1133 = vshll.u32 %v1009, 16
        %v1135 = vrot.slane %v1133, 5
        %v1136 = vsel %vm1074, %v1131, %v1135
        %v1137 = vshrl.u32 %v1009, 16
        %v1139 = vrot.slane %v1137, 4
        %v1140 = vor.u32 %v1139, %v1135
        %v1141 = vrot.slane %v1140, 4
        %v1143 = vshll.u32 %v1010, 16
        %v1145 = vrot.slane %v1143, 5
        %v1146 = vsel %vm1074, %v1141, %v1145
        %v1148 = vshrl.u32 %v1011, 16
        %v1150 = vrot.slane %v1148, 4
        %v1151 = vshll.u32 %v1011, 16
        %v1153 = vrot.slane %v1151, 5
        %v1154 = vor.u32 %v1150, %v1153
        %v1155 = vrot.slane %v1154, 4
        %v1157 = vshll.u32 %v1012, 16
        %v1159 = vrot.slane %v1157, 5
        %v1160 = vsel %vm1074, %v1155, %v1159
        %v1161 = vshrl.u32 %v1012, 16
        %v1163 = vrot.slane %v1161, 4
        %v1164 = vor.u32 %v1163, %v1159
        %v1165 = vrot.slane %v1164, 4
        %v1167 = vshll.u32 %v1013, 16
        %v1169 = vrot.slane %v1167, 5
        %v1170 = vsel %vm1074, %v1165, %v1169
        %v1172 = vshrl.u32 %v1014, 16
        %v1174 = vrot.slane %v1172, 4
        %v1175 = vshll.u32 %v1014, 16
        %v1177 = vrot.slane %v1175, 5
        %v1178 = vor.u32 %v1174, %v1177
        %v1179 = vrot.slane %v1178, 4
        %v1181 = vshll.u32 %v1015, 16
        %v1183 = vrot.slane %v1181, 5
        %v1184 = vsel %vm1074, %v1179, %v1183
        %v1185 = vshrl.u32 %v1015, 16
        %v1187 = vrot.slane %v1185, 4
        %v1188 = vor.u32 %v1187, %v1183
        %v1189 = vrot.slane %v1188, 4
        %v1191 = vshll.u32 %v1016, 16
        %v1193 = vrot.slane %v1191, 5
        %v1194 = vsel %vm1074, %v1189, %v1193
        %v1196 = vshrl.u32 %v1017, 16
        %v1198 = vrot.slane %v1196, 4
        %v1199 = vshll.u32 %v1017, 16
        %v1201 = vrot.slane %v1199, 5
        %v1202 = vor.u32 %v1198, %v1201
        %v1203 = vrot.slane %v1202, 4
        %v1205 = vshll.u32 %v1018, 16
        %v1207 = vrot.slane %v1205, 5
        %v1208 = vsel %vm1074, %v1203, %v1207
        %v1209 = vshrl.u32 %v1018, 16
        %v1211 = vrot.slane %v1209, 4
        %v1212 = vor.u32 %v1211, %v1207
        %v1213 = vrot.slane %v1212, 4
        %v1215 = vshll.u32 %v1019, 16
        %v1217 = vrot.slane %v1215, 5
        %v1218 = vsel %vm1074, %v1213, %v1217
        %v1220 = vshrl.u32 %v1020, 16
        %v1222 = vrot.slane %v1220, 4
        %v1223 = vshll.u32 %v1020, 16
        %v1225 = vrot.slane %v1223, 5
        %v1226 = vor.u32 %v1222, %v1225
        %v1227 = vrot.slane %v1226, 4
        %v1229 = vshll.u32 %v1021, 16
        %v1231 = vrot.slane %v1229, 5
        %v1232 = vsel %vm1074, %v1227, %v1231
        %v1233 = vshrl.u32 %v1021, 16
        %v1235 = vrot.slane %v1233, 4
        %v1236 = vor.u32 %v1235, %v1231
        %v1237 = vrot.slane %v1236, 4
        %v1239 = vshll.u32 %v1022, 16
        %v1241 = vrot.slane %v1239, 5
        %v1242 = vsel %vm1074, %v1237, %v1241
        %v1244 = vshrl.u32 %v1023, 16
        %v1246 = vrot.slane %v1244, 4
        %v1247 = vshll.u32 %v1023, 16
        %v1249 = vrot.slane %v1247, 5
        %v1250 = vor.u32 %v1246, %v1249
        %v1251 = vrot.slane %v1250, 4
        %v1253 = vshll.u32 %v1024, 16
        %v1255 = vrot.slane %v1253, 5
        %v1256 = vsel %vm1074, %v1251, %v1255
        %v1257 = vshrl.u32 %v1024, 16
        %v1259 = vrot.slane %v1257, 4
        %v1260 = vor.u32 %v1259, %v1255
        %v1261 = vrot.slane %v1260, 4
        %v1263 = vshll.u32 %v1025, 16
        %v1265 = vrot.slane %v1263, 5
        %v1266 = vsel %vm1074, %v1261, %v1265
        %v1268 = vshrl.u32 %v1026, 16
        %v1270 = vrot.slane %v1268, 4
        %v1271 = vshll.u32 %v1026, 16
        %v1273 = vrot.slane %v1271, 5
        %v1274 = vor.u32 %v1270, %v1273
        %v1275 = vrot.slane %v1274, 4
        %v1277 = vshll.u32 %v1027, 16
        %v1279 = vrot.slane %v1277, 5
        %v1280 = vsel %vm1074, %v1275, %v1279
        %v1281 = vshrl.u32 %v1027, 16
        %v1283 = vrot.slane %v1281, 4
        %v1284 = vor.u32 %v1283, %v1279
        %v1285 = vrot.slane %v1284, 4
        %v1287 = vshll.u32 %v1028, 16
        %v1289 = vrot.slane %v1287, 5
        %v1290 = vsel %vm1074, %v1285, %v1289
        %v1292 = vshrl.u32 %v1029, 16
        %v1294 = vrot.slane %v1292, 4
        %v1295 = vshll.u32 %v1029, 16
        %v1297 = vrot.slane %v1295, 5
        %v1298 = vor.u32 %v1294, %v1297
        %v1299 = vrot.slane %v1298, 4
        %v1301 = vshll.u32 %v1030, 16
        %v1303 = vrot.slane %v1301, 5
        %v1304 = vsel %vm1074, %v1299, %v1303
        %v1305 = vshrl.u32 %v1030, 16
        %v1307 = vrot.slane %v1305, 4
        %v1308 = vor.u32 %v1307, %v1303
        %v1309 = vrot.slane %v1308, 4
        %v1311 = vshll.u32 %v1031, 16
        %v1313 = vrot.slane %v1311, 5
        %v1314 = vsel %vm1074, %v1309, %v1313
        %v1316 = vshrl.u32 %v1032, 16
        %v1318 = vrot.slane %v1316, 4
        %v1319 = vshll.u32 %v1032, 16
        %v1321 = vrot.slane %v1319, 5
        %v1322 = vor.u32 %v1318, %v1321
        %v1323 = vrot.slane %v1322, 4
        %v1325 = vshll.u32 %v1033, 16
        %v1327 = vrot.slane %v1325, 5
        %v1328 = vsel %vm1074, %v1323, %v1327
        %v1329 = vshrl.u32 %v1033, 16
        %v1331 = vrot.slane %v1329, 4
        %v1332 = vor.u32 %v1331, %v1327
        %v1333 = vrot.slane %v1332, 4
        %v1335 = vshll.u32 %v1034, 16
        %v1337 = vrot.slane %v1335, 5
        %v1338 = vsel %vm1074, %v1333, %v1337
        %v1340 = vshrl.u32 %v1035, 16
        %v1342 = vrot.slane %v1340, 4
        %v1343 = vshll.u32 %v1035, 16
        %v1345 = vrot.slane %v1343, 5
        %v1346 = vor.u32 %v1342, %v1345
        %v1347 = vrot.slane %v1346, 4
        %v1349 = vshll.u32 %v1036, 16
        %v1351 = vrot.slane %v1349, 5
        %v1352 = vsel %vm1074, %v1347, %v1351
        %v1353 = vshrl.u32 %v1036, 16
        %v1355 = vrot.slane %v1353, 4
        %v1356 = vor.u32 %v1355, %v1351
        %v1357 = vrot.slane %v1356, 4
        %v1359 = vshll.u32 %v1037, 16
        %v1361 = vrot.slane %v1359, 5
        %v1362 = vsel %vm1074, %v1357, %v1361
        %v1364 = vshrl.u32 %v1038, 16
        %v1366 = vrot.slane %v1364, 4
        %v1367 = vshll.u32 %v1038, 16
        %v1369 = vrot.slane %v1367, 5
        %v1370 = vor.u32 %v1366, %v1369
        %v1371 = vrot.slane %v1370, 4
        %v1373 = vshll.u32 %v1039, 16
        %v1375 = vrot.slane %v1373, 5
        %v1376 = vsel %vm1074, %v1371, %v1375
        %v1377 = vshrl.u32 %v1039, 16
        %v1379 = vrot.slane %v1377, 4
        %v1380 = vor.u32 %v1379, %v1375
        %v1381 = vrot.slane %v1380, 4
        %v1383 = vshll.u32 %v1040, 16
        %v1385 = vrot.slane %v1383, 5
        %v1386 = vsel %vm1074, %v1381, %v1385
        %v1388 = vshrl.u32 %v1041, 16
        %v1390 = vrot.slane %v1388, 4
        %v1391 = vshll.u32 %v1041, 16
        %v1393 = vrot.slane %v1391, 5
        %v1394 = vor.u32 %v1390, %v1393
        %v1395 = vrot.slane %v1394, 4
        %v1397 = vshll.u32 %v1042, 16
        %v1399 = vrot.slane %v1397, 5
        %v1400 = vsel %vm1074, %v1395, %v1399
        %v1401 = vshrl.u32 %v1042, 16
        %v1403 = vrot.slane %v1401, 4
        %v1404 = vor.u32 %v1403, %v1399
        %v1405 = vrot.slane %v1404, 4
        %v1407 = vshll.u32 %v1043, 16
        %v1409 = vrot.slane %v1407, 5
        %v1410 = vsel %vm1074, %v1405, %v1409
        %v1412 = vshrl.u32 %v1044, 16
        %v1414 = vrot.slane %v1412, 4
        %v1415 = vshll.u32 %v1044, 16
        %v1417 = vrot.slane %v1415, 5
        %v1418 = vor.u32 %v1414, %v1417
        %v1419 = vrot.slane %v1418, 4
        %v1421 = vshll.u32 %v1045, 16
        %v1423 = vrot.slane %v1421, 5
        %v1424 = vsel %vm1074, %v1419, %v1423
        %v1425 = vshrl.u32 %v1045, 16
        %v1427 = vrot.slane %v1425, 4
        %v1428 = vor.u32 %v1427, %v1423
        %v1429 = vrot.slane %v1428, 4
        %v1431 = vshll.u32 %v1046, 16
        %v1433 = vrot.slane %v1431, 5
        %v1434 = vsel %vm1074, %v1429, %v1433
        %v1436 = vshrl.u32 %v1047, 16
        %v1438 = vrot.slane %v1436, 4
        %v1439 = vshll.u32 %v1047, 16
        %v1441 = vrot.slane %v1439, 5
        %v1442 = vor.u32 %v1438, %v1441
        %v1443 = vrot.slane %v1442, 4
        %v1445 = vshll.u32 %v1048, 16
        %v1447 = vrot.slane %v1445, 5
        %v1448 = vsel %vm1074, %v1443, %v1447
        %v1449 = vshrl.u32 %v1048, 16
        %v1451 = vrot.slane %v1449, 4
        %v1452 = vor.u32 %v1451, %v1447
        %v1453 = vrot.slane %v1452, 4
        %v1455 = vshll.u32 %v1049, 16
        %v1457 = vrot.slane %v1455, 5
        %v1458 = vsel %vm1074, %v1453, %v1457
        %s1459 = scalar_lea.vmem [#allocation7], 128
        %v1460 = vld [vmem:[%s1459] sm:$0xff]
        %v1461 = vld [vmem:[%s1459 + $0x8] sm:$0xff]
        %v1462 = vld [vmem:[%s1459 + $0x10] sm:$0xff]
        %v1463 = vld [vmem:[%s1459 + $0x18] sm:$0xff]
        %v1464 = vld [vmem:[%s1459 + $0x20] sm:$0xff]
        %v1465 = vld [vmem:[%s1459 + $0x28] sm:$0xff]
        %v1466 = vld [vmem:[%s1459 + $0x30] sm:$0xff]
        %v1467 = vld [vmem:[%s1459 + $0x38] sm:$0xff]
        %v1468 = vld [vmem:[%s1459 + $0x40] sm:$0xff]
        %v1469 = vld [vmem:[%s1459 + $0x48] sm:$0xff]
        %v1470 = vld [vmem:[%s1459 + $0x50] sm:$0xff]
        %v1471 = vld [vmem:[%s1459 + $0x58] sm:$0xff]
        %v1472 = vld [vmem:[%s1459 + $0x60] sm:$0xff]
        %v1473 = vld [vmem:[%s1459 + $0x68] sm:$0xff]
        %v1474 = vld [vmem:[%s1459 + $0x70] sm:$0xff]
        %v1475 = vld [vmem:[%s1459 + $0x78] sm:$0xff]
        %v1476 = vunpack.c.l.b16 %v1088
        %v1477 = vunpack.c.l.b16 %v1098
        %v1478 = vunpack.c.l.b16 %v1112
        %v1479 = vunpack.c.l.b16 %v1122
        %v1480 = vunpack.c.l.b16 %v1136
        %v1481 = vunpack.c.l.b16 %v1146
        %v1482 = vunpack.c.l.b16 %v1160
        %v1483 = vunpack.c.l.b16 %v1170
        %v1484 = vunpack.c.l.b16 %v1184
        %v1485 = vunpack.c.l.b16 %v1194
        %v1486 = vunpack.c.l.b16 %v1208
        %v1487 = vunpack.c.l.b16 %v1218
        %v1488 = vunpack.c.l.b16 %v1232
        %v1489 = vunpack.c.l.b16 %v1242
        %v1490 = vunpack.c.l.b16 %v1256
        %v1491 = vunpack.c.l.b16 %v1266
        %v1492 = vunpack.c.l.b16 %v1280
        %v1493 = vunpack.c.l.b16 %v1290
        %v1494 = vunpack.c.l.b16 %v1304
        %v1495 = vunpack.c.l.b16 %v1314
        %v1496 = vunpack.c.l.b16 %v1328
        %v1497 = vunpack.c.l.b16 %v1338
        %v1498 = vunpack.c.l.b16 %v1352
        %v1499 = vunpack.c.l.b16 %v1362
        %v1500 = vunpack.c.l.b16 %v1376
        %v1501 = vunpack.c.l.b16 %v1386
        %v1502 = vunpack.c.l.b16 %v1400
        %v1503 = vunpack.c.l.b16 %v1410
        %v1504 = vunpack.c.l.b16 %v1424
        %v1505 = vunpack.c.l.b16 %v1434
        %v1506 = vunpack.c.l.b16 %v1448
        %v1507 = vunpack.c.l.b16 %v1458
        %v1508 = vpack.c.b16 %v1477, %v1476
        %v1509 = vpack.c.b16 %v1479, %v1478
        %v1510 = vpack.c.b16 %v1481, %v1480
        %v1511 = vpack.c.b16 %v1483, %v1482
        %v1512 = vpack.c.b16 %v1485, %v1484
        %v1513 = vpack.c.b16 %v1487, %v1486
        %v1514 = vpack.c.b16 %v1489, %v1488
        %v1515 = vpack.c.b16 %v1491, %v1490
        %v1516 = vpack.c.b16 %v1493, %v1492
        %v1517 = vpack.c.b16 %v1495, %v1494
        %v1518 = vpack.c.b16 %v1497, %v1496
        %v1519 = vpack.c.b16 %v1499, %v1498
        %v1520 = vpack.c.b16 %v1501, %v1500
        %v1521 = vpack.c.b16 %v1503, %v1502
        %v1522 = vpack.c.b16 %v1505, %v1504
        %v1523 = vpack.c.b16 %v1507, %v1506
        %v1556 = vunpack.c.l.b16 %v1460
        %v1557 = vunpack.c.h.b16 %v1460
        %v1558 = vunpack.c.l.b16 %v1461
        %v1559 = vunpack.c.h.b16 %v1461
        %v1560 = vunpack.c.l.b16 %v1462
        %v1561 = vunpack.c.h.b16 %v1462
        %v1562 = vunpack.c.l.b16 %v1463
        %v1563 = vunpack.c.h.b16 %v1463
        %v1564 = vunpack.c.l.b16 %v1464
        %v1565 = vunpack.c.h.b16 %v1464
        %v1566 = vunpack.c.l.b16 %v1465
        %v1567 = vunpack.c.h.b16 %v1465
        %v1568 = vunpack.c.l.b16 %v1466
        %v1569 = vunpack.c.h.b16 %v1466
        %v1570 = vunpack.c.l.b16 %v1467
        %v1571 = vunpack.c.h.b16 %v1467
        %v1572 = vunpack.c.l.b16 %v1468
        %v1573 = vunpack.c.h.b16 %v1468
        %v1574 = vunpack.c.l.b16 %v1469
        %v1575 = vunpack.c.h.b16 %v1469
        %v1576 = vunpack.c.l.b16 %v1470
        %v1577 = vunpack.c.h.b16 %v1470
        %v1578 = vunpack.c.l.b16 %v1471
        %v1579 = vunpack.c.h.b16 %v1471
        %v1580 = vunpack.c.l.b16 %v1472
        %v1581 = vunpack.c.h.b16 %v1472
        %v1582 = vunpack.c.l.b16 %v1473
        %v1583 = vunpack.c.h.b16 %v1473
        %v1584 = vunpack.c.l.b16 %v1474
        %v1585 = vunpack.c.h.b16 %v1474
        %v1586 = vunpack.c.l.b16 %v1475
        %v1587 = vunpack.c.h.b16 %v1475
        %v1588 = vpack.c.b16 %v1558, %v1556
        %v1589 = vpack.c.b16 %v1559, %v1557
        %v1590 = vpack.c.b16 %v1562, %v1560
        %v1591 = vpack.c.b16 %v1563, %v1561
        %v1592 = vpack.c.b16 %v1566, %v1564
        %v1593 = vpack.c.b16 %v1567, %v1565
        %v1594 = vpack.c.b16 %v1570, %v1568
        %v1595 = vpack.c.b16 %v1571, %v1569
        %v1596 = vpack.c.b16 %v1574, %v1572
        %v1597 = vpack.c.b16 %v1575, %v1573
        %v1598 = vpack.c.b16 %v1578, %v1576
        %v1599 = vpack.c.b16 %v1579, %v1577
        %v1600 = vpack.c.b16 %v1582, %v1580
        %v1601 = vpack.c.b16 %v1583, %v1581
        %v1602 = vpack.c.b16 %v1586, %v1584
        %v1603 = vpack.c.b16 %v1587, %v1585
        %1620 = vmatprep.subr.bf16.mxu0 %v1589
        %1621 = vmatpush1.bf16.msra.mxu0 %v1588
        %1622 = vmatprep.subr.bf16.mxu0 %v1591
        %1623 = vmatpush1.bf16.msra.mxu0 %v1590
        %1624 = vmatprep.subr.bf16.mxu0 %v1593
        %1625 = vmatpush1.bf16.msra.mxu0 %v1592
        %1626 = vmatprep.subr.bf16.mxu0 %v1595
        %1627 = vmatpush1.bf16.msra.mxu0 %v1594
        %1628 = vmatprep.subr.bf16.mxu0 %v1597
        %1629 = vmatpush1.bf16.msra.mxu0 %v1596
        %1630 = vmatprep.subr.bf16.mxu0 %v1599
        %1631 = vmatpush1.bf16.msra.mxu0 %v1598
        %1632 = vmatprep.subr.bf16.mxu0 %v1601
        %1633 = vmatpush1.bf16.msra.mxu0 %v1600
        %1634 = vmatprep.subr.bf16.mxu0 %v1603
        %1635 = vmatpush1.bf16.msra.mxu0 %v1602
        %1636 = vmatprep.subr.bf16.mxu0 0
        %1637 = vmatpush1.bf16.msra.mxu0 0
        %1638 = vmatprep.subr.bf16.mxu0 0
        %1639 = vmatpush1.bf16.msra.mxu0 0
        %1640 = vmatprep.subr.bf16.mxu0 0
        %1641 = vmatpush1.bf16.msra.mxu0 0
        %1642 = vmatprep.subr.bf16.mxu0 0
        %1643 = vmatpush1.bf16.msra.mxu0 0
        %1644 = vmatprep.subr.bf16.mxu0 0
        %1645 = vmatpush1.bf16.msra.mxu0 0
        %1646 = vmatprep.subr.bf16.mxu0 0
        %1647 = vmatpush1.bf16.msra.mxu0 0
        %1648 = vmatprep.subr.bf16.mxu0 0
        %1649 = vmatpush1.bf16.msra.mxu0 0
        %1650 = vmatprep.subr.bf16.mxu0 0
        %1651 = vmatpush1.bf16.msra.mxu0 0
        %1652 = vmatprep.mubr.bf16.mxu0 0
        %1653 = vmatmul.mubr.bf16.gmra.mrb[0].mxu0 %v1508
        %v1654 = vpop.f32.mrb[0].mxu0
        %v1655 = vadd.f32 0.0, %v1654
        %v1656 = vpop.f32.mrb[0].mxu0
        %v1657 = vadd.f32 0.0, %v1656
        %v1658 = vpop.f32.mrb[0].mxu0
        %v1659 = vadd.f32 0.0, %v1658
        %v1660 = vpop.f32.mrb[0].mxu0
        %v1661 = vadd.f32 0.0, %v1660
        %1662 = vmatprep.mubr.bf16.mxu0 0
        %1663 = vmatmul.mubr.bf16.gmra.mrb[0].mxu0 %v1509
        %v1664 = vpop.f32.mrb[0].mxu0
        %v1665 = vadd.f32 0.0, %v1664
        %v1666 = vpop.f32.mrb[0].mxu0
        %v1667 = vadd.f32 0.0, %v1666
        %v1668 = vpop.f32.mrb[0].mxu0
        %v1669 = vadd.f32 0.0, %v1668
        %v1670 = vpop.f32.mrb[0].mxu0
        %v1671 = vadd.f32 0.0, %v1670
        %1672 = vmatprep.mubr.bf16.mxu0 0
        %1673 = vmatmul.mubr.bf16.gmra.mrb[0].mxu0 %v1510
        %v1674 = vpop.f32.mrb[0].mxu0
        %v1675 = vadd.f32 0.0, %v1674
        %v1676 = vpop.f32.mrb[0].mxu0
        %v1677 = vadd.f32 0.0, %v1676
        %v1678 = vpop.f32.mrb[0].mxu0
        %v1679 = vadd.f32 0.0, %v1678
        %v1680 = vpop.f32.mrb[0].mxu0
        %v1681 = vadd.f32 0.0, %v1680
        %1682 = vmatprep.mubr.bf16.mxu0 0
        %1683 = vmatmul.mubr.bf16.gmra.mrb[0].mxu0 %v1511
        %v1684 = vpop.f32.mrb[0].mxu0
        %v1685 = vadd.f32 0.0, %v1684
        %v1686 = vpop.f32.mrb[0].mxu0
        %v1687 = vadd.f32 0.0, %v1686
        %v1688 = vpop.f32.mrb[0].mxu0
        %v1689 = vadd.f32 0.0, %v1688
        %v1690 = vpop.f32.mrb[0].mxu0
        %v1691 = vadd.f32 0.0, %v1690
        %1692 = vmatprep.mubr.bf16.mxu0 0
        %1693 = vmatmul.mubr.bf16.gmra.mrb[0].mxu0 %v1512
        %v1694 = vpop.f32.mrb[0].mxu0
        %v1695 = vadd.f32 0.0, %v1694
        %v1696 = vpop.f32.mrb[0].mxu0
        %v1697 = vadd.f32 0.0, %v1696
        %v1698 = vpop.f32.mrb[0].mxu0
        %v1699 = vadd.f32 0.0, %v1698
        %v1700 = vpop.f32.mrb[0].mxu0
        %v1701 = vadd.f32 0.0, %v1700
        %1702 = vmatprep.mubr.bf16.mxu0 0
        %1703 = vmatmul.mubr.bf16.gmra.mrb[0].mxu0 %v1513
        %v1704 = vpop.f32.mrb[0].mxu0
        %v1705 = vadd.f32 0.0, %v1704
        %v1706 = vpop.f32.mrb[0].mxu0
        %v1707 = vadd.f32 0.0, %v1706
        %v1708 = vpop.f32.mrb[0].mxu0
        %v1709 = vadd.f32 0.0, %v1708
        %v1710 = vpop.f32.mrb[0].mxu0
        %v1711 = vadd.f32 0.0, %v1710
        %1712 = vmatprep.mubr.bf16.mxu0 0
        %1713 = vmatmul.mubr.bf16.gmra.mrb[0].mxu0 %v1514
        %v1714 = vpop.f32.mrb[0].mxu0
        %v1715 = vadd.f32 0.0, %v1714
        %v1716 = vpop.f32.mrb[0].mxu0
        %v1717 = vadd.f32 0.0, %v1716
        %v1718 = vpop.f32.mrb[0].mxu0
        %v1719 = vadd.f32 0.0, %v1718
        %v1720 = vpop.f32.mrb[0].mxu0
        %v1721 = vadd.f32 0.0, %v1720
        %1722 = vmatprep.mubr.bf16.mxu0 0
        %1723 = vmatmul.mubr.bf16.gmra.mrb[0].mxu0 %v1515
        %v1724 = vpop.f32.mrb[0].mxu0
        %v1725 = vadd.f32 0.0, %v1724
        %v1726 = vpop.f32.mrb[0].mxu0
        %v1727 = vadd.f32 0.0, %v1726
        %v1728 = vpop.f32.mrb[0].mxu0
        %v1729 = vadd.f32 0.0, %v1728
        %v1730 = vpop.f32.mrb[0].mxu0
        %v1731 = vadd.f32 0.0, %v1730
        %1732 = vmatprep.mubr.bf16.mxu0 0
        %1733 = vmatmul.mubr.bf16.gmra.mrb[0].mxu0 %v1516
        %v1734 = vpop.f32.mrb[0].mxu0
        %v1735 = vadd.f32 0.0, %v1734
        %v1736 = vpop.f32.mrb[0].mxu0
        %v1737 = vadd.f32 0.0, %v1736
        %v1738 = vpop.f32.mrb[0].mxu0
        %v1739 = vadd.f32 0.0, %v1738
        %v1740 = vpop.f32.mrb[0].mxu0
        %v1741 = vadd.f32 0.0, %v1740
        %1742 = vmatprep.mubr.bf16.mxu0 0
        %1743 = vmatmul.mubr.bf16.gmra.mrb[0].mxu0 %v1517
        %v1744 = vpop.f32.mrb[0].mxu0
        %v1745 = vadd.f32 0.0, %v1744
        %v1746 = vpop.f32.mrb[0].mxu0
        %v1747 = vadd.f32 0.0, %v1746
        %v1748 = vpop.f32.mrb[0].mxu0
        %v1749 = vadd.f32 0.0, %v1748
        %v1750 = vpop.f32.mrb[0].mxu0
        %v1751 = vadd.f32 0.0, %v1750
        %1752 = vmatprep.mubr.bf16.mxu0 0
        %1753 = vmatmul.mubr.bf16.gmra.mrb[0].mxu0 %v1518
        %v1754 = vpop.f32.mrb[0].mxu0
        %v1755 = vadd.f32 0.0, %v1754
        %v1756 = vpop.f32.mrb[0].mxu0
        %v1757 = vadd.f32 0.0, %v1756
        %v1758 = vpop.f32.mrb[0].mxu0
        %v1759 = vadd.f32 0.0, %v1758
        %v1760 = vpop.f32.mrb[0].mxu0
        %v1761 = vadd.f32 0.0, %v1760
        %1762 = vmatprep.mubr.bf16.mxu0 0
        %1763 = vmatmul.mubr.bf16.gmra.mrb[0].mxu0 %v1519
        %v1764 = vpop.f32.mrb[0].mxu0
        %v1765 = vadd.f32 0.0, %v1764
        %v1766 = vpop.f32.mrb[0].mxu0
        %v1767 = vadd.f32 0.0, %v1766
        %v1768 = vpop.f32.mrb[0].mxu0
        %v1769 = vadd.f32 0.0, %v1768
        %v1770 = vpop.f32.mrb[0].mxu0
        %v1771 = vadd.f32 0.0, %v1770
        %1772 = vmatprep.mubr.bf16.mxu0 0
        %1773 = vmatmul.mubr.bf16.gmra.mrb[0].mxu0 %v1520
        %v1774 = vpop.f32.mrb[0].mxu0
        %v1775 = vadd.f32 0.0, %v1774
        %v1776 = vpop.f32.mrb[0].mxu0
        %v1777 = vadd.f32 0.0, %v1776
        %v1778 = vpop.f32.mrb[0].mxu0
        %v1779 = vadd.f32 0.0, %v1778
        %v1780 = vpop.f32.mrb[0].mxu0
        %v1781 = vadd.f32 0.0, %v1780
        %1782 = vmatprep.mubr.bf16.mxu0 0
        %1783 = vmatmul.mubr.bf16.gmra.mrb[0].mxu0 %v1521
        %v1784 = vpop.f32.mrb[0].mxu0
        %v1785 = vadd.f32 0.0, %v1784
        %v1786 = vpop.f32.mrb[0].mxu0
        %v1787 = vadd.f32 0.0, %v1786
        %v1788 = vpop.f32.mrb[0].mxu0
        %v1789 = vadd.f32 0.0, %v1788
        %v1790 = vpop.f32.mrb[0].mxu0
        %v1791 = vadd.f32 0.0, %v1790
        %1792 = vmatprep.mubr.bf16.mxu0 0
        %1793 = vmatmul.mubr.bf16.gmra.mrb[0].mxu0 %v1522
        %v1794 = vpop.f32.mrb[0].mxu0
        %v1795 = vadd.f32 0.0, %v1794
        %v1796 = vpop.f32.mrb[0].mxu0
        %v1797 = vadd.f32 0.0, %v1796
        %v1798 = vpop.f32.mrb[0].mxu0
        %v1799 = vadd.f32 0.0, %v1798
        %v1800 = vpop.f32.mrb[0].mxu0
        %v1801 = vadd.f32 0.0, %v1800
        %1802 = vmatprep.mubr.bf16.mxu0 0
        %1803 = vmatmul.mubr.bf16.gmra.mrb[0].mxu0 %v1523
        %v1804 = vpop.f32.mrb[0].mxu0
        %v1805 = vadd.f32 0.0, %v1804
        %v1806 = vpop.f32.mrb[0].mxu0
        %v1807 = vadd.f32 0.0, %v1806
        %v1808 = vpop.f32.mrb[0].mxu0
        %v1809 = vadd.f32 0.0, %v1808
        %v1810 = vpop.f32.mrb[0].mxu0
        %v1811 = vadd.f32 0.0, %v1810
        %1812 = vdwg.mxu0
        %v1845 = vunpack.c.l.b16 %v1002
        %v1846 = vunpack.c.l.b16 %v1003
        %v1847 = vunpack.c.l.b16 %v1005
        %v1848 = vunpack.c.l.b16 %v1006
        %v1849 = vunpack.c.l.b16 %v1008
        %v1850 = vunpack.c.l.b16 %v1009
        %v1851 = vunpack.c.l.b16 %v1011
        %v1852 = vunpack.c.l.b16 %v1012
        %v1853 = vunpack.c.l.b16 %v1014
        %v1854 = vunpack.c.l.b16 %v1015
        %v1855 = vunpack.c.l.b16 %v1017
        %v1856 = vunpack.c.l.b16 %v1018
        %v1857 = vunpack.c.l.b16 %v1020
        %v1858 = vunpack.c.l.b16 %v1021
        %v1859 = vunpack.c.l.b16 %v1023
        %v1860 = vunpack.c.l.b16 %v1024
        %v1861 = vunpack.c.l.b16 %v1026
        %v1862 = vunpack.c.l.b16 %v1027
        %v1863 = vunpack.c.l.b16 %v1029
        %v1864 = vunpack.c.l.b16 %v1030
        %v1865 = vunpack.c.l.b16 %v1032
        %v1866 = vunpack.c.l.b16 %v1033
        %v1867 = vunpack.c.l.b16 %v1035
        %v1868 = vunpack.c.l.b16 %v1036
        %v1869 = vunpack.c.l.b16 %v1038
        %v1870 = vunpack.c.l.b16 %v1039
        %v1871 = vunpack.c.l.b16 %v1041
        %v1872 = vunpack.c.l.b16 %v1042
        %v1873 = vunpack.c.l.b16 %v1044
        %v1874 = vunpack.c.l.b16 %v1045
        %v1875 = vunpack.c.l.b16 %v1047
        %v1876 = vunpack.c.l.b16 %v1048
        %v1877 = vpack.c.b16 %v1846, %v1845
        %v1878 = vpack.c.b16 %v1848, %v1847
        %v1879 = vpack.c.b16 %v1850, %v1849
        %v1880 = vpack.c.b16 %v1852, %v1851
        %v1881 = vpack.c.b16 %v1854, %v1853
        %v1882 = vpack.c.b16 %v1856, %v1855
        %v1883 = vpack.c.b16 %v1858, %v1857
        %v1884 = vpack.c.b16 %v1860, %v1859
        %v1885 = vpack.c.b16 %v1862, %v1861
        %v1886 = vpack.c.b16 %v1864, %v1863
        %v1887 = vpack.c.b16 %v1866, %v1865
        %v1888 = vpack.c.b16 %v1868, %v1867
        %v1889 = vpack.c.b16 %v1870, %v1869
        %v1890 = vpack.c.b16 %v1872, %v1871
        %v1891 = vpack.c.b16 %v1874, %v1873
        %v1892 = vpack.c.b16 %v1876, %v1875
        %v1925 = vunpack.c.l.b16 %v1056
        %v1926 = vunpack.c.h.b16 %v1056
        %v1927 = vunpack.c.l.b16 %v1057
        %v1928 = vunpack.c.h.b16 %v1057
        %v1929 = vunpack.c.l.b16 %v1058
        %v1930 = vunpack.c.h.b16 %v1058
        %v1931 = vunpack.c.l.b16 %v1059
        %v1932 = vunpack.c.h.b16 %v1059
        %v1933 = vunpack.c.l.b16 %v1060
        %v1934 = vunpack.c.h.b16 %v1060
        %v1935 = vunpack.c.l.b16 %v1061
        %v1936 = vunpack.c.h.b16 %v1061
        %v1937 = vunpack.c.l.b16 %v1062
        %v1938 = vunpack.c.h.b16 %v1062
        %v1939 = vunpack.c.l.b16 %v1063
        %v1940 = vunpack.c.h.b16 %v1063
        %v1941 = vunpack.c.l.b16 %v1064
        %v1942 = vunpack.c.h.b16 %v1064
        %v1943 = vunpack.c.l.b16 %v1065
        %v1944 = vunpack.c.h.b16 %v1065
        %v1945 = vunpack.c.l.b16 %v1066
        %v1946 = vunpack.c.h.b16 %v1066
        %v1947 = vunpack.c.l.b16 %v1067
        %v1948 = vunpack.c.h.b16 %v1067
        %v1949 = vunpack.c.l.b16 %v1068
        %v1950 = vunpack.c.h.b16 %v1068
        %v1951 = vunpack.c.l.b16 %v1069
        %v1952 = vunpack.c.h.b16 %v1069
        %v1953 = vunpack.c.l.b16 %v1070
        %v1954 = vunpack.c.h.b16 %v1070
        %v1955 = vunpack.c.l.b16 %v1071
        %v1956 = vunpack.c.h.b16 %v1071
        %v1957 = vpack.c.b16 %v1927, %v1925
        %v1958 = vpack.c.b16 %v1928, %v1926
        %v1959 = vpack.c.b16 %v1931, %v1929
        %v1960 = vpack.c.b16 %v1932, %v1930
        %v1961 = vpack.c.b16 %v1935, %v1933
        %v1962 = vpack.c.b16 %v1936, %v1934
        %v1963 = vpack.c.b16 %v1939, %v1937
        %v1964 = vpack.c.b16 %v1940, %v1938
        %v1965 = vpack.c.b16 %v1943, %v1941
        %v1966 = vpack.c.b16 %v1944, %v1942
        %v1967 = vpack.c.b16 %v1947, %v1945
        %v1968 = vpack.c.b16 %v1948, %v1946
        %v1969 = vpack.c.b16 %v1951, %v1949
        %v1970 = vpack.c.b16 %v1952, %v1950
        %v1971 = vpack.c.b16 %v1955, %v1953
        %v1972 = vpack.c.b16 %v1956, %v1954
        %1989 = vmatprep.subr.bf16.mxu0 %v1958
        %1990 = vmatpush1.bf16.msra.mxu0 %v1957
        %1991 = vmatprep.subr.bf16.mxu0 %v1960
        %1992 = vmatpush1.bf16.msra.mxu0 %v1959
        %1993 = vmatprep.subr.bf16.mxu0 %v1962
        %1994 = vmatpush1.bf16.msra.mxu0 %v1961
        %1995 = vmatprep.subr.bf16.mxu0 %v1964
        %1996 = vmatpush1.bf16.msra.mxu0 %v1963
        %1997 = vmatprep.subr.bf16.mxu0 %v1966
        %1998 = vmatpush1.bf16.msra.mxu0 %v1965
        %1999 = vmatprep.subr.bf16.mxu0 %v1968
        %2000 = vmatpush1.bf16.msra.mxu0 %v1967
        %2001 = vmatprep.subr.bf16.mxu0 %v1970
        %2002 = vmatpush1.bf16.msra.mxu0 %v1969
        %2003 = vmatprep.subr.bf16.mxu0 %v1972
        %2004 = vmatpush1.bf16.msra.mxu0 %v1971
        %2005 = vmatprep.subr.bf16.mxu0 0
        %2006 = vmatpush1.bf16.msra.mxu0 0
        %2007 = vmatprep.subr.bf16.mxu0 0
        %2008 = vmatpush1.bf16.msra.mxu0 0
        %2009 = vmatprep.subr.bf16.mxu0 0
        %2010 = vmatpush1.bf16.msra.mxu0 0
        %2011 = vmatprep.subr.bf16.mxu0 0
        %2012 = vmatpush1.bf16.msra.mxu0 0
        %2013 = vmatprep.subr.bf16.mxu0 0
        %2014 = vmatpush1.bf16.msra.mxu0 0
        %2015 = vmatprep.subr.bf16.mxu0 0
        %2016 = vmatpush1.bf16.msra.mxu0 0
        %2017 = vmatprep.subr.bf16.mxu0 0
        %2018 = vmatpush1.bf16.msra.mxu0 0
        %2019 = vmatprep.subr.bf16.mxu0 0
        %2020 = vmatpush1.bf16.msra.mxu0 0
        %2021 = vmatprep.mubr.bf16.mxu0 0
        %2022 = vmatmul.mubr.bf16.gmra.mrb[0].mxu0 %v1877
        %v2023 = vpop.f32.mrb[0].mxu0
        %v2024 = vadd.f32 %v1655, %v2023
        %v2025 = vpop.f32.mrb[0].mxu0
        %v2026 = vadd.f32 %v1657, %v2025
        %v2027 = vpop.f32.mrb[0].mxu0
        %v2028 = vadd.f32 %v1659, %v2027
        %v2029 = vpop.f32.mrb[0].mxu0
        %v2030 = vadd.f32 %v1661, %v2029
        %2031 = vmatprep.mubr.bf16.mxu0 0
        %2032 = vmatmul.mubr.bf16.gmra.mrb[0].mxu0 %v1878
        %v2033 = vpop.f32.mrb[0].mxu0
        %v2034 = vadd.f32 %v1665, %v2033
        %v2035 = vpop.f32.mrb[0].mxu0
        %v2036 = vadd.f32 %v1667, %v2035
        %v2037 = vpop.f32.mrb[0].mxu0
        %v2038 = vadd.f32 %v1669, %v2037
        %v2039 = vpop.f32.mrb[0].mxu0
        %v2040 = vadd.f32 %v1671, %v2039
        %2041 = vmatprep.mubr.bf16.mxu0 0
        %2042 = vmatmul.mubr.bf16.gmra.mrb[0].mxu0 %v1879
        %v2043 = vpop.f32.mrb[0].mxu0
        %v2044 = vadd.f32 %v1675, %v2043
        %v2045 = vpop.f32.mrb[0].mxu0
        %v2046 = vadd.f32 %v1677, %v2045
        %v2047 = vpop.f32.mrb[0].mxu0
        %v2048 = vadd.f32 %v1679, %v2047
        %v2049 = vpop.f32.mrb[0].mxu0
        %v2050 = vadd.f32 %v1681, %v2049
        %2051 = vmatprep.mubr.bf16.mxu0 0
        %2052 = vmatmul.mubr.bf16.gmra.mrb[0].mxu0 %v1880
        %v2053 = vpop.f32.mrb[0].mxu0
        %v2054 = vadd.f32 %v1685, %v2053
        %v2055 = vpop.f32.mrb[0].mxu0
        %v2056 = vadd.f32 %v1687, %v2055
        %v2057 = vpop.f32.mrb[0].mxu0
        %v2058 = vadd.f32 %v1689, %v2057
        %v2059 = vpop.f32.mrb[0].mxu0
        %v2060 = vadd.f32 %v1691, %v2059
        %2061 = vmatprep.mubr.bf16.mxu0 0
        %2062 = vmatmul.mubr.bf16.gmra.mrb[0].mxu0 %v1881
        %v2063 = vpop.f32.mrb[0].mxu0
        %v2064 = vadd.f32 %v1695, %v2063
        %v2065 = vpop.f32.mrb[0].mxu0
        %v2066 = vadd.f32 %v1697, %v2065
        %v2067 = vpop.f32.mrb[0].mxu0
        %v2068 = vadd.f32 %v1699, %v2067
        %v2069 = vpop.f32.mrb[0].mxu0
        %v2070 = vadd.f32 %v1701, %v2069
        %2071 = vmatprep.mubr.bf16.mxu0 0
        %2072 = vmatmul.mubr.bf16.gmra.mrb[0].mxu0 %v1882
        %v2073 = vpop.f32.mrb[0].mxu0
        %v2074 = vadd.f32 %v1705, %v2073
        %v2075 = vpop.f32.mrb[0].mxu0
        %v2076 = vadd.f32 %v1707, %v2075
        %v2077 = vpop.f32.mrb[0].mxu0
        %v2078 = vadd.f32 %v1709, %v2077
        %v2079 = vpop.f32.mrb[0].mxu0
        %v2080 = vadd.f32 %v1711, %v2079
        %2081 = vmatprep.mubr.bf16.mxu0 0
        %2082 = vmatmul.mubr.bf16.gmra.mrb[0].mxu0 %v1883
        %v2083 = vpop.f32.mrb[0].mxu0
        %v2084 = vadd.f32 %v1715, %v2083
        %v2085 = vpop.f32.mrb[0].mxu0
        %v2086 = vadd.f32 %v1717, %v2085
        %v2087 = vpop.f32.mrb[0].mxu0
        %v2088 = vadd.f32 %v1719, %v2087
        %v2089 = vpop.f32.mrb[0].mxu0
        %v2090 = vadd.f32 %v1721, %v2089
        %2091 = vmatprep.mubr.bf16.mxu0 0
        %2092 = vmatmul.mubr.bf16.gmra.mrb[0].mxu0 %v1884
        %v2093 = vpop.f32.mrb[0].mxu0
        %v2094 = vadd.f32 %v1725, %v2093
        %v2095 = vpop.f32.mrb[0].mxu0
        %v2096 = vadd.f32 %v1727, %v2095
        %v2097 = vpop.f32.mrb[0].mxu0
        %v2098 = vadd.f32 %v1729, %v2097
        %v2099 = vpop.f32.mrb[0].mxu0
        %v2100 = vadd.f32 %v1731, %v2099
        %2101 = vmatprep.mubr.bf16.mxu0 0
        %2102 = vmatmul.mubr.bf16.gmra.mrb[0].mxu0 %v1885
        %v2103 = vpop.f32.mrb[0].mxu0
        %v2104 = vadd.f32 %v1735, %v2103
        %v2105 = vpop.f32.mrb[0].mxu0
        %v2106 = vadd.f32 %v1737, %v2105
        %v2107 = vpop.f32.mrb[0].mxu0
        %v2108 = vadd.f32 %v1739, %v2107
        %v2109 = vpop.f32.mrb[0].mxu0
        %v2110 = vadd.f32 %v1741, %v2109
        %2111 = vmatprep.mubr.bf16.mxu0 0
        %2112 = vmatmul.mubr.bf16.gmra.mrb[0].mxu0 %v1886
        %v2113 = vpop.f32.mrb[0].mxu0
        %v2114 = vadd.f32 %v1745, %v2113
        %v2115 = vpop.f32.mrb[0].mxu0
        %v2116 = vadd.f32 %v1747, %v2115
        %v2117 = vpop.f32.mrb[0].mxu0
        %v2118 = vadd.f32 %v1749, %v2117
        %v2119 = vpop.f32.mrb[0].mxu0
        %v2120 = vadd.f32 %v1751, %v2119
        %2121 = vmatprep.mubr.bf16.mxu0 0
        %2122 = vmatmul.mubr.bf16.gmra.mrb[0].mxu0 %v1887
        %v2123 = vpop.f32.mrb[0].mxu0
        %v2124 = vadd.f32 %v1755, %v2123
        %v2125 = vpop.f32.mrb[0].mxu0
        %v2126 = vadd.f32 %v1757, %v2125
        %v2127 = vpop.f32.mrb[0].mxu0
        %v2128 = vadd.f32 %v1759, %v2127
        %v2129 = vpop.f32.mrb[0].mxu0
        %v2130 = vadd.f32 %v1761, %v2129
        %2131 = vmatprep.mubr.bf16.mxu0 0
        %2132 = vmatmul.mubr.bf16.gmra.mrb[0].mxu0 %v1888
        %v2133 = vpop.f32.mrb[0].mxu0
        %v2134 = vadd.f32 %v1765, %v2133
        %v2135 = vpop.f32.mrb[0].mxu0
        %v2136 = vadd.f32 %v1767, %v2135
        %v2137 = vpop.f32.mrb[0].mxu0
        %v2138 = vadd.f32 %v1769, %v2137
        %v2139 = vpop.f32.mrb[0].mxu0
        %v2140 = vadd.f32 %v1771, %v2139
        %2141 = vmatprep.mubr.bf16.mxu0 0
        %2142 = vmatmul.mubr.bf16.gmra.mrb[0].mxu0 %v1889
        %v2143 = vpop.f32.mrb[0].mxu0
        %v2144 = vadd.f32 %v1775, %v2143
        %v2145 = vpop.f32.mrb[0].mxu0
        %v2146 = vadd.f32 %v1777, %v2145
        %v2147 = vpop.f32.mrb[0].mxu0
        %v2148 = vadd.f32 %v1779, %v2147
        %v2149 = vpop.f32.mrb[0].mxu0
        %v2150 = vadd.f32 %v1781, %v2149
        %2151 = vmatprep.mubr.bf16.mxu0 0
        %2152 = vmatmul.mubr.bf16.gmra.mrb[0].mxu0 %v1890
        %v2153 = vpop.f32.mrb[0].mxu0
        %v2154 = vadd.f32 %v1785, %v2153
        %v2155 = vpop.f32.mrb[0].mxu0
        %v2156 = vadd.f32 %v1787, %v2155
        %v2157 = vpop.f32.mrb[0].mxu0
        %v2158 = vadd.f32 %v1789, %v2157
        %v2159 = vpop.f32.mrb[0].mxu0
        %v2160 = vadd.f32 %v1791, %v2159
        %2161 = vmatprep.mubr.bf16.mxu0 0
        %2162 = vmatmul.mubr.bf16.gmra.mrb[0].mxu0 %v1891
        %v2163 = vpop.f32.mrb[0].mxu0
        %v2164 = vadd.f32 %v1795, %v2163
        %v2165 = vpop.f32.mrb[0].mxu0
        %v2166 = vadd.f32 %v1797, %v2165
        %v2167 = vpop.f32.mrb[0].mxu0
        %v2168 = vadd.f32 %v1799, %v2167
        %v2169 = vpop.f32.mrb[0].mxu0
        %v2170 = vadd.f32 %v1801, %v2169
        %2171 = vmatprep.mubr.bf16.mxu0 0
        %2172 = vmatmul.mubr.bf16.gmra.mrb[0].mxu0 %v1892
        %v2173 = vpop.f32.mrb[0].mxu0
        %v2174 = vadd.f32 %v1805, %v2173
        %v2175 = vpop.f32.mrb[0].mxu0
        %v2176 = vadd.f32 %v1807, %v2175
        %v2177 = vpop.f32.mrb[0].mxu0
        %v2178 = vadd.f32 %v1809, %v2177
        %v2179 = vpop.f32.mrb[0].mxu0
        %v2180 = vadd.f32 %v1811, %v2179
        %2181 = vdwg.mxu0
        %vm2198 = vcmask 1042432
        %vm2199 = vcmask 1046532
        %vm2200 = vmor %vm2198, %vm2199
        %v2201 = vrot.slane %v1002, 5
        %v2202 = vrot.slane %v2201, 4
        %v2203 = vrot.slane %v1003, 5
        %v2204 = vsel %vm2200, %v2202, %v2203
        %v2205 = vrot.slane %v2203, 4
        %v2206 = vrot.slane %v1004, 5
        %v2207 = vsel %vm2200, %v2205, %v2206
        %v2208 = vrot.slane %v1005, 5
        %v2209 = vrot.slane %v2208, 4
        %v2210 = vrot.slane %v1006, 5
        %v2211 = vsel %vm2200, %v2209, %v2210
        %v2212 = vrot.slane %v2210, 4
        %v2213 = vrot.slane %v1007, 5
        %v2214 = vsel %vm2200, %v2212, %v2213
        %v2215 = vrot.slane %v1008, 5
        %v2216 = vrot.slane %v2215, 4
        %v2217 = vrot.slane %v1009, 5
        %v2218 = vsel %vm2200, %v2216, %v2217
        %v2219 = vrot.slane %v2217, 4
        %v2220 = vrot.slane %v1010, 5
        %v2221 = vsel %vm2200, %v2219, %v2220
        %v2222 = vrot.slane %v1011, 5
        %v2223 = vrot.slane %v2222, 4
        %v2224 = vrot.slane %v1012, 5
        %v2225 = vsel %vm2200, %v2223, %v2224
        %v2226 = vrot.slane %v2224, 4
        %v2227 = vrot.slane %v1013, 5
        %v2228 = vsel %vm2200, %v2226, %v2227
        %v2229 = vrot.slane %v1014, 5
        %v2230 = vrot.slane %v2229, 4
        %v2231 = vrot.slane %v1015, 5
        %v2232 = vsel %vm2200, %v2230, %v2231
        %v2233 = vrot.slane %v2231, 4
        %v2234 = vrot.slane %v1016, 5
        %v2235 = vsel %vm2200, %v2233, %v2234
        %v2236 = vrot.slane %v1017, 5
        %v2237 = vrot.slane %v2236, 4
        %v2238 = vrot.slane %v1018, 5
        %v2239 = vsel %vm2200, %v2237, %v2238
        %v2240 = vrot.slane %v2238, 4
        %v2241 = vrot.slane %v1019, 5
        %v2242 = vsel %vm2200, %v2240, %v2241
        %v2243 = vrot.slane %v1020, 5
        %v2244 = vrot.slane %v2243, 4
        %v2245 = vrot.slane %v1021, 5
        %v2246 = vsel %vm2200, %v2244, %v2245
        %v2247 = vrot.slane %v2245, 4
        %v2248 = vrot.slane %v1022, 5
        %v2249 = vsel %vm2200, %v2247, %v2248
        %v2250 = vrot.slane %v1023, 5
        %v2251 = vrot.slane %v2250, 4
        %v2252 = vrot.slane %v1024, 5
        %v2253 = vsel %vm2200, %v2251, %v2252
        %v2254 = vrot.slane %v2252, 4
        %v2255 = vrot.slane %v1025, 5
        %v2256 = vsel %vm2200, %v2254, %v2255
        %v2257 = vrot.slane %v1026, 5
        %v2258 = vrot.slane %v2257, 4
        %v2259 = vrot.slane %v1027, 5
        %v2260 = vsel %vm2200, %v2258, %v2259
        %v2261 = vrot.slane %v2259, 4
        %v2262 = vrot.slane %v1028, 5
        %v2263 = vsel %vm2200, %v2261, %v2262
        %v2264 = vrot.slane %v1029, 5
        %v2265 = vrot.slane %v2264, 4
        %v2266 = vrot.slane %v1030, 5
        %v2267 = vsel %vm2200, %v2265, %v2266
        %v2268 = vrot.slane %v2266, 4
        %v2269 = vrot.slane %v1031, 5
        %v2270 = vsel %vm2200, %v2268, %v2269
        %v2271 = vrot.slane %v1032, 5
        %v2272 = vrot.slane %v2271, 4
        %v2273 = vrot.slane %v1033, 5
        %v2274 = vsel %vm2200, %v2272, %v2273
        %v2275 = vrot.slane %v2273, 4
        %v2276 = vrot.slane %v1034, 5
        %v2277 = vsel %vm2200, %v2275, %v2276
        %v2278 = vrot.slane %v1035, 5
        %v2279 = vrot.slane %v2278, 4
        %v2280 = vrot.slane %v1036, 5
        %v2281 = vsel %vm2200, %v2279, %v2280
        %v2282 = vrot.slane %v2280, 4
        %v2283 = vrot.slane %v1037, 5
        %v2284 = vsel %vm2200, %v2282, %v2283
        %v2285 = vrot.slane %v1038, 5
        %v2286 = vrot.slane %v2285, 4
        %v2287 = vrot.slane %v1039, 5
        %v2288 = vsel %vm2200, %v2286, %v2287
        %v2289 = vrot.slane %v2287, 4
        %v2290 = vrot.slane %v1040, 5
        %v2291 = vsel %vm2200, %v2289, %v2290
        %v2292 = vrot.slane %v1041, 5
        %v2293 = vrot.slane %v2292, 4
        %v2294 = vrot.slane %v1042, 5
        %v2295 = vsel %vm2200, %v2293, %v2294
        %v2296 = vrot.slane %v2294, 4
        %v2297 = vrot.slane %v1043, 5
        %v2298 = vsel %vm2200, %v2296, %v2297
        %v2299 = vrot.slane %v1044, 5
        %v2300 = vrot.slane %v2299, 4
        %v2301 = vrot.slane %v1045, 5
        %v2302 = vsel %vm2200, %v2300, %v2301
        %v2303 = vrot.slane %v2301, 4
        %v2304 = vrot.slane %v1046, 5
        %v2305 = vsel %vm2200, %v2303, %v2304
        %v2306 = vrot.slane %v1047, 5
        %v2307 = vrot.slane %v2306, 4
        %v2308 = vrot.slane %v1048, 5
        %v2309 = vsel %vm2200, %v2307, %v2308
        %v2310 = vrot.slane %v2308, 4
        %v2311 = vrot.slane %v1049, 5
        %v2312 = vsel %vm2200, %v2310, %v2311
        %s2313 = scalar_lea.vmem [#allocation7], 256
        %v2314 = vld [vmem:[%s2313] sm:$0xff]
        %v2315 = vld [vmem:[%s2313 + $0x8] sm:$0xff]
        %v2316 = vld [vmem:[%s2313 + $0x10] sm:$0xff]
        %v2317 = vld [vmem:[%s2313 + $0x18] sm:$0xff]
        %v2318 = vld [vmem:[%s2313 + $0x20] sm:$0xff]
        %v2319 = vld [vmem:[%s2313 + $0x28] sm:$0xff]
        %v2320 = vld [vmem:[%s2313 + $0x30] sm:$0xff]
        %v2321 = vld [vmem:[%s2313 + $0x38] sm:$0xff]
        %v2322 = vld [vmem:[%s2313 + $0x40] sm:$0xff]
        %v2323 = vld [vmem:[%s2313 + $0x48] sm:$0xff]
        %v2324 = vld [vmem:[%s2313 + $0x50] sm:$0xff]
        %v2325 = vld [vmem:[%s2313 + $0x58] sm:$0xff]
        %v2326 = vld [vmem:[%s2313 + $0x60] sm:$0xff]
        %v2327 = vld [vmem:[%s2313 + $0x68] sm:$0xff]
        %v2328 = vld [vmem:[%s2313 + $0x70] sm:$0xff]
        %v2329 = vld [vmem:[%s2313 + $0x78] sm:$0xff]
        %v2330 = vunpack.c.l.b16 %v2204
        %v2331 = vunpack.c.l.b16 %v2207
        %v2332 = vunpack.c.l.b16 %v2211
        %v2333 = vunpack.c.l.b16 %v2214
        %v2334 = vunpack.c.l.b16 %v2218
        %v2335 = vunpack.c.l.b16 %v2221
        %v2336 = vunpack.c.l.b16 %v2225
        %v2337 = vunpack.c.l.b16 %v2228
        %v2338 = vunpack.c.l.b16 %v2232
        %v2339 = vunpack.c.l.b16 %v2235
        %v2340 = vunpack.c.l.b16 %v2239
        %v2341 = vunpack.c.l.b16 %v2242
        %v2342 = vunpack.c.l.b16 %v2246
        %v2343 = vunpack.c.l.b16 %v2249
        %v2344 = vunpack.c.l.b16 %v2253
        %v2345 = vunpack.c.l.b16 %v2256
        %v2346 = vunpack.c.l.b16 %v2260
        %v2347 = vunpack.c.l.b16 %v2263
        %v2348 = vunpack.c.l.b16 %v2267
        %v2349 = vunpack.c.l.b16 %v2270
        %v2350 = vunpack.c.l.b16 %v2274
        %v2351 = vunpack.c.l.b16 %v2277
        %v2352 = vunpack.c.l.b16 %v2281
        %v2353 = vunpack.c.l.b16 %v2284
        %v2354 = vunpack.c.l.b16 %v2288
        %v2355 = vunpack.c.l.b16 %v2291
        %v2356 = vunpack.c.l.b16 %v2295
        %v2357 = vunpack.c.l.b16 %v2298
        %v2358 = vunpack.c.l.b16 %v2302
        %v2359 = vunpack.c.l.b16 %v2305
        %v2360 = vunpack.c.l.b16 %v2309
        %v2361 = vunpack.c.l.b16 %v2312
        %v2362 = vpack.c.b16 %v2331, %v2330
        %v2363 = vpack.c.b16 %v2333, %v2332
        %v2364 = vpack.c.b16 %v2335, %v2334
        %v2365 = vpack.c.b16 %v2337, %v2336
        %v2366 = vpack.c.b16 %v2339, %v2338
        %v2367 = vpack.c.b16 %v2341, %v2340
        %v2368 = vpack.c.b16 %v2343, %v2342
        %v2369 = vpack.c.b16 %v2345, %v2344
        %v2370 = vpack.c.b16 %v2347, %v2346
        %v2371 = vpack.c.b16 %v2349, %v2348
        %v2372 = vpack.c.b16 %v2351, %v2350
        %v2373 = vpack.c.b16 %v2353, %v2352
        %v2374 = vpack.c.b16 %v2355, %v2354
        %v2375 = vpack.c.b16 %v2357, %v2356
        %v2376 = vpack.c.b16 %v2359, %v2358
        %v2377 = vpack.c.b16 %v2361, %v2360
        %v2410 = vunpack.c.l.b16 %v2314
        %v2411 = vunpack.c.h.b16 %v2314
        %v2412 = vunpack.c.l.b16 %v2315
        %v2413 = vunpack.c.h.b16 %v2315
        %v2414 = vunpack.c.l.b16 %v2316
        %v2415 = vunpack.c.h.b16 %v2316
        %v2416 = vunpack.c.l.b16 %v2317
        %v2417 = vunpack.c.h.b16 %v2317
        %v2418 = vunpack.c.l.b16 %v2318
        %v2419 = vunpack.c.h.b16 %v2318
        %v2420 = vunpack.c.l.b16 %v2319
        %v2421 = vunpack.c.h.b16 %v2319
        %v2422 = vunpack.c.l.b16 %v2320
        %v2423 = vunpack.c.h.b16 %v2320
        %v2424 = vunpack.c.l.b16 %v2321
        %v2425 = vunpack.c.h.b16 %v2321
        %v2426 = vunpack.c.l.b16 %v2322
        %v2427 = vunpack.c.h.b16 %v2322
        %v2428 = vunpack.c.l.b16 %v2323
        %v2429 = vunpack.c.h.b16 %v2323
        %v2430 = vunpack.c.l.b16 %v2324
        %v2431 = vunpack.c.h.b16 %v2324
        %v2432 = vunpack.c.l.b16 %v2325
        %v2433 = vunpack.c.h.b16 %v2325
        %v2434 = vunpack.c.l.b16 %v2326
        %v2435 = vunpack.c.h.b16 %v2326
        %v2436 = vunpack.c.l.b16 %v2327
        %v2437 = vunpack.c.h.b16 %v2327
        %v2438 = vunpack.c.l.b16 %v2328
        %v2439 = vunpack.c.h.b16 %v2328
        %v2440 = vunpack.c.l.b16 %v2329
        %v2441 = vunpack.c.h.b16 %v2329
        %v2442 = vpack.c.b16 %v2412, %v2410
        %v2443 = vpack.c.b16 %v2413, %v2411
        %v2444 = vpack.c.b16 %v2416, %v2414
        %v2445 = vpack.c.b16 %v2417, %v2415
        %v2446 = vpack.c.b16 %v2420, %v2418
        %v2447 = vpack.c.b16 %v2421, %v2419
        %v2448 = vpack.c.b16 %v2424, %v2422
        %v2449 = vpack.c.b16 %v2425, %v2423
        %v2450 = vpack.c.b16 %v2428, %v2426
        %v2451 = vpack.c.b16 %v2429, %v2427
        %v2452 = vpack.c.b16 %v2432, %v2430
        %v2453 = vpack.c.b16 %v2433, %v2431
        %v2454 = vpack.c.b16 %v2436, %v2434
        %v2455 = vpack.c.b16 %v2437, %v2435
        %v2456 = vpack.c.b16 %v2440, %v2438
        %v2457 = vpack.c.b16 %v2441, %v2439
        %2474 = vmatprep.subr.bf16.mxu0 %v2443
        %2475 = vmatpush1.bf16.msra.mxu0 %v2442
        %2476 = vmatprep.subr.bf16.mxu0 %v2445
        %2477 = vmatpush1.bf16.msra.mxu0 %v2444
        %2478 = vmatprep.subr.bf16.mxu0 %v2447
        %2479 = vmatpush1.bf16.msra.mxu0 %v2446
        %2480 = vmatprep.subr.bf16.mxu0 %v2449
        %2481 = vmatpush1.bf16.msra.mxu0 %v2448
        %2482 = vmatprep.subr.bf16.mxu0 %v2451
        %2483 = vmatpush1.bf16.msra.mxu0 %v2450
        %2484 = vmatprep.subr.bf16.mxu0 %v2453
        %2485 = vmatpush1.bf16.msra.mxu0 %v2452
        %2486 = vmatprep.subr.bf16.mxu0 %v2455
        %2487 = vmatpush1.bf16.msra.mxu0 %v2454
        %2488 = vmatprep.subr.bf16.mxu0 %v2457
        %2489 = vmatpush1.bf16.msra.mxu0 %v2456
        %2490 = vmatprep.subr.bf16.mxu0 0
        %2491 = vmatpush1.bf16.msra.mxu0 0
        %2492 = vmatprep.subr.bf16.mxu0 0
        %2493 = vmatpush1.bf16.msra.mxu0 0
        %2494 = vmatprep.subr.bf16.mxu0 0
        %2495 = vmatpush1.bf16.msra.mxu0 0
        %2496 = vmatprep.subr.bf16.mxu0 0
        %2497 = vmatpush1.bf16.msra.mxu0 0
        %2498 = vmatprep.subr.bf16.mxu0 0
        %2499 = vmatpush1.bf16.msra.mxu0 0
        %2500 = vmatprep.subr.bf16.mxu0 0
        %2501 = vmatpush1.bf16.msra.mxu0 0
        %2502 = vmatprep.subr.bf16.mxu0 0
        %2503 = vmatpush1.bf16.msra.mxu0 0
        %2504 = vmatprep.subr.bf16.mxu0 0
        %2505 = vmatpush1.bf16.msra.mxu0 0
        %2506 = vmatprep.mubr.bf16.mxu0 0
        %2507 = vmatmul.mubr.bf16.gmra.mrb[0].mxu0 %v2362
        %v2508 = vpop.f32.mrb[0].mxu0
        %v2509 = vadd.f32 0.0, %v2508
        %v2510 = vpop.f32.mrb[0].mxu0
        %v2511 = vadd.f32 0.0, %v2510
        %v2512 = vpop.f32.mrb[0].mxu0
        %v2513 = vadd.f32 0.0, %v2512
        %v2514 = vpop.f32.mrb[0].mxu0
        %v2515 = vadd.f32 0.0, %v2514
        %2516 = vmatprep.mubr.bf16.mxu0 0
        %2517 = vmatmul.mubr.bf16.gmra.mrb[0].mxu0 %v2363
        %v2518 = vpop.f32.mrb[0].mxu0
        %v2519 = vadd.f32 0.0, %v2518
        %v2520 = vpop.f32.mrb[0].mxu0
        %v2521 = vadd.f32 0.0, %v2520
        %v2522 = vpop.f32.mrb[0].mxu0
        %v2523 = vadd.f32 0.0, %v2522
        %v2524 = vpop.f32.mrb[0].mxu0
        %v2525 = vadd.f32 0.0, %v2524
        %2526 = vmatprep.mubr.bf16.mxu0 0
        %2527 = vmatmul.mubr.bf16.gmra.mrb[0].mxu0 %v2364
        %v2528 = vpop.f32.mrb[0].mxu0
        %v2529 = vadd.f32 0.0, %v2528
        %v2530 = vpop.f32.mrb[0].mxu0
        %v2531 = vadd.f32 0.0, %v2530
        %v2532 = vpop.f32.mrb[0].mxu0
        %v2533 = vadd.f32 0.0, %v2532
        %v2534 = vpop.f32.mrb[0].mxu0
        %v2535 = vadd.f32 0.0, %v2534
        %2536 = vmatprep.mubr.bf16.mxu0 0
        %2537 = vmatmul.mubr.bf16.gmra.mrb[0].mxu0 %v2365
        %v2538 = vpop.f32.mrb[0].mxu0
        %v2539 = vadd.f32 0.0, %v2538
        %v2540 = vpop.f32.mrb[0].mxu0
        %v2541 = vadd.f32 0.0, %v2540
        %v2542 = vpop.f32.mrb[0].mxu0
        %v2543 = vadd.f32 0.0, %v2542
        %v2544 = vpop.f32.mrb[0].mxu0
        %v2545 = vadd.f32 0.0, %v2544
        %2546 = vmatprep.mubr.bf16.mxu0 0
        %2547 = vmatmul.mubr.bf16.gmra.mrb[0].mxu0 %v2366
        %v2548 = vpop.f32.mrb[0].mxu0
        %v2549 = vadd.f32 0.0, %v2548
        %v2550 = vpop.f32.mrb[0].mxu0
        %v2551 = vadd.f32 0.0, %v2550
        %v2552 = vpop.f32.mrb[0].mxu0
        %v2553 = vadd.f32 0.0, %v2552
        %v2554 = vpop.f32.mrb[0].mxu0
        %v2555 = vadd.f32 0.0, %v2554
        %2556 = vmatprep.mubr.bf16.mxu0 0
        %2557 = vmatmul.mubr.bf16.gmra.mrb[0].mxu0 %v2367
        %v2558 = vpop.f32.mrb[0].mxu0
        %v2559 = vadd.f32 0.0, %v2558
        %v2560 = vpop.f32.mrb[0].mxu0
        %v2561 = vadd.f32 0.0, %v2560
        %v2562 = vpop.f32.mrb[0].mxu0
        %v2563 = vadd.f32 0.0, %v2562
        %v2564 = vpop.f32.mrb[0].mxu0
        %v2565 = vadd.f32 0.0, %v2564
        %2566 = vmatprep.mubr.bf16.mxu0 0
        %2567 = vmatmul.mubr.bf16.gmra.mrb[0].mxu0 %v2368
        %v2568 = vpop.f32.mrb[0].mxu0
        %v2569 = vadd.f32 0.0, %v2568
        %v2570 = vpop.f32.mrb[0].mxu0
        %v2571 = vadd.f32 0.0, %v2570
        %v2572 = vpop.f32.mrb[0].mxu0
        %v2573 = vadd.f32 0.0, %v2572
        %v2574 = vpop.f32.mrb[0].mxu0
        %v2575 = vadd.f32 0.0, %v2574
        %2576 = vmatprep.mubr.bf16.mxu0 0
        %2577 = vmatmul.mubr.bf16.gmra.mrb[0].mxu0 %v2369
        %v2578 = vpop.f32.mrb[0].mxu0
        %v2579 = vadd.f32 0.0, %v2578
        %v2580 = vpop.f32.mrb[0].mxu0
        %v2581 = vadd.f32 0.0, %v2580
        %v2582 = vpop.f32.mrb[0].mxu0
        %v2583 = vadd.f32 0.0, %v2582
        %v2584 = vpop.f32.mrb[0].mxu0
        %v2585 = vadd.f32 0.0, %v2584
        %2586 = vmatprep.mubr.bf16.mxu0 0
        %2587 = vmatmul.mubr.bf16.gmra.mrb[0].mxu0 %v2370
        %v2588 = vpop.f32.mrb[0].mxu0
        %v2589 = vadd.f32 0.0, %v2588
        %v2590 = vpop.f32.mrb[0].mxu0
        %v2591 = vadd.f32 0.0, %v2590
        %v2592 = vpop.f32.mrb[0].mxu0
        %v2593 = vadd.f32 0.0, %v2592
        %v2594 = vpop.f32.mrb[0].mxu0
        %v2595 = vadd.f32 0.0, %v2594
        %2596 = vmatprep.mubr.bf16.mxu0 0
        %2597 = vmatmul.mubr.bf16.gmra.mrb[0].mxu0 %v2371
        %v2598 = vpop.f32.mrb[0].mxu0
        %v2599 = vadd.f32 0.0, %v2598
        %v2600 = vpop.f32.mrb[0].mxu0
        %v2601 = vadd.f32 0.0, %v2600
        %v2602 = vpop.f32.mrb[0].mxu0
        %v2603 = vadd.f32 0.0, %v2602
        %v2604 = vpop.f32.mrb[0].mxu0
        %v2605 = vadd.f32 0.0, %v2604
        %2606 = vmatprep.mubr.bf16.mxu0 0
        %2607 = vmatmul.mubr.bf16.gmra.mrb[0].mxu0 %v2372
        %v2608 = vpop.f32.mrb[0].mxu0
        %v2609 = vadd.f32 0.0, %v2608
        %v2610 = vpop.f32.mrb[0].mxu0
        %v2611 = vadd.f32 0.0, %v2610
        %v2612 = vpop.f32.mrb[0].mxu0
        %v2613 = vadd.f32 0.0, %v2612
        %v2614 = vpop.f32.mrb[0].mxu0
        %v2615 = vadd.f32 0.0, %v2614
        %2616 = vmatprep.mubr.bf16.mxu0 0
        %2617 = vmatmul.mubr.bf16.gmra.mrb[0].mxu0 %v2373
        %v2618 = vpop.f32.mrb[0].mxu0
        %v2619 = vadd.f32 0.0, %v2618
        %v2620 = vpop.f32.mrb[0].mxu0
        %v2621 = vadd.f32 0.0, %v2620
        %v2622 = vpop.f32.mrb[0].mxu0
        %v2623 = vadd.f32 0.0, %v2622
        %v2624 = vpop.f32.mrb[0].mxu0
        %v2625 = vadd.f32 0.0, %v2624
        %2626 = vmatprep.mubr.bf16.mxu0 0
        %2627 = vmatmul.mubr.bf16.gmra.mrb[0].mxu0 %v2374
        %v2628 = vpop.f32.mrb[0].mxu0
        %v2629 = vadd.f32 0.0, %v2628
        %v2630 = vpop.f32.mrb[0].mxu0
        %v2631 = vadd.f32 0.0, %v2630
        %v2632 = vpop.f32.mrb[0].mxu0
        %v2633 = vadd.f32 0.0, %v2632
        %v2634 = vpop.f32.mrb[0].mxu0
        %v2635 = vadd.f32 0.0, %v2634
        %2636 = vmatprep.mubr.bf16.mxu0 0
        %2637 = vmatmul.mubr.bf16.gmra.mrb[0].mxu0 %v2375
        %v2638 = vpop.f32.mrb[0].mxu0
        %v2639 = vadd.f32 0.0, %v2638
        %v2640 = vpop.f32.mrb[0].mxu0
        %v2641 = vadd.f32 0.0, %v2640
        %v2642 = vpop.f32.mrb[0].mxu0
        %v2643 = vadd.f32 0.0, %v2642
        %v2644 = vpop.f32.mrb[0].mxu0
        %v2645 = vadd.f32 0.0, %v2644
        %2646 = vmatprep.mubr.bf16.mxu0 0
        %2647 = vmatmul.mubr.bf16.gmra.mrb[0].mxu0 %v2376
        %v2648 = vpop.f32.mrb[0].mxu0
        %v2649 = vadd.f32 0.0, %v2648
        %v2650 = vpop.f32.mrb[0].mxu0
        %v2651 = vadd.f32 0.0, %v2650
        %v2652 = vpop.f32.mrb[0].mxu0
        %v2653 = vadd.f32 0.0, %v2652
        %v2654 = vpop.f32.mrb[0].mxu0
        %v2655 = vadd.f32 0.0, %v2654
        %2656 = vmatprep.mubr.bf16.mxu0 0
        %2657 = vmatmul.mubr.bf16.gmra.mrb[0].mxu0 %v2377
        %v2658 = vpop.f32.mrb[0].mxu0
        %v2659 = vadd.f32 0.0, %v2658
        %v2660 = vpop.f32.mrb[0].mxu0
        %v2661 = vadd.f32 0.0, %v2660
        %v2662 = vpop.f32.mrb[0].mxu0
        %v2663 = vadd.f32 0.0, %v2662
        %v2664 = vpop.f32.mrb[0].mxu0
        %v2665 = vadd.f32 0.0, %v2664
        %2666 = vdwg.mxu0
        %v2667 = vadd.f32 %v2024, %v2509
        %v2668 = vadd.f32 %v2026, %v2511
        %v2669 = vadd.f32 %v2028, %v2513
        %v2670 = vadd.f32 %v2030, %v2515
        %v2671 = vadd.f32 %v2034, %v2519
        %v2672 = vadd.f32 %v2036, %v2521
        %v2673 = vadd.f32 %v2038, %v2523
        %v2674 = vadd.f32 %v2040, %v2525
        %v2675 = vadd.f32 %v2044, %v2529
        %v2676 = vadd.f32 %v2046, %v2531
        %v2677 = vadd.f32 %v2048, %v2533
        %v2678 = vadd.f32 %v2050, %v2535
        %v2679 = vadd.f32 %v2054, %v2539
        %v2680 = vadd.f32 %v2056, %v2541
        %v2681 = vadd.f32 %v2058, %v2543
        %v2682 = vadd.f32 %v2060, %v2545
        %v2683 = vadd.f32 %v2064, %v2549
        %v2684 = vadd.f32 %v2066, %v2551
        %v2685 = vadd.f32 %v2068, %v2553
        %v2686 = vadd.f32 %v2070, %v2555
        %v2687 = vadd.f32 %v2074, %v2559
        %v2688 = vadd.f32 %v2076, %v2561
        %v2689 = vadd.f32 %v2078, %v2563
        %v2690 = vadd.f32 %v2080, %v2565
        %v2691 = vadd.f32 %v2084, %v2569
        %v2692 = vadd.f32 %v2086, %v2571
        %v2693 = vadd.f32 %v2088, %v2573
        %v2694 = vadd.f32 %v2090, %v2575
        %v2695 = vadd.f32 %v2094, %v2579
        %v2696 = vadd.f32 %v2096, %v2581
        %v2697 = vadd.f32 %v2098, %v2583
        %v2698 = vadd.f32 %v2100, %v2585
        %v2699 = vadd.f32 %v2104, %v2589
        %v2700 = vadd.f32 %v2106, %v2591
        %v2701 = vadd.f32 %v2108, %v2593
        %v2702 = vadd.f32 %v2110, %v2595
        %v2703 = vadd.f32 %v2114, %v2599
        %v2704 = vadd.f32 %v2116, %v2601
        %v2705 = vadd.f32 %v2118, %v2603
        %v2706 = vadd.f32 %v2120, %v2605
        %v2707 = vadd.f32 %v2124, %v2609
        %v2708 = vadd.f32 %v2126, %v2611
        %v2709 = vadd.f32 %v2128, %v2613
        %v2710 = vadd.f32 %v2130, %v2615
        %v2711 = vadd.f32 %v2134, %v2619
        %v2712 = vadd.f32 %v2136, %v2621
        %v2713 = vadd.f32 %v2138, %v2623
        %v2714 = vadd.f32 %v2140, %v2625
        %v2715 = vadd.f32 %v2144, %v2629
        %v2716 = vadd.f32 %v2146, %v2631
        %v2717 = vadd.f32 %v2148, %v2633
        %v2718 = vadd.f32 %v2150, %v2635
        %v2719 = vadd.f32 %v2154, %v2639
        %v2720 = vadd.f32 %v2156, %v2641
        %v2721 = vadd.f32 %v2158, %v2643
        %v2722 = vadd.f32 %v2160, %v2645
        %v2723 = vadd.f32 %v2164, %v2649
        %v2724 = vadd.f32 %v2166, %v2651
        %v2725 = vadd.f32 %v2168, %v2653
        %v2726 = vadd.f32 %v2170, %v2655
        %v2727 = vadd.f32 %v2174, %v2659
        %v2728 = vadd.f32 %v2176, %v2661
        %v2729 = vadd.f32 %v2178, %v2663
        %v2730 = vadd.f32 %v2180, %v2665
        %s2731 = scalar_lea.vmem [#allocation7], 384
        %v2732 = vld [vmem:[%s2731] sm:$0xff]
        %v2733 = vld [vmem:[%s2731 + $0x8] sm:$0xff]
        %v2734 = vld [vmem:[%s2731 + $0x10] sm:$0xff]
        %v2735 = vld [vmem:[%s2731 + $0x18] sm:$0xff]
        %v2736 = vld [vmem:[%s2731 + $0x20] sm:$0xff]
        %v2737 = vld [vmem:[%s2731 + $0x28] sm:$0xff]
        %v2738 = vld [vmem:[%s2731 + $0x30] sm:$0xff]
        %v2739 = vld [vmem:[%s2731 + $0x38] sm:$0xff]
        %v2740 = vld [vmem:[%s2731 + $0x40] sm:$0xff]
        %v2741 = vld [vmem:[%s2731 + $0x48] sm:$0xff]
        %v2742 = vld [vmem:[%s2731 + $0x50] sm:$0xff]
        %v2743 = vld [vmem:[%s2731 + $0x58] sm:$0xff]
        %v2744 = vld [vmem:[%s2731 + $0x60] sm:$0xff]
        %v2745 = vld [vmem:[%s2731 + $0x68] sm:$0xff]
        %v2746 = vld [vmem:[%s2731 + $0x70] sm:$0xff]
        %v2747 = vld [vmem:[%s2731 + $0x78] sm:$0xff]
        %v2750 = vunpack.c.l.b16 %v1050
        %v2751 = vunpack.c.l.b16 %v1051
        %v2752 = vpack.c.b16 %v2751, %v2750
        %v2770 = vunpack.c.l.b16 %v2732
        %v2771 = vunpack.c.h.b16 %v2732
        %v2772 = vunpack.c.l.b16 %v2733
        %v2773 = vunpack.c.h.b16 %v2733
        %v2774 = vunpack.c.l.b16 %v2734
        %v2775 = vunpack.c.h.b16 %v2734
        %v2776 = vunpack.c.l.b16 %v2735
        %v2777 = vunpack.c.h.b16 %v2735
        %v2778 = vunpack.c.l.b16 %v2736
        %v2779 = vunpack.c.h.b16 %v2736
        %v2780 = vunpack.c.l.b16 %v2737
        %v2781 = vunpack.c.h.b16 %v2737
        %v2782 = vunpack.c.l.b16 %v2738
        %v2783 = vunpack.c.h.b16 %v2738
        %v2784 = vunpack.c.l.b16 %v2739
        %v2785 = vunpack.c.h.b16 %v2739
        %v2786 = vunpack.c.l.b16 %v2740
        %v2787 = vunpack.c.h.b16 %v2740
        %v2788 = vunpack.c.l.b16 %v2741
        %v2789 = vunpack.c.h.b16 %v2741
        %v2790 = vunpack.c.l.b16 %v2742
        %v2791 = vunpack.c.h.b16 %v2742
        %v2792 = vunpack.c.l.b16 %v2743
        %v2793 = vunpack.c.h.b16 %v2743
        %v2794 = vunpack.c.l.b16 %v2744
        %v2795 = vunpack.c.h.b16 %v2744
        %v2796 = vunpack.c.l.b16 %v2745
        %v2797 = vunpack.c.h.b16 %v2745
        %v2798 = vunpack.c.l.b16 %v2746
        %v2799 = vunpack.c.h.b16 %v2746
        %v2800 = vunpack.c.l.b16 %v2747
        %v2801 = vunpack.c.h.b16 %v2747
        %v2802 = vpack.c.b16 %v2772, %v2770
        %v2803 = vpack.c.b16 %v2773, %v2771
        %v2804 = vpack.c.b16 %v2776, %v2774
        %v2805 = vpack.c.b16 %v2777, %v2775
        %v2806 = vpack.c.b16 %v2780, %v2778
        %v2807 = vpack.c.b16 %v2781, %v2779
        %v2808 = vpack.c.b16 %v2784, %v2782
        %v2809 = vpack.c.b16 %v2785, %v2783
        %v2810 = vpack.c.b16 %v2788, %v2786
        %v2811 = vpack.c.b16 %v2789, %v2787
        %v2812 = vpack.c.b16 %v2792, %v2790
        %v2813 = vpack.c.b16 %v2793, %v2791
        %v2814 = vpack.c.b16 %v2796, %v2794
        %v2815 = vpack.c.b16 %v2797, %v2795
        %v2816 = vpack.c.b16 %v2800, %v2798
        %v2817 = vpack.c.b16 %v2801, %v2799
        %2834 = vmatprep.subr.bf16.mxu0 %v2803
        %2835 = vmatpush1.bf16.msra.mxu0 %v2802
        %2836 = vmatprep.subr.bf16.mxu0 %v2805
        %2837 = vmatpush1.bf16.msra.mxu0 %v2804
        %2838 = vmatprep.subr.bf16.mxu0 %v2807
        %2839 = vmatpush1.bf16.msra.mxu0 %v2806
        %2840 = vmatprep.subr.bf16.mxu0 %v2809
        %2841 = vmatpush1.bf16.msra.mxu0 %v2808
        %2842 = vmatprep.subr.bf16.mxu0 %v2811
        %2843 = vmatpush1.bf16.msra.mxu0 %v2810
        %2844 = vmatprep.subr.bf16.mxu0 %v2813
        %2845 = vmatpush1.bf16.msra.mxu0 %v2812
        %2846 = vmatprep.subr.bf16.mxu0 %v2815
        %2847 = vmatpush1.bf16.msra.mxu0 %v2814
        %2848 = vmatprep.subr.bf16.mxu0 %v2817
        %2849 = vmatpush1.bf16.msra.mxu0 %v2816
        %2850 = vmatprep.subr.bf16.mxu0 0
        %2851 = vmatpush1.bf16.msra.mxu0 0
        %2852 = vmatprep.subr.bf16.mxu0 0
        %2853 = vmatpush1.bf16.msra.mxu0 0
        %2854 = vmatprep.subr.bf16.mxu0 0
        %2855 = vmatpush1.bf16.msra.mxu0 0
        %2856 = vmatprep.subr.bf16.mxu0 0
        %2857 = vmatpush1.bf16.msra.mxu0 0
        %2858 = vmatprep.subr.bf16.mxu0 0
        %2859 = vmatpush1.bf16.msra.mxu0 0
        %2860 = vmatprep.subr.bf16.mxu0 0
        %2861 = vmatpush1.bf16.msra.mxu0 0
        %2862 = vmatprep.subr.bf16.mxu0 0
        %2863 = vmatpush1.bf16.msra.mxu0 0
        %2864 = vmatprep.subr.bf16.mxu0 0
        %2865 = vmatpush1.bf16.msra.mxu0 0
        %2866 = vmatprep.mubr.bf16.mxu0 0
        %2867 = vmatmul.mubr.bf16.gmra.mrb[0].mxu0 %v1878
        %v2868 = vpop.f32.mrb[0].mxu0
        %v2869 = vadd.f32 0.0, %v2868
        %v2870 = vpop.f32.mrb[0].mxu0
        %v2871 = vadd.f32 0.0, %v2870
        %v2872 = vpop.f32.mrb[0].mxu0
        %v2873 = vadd.f32 0.0, %v2872
        %v2874 = vpop.f32.mrb[0].mxu0
        %v2875 = vadd.f32 0.0, %v2874
        %2876 = vmatprep.mubr.bf16.mxu0 0
        %2877 = vmatmul.mubr.bf16.gmra.mrb[0].mxu0 %v1879
        %v2878 = vpop.f32.mrb[0].mxu0
        %v2879 = vadd.f32 0.0, %v2878
        %v2880 = vpop.f32.mrb[0].mxu0
        %v2881 = vadd.f32 0.0, %v2880
        %v2882 = vpop.f32.mrb[0].mxu0
        %v2883 = vadd.f32 0.0, %v2882
        %v2884 = vpop.f32.mrb[0].mxu0
        %v2885 = vadd.f32 0.0, %v2884
        %2886 = vmatprep.mubr.bf16.mxu0 0
        %2887 = vmatmul.mubr.bf16.gmra.mrb[0].mxu0 %v1880
        %v2888 = vpop.f32.mrb[0].mxu0
        %v2889 = vadd.f32 0.0, %v2888
        %v2890 = vpop.f32.mrb[0].mxu0
        %v2891 = vadd.f32 0.0, %v2890
        %v2892 = vpop.f32.mrb[0].mxu0
        %v2893 = vadd.f32 0.0, %v2892
        %v2894 = vpop.f32.mrb[0].mxu0
        %v2895 = vadd.f32 0.0, %v2894
        %2896 = vmatprep.mubr.bf16.mxu0 0
        %2897 = vmatmul.mubr.bf16.gmra.mrb[0].mxu0 %v1881
        %v2898 = vpop.f32.mrb[0].mxu0
        %v2899 = vadd.f32 0.0, %v2898
        %v2900 = vpop.f32.mrb[0].mxu0
        %v2901 = vadd.f32 0.0, %v2900
        %v2902 = vpop.f32.mrb[0].mxu0
        %v2903 = vadd.f32 0.0, %v2902
        %v2904 = vpop.f32.mrb[0].mxu0
        %v2905 = vadd.f32 0.0, %v2904
        %2906 = vmatprep.mubr.bf16.mxu0 0
        %2907 = vmatmul.mubr.bf16.gmra.mrb[0].mxu0 %v1882
        %v2908 = vpop.f32.mrb[0].mxu0
        %v2909 = vadd.f32 0.0, %v2908
        %v2910 = vpop.f32.mrb[0].mxu0
        %v2911 = vadd.f32 0.0, %v2910
        %v2912 = vpop.f32.mrb[0].mxu0
        %v2913 = vadd.f32 0.0, %v2912
        %v2914 = vpop.f32.mrb[0].mxu0
        %v2915 = vadd.f32 0.0, %v2914
        %2916 = vmatprep.mubr.bf16.mxu0 0
        %2917 = vmatmul.mubr.bf16.gmra.mrb[0].mxu0 %v1883
        %v2918 = vpop.f32.mrb[0].mxu0
        %v2919 = vadd.f32 0.0, %v2918
        %v2920 = vpop.f32.mrb[0].mxu0
        %v2921 = vadd.f32 0.0, %v2920
        %v2922 = vpop.f32.mrb[0].mxu0
        %v2923 = vadd.f32 0.0, %v2922
        %v2924 = vpop.f32.mrb[0].mxu0
        %v2925 = vadd.f32 0.0, %v2924
        %2926 = vmatprep.mubr.bf16.mxu0 0
        %2927 = vmatmul.mubr.bf16.gmra.mrb[0].mxu0 %v1884
        %v2928 = vpop.f32.mrb[0].mxu0
        %v2929 = vadd.f32 0.0, %v2928
        %v2930 = vpop.f32.mrb[0].mxu0
        %v2931 = vadd.f32 0.0, %v2930
        %v2932 = vpop.f32.mrb[0].mxu0
        %v2933 = vadd.f32 0.0, %v2932
        %v2934 = vpop.f32.mrb[0].mxu0
        %v2935 = vadd.f32 0.0, %v2934
        %2936 = vmatprep.mubr.bf16.mxu0 0
        %2937 = vmatmul.mubr.bf16.gmra.mrb[0].mxu0 %v1885
        %v2938 = vpop.f32.mrb[0].mxu0
        %v2939 = vadd.f32 0.0, %v2938
        %v2940 = vpop.f32.mrb[0].mxu0
        %v2941 = vadd.f32 0.0, %v2940
        %v2942 = vpop.f32.mrb[0].mxu0
        %v2943 = vadd.f32 0.0, %v2942
        %v2944 = vpop.f32.mrb[0].mxu0
        %v2945 = vadd.f32 0.0, %v2944
        %2946 = vmatprep.mubr.bf16.mxu0 0
        %2947 = vmatmul.mubr.bf16.gmra.mrb[0].mxu0 %v1886
        %v2948 = vpop.f32.mrb[0].mxu0
        %v2949 = vadd.f32 0.0, %v2948
        %v2950 = vpop.f32.mrb[0].mxu0
        %v2951 = vadd.f32 0.0, %v2950
        %v2952 = vpop.f32.mrb[0].mxu0
        %v2953 = vadd.f32 0.0, %v2952
        %v2954 = vpop.f32.mrb[0].mxu0
        %v2955 = vadd.f32 0.0, %v2954
        %2956 = vmatprep.mubr.bf16.mxu0 0
        %2957 = vmatmul.mubr.bf16.gmra.mrb[0].mxu0 %v1887
        %v2958 = vpop.f32.mrb[0].mxu0
        %v2959 = vadd.f32 0.0, %v2958
        %v2960 = vpop.f32.mrb[0].mxu0
        %v2961 = vadd.f32 0.0, %v2960
        %v2962 = vpop.f32.mrb[0].mxu0
        %v2963 = vadd.f32 0.0, %v2962
        %v2964 = vpop.f32.mrb[0].mxu0
        %v2965 = vadd.f32 0.0, %v2964
        %2966 = vmatprep.mubr.bf16.mxu0 0
        %2967 = vmatmul.mubr.bf16.gmra.mrb[0].mxu0 %v1888
        %v2968 = vpop.f32.mrb[0].mxu0
        %v2969 = vadd.f32 0.0, %v2968
        %v2970 = vpop.f32.mrb[0].mxu0
        %v2971 = vadd.f32 0.0, %v2970
        %v2972 = vpop.f32.mrb[0].mxu0
        %v2973 = vadd.f32 0.0, %v2972
        %v2974 = vpop.f32.mrb[0].mxu0
        %v2975 = vadd.f32 0.0, %v2974
        %2976 = vmatprep.mubr.bf16.mxu0 0
        %2977 = vmatmul.mubr.bf16.gmra.mrb[0].mxu0 %v1889
        %v2978 = vpop.f32.mrb[0].mxu0
        %v2979 = vadd.f32 0.0, %v2978
        %v2980 = vpop.f32.mrb[0].mxu0
        %v2981 = vadd.f32 0.0, %v2980
        %v2982 = vpop.f32.mrb[0].mxu0
        %v2983 = vadd.f32 0.0, %v2982
        %v2984 = vpop.f32.mrb[0].mxu0
        %v2985 = vadd.f32 0.0, %v2984
        %2986 = vmatprep.mubr.bf16.mxu0 0
        %2987 = vmatmul.mubr.bf16.gmra.mrb[0].mxu0 %v1890
        %v2988 = vpop.f32.mrb[0].mxu0
        %v2989 = vadd.f32 0.0, %v2988
        %v2990 = vpop.f32.mrb[0].mxu0
        %v2991 = vadd.f32 0.0, %v2990
        %v2992 = vpop.f32.mrb[0].mxu0
        %v2993 = vadd.f32 0.0, %v2992
        %v2994 = vpop.f32.mrb[0].mxu0
        %v2995 = vadd.f32 0.0, %v2994
        %2996 = vmatprep.mubr.bf16.mxu0 0
        %2997 = vmatmul.mubr.bf16.gmra.mrb[0].mxu0 %v1891
        %v2998 = vpop.f32.mrb[0].mxu0
        %v2999 = vadd.f32 0.0, %v2998
        %v3000 = vpop.f32.mrb[0].mxu0
        %v3001 = vadd.f32 0.0, %v3000
        %v3002 = vpop.f32.mrb[0].mxu0
        %v3003 = vadd.f32 0.0, %v3002
        %v3004 = vpop.f32.mrb[0].mxu0
        %v3005 = vadd.f32 0.0, %v3004
        %3006 = vmatprep.mubr.bf16.mxu0 0
        %3007 = vmatmul.mubr.bf16.gmra.mrb[0].mxu0 %v1892
        %v3008 = vpop.f32.mrb[0].mxu0
        %v3009 = vadd.f32 0.0, %v3008
        %v3010 = vpop.f32.mrb[0].mxu0
        %v3011 = vadd.f32 0.0, %v3010
        %v3012 = vpop.f32.mrb[0].mxu0
        %v3013 = vadd.f32 0.0, %v3012
        %v3014 = vpop.f32.mrb[0].mxu0
        %v3015 = vadd.f32 0.0, %v3014
        %3016 = vmatprep.mubr.bf16.mxu0 0
        %3017 = vmatmul.mubr.bf16.gmra.mrb[0].mxu0 %v2752
        %v3018 = vpop.f32.mrb[0].mxu0
        %v3019 = vadd.f32 0.0, %v3018
        %v3020 = vpop.f32.mrb[0].mxu0
        %v3021 = vadd.f32 0.0, %v3020
        %v3022 = vpop.f32.mrb[0].mxu0
        %v3023 = vadd.f32 0.0, %v3022
        %v3024 = vpop.f32.mrb[0].mxu0
        %v3025 = vadd.f32 0.0, %v3024
        %3026 = vdwg.mxu0
        %v3027 = vadd.f32 %v2667, %v2869
        %v3028 = vadd.f32 %v2668, %v2871
        %v3029 = vadd.f32 %v2669, %v2873
        %v3030 = vadd.f32 %v2670, %v2875
        %v3031 = vadd.f32 %v2671, %v2879
        %v3032 = vadd.f32 %v2672, %v2881
        %v3033 = vadd.f32 %v2673, %v2883
        %v3034 = vadd.f32 %v2674, %v2885
        %v3035 = vadd.f32 %v2675, %v2889
        %v3036 = vadd.f32 %v2676, %v2891
        %v3037 = vadd.f32 %v2677, %v2893
        %v3038 = vadd.f32 %v2678, %v2895
        %v3039 = vadd.f32 %v2679, %v2899
        %v3040 = vadd.f32 %v2680, %v2901
        %v3041 = vadd.f32 %v2681, %v2903
        %v3042 = vadd.f32 %v2682, %v2905
        %v3043 = vadd.f32 %v2683, %v2909
        %v3044 = vadd.f32 %v2684, %v2911
        %v3045 = vadd.f32 %v2685, %v2913
        %v3046 = vadd.f32 %v2686, %v2915
        %v3047 = vadd.f32 %v2687, %v2919
        %v3048 = vadd.f32 %v2688, %v2921
        %v3049 = vadd.f32 %v2689, %v2923
        %v3050 = vadd.f32 %v2690, %v2925
        %v3051 = vadd.f32 %v2691, %v2929
        %v3052 = vadd.f32 %v2692, %v2931
        %v3053 = vadd.f32 %v2693, %v2933
        %v3054 = vadd.f32 %v2694, %v2935
        %v3055 = vadd.f32 %v2695, %v2939
        %v3056 = vadd.f32 %v2696, %v2941
        %v3057 = vadd.f32 %v2697, %v2943
        %v3058 = vadd.f32 %v2698, %v2945
        %v3059 = vadd.f32 %v2699, %v2949
        %v3060 = vadd.f32 %v2700, %v2951
        %v3061 = vadd.f32 %v2701, %v2953
        %v3062 = vadd.f32 %v2702, %v2955
        %v3063 = vadd.f32 %v2703, %v2959
        %v3064 = vadd.f32 %v2704, %v2961
        %v3065 = vadd.f32 %v2705, %v2963
        %v3066 = vadd.f32 %v2706, %v2965
        %v3067 = vadd.f32 %v2707, %v2969
        %v3068 = vadd.f32 %v2708, %v2971
        %v3069 = vadd.f32 %v2709, %v2973
        %v3070 = vadd.f32 %v2710, %v2975
        %v3071 = vadd.f32 %v2711, %v2979
        %v3072 = vadd.f32 %v2712, %v2981
        %v3073 = vadd.f32 %v2713, %v2983
        %v3074 = vadd.f32 %v2714, %v2985
        %v3075 = vadd.f32 %v2715, %v2989
        %v3076 = vadd.f32 %v2716, %v2991
        %v3077 = vadd.f32 %v2717, %v2993
        %v3078 = vadd.f32 %v2718, %v2995
        %v3079 = vadd.f32 %v2719, %v2999
        %v3080 = vadd.f32 %v2720, %v3001
        %v3081 = vadd.f32 %v2721, %v3003
        %v3082 = vadd.f32 %v2722, %v3005
        %v3083 = vadd.f32 %v2723, %v3009
        %v3084 = vadd.f32 %v2724, %v3011
        %v3085 = vadd.f32 %v2725, %v3013
        %v3086 = vadd.f32 %v2726, %v3015
        %v3087 = vadd.f32 %v2727, %v3019
        %v3088 = vadd.f32 %v2728, %v3021
        %v3089 = vadd.f32 %v2729, %v3023
        %v3090 = vadd.f32 %v2730, %v3025
        %v3092 = vshrl.u32 %v1050, 16
        %v3094 = vrot.slane %v3092, 4
        %v3095 = vshll.u32 %v1050, 16
        %v3097 = vrot.slane %v3095, 5
        %v3098 = vor.u32 %v3094, %v3097
        %v3099 = vrot.slane %v3098, 4
        %v3101 = vshll.u32 %v1051, 16
        %v3103 = vrot.slane %v3101, 5
        %v3104 = vsel %vm1074, %v3099, %v3103
        %v3105 = vshrl.u32 %v1051, 16
        %v3107 = vrot.slane %v3105, 4
        %v3108 = vor.u32 %v3107, %v3103
        %v3109 = vrot.slane %v3108, 4
        %v3111 = vshll.u32 %v1052, 16
        %v3113 = vrot.slane %v3111, 5
        %v3114 = vsel %vm1074, %v3109, %v3113
        %s3115 = scalar_lea.vmem [#allocation7], 512
        %v3116 = vld [vmem:[%s3115] sm:$0xff]
        %v3117 = vld [vmem:[%s3115 + $0x8] sm:$0xff]
        %v3118 = vld [vmem:[%s3115 + $0x10] sm:$0xff]
        %v3119 = vld [vmem:[%s3115 + $0x18] sm:$0xff]
        %v3120 = vld [vmem:[%s3115 + $0x20] sm:$0xff]
        %v3121 = vld [vmem:[%s3115 + $0x28] sm:$0xff]
        %v3122 = vld [vmem:[%s3115 + $0x30] sm:$0xff]
        %v3123 = vld [vmem:[%s3115 + $0x38] sm:$0xff]
        %v3124 = vld [vmem:[%s3115 + $0x40] sm:$0xff]
        %v3125 = vld [vmem:[%s3115 + $0x48] sm:$0xff]
        %v3126 = vld [vmem:[%s3115 + $0x50] sm:$0xff]
        %v3127 = vld [vmem:[%s3115 + $0x58] sm:$0xff]
        %v3128 = vld [vmem:[%s3115 + $0x60] sm:$0xff]
        %v3129 = vld [vmem:[%s3115 + $0x68] sm:$0xff]
        %v3130 = vld [vmem:[%s3115 + $0x70] sm:$0xff]
        %v3131 = vld [vmem:[%s3115 + $0x78] sm:$0xff]
        %v3132 = vunpack.c.l.b16 %v3104
        %v3133 = vunpack.c.l.b16 %v3114
        %v3134 = vpack.c.b16 %v3133, %v3132
        %v3152 = vunpack.c.l.b16 %v3116
        %v3153 = vunpack.c.h.b16 %v3116
        %v3154 = vunpack.c.l.b16 %v3117
        %v3155 = vunpack.c.h.b16 %v3117
        %v3156 = vunpack.c.l.b16 %v3118
        %v3157 = vunpack.c.h.b16 %v3118
        %v3158 = vunpack.c.l.b16 %v3119
        %v3159 = vunpack.c.h.b16 %v3119
        %v3160 = vunpack.c.l.b16 %v3120
        %v3161 = vunpack.c.h.b16 %v3120
        %v3162 = vunpack.c.l.b16 %v3121
        %v3163 = vunpack.c.h.b16 %v3121
        %v3164 = vunpack.c.l.b16 %v3122
        %v3165 = vunpack.c.h.b16 %v3122
        %v3166 = vunpack.c.l.b16 %v3123
        %v3167 = vunpack.c.h.b16 %v3123
        %v3168 = vunpack.c.l.b16 %v3124
        %v3169 = vunpack.c.h.b16 %v3124
        %v3170 = vunpack.c.l.b16 %v3125
        %v3171 = vunpack.c.h.b16 %v3125
        %v3172 = vunpack.c.l.b16 %v3126
        %v3173 = vunpack.c.h.b16 %v3126
        %v3174 = vunpack.c.l.b16 %v3127
        %v3175 = vunpack.c.h.b16 %v3127
        %v3176 = vunpack.c.l.b16 %v3128
        %v3177 = vunpack.c.h.b16 %v3128
        %v3178 = vunpack.c.l.b16 %v3129
        %v3179 = vunpack.c.h.b16 %v3129
        %v3180 = vunpack.c.l.b16 %v3130
        %v3181 = vunpack.c.h.b16 %v3130
        %v3182 = vunpack.c.l.b16 %v3131
        %v3183 = vunpack.c.h.b16 %v3131
        %v3184 = vpack.c.b16 %v3154, %v3152
        %v3185 = vpack.c.b16 %v3155, %v3153
        %v3186 = vpack.c.b16 %v3158, %v3156
        %v3187 = vpack.c.b16 %v3159, %v3157
        %v3188 = vpack.c.b16 %v3162, %v3160
        %v3189 = vpack.c.b16 %v3163, %v3161
        %v3190 = vpack.c.b16 %v3166, %v3164
        %v3191 = vpack.c.b16 %v3167, %v3165
        %v3192 = vpack.c.b16 %v3170, %v3168
        %v3193 = vpack.c.b16 %v3171, %v3169
        %v3194 = vpack.c.b16 %v3174, %v3172
        %v3195 = vpack.c.b16 %v3175, %v3173
        %v3196 = vpack.c.b16 %v3178, %v3176
        %v3197 = vpack.c.b16 %v3179, %v3177
        %v3198 = vpack.c.b16 %v3182, %v3180
        %v3199 = vpack.c.b16 %v3183, %v3181
        %3216 = vmatprep.subr.bf16.mxu0 %v3185
        %3217 = vmatpush1.bf16.msra.mxu0 %v3184
        %3218 = vmatprep.subr.bf16.mxu0 %v3187
        %3219 = vmatpush1.bf16.msra.mxu0 %v3186
        %3220 = vmatprep.subr.bf16.mxu0 %v3189
        %3221 = vmatpush1.bf16.msra.mxu0 %v3188
        %3222 = vmatprep.subr.bf16.mxu0 %v3191
        %3223 = vmatpush1.bf16.msra.mxu0 %v3190
        %3224 = vmatprep.subr.bf16.mxu0 %v3193
        %3225 = vmatpush1.bf16.msra.mxu0 %v3192
        %3226 = vmatprep.subr.bf16.mxu0 %v3195
        %3227 = vmatpush1.bf16.msra.mxu0 %v3194
        %3228 = vmatprep.subr.bf16.mxu0 %v3197
        %3229 = vmatpush1.bf16.msra.mxu0 %v3196
        %3230 = vmatprep.subr.bf16.mxu0 %v3199
        %3231 = vmatpush1.bf16.msra.mxu0 %v3198
        %3232 = vmatprep.subr.bf16.mxu0 0
        %3233 = vmatpush1.bf16.msra.mxu0 0
        %3234 = vmatprep.subr.bf16.mxu0 0
        %3235 = vmatpush1.bf16.msra.mxu0 0
        %3236 = vmatprep.subr.bf16.mxu0 0
        %3237 = vmatpush1.bf16.msra.mxu0 0
        %3238 = vmatprep.subr.bf16.mxu0 0
        %3239 = vmatpush1.bf16.msra.mxu0 0
        %3240 = vmatprep.subr.bf16.mxu0 0
        %3241 = vmatpush1.bf16.msra.mxu0 0
        %3242 = vmatprep.subr.bf16.mxu0 0
        %3243 = vmatpush1.bf16.msra.mxu0 0
        %3244 = vmatprep.subr.bf16.mxu0 0
        %3245 = vmatpush1.bf16.msra.mxu0 0
        %3246 = vmatprep.subr.bf16.mxu0 0
        %3247 = vmatpush1.bf16.msra.mxu0 0
        %3248 = vmatprep.mubr.bf16.mxu0 0
        %3249 = vmatmul.mubr.bf16.gmra.mrb[0].mxu0 %v1509
        %v3250 = vpop.f32.mrb[0].mxu0
        %v3251 = vadd.f32 0.0, %v3250
        %v3252 = vpop.f32.mrb[0].mxu0
        %v3253 = vadd.f32 0.0, %v3252
        %v3254 = vpop.f32.mrb[0].mxu0
        %v3255 = vadd.f32 0.0, %v3254
        %v3256 = vpop.f32.mrb[0].mxu0
        %v3257 = vadd.f32 0.0, %v3256
        %3258 = vmatprep.mubr.bf16.mxu0 0
        %3259 = vmatmul.mubr.bf16.gmra.mrb[0].mxu0 %v1510
        %v3260 = vpop.f32.mrb[0].mxu0
        %v3261 = vadd.f32 0.0, %v3260
        %v3262 = vpop.f32.mrb[0].mxu0
        %v3263 = vadd.f32 0.0, %v3262
        %v3264 = vpop.f32.mrb[0].mxu0
        %v3265 = vadd.f32 0.0, %v3264
        %v3266 = vpop.f32.mrb[0].mxu0
        %v3267 = vadd.f32 0.0, %v3266
        %3268 = vmatprep.mubr.bf16.mxu0 0
        %3269 = vmatmul.mubr.bf16.gmra.mrb[0].mxu0 %v1511
        %v3270 = vpop.f32.mrb[0].mxu0
        %v3271 = vadd.f32 0.0, %v3270
        %v3272 = vpop.f32.mrb[0].mxu0
        %v3273 = vadd.f32 0.0, %v3272
        %v3274 = vpop.f32.mrb[0].mxu0
        %v3275 = vadd.f32 0.0, %v3274
        %v3276 = vpop.f32.mrb[0].mxu0
        %v3277 = vadd.f32 0.0, %v3276
        %3278 = vmatprep.mubr.bf16.mxu0 0
        %3279 = vmatmul.mubr.bf16.gmra.mrb[0].mxu0 %v1512
        %v3280 = vpop.f32.mrb[0].mxu0
        %v3281 = vadd.f32 0.0, %v3280
        %v3282 = vpop.f32.mrb[0].mxu0
        %v3283 = vadd.f32 0.0, %v3282
        %v3284 = vpop.f32.mrb[0].mxu0
        %v3285 = vadd.f32 0.0, %v3284
        %v3286 = vpop.f32.mrb[0].mxu0
        %v3287 = vadd.f32 0.0, %v3286
        %3288 = vmatprep.mubr.bf16.mxu0 0
        %3289 = vmatmul.mubr.bf16.gmra.mrb[0].mxu0 %v1513
        %v3290 = vpop.f32.mrb[0].mxu0
        %v3291 = vadd.f32 0.0, %v3290
        %v3292 = vpop.f32.mrb[0].mxu0
        %v3293 = vadd.f32 0.0, %v3292
        %v3294 = vpop.f32.mrb[0].mxu0
        %v3295 = vadd.f32 0.0, %v3294
        %v3296 = vpop.f32.mrb[0].mxu0
        %v3297 = vadd.f32 0.0, %v3296
        %3298 = vmatprep.mubr.bf16.mxu0 0
        %3299 = vmatmul.mubr.bf16.gmra.mrb[0].mxu0 %v1514
        %v3300 = vpop.f32.mrb[0].mxu0
        %v3301 = vadd.f32 0.0, %v3300
        %v3302 = vpop.f32.mrb[0].mxu0
        %v3303 = vadd.f32 0.0, %v3302
        %v3304 = vpop.f32.mrb[0].mxu0
        %v3305 = vadd.f32 0.0, %v3304
        %v3306 = vpop.f32.mrb[0].mxu0
        %v3307 = vadd.f32 0.0, %v3306
        %3308 = vmatprep.mubr.bf16.mxu0 0
        %3309 = vmatmul.mubr.bf16.gmra.mrb[0].mxu0 %v1515
        %v3310 = vpop.f32.mrb[0].mxu0
        %v3311 = vadd.f32 0.0, %v3310
        %v3312 = vpop.f32.mrb[0].mxu0
        %v3313 = vadd.f32 0.0, %v3312
        %v3314 = vpop.f32.mrb[0].mxu0
        %v3315 = vadd.f32 0.0, %v3314
        %v3316 = vpop.f32.mrb[0].mxu0
        %v3317 = vadd.f32 0.0, %v3316
        %3318 = vmatprep.mubr.bf16.mxu0 0
        %3319 = vmatmul.mubr.bf16.gmra.mrb[0].mxu0 %v1516
        %v3320 = vpop.f32.mrb[0].mxu0
        %v3321 = vadd.f32 0.0, %v3320
        %v3322 = vpop.f32.mrb[0].mxu0
        %v3323 = vadd.f32 0.0, %v3322
        %v3324 = vpop.f32.mrb[0].mxu0
        %v3325 = vadd.f32 0.0, %v3324
        %v3326 = vpop.f32.mrb[0].mxu0
        %v3327 = vadd.f32 0.0, %v3326
        %3328 = vmatprep.mubr.bf16.mxu0 0
        %3329 = vmatmul.mubr.bf16.gmra.mrb[0].mxu0 %v1517
        %v3330 = vpop.f32.mrb[0].mxu0
        %v3331 = vadd.f32 0.0, %v3330
        %v3332 = vpop.f32.mrb[0].mxu0
        %v3333 = vadd.f32 0.0, %v3332
        %v3334 = vpop.f32.mrb[0].mxu0
        %v3335 = vadd.f32 0.0, %v3334
        %v3336 = vpop.f32.mrb[0].mxu0
        %v3337 = vadd.f32 0.0, %v3336
        %3338 = vmatprep.mubr.bf16.mxu0 0
        %3339 = vmatmul.mubr.bf16.gmra.mrb[0].mxu0 %v1518
        %v3340 = vpop.f32.mrb[0].mxu0
        %v3341 = vadd.f32 0.0, %v3340
        %v3342 = vpop.f32.mrb[0].mxu0
        %v3343 = vadd.f32 0.0, %v3342
        %v3344 = vpop.f32.mrb[0].mxu0
        %v3345 = vadd.f32 0.0, %v3344
        %v3346 = vpop.f32.mrb[0].mxu0
        %v3347 = vadd.f32 0.0, %v3346
        %3348 = vmatprep.mubr.bf16.mxu0 0
        %3349 = vmatmul.mubr.bf16.gmra.mrb[0].mxu0 %v1519
        %v3350 = vpop.f32.mrb[0].mxu0
        %v3351 = vadd.f32 0.0, %v3350
        %v3352 = vpop.f32.mrb[0].mxu0
        %v3353 = vadd.f32 0.0, %v3352
        %v3354 = vpop.f32.mrb[0].mxu0
        %v3355 = vadd.f32 0.0, %v3354
        %v3356 = vpop.f32.mrb[0].mxu0
        %v3357 = vadd.f32 0.0, %v3356
        %3358 = vmatprep.mubr.bf16.mxu0 0
        %3359 = vmatmul.mubr.bf16.gmra.mrb[0].mxu0 %v1520
        %v3360 = vpop.f32.mrb[0].mxu0
        %v3361 = vadd.f32 0.0, %v3360
        %v3362 = vpop.f32.mrb[0].mxu0
        %v3363 = vadd.f32 0.0, %v3362
        %v3364 = vpop.f32.mrb[0].mxu0
        %v3365 = vadd.f32 0.0, %v3364
        %v3366 = vpop.f32.mrb[0].mxu0
        %v3367 = vadd.f32 0.0, %v3366
        %3368 = vmatprep.mubr.bf16.mxu0 0
        %3369 = vmatmul.mubr.bf16.gmra.mrb[0].mxu0 %v1521
        %v3370 = vpop.f32.mrb[0].mxu0
        %v3371 = vadd.f32 0.0, %v3370
        %v3372 = vpop.f32.mrb[0].mxu0
        %v3373 = vadd.f32 0.0, %v3372
        %v3374 = vpop.f32.mrb[0].mxu0
        %v3375 = vadd.f32 0.0, %v3374
        %v3376 = vpop.f32.mrb[0].mxu0
        %v3377 = vadd.f32 0.0, %v3376
        %3378 = vmatprep.mubr.bf16.mxu0 0
        %3379 = vmatmul.mubr.bf16.gmra.mrb[0].mxu0 %v1522
        %v3380 = vpop.f32.mrb[0].mxu0
        %v3381 = vadd.f32 0.0, %v3380
        %v3382 = vpop.f32.mrb[0].mxu0
        %v3383 = vadd.f32 0.0, %v3382
        %v3384 = vpop.f32.mrb[0].mxu0
        %v3385 = vadd.f32 0.0, %v3384
        %v3386 = vpop.f32.mrb[0].mxu0
        %v3387 = vadd.f32 0.0, %v3386
        %3388 = vmatprep.mubr.bf16.mxu0 0
        %3389 = vmatmul.mubr.bf16.gmra.mrb[0].mxu0 %v1523
        %v3390 = vpop.f32.mrb[0].mxu0
        %v3391 = vadd.f32 0.0, %v3390
        %v3392 = vpop.f32.mrb[0].mxu0
        %v3393 = vadd.f32 0.0, %v3392
        %v3394 = vpop.f32.mrb[0].mxu0
        %v3395 = vadd.f32 0.0, %v3394
        %v3396 = vpop.f32.mrb[0].mxu0
        %v3397 = vadd.f32 0.0, %v3396
        %3398 = vmatprep.mubr.bf16.mxu0 0
        %3399 = vmatmul.mubr.bf16.gmra.mrb[0].mxu0 %v3134
        %v3400 = vpop.f32.mrb[0].mxu0
        %v3401 = vadd.f32 0.0, %v3400
        %v3402 = vpop.f32.mrb[0].mxu0
        %v3403 = vadd.f32 0.0, %v3402
        %v3404 = vpop.f32.mrb[0].mxu0
        %v3405 = vadd.f32 0.0, %v3404
        %v3406 = vpop.f32.mrb[0].mxu0
        %v3407 = vadd.f32 0.0, %v3406
        %3408 = vdwg.mxu0
        %v3409 = vadd.f32 %v3027, %v3251
        %v3410 = vadd.f32 %v3028, %v3253
        %v3411 = vadd.f32 %v3029, %v3255
        %v3412 = vadd.f32 %v3030, %v3257
        %v3413 = vadd.f32 %v3031, %v3261
        %v3414 = vadd.f32 %v3032, %v3263
        %v3415 = vadd.f32 %v3033, %v3265
        %v3416 = vadd.f32 %v3034, %v3267
        %v3417 = vadd.f32 %v3035, %v3271
        %v3418 = vadd.f32 %v3036, %v3273
        %v3419 = vadd.f32 %v3037, %v3275
        %v3420 = vadd.f32 %v3038, %v3277
        %v3421 = vadd.f32 %v3039, %v3281
        %v3422 = vadd.f32 %v3040, %v3283
        %v3423 = vadd.f32 %v3041, %v3285
        %v3424 = vadd.f32 %v3042, %v3287
        %v3425 = vadd.f32 %v3043, %v3291
        %v3426 = vadd.f32 %v3044, %v3293
        %v3427 = vadd.f32 %v3045, %v3295
        %v3428 = vadd.f32 %v3046, %v3297
        %v3429 = vadd.f32 %v3047, %v3301
        %v3430 = vadd.f32 %v3048, %v3303
        %v3431 = vadd.f32 %v3049, %v3305
        %v3432 = vadd.f32 %v3050, %v3307
        %v3433 = vadd.f32 %v3051, %v3311
        %v3434 = vadd.f32 %v3052, %v3313
        %v3435 = vadd.f32 %v3053, %v3315
        %v3436 = vadd.f32 %v3054, %v3317
        %v3437 = vadd.f32 %v3055, %v3321
        %v3438 = vadd.f32 %v3056, %v3323
        %v3439 = vadd.f32 %v3057, %v3325
        %v3440 = vadd.f32 %v3058, %v3327
        %v3441 = vadd.f32 %v3059, %v3331
        %v3442 = vadd.f32 %v3060, %v3333
        %v3443 = vadd.f32 %v3061, %v3335
        %v3444 = vadd.f32 %v3062, %v3337
        %v3445 = vadd.f32 %v3063, %v3341
        %v3446 = vadd.f32 %v3064, %v3343
        %v3447 = vadd.f32 %v3065, %v3345
        %v3448 = vadd.f32 %v3066, %v3347
        %v3449 = vadd.f32 %v3067, %v3351
        %v3450 = vadd.f32 %v3068, %v3353
        %v3451 = vadd.f32 %v3069, %v3355
        %v3452 = vadd.f32 %v3070, %v3357
        %v3453 = vadd.f32 %v3071, %v3361
        %v3454 = vadd.f32 %v3072, %v3363
        %v3455 = vadd.f32 %v3073, %v3365
        %v3456 = vadd.f32 %v3074, %v3367
        %v3457 = vadd.f32 %v3075, %v3371
        %v3458 = vadd.f32 %v3076, %v3373
        %v3459 = vadd.f32 %v3077, %v3375
        %v3460 = vadd.f32 %v3078, %v3377
        %v3461 = vadd.f32 %v3079, %v3381
        %v3462 = vadd.f32 %v3080, %v3383
        %v3463 = vadd.f32 %v3081, %v3385
        %v3464 = vadd.f32 %v3082, %v3387
        %v3465 = vadd.f32 %v3083, %v3391
        %v3466 = vadd.f32 %v3084, %v3393
        %v3467 = vadd.f32 %v3085, %v3395
        %v3468 = vadd.f32 %v3086, %v3397
        %v3469 = vadd.f32 %v3087, %v3401
        %v3470 = vadd.f32 %v3088, %v3403
        %v3471 = vadd.f32 %v3089, %v3405
        %v3472 = vadd.f32 %v3090, %v3407
        %v3474 = vrot.slane %v1050, 5
        %v3475 = vrot.slane %v3474, 4
        %v3476 = vrot.slane %v1051, 5
        %v3477 = vsel %vm2200, %v3475, %v3476
        %v3478 = vrot.slane %v3476, 4
        %v3479 = vrot.slane %v1052, 5
        %v3480 = vsel %vm2200, %v3478, %v3479
        %s3481 = scalar_lea.vmem [#allocation7], 640
        %v3482 = vld [vmem:[%s3481] sm:$0xff]
        %v3483 = vld [vmem:[%s3481 + $0x8] sm:$0xff]
        %v3484 = vld [vmem:[%s3481 + $0x10] sm:$0xff]
        %v3485 = vld [vmem:[%s3481 + $0x18] sm:$0xff]
        %v3486 = vld [vmem:[%s3481 + $0x20] sm:$0xff]
        %v3487 = vld [vmem:[%s3481 + $0x28] sm:$0xff]
        %v3488 = vld [vmem:[%s3481 + $0x30] sm:$0xff]
        %v3489 = vld [vmem:[%s3481 + $0x38] sm:$0xff]
        %v3490 = vld [vmem:[%s3481 + $0x40] sm:$0xff]
        %v3491 = vld [vmem:[%s3481 + $0x48] sm:$0xff]
        %v3492 = vld [vmem:[%s3481 + $0x50] sm:$0xff]
        %v3493 = vld [vmem:[%s3481 + $0x58] sm:$0xff]
        %v3494 = vld [vmem:[%s3481 + $0x60] sm:$0xff]
        %v3495 = vld [vmem:[%s3481 + $0x68] sm:$0xff]
        %v3496 = vld [vmem:[%s3481 + $0x70] sm:$0xff]
        %v3497 = vld [vmem:[%s3481 + $0x78] sm:$0xff]
        %v3498 = vunpack.c.l.b16 %v3477
        %v3499 = vunpack.c.l.b16 %v3480
        %v3500 = vpack.c.b16 %v3499, %v3498
        %v3518 = vunpack.c.l.b16 %v3482
        %v3519 = vunpack.c.h.b16 %v3482
        %v3520 = vunpack.c.l.b16 %v3483
        %v3521 = vunpack.c.h.b16 %v3483
        %v3522 = vunpack.c.l.b16 %v3484
        %v3523 = vunpack.c.h.b16 %v3484
        %v3524 = vunpack.c.l.b16 %v3485
        %v3525 = vunpack.c.h.b16 %v3485
        %v3526 = vunpack.c.l.b16 %v3486
        %v3527 = vunpack.c.h.b16 %v3486
        %v3528 = vunpack.c.l.b16 %v3487
        %v3529 = vunpack.c.h.b16 %v3487
        %v3530 = vunpack.c.l.b16 %v3488
        %v3531 = vunpack.c.h.b16 %v3488
        %v3532 = vunpack.c.l.b16 %v3489
        %v3533 = vunpack.c.h.b16 %v3489
        %v3534 = vunpack.c.l.b16 %v3490
        %v3535 = vunpack.c.h.b16 %v3490
        %v3536 = vunpack.c.l.b16 %v3491
        %v3537 = vunpack.c.h.b16 %v3491
        %v3538 = vunpack.c.l.b16 %v3492
        %v3539 = vunpack.c.h.b16 %v3492
        %v3540 = vunpack.c.l.b16 %v3493
        %v3541 = vunpack.c.h.b16 %v3493
        %v3542 = vunpack.c.l.b16 %v3494
        %v3543 = vunpack.c.h.b16 %v3494
        %v3544 = vunpack.c.l.b16 %v3495
        %v3545 = vunpack.c.h.b16 %v3495
        %v3546 = vunpack.c.l.b16 %v3496
        %v3547 = vunpack.c.h.b16 %v3496
        %v3548 = vunpack.c.l.b16 %v3497
        %v3549 = vunpack.c.h.b16 %v3497
        %v3550 = vpack.c.b16 %v3520, %v3518
        %v3551 = vpack.c.b16 %v3521, %v3519
        %v3552 = vpack.c.b16 %v3524, %v3522
        %v3553 = vpack.c.b16 %v3525, %v3523
        %v3554 = vpack.c.b16 %v3528, %v3526
        %v3555 = vpack.c.b16 %v3529, %v3527
        %v3556 = vpack.c.b16 %v3532, %v3530
        %v3557 = vpack.c.b16 %v3533, %v3531
        %v3558 = vpack.c.b16 %v3536, %v3534
        %v3559 = vpack.c.b16 %v3537, %v3535
        %v3560 = vpack.c.b16 %v3540, %v3538
        %v3561 = vpack.c.b16 %v3541, %v3539
        %v3562 = vpack.c.b16 %v3544, %v3542
        %v3563 = vpack.c.b16 %v3545, %v3543
        %v3564 = vpack.c.b16 %v3548, %v3546
        %v3565 = vpack.c.b16 %v3549, %v3547
        %3582 = vmatprep.subr.bf16.mxu0 %v3551
        %3583 = vmatpush1.bf16.msra.mxu0 %v3550
        %3584 = vmatprep.subr.bf16.mxu0 %v3553
        %3585 = vmatpush1.bf16.msra.mxu0 %v3552
        %3586 = vmatprep.subr.bf16.mxu0 %v3555
        %3587 = vmatpush1.bf16.msra.mxu0 %v3554
        %3588 = vmatprep.subr.bf16.mxu0 %v3557
        %3589 = vmatpush1.bf16.msra.mxu0 %v3556
        %3590 = vmatprep.subr.bf16.mxu0 %v3559
        %3591 = vmatpush1.bf16.msra.mxu0 %v3558
        %3592 = vmatprep.subr.bf16.mxu0 %v3561
        %3593 = vmatpush1.bf16.msra.mxu0 %v3560
        %3594 = vmatprep.subr.bf16.mxu0 %v3563
        %3595 = vmatpush1.bf16.msra.mxu0 %v3562
        %3596 = vmatprep.subr.bf16.mxu0 %v3565
        %3597 = vmatpush1.bf16.msra.mxu0 %v3564
        %3598 = vmatprep.subr.bf16.mxu0 0
        %3599 = vmatpush1.bf16.msra.mxu0 0
        %3600 = vmatprep.subr.bf16.mxu0 0
        %3601 = vmatpush1.bf16.msra.mxu0 0
        %3602 = vmatprep.subr.bf16.mxu0 0
        %3603 = vmatpush1.bf16.msra.mxu0 0
        %3604 = vmatprep.subr.bf16.mxu0 0
        %3605 = vmatpush1.bf16.msra.mxu0 0
        %3606 = vmatprep.subr.bf16.mxu0 0
        %3607 = vmatpush1.bf16.msra.mxu0 0
        %3608 = vmatprep.subr.bf16.mxu0 0
        %3609 = vmatpush1.bf16.msra.mxu0 0
        %3610 = vmatprep.subr.bf16.mxu0 0
        %3611 = vmatpush1.bf16.msra.mxu0 0
        %3612 = vmatprep.subr.bf16.mxu0 0
        %3613 = vmatpush1.bf16.msra.mxu0 0
        %3614 = vmatprep.mubr.bf16.mxu0 0
        %3615 = vmatmul.mubr.bf16.gmra.mrb[0].mxu0 %v2363
        %v3616 = vpop.f32.mrb[0].mxu0
        %v3617 = vadd.f32 0.0, %v3616
        %v3618 = vpop.f32.mrb[0].mxu0
        %v3619 = vadd.f32 0.0, %v3618
        %v3620 = vpop.f32.mrb[0].mxu0
        %v3621 = vadd.f32 0.0, %v3620
        %v3622 = vpop.f32.mrb[0].mxu0
        %v3623 = vadd.f32 0.0, %v3622
        %3624 = vmatprep.mubr.bf16.mxu0 0
        %3625 = vmatmul.mubr.bf16.gmra.mrb[0].mxu0 %v2364
        %v3626 = vpop.f32.mrb[0].mxu0
        %v3627 = vadd.f32 0.0, %v3626
        %v3628 = vpop.f32.mrb[0].mxu0
        %v3629 = vadd.f32 0.0, %v3628
        %v3630 = vpop.f32.mrb[0].mxu0
        %v3631 = vadd.f32 0.0, %v3630
        %v3632 = vpop.f32.mrb[0].mxu0
        %v3633 = vadd.f32 0.0, %v3632
        %3634 = vmatprep.mubr.bf16.mxu0 0
        %3635 = vmatmul.mubr.bf16.gmra.mrb[0].mxu0 %v2365
        %v3636 = vpop.f32.mrb[0].mxu0
        %v3637 = vadd.f32 0.0, %v3636
        %v3638 = vpop.f32.mrb[0].mxu0
        %v3639 = vadd.f32 0.0, %v3638
        %v3640 = vpop.f32.mrb[0].mxu0
        %v3641 = vadd.f32 0.0, %v3640
        %v3642 = vpop.f32.mrb[0].mxu0
        %v3643 = vadd.f32 0.0, %v3642
        %3644 = vmatprep.mubr.bf16.mxu0 0
        %3645 = vmatmul.mubr.bf16.gmra.mrb[0].mxu0 %v2366
        %v3646 = vpop.f32.mrb[0].mxu0
        %v3647 = vadd.f32 0.0, %v3646
        %v3648 = vpop.f32.mrb[0].mxu0
        %v3649 = vadd.f32 0.0, %v3648
        %v3650 = vpop.f32.mrb[0].mxu0
        %v3651 = vadd.f32 0.0, %v3650
        %v3652 = vpop.f32.mrb[0].mxu0
        %v3653 = vadd.f32 0.0, %v3652
        %3654 = vmatprep.mubr.bf16.mxu0 0
        %3655 = vmatmul.mubr.bf16.gmra.mrb[0].mxu0 %v2367
        %v3656 = vpop.f32.mrb[0].mxu0
        %v3657 = vadd.f32 0.0, %v3656
        %v3658 = vpop.f32.mrb[0].mxu0
        %v3659 = vadd.f32 0.0, %v3658
        %v3660 = vpop.f32.mrb[0].mxu0
        %v3661 = vadd.f32 0.0, %v3660
        %v3662 = vpop.f32.mrb[0].mxu0
        %v3663 = vadd.f32 0.0, %v3662
        %3664 = vmatprep.mubr.bf16.mxu0 0
        %3665 = vmatmul.mubr.bf16.gmra.mrb[0].mxu0 %v2368
        %v3666 = vpop.f32.mrb[0].mxu0
        %v3667 = vadd.f32 0.0, %v3666
        %v3668 = vpop.f32.mrb[0].mxu0
        %v3669 = vadd.f32 0.0, %v3668
        %v3670 = vpop.f32.mrb[0].mxu0
        %v3671 = vadd.f32 0.0, %v3670
        %v3672 = vpop.f32.mrb[0].mxu0
        %v3673 = vadd.f32 0.0, %v3672
        %3674 = vmatprep.mubr.bf16.mxu0 0
        %3675 = vmatmul.mubr.bf16.gmra.mrb[0].mxu0 %v2369
        %v3676 = vpop.f32.mrb[0].mxu0
        %v3677 = vadd.f32 0.0, %v3676
        %v3678 = vpop.f32.mrb[0].mxu0
        %v3679 = vadd.f32 0.0, %v3678
        %v3680 = vpop.f32.mrb[0].mxu0
        %v3681 = vadd.f32 0.0, %v3680
        %v3682 = vpop.f32.mrb[0].mxu0
        %v3683 = vadd.f32 0.0, %v3682
        %3684 = vmatprep.mubr.bf16.mxu0 0
        %3685 = vmatmul.mubr.bf16.gmra.mrb[0].mxu0 %v2370
        %v3686 = vpop.f32.mrb[0].mxu0
        %v3687 = vadd.f32 0.0, %v3686
        %v3688 = vpop.f32.mrb[0].mxu0
        %v3689 = vadd.f32 0.0, %v3688
        %v3690 = vpop.f32.mrb[0].mxu0
        %v3691 = vadd.f32 0.0, %v3690
        %v3692 = vpop.f32.mrb[0].mxu0
        %v3693 = vadd.f32 0.0, %v3692
        %3694 = vmatprep.mubr.bf16.mxu0 0
        %3695 = vmatmul.mubr.bf16.gmra.mrb[0].mxu0 %v2371
        %v3696 = vpop.f32.mrb[0].mxu0
        %v3697 = vadd.f32 0.0, %v3696
        %v3698 = vpop.f32.mrb[0].mxu0
        %v3699 = vadd.f32 0.0, %v3698
        %v3700 = vpop.f32.mrb[0].mxu0
        %v3701 = vadd.f32 0.0, %v3700
        %v3702 = vpop.f32.mrb[0].mxu0
        %v3703 = vadd.f32 0.0, %v3702
        %3704 = vmatprep.mubr.bf16.mxu0 0
        %3705 = vmatmul.mubr.bf16.gmra.mrb[0].mxu0 %v2372
        %v3706 = vpop.f32.mrb[0].mxu0
        %v3707 = vadd.f32 0.0, %v3706
        %v3708 = vpop.f32.mrb[0].mxu0
        %v3709 = vadd.f32 0.0, %v3708
        %v3710 = vpop.f32.mrb[0].mxu0
        %v3711 = vadd.f32 0.0, %v3710
        %v3712 = vpop.f32.mrb[0].mxu0
        %v3713 = vadd.f32 0.0, %v3712
        %3714 = vmatprep.mubr.bf16.mxu0 0
        %3715 = vmatmul.mubr.bf16.gmra.mrb[0].mxu0 %v2373
        %v3716 = vpop.f32.mrb[0].mxu0
        %v3717 = vadd.f32 0.0, %v3716
        %v3718 = vpop.f32.mrb[0].mxu0
        %v3719 = vadd.f32 0.0, %v3718
        %v3720 = vpop.f32.mrb[0].mxu0
        %v3721 = vadd.f32 0.0, %v3720
        %v3722 = vpop.f32.mrb[0].mxu0
        %v3723 = vadd.f32 0.0, %v3722
        %3724 = vmatprep.mubr.bf16.mxu0 0
        %3725 = vmatmul.mubr.bf16.gmra.mrb[0].mxu0 %v2374
        %v3726 = vpop.f32.mrb[0].mxu0
        %v3727 = vadd.f32 0.0, %v3726
        %v3728 = vpop.f32.mrb[0].mxu0
        %v3729 = vadd.f32 0.0, %v3728
        %v3730 = vpop.f32.mrb[0].mxu0
        %v3731 = vadd.f32 0.0, %v3730
        %v3732 = vpop.f32.mrb[0].mxu0
        %v3733 = vadd.f32 0.0, %v3732
        %3734 = vmatprep.mubr.bf16.mxu0 0
        %3735 = vmatmul.mubr.bf16.gmra.mrb[0].mxu0 %v2375
        %v3736 = vpop.f32.mrb[0].mxu0
        %v3737 = vadd.f32 0.0, %v3736
        %v3738 = vpop.f32.mrb[0].mxu0
        %v3739 = vadd.f32 0.0, %v3738
        %v3740 = vpop.f32.mrb[0].mxu0
        %v3741 = vadd.f32 0.0, %v3740
        %v3742 = vpop.f32.mrb[0].mxu0
        %v3743 = vadd.f32 0.0, %v3742
        %3744 = vmatprep.mubr.bf16.mxu0 0
        %3745 = vmatmul.mubr.bf16.gmra.mrb[0].mxu0 %v2376
        %v3746 = vpop.f32.mrb[0].mxu0
        %v3747 = vadd.f32 0.0, %v3746
        %v3748 = vpop.f32.mrb[0].mxu0
        %v3749 = vadd.f32 0.0, %v3748
        %v3750 = vpop.f32.mrb[0].mxu0
        %v3751 = vadd.f32 0.0, %v3750
        %v3752 = vpop.f32.mrb[0].mxu0
        %v3753 = vadd.f32 0.0, %v3752
        %3754 = vmatprep.mubr.bf16.mxu0 0
        %3755 = vmatmul.mubr.bf16.gmra.mrb[0].mxu0 %v2377
        %v3756 = vpop.f32.mrb[0].mxu0
        %v3757 = vadd.f32 0.0, %v3756
        %v3758 = vpop.f32.mrb[0].mxu0
        %v3759 = vadd.f32 0.0, %v3758
        %v3760 = vpop.f32.mrb[0].mxu0
        %v3761 = vadd.f32 0.0, %v3760
        %v3762 = vpop.f32.mrb[0].mxu0
        %v3763 = vadd.f32 0.0, %v3762
        %3764 = vmatprep.mubr.bf16.mxu0 0
        %3765 = vmatmul.mubr.bf16.gmra.mrb[0].mxu0 %v3500
        %v3766 = vpop.f32.mrb[0].mxu0
        %v3767 = vadd.f32 0.0, %v3766
        %v3768 = vpop.f32.mrb[0].mxu0
        %v3769 = vadd.f32 0.0, %v3768
        %v3770 = vpop.f32.mrb[0].mxu0
        %v3771 = vadd.f32 0.0, %v3770
        %v3772 = vpop.f32.mrb[0].mxu0
        %v3773 = vadd.f32 0.0, %v3772
        %3774 = vdwg.mxu0
        %v3775 = vadd.f32 %v3409, %v3617
        %v3776 = vadd.f32 %v3410, %v3619
        %v3777 = vadd.f32 %v3411, %v3621
        %v3778 = vadd.f32 %v3412, %v3623
        %v3779 = vadd.f32 %v3413, %v3627
        %v3780 = vadd.f32 %v3414, %v3629
        %v3781 = vadd.f32 %v3415, %v3631
        %v3782 = vadd.f32 %v3416, %v3633
        %v3783 = vadd.f32 %v3417, %v3637
        %v3784 = vadd.f32 %v3418, %v3639
        %v3785 = vadd.f32 %v3419, %v3641
        %v3786 = vadd.f32 %v3420, %v3643
        %v3787 = vadd.f32 %v3421, %v3647
        %v3788 = vadd.f32 %v3422, %v3649
        %v3789 = vadd.f32 %v3423, %v3651
        %v3790 = vadd.f32 %v3424, %v3653
        %v3791 = vadd.f32 %v3425, %v3657
        %v3792 = vadd.f32 %v3426, %v3659
        %v3793 = vadd.f32 %v3427, %v3661
        %v3794 = vadd.f32 %v3428, %v3663
        %v3795 = vadd.f32 %v3429, %v3667
        %v3796 = vadd.f32 %v3430, %v3669
        %v3797 = vadd.f32 %v3431, %v3671
        %v3798 = vadd.f32 %v3432, %v3673
        %v3799 = vadd.f32 %v3433, %v3677
        %v3800 = vadd.f32 %v3434, %v3679
        %v3801 = vadd.f32 %v3435, %v3681
        %v3802 = vadd.f32 %v3436, %v3683
        %v3803 = vadd.f32 %v3437, %v3687
        %v3804 = vadd.f32 %v3438, %v3689
        %v3805 = vadd.f32 %v3439, %v3691
        %v3806 = vadd.f32 %v3440, %v3693
        %v3807 = vadd.f32 %v3441, %v3697
        %v3808 = vadd.f32 %v3442, %v3699
        %v3809 = vadd.f32 %v3443, %v3701
        %v3810 = vadd.f32 %v3444, %v3703
        %v3811 = vadd.f32 %v3445, %v3707
        %v3812 = vadd.f32 %v3446, %v3709
        %v3813 = vadd.f32 %v3447, %v3711
        %v3814 = vadd.f32 %v3448, %v3713
        %v3815 = vadd.f32 %v3449, %v3717
        %v3816 = vadd.f32 %v3450, %v3719
        %v3817 = vadd.f32 %v3451, %v3721
        %v3818 = vadd.f32 %v3452, %v3723
        %v3819 = vadd.f32 %v3453, %v3727
        %v3820 = vadd.f32 %v3454, %v3729
        %v3821 = vadd.f32 %v3455, %v3731
        %v3822 = vadd.f32 %v3456, %v3733
        %v3823 = vadd.f32 %v3457, %v3737
        %v3824 = vadd.f32 %v3458, %v3739
        %v3825 = vadd.f32 %v3459, %v3741
        %v3826 = vadd.f32 %v3460, %v3743
        %v3827 = vadd.f32 %v3461, %v3747
        %v3828 = vadd.f32 %v3462, %v3749
        %v3829 = vadd.f32 %v3463, %v3751
        %v3830 = vadd.f32 %v3464, %v3753
        %v3831 = vadd.f32 %v3465, %v3757
        %v3832 = vadd.f32 %v3466, %v3759
        %v3833 = vadd.f32 %v3467, %v3761
        %v3834 = vadd.f32 %v3468, %v3763
        %v3835 = vadd.f32 %v3469, %v3767
        %v3836 = vadd.f32 %v3470, %v3769
        %v3837 = vadd.f32 %v3471, %v3771
        %v3838 = vadd.f32 %v3472, %v3773
        %s3839 = scalar_lea.vmem [#allocation7], 768
        %v3840 = vld [vmem:[%s3839] sm:$0xff]
        %v3841 = vld [vmem:[%s3839 + $0x8] sm:$0xff]
        %v3842 = vld [vmem:[%s3839 + $0x10] sm:$0xff]
        %v3843 = vld [vmem:[%s3839 + $0x18] sm:$0xff]
        %v3844 = vld [vmem:[%s3839 + $0x20] sm:$0xff]
        %v3845 = vld [vmem:[%s3839 + $0x28] sm:$0xff]
        %v3846 = vld [vmem:[%s3839 + $0x30] sm:$0xff]
        %v3847 = vld [vmem:[%s3839 + $0x38] sm:$0xff]
        %v3848 = vld [vmem:[%s3839 + $0x40] sm:$0xff]
        %v3849 = vld [vmem:[%s3839 + $0x48] sm:$0xff]
        %v3850 = vld [vmem:[%s3839 + $0x50] sm:$0xff]
        %v3851 = vld [vmem:[%s3839 + $0x58] sm:$0xff]
        %v3852 = vld [vmem:[%s3839 + $0x60] sm:$0xff]
        %v3853 = vld [vmem:[%s3839 + $0x68] sm:$0xff]
        %v3854 = vld [vmem:[%s3839 + $0x70] sm:$0xff]
        %v3855 = vld [vmem:[%s3839 + $0x78] sm:$0xff]
        %v3858 = vunpack.c.l.b16 %v1053
        %v3859 = vunpack.c.l.b16 %v1054
        %v3860 = vpack.c.b16 %v3859, %v3858
        %v3878 = vunpack.c.l.b16 %v3840
        %v3879 = vunpack.c.h.b16 %v3840
        %v3880 = vunpack.c.l.b16 %v3841
        %v3881 = vunpack.c.h.b16 %v3841
        %v3882 = vunpack.c.l.b16 %v3842
        %v3883 = vunpack.c.h.b16 %v3842
        %v3884 = vunpack.c.l.b16 %v3843
        %v3885 = vunpack.c.h.b16 %v3843
        %v3886 = vunpack.c.l.b16 %v3844
        %v3887 = vunpack.c.h.b16 %v3844
        %v3888 = vunpack.c.l.b16 %v3845
        %v3889 = vunpack.c.h.b16 %v3845
        %v3890 = vunpack.c.l.b16 %v3846
        %v3891 = vunpack.c.h.b16 %v3846
        %v3892 = vunpack.c.l.b16 %v3847
        %v3893 = vunpack.c.h.b16 %v3847
        %v3894 = vunpack.c.l.b16 %v3848
        %v3895 = vunpack.c.h.b16 %v3848
        %v3896 = vunpack.c.l.b16 %v3849
        %v3897 = vunpack.c.h.b16 %v3849
        %v3898 = vunpack.c.l.b16 %v3850
        %v3899 = vunpack.c.h.b16 %v3850
        %v3900 = vunpack.c.l.b16 %v3851
        %v3901 = vunpack.c.h.b16 %v3851
        %v3902 = vunpack.c.l.b16 %v3852
        %v3903 = vunpack.c.h.b16 %v3852
        %v3904 = vunpack.c.l.b16 %v3853
        %v3905 = vunpack.c.h.b16 %v3853
        %v3906 = vunpack.c.l.b16 %v3854
        %v3907 = vunpack.c.h.b16 %v3854
        %v3908 = vunpack.c.l.b16 %v3855
        %v3909 = vunpack.c.h.b16 %v3855
        %v3910 = vpack.c.b16 %v3880, %v3878
        %v3911 = vpack.c.b16 %v3881, %v3879
        %v3912 = vpack.c.b16 %v3884, %v3882
        %v3913 = vpack.c.b16 %v3885, %v3883
        %v3914 = vpack.c.b16 %v3888, %v3886
        %v3915 = vpack.c.b16 %v3889, %v3887
        %v3916 = vpack.c.b16 %v3892, %v3890
        %v3917 = vpack.c.b16 %v3893, %v3891
        %v3918 = vpack.c.b16 %v3896, %v3894
        %v3919 = vpack.c.b16 %v3897, %v3895
        %v3920 = vpack.c.b16 %v3900, %v3898
        %v3921 = vpack.c.b16 %v3901, %v3899
        %v3922 = vpack.c.b16 %v3904, %v3902
        %v3923 = vpack.c.b16 %v3905, %v3903
        %v3924 = vpack.c.b16 %v3908, %v3906
        %v3925 = vpack.c.b16 %v3909, %v3907
        %3942 = vmatprep.subr.bf16.mxu0 %v3911
        %3943 = vmatpush1.bf16.msra.mxu0 %v3910
        %3944 = vmatprep.subr.bf16.mxu0 %v3913
        %3945 = vmatpush1.bf16.msra.mxu0 %v3912
        %3946 = vmatprep.subr.bf16.mxu0 %v3915
        %3947 = vmatpush1.bf16.msra.mxu0 %v3914
        %3948 = vmatprep.subr.bf16.mxu0 %v3917
        %3949 = vmatpush1.bf16.msra.mxu0 %v3916
        %3950 = vmatprep.subr.bf16.mxu0 %v3919
        %3951 = vmatpush1.bf16.msra.mxu0 %v3918
        %3952 = vmatprep.subr.bf16.mxu0 %v3921
        %3953 = vmatpush1.bf16.msra.mxu0 %v3920
        %3954 = vmatprep.subr.bf16.mxu0 %v3923
        %3955 = vmatpush1.bf16.msra.mxu0 %v3922
        %3956 = vmatprep.subr.bf16.mxu0 %v3925
        %3957 = vmatpush1.bf16.msra.mxu0 %v3924
        %3958 = vmatprep.subr.bf16.mxu0 0
        %3959 = vmatpush1.bf16.msra.mxu0 0
        %3960 = vmatprep.subr.bf16.mxu0 0
        %3961 = vmatpush1.bf16.msra.mxu0 0
        %3962 = vmatprep.subr.bf16.mxu0 0
        %3963 = vmatpush1.bf16.msra.mxu0 0
        %3964 = vmatprep.subr.bf16.mxu0 0
        %3965 = vmatpush1.bf16.msra.mxu0 0
        %3966 = vmatprep.subr.bf16.mxu0 0
        %3967 = vmatpush1.bf16.msra.mxu0 0
        %3968 = vmatprep.subr.bf16.mxu0 0
        %3969 = vmatpush1.bf16.msra.mxu0 0
        %3970 = vmatprep.subr.bf16.mxu0 0
        %3971 = vmatpush1.bf16.msra.mxu0 0
        %3972 = vmatprep.subr.bf16.mxu0 0
        %3973 = vmatpush1.bf16.msra.mxu0 0
        %3974 = vmatprep.mubr.bf16.mxu0 0
        %3975 = vmatmul.mubr.bf16.gmra.mrb[0].mxu0 %v1879
        %v3976 = vpop.f32.mrb[0].mxu0
        %v3977 = vadd.f32 0.0, %v3976
        %v3978 = vpop.f32.mrb[0].mxu0
        %v3979 = vadd.f32 0.0, %v3978
        %v3980 = vpop.f32.mrb[0].mxu0
        %v3981 = vadd.f32 0.0, %v3980
        %v3982 = vpop.f32.mrb[0].mxu0
        %v3983 = vadd.f32 0.0, %v3982
        %3984 = vmatprep.mubr.bf16.mxu0 0
        %3985 = vmatmul.mubr.bf16.gmra.mrb[0].mxu0 %v1880
        %v3986 = vpop.f32.mrb[0].mxu0
        %v3987 = vadd.f32 0.0, %v3986
        %v3988 = vpop.f32.mrb[0].mxu0
        %v3989 = vadd.f32 0.0, %v3988
        %v3990 = vpop.f32.mrb[0].mxu0
        %v3991 = vadd.f32 0.0, %v3990
        %v3992 = vpop.f32.mrb[0].mxu0
        %v3993 = vadd.f32 0.0, %v3992
        %3994 = vmatprep.mubr.bf16.mxu0 0
        %3995 = vmatmul.mubr.bf16.gmra.mrb[0].mxu0 %v1881
        %v3996 = vpop.f32.mrb[0].mxu0
        %v3997 = vadd.f32 0.0, %v3996
        %v3998 = vpop.f32.mrb[0].mxu0
        %v3999 = vadd.f32 0.0, %v3998
        %v4000 = vpop.f32.mrb[0].mxu0
        %v4001 = vadd.f32 0.0, %v4000
        %v4002 = vpop.f32.mrb[0].mxu0
        %v4003 = vadd.f32 0.0, %v4002
        %4004 = vmatprep.mubr.bf16.mxu0 0
        %4005 = vmatmul.mubr.bf16.gmra.mrb[0].mxu0 %v1882
        %v4006 = vpop.f32.mrb[0].mxu0
        %v4007 = vadd.f32 0.0, %v4006
        %v4008 = vpop.f32.mrb[0].mxu0
        %v4009 = vadd.f32 0.0, %v4008
        %v4010 = vpop.f32.mrb[0].mxu0
        %v4011 = vadd.f32 0.0, %v4010
        %v4012 = vpop.f32.mrb[0].mxu0
        %v4013 = vadd.f32 0.0, %v4012
        %4014 = vmatprep.mubr.bf16.mxu0 0
        %4015 = vmatmul.mubr.bf16.gmra.mrb[0].mxu0 %v1883
        %v4016 = vpop.f32.mrb[0].mxu0
        %v4017 = vadd.f32 0.0, %v4016
        %v4018 = vpop.f32.mrb[0].mxu0
        %v4019 = vadd.f32 0.0, %v4018
        %v4020 = vpop.f32.mrb[0].mxu0
        %v4021 = vadd.f32 0.0, %v4020
        %v4022 = vpop.f32.mrb[0].mxu0
        %v4023 = vadd.f32 0.0, %v4022
        %4024 = vmatprep.mubr.bf16.mxu0 0
        %4025 = vmatmul.mubr.bf16.gmra.mrb[0].mxu0 %v1884
        %v4026 = vpop.f32.mrb[0].mxu0
        %v4027 = vadd.f32 0.0, %v4026
        %v4028 = vpop.f32.mrb[0].mxu0
        %v4029 = vadd.f32 0.0, %v4028
        %v4030 = vpop.f32.mrb[0].mxu0
        %v4031 = vadd.f32 0.0, %v4030
        %v4032 = vpop.f32.mrb[0].mxu0
        %v4033 = vadd.f32 0.0, %v4032
        %4034 = vmatprep.mubr.bf16.mxu0 0
        %4035 = vmatmul.mubr.bf16.gmra.mrb[0].mxu0 %v1885
        %v4036 = vpop.f32.mrb[0].mxu0
        %v4037 = vadd.f32 0.0, %v4036
        %v4038 = vpop.f32.mrb[0].mxu0
        %v4039 = vadd.f32 0.0, %v4038
        %v4040 = vpop.f32.mrb[0].mxu0
        %v4041 = vadd.f32 0.0, %v4040
        %v4042 = vpop.f32.mrb[0].mxu0
        %v4043 = vadd.f32 0.0, %v4042
        %4044 = vmatprep.mubr.bf16.mxu0 0
        %4045 = vmatmul.mubr.bf16.gmra.mrb[0].mxu0 %v1886
        %v4046 = vpop.f32.mrb[0].mxu0
        %v4047 = vadd.f32 0.0, %v4046
        %v4048 = vpop.f32.mrb[0].mxu0
        %v4049 = vadd.f32 0.0, %v4048
        %v4050 = vpop.f32.mrb[0].mxu0
        %v4051 = vadd.f32 0.0, %v4050
        %v4052 = vpop.f32.mrb[0].mxu0
        %v4053 = vadd.f32 0.0, %v4052
        %4054 = vmatprep.mubr.bf16.mxu0 0
        %4055 = vmatmul.mubr.bf16.gmra.mrb[0].mxu0 %v1887
        %v4056 = vpop.f32.mrb[0].mxu0
        %v4057 = vadd.f32 0.0, %v4056
        %v4058 = vpop.f32.mrb[0].mxu0
        %v4059 = vadd.f32 0.0, %v4058
        %v4060 = vpop.f32.mrb[0].mxu0
        %v4061 = vadd.f32 0.0, %v4060
        %v4062 = vpop.f32.mrb[0].mxu0
        %v4063 = vadd.f32 0.0, %v4062
        %4064 = vmatprep.mubr.bf16.mxu0 0
        %4065 = vmatmul.mubr.bf16.gmra.mrb[0].mxu0 %v1888
        %v4066 = vpop.f32.mrb[0].mxu0
        %v4067 = vadd.f32 0.0, %v4066
        %v4068 = vpop.f32.mrb[0].mxu0
        %v4069 = vadd.f32 0.0, %v4068
        %v4070 = vpop.f32.mrb[0].mxu0
        %v4071 = vadd.f32 0.0, %v4070
        %v4072 = vpop.f32.mrb[0].mxu0
        %v4073 = vadd.f32 0.0, %v4072
        %4074 = vmatprep.mubr.bf16.mxu0 0
        %4075 = vmatmul.mubr.bf16.gmra.mrb[0].mxu0 %v1889
        %v4076 = vpop.f32.mrb[0].mxu0
        %v4077 = vadd.f32 0.0, %v4076
        %v4078 = vpop.f32.mrb[0].mxu0
        %v4079 = vadd.f32 0.0, %v4078
        %v4080 = vpop.f32.mrb[0].mxu0
        %v4081 = vadd.f32 0.0, %v4080
        %v4082 = vpop.f32.mrb[0].mxu0
        %v4083 = vadd.f32 0.0, %v4082
        %4084 = vmatprep.mubr.bf16.mxu0 0
        %4085 = vmatmul.mubr.bf16.gmra.mrb[0].mxu0 %v1890
        %v4086 = vpop.f32.mrb[0].mxu0
        %v4087 = vadd.f32 0.0, %v4086
        %v4088 = vpop.f32.mrb[0].mxu0
        %v4089 = vadd.f32 0.0, %v4088
        %v4090 = vpop.f32.mrb[0].mxu0
        %v4091 = vadd.f32 0.0, %v4090
        %v4092 = vpop.f32.mrb[0].mxu0
        %v4093 = vadd.f32 0.0, %v4092
        %4094 = vmatprep.mubr.bf16.mxu0 0
        %4095 = vmatmul.mubr.bf16.gmra.mrb[0].mxu0 %v1891
        %v4096 = vpop.f32.mrb[0].mxu0
        %v4097 = vadd.f32 0.0, %v4096
        %v4098 = vpop.f32.mrb[0].mxu0
        %v4099 = vadd.f32 0.0, %v4098
        %v4100 = vpop.f32.mrb[0].mxu0
        %v4101 = vadd.f32 0.0, %v4100
        %v4102 = vpop.f32.mrb[0].mxu0
        %v4103 = vadd.f32 0.0, %v4102
        %4104 = vmatprep.mubr.bf16.mxu0 0
        %4105 = vmatmul.mubr.bf16.gmra.mrb[0].mxu0 %v1892
        %v4106 = vpop.f32.mrb[0].mxu0
        %v4107 = vadd.f32 0.0, %v4106
        %v4108 = vpop.f32.mrb[0].mxu0
        %v4109 = vadd.f32 0.0, %v4108
        %v4110 = vpop.f32.mrb[0].mxu0
        %v4111 = vadd.f32 0.0, %v4110
        %v4112 = vpop.f32.mrb[0].mxu0
        %v4113 = vadd.f32 0.0, %v4112
        %4114 = vmatprep.mubr.bf16.mxu0 0
        %4115 = vmatmul.mubr.bf16.gmra.mrb[0].mxu0 %v2752
        %v4116 = vpop.f32.mrb[0].mxu0
        %v4117 = vadd.f32 0.0, %v4116
        %v4118 = vpop.f32.mrb[0].mxu0
        %v4119 = vadd.f32 0.0, %v4118
        %v4120 = vpop.f32.mrb[0].mxu0
        %v4121 = vadd.f32 0.0, %v4120
        %v4122 = vpop.f32.mrb[0].mxu0
        %v4123 = vadd.f32 0.0, %v4122
        %4124 = vmatprep.mubr.bf16.mxu0 0
        %4125 = vmatmul.mubr.bf16.gmra.mrb[0].mxu0 %v3860
        %v4126 = vpop.f32.mrb[0].mxu0
        %v4127 = vadd.f32 0.0, %v4126
        %v4128 = vpop.f32.mrb[0].mxu0
        %v4129 = vadd.f32 0.0, %v4128
        %v4130 = vpop.f32.mrb[0].mxu0
        %v4131 = vadd.f32 0.0, %v4130
        %v4132 = vpop.f32.mrb[0].mxu0
        %v4133 = vadd.f32 0.0, %v4132
        %4134 = vdwg.mxu0
        %v4135 = vadd.f32 %v3775, %v3977
        %v4136 = vadd.f32 %v3776, %v3979
        %v4137 = vadd.f32 %v3777, %v3981
        %v4138 = vadd.f32 %v3778, %v3983
        %v4139 = vadd.f32 %v3779, %v3987
        %v4140 = vadd.f32 %v3780, %v3989
        %v4141 = vadd.f32 %v3781, %v3991
        %v4142 = vadd.f32 %v3782, %v3993
        %v4143 = vadd.f32 %v3783, %v3997
        %v4144 = vadd.f32 %v3784, %v3999
        %v4145 = vadd.f32 %v3785, %v4001
        %v4146 = vadd.f32 %v3786, %v4003
        %v4147 = vadd.f32 %v3787, %v4007
        %v4148 = vadd.f32 %v3788, %v4009
        %v4149 = vadd.f32 %v3789, %v4011
        %v4150 = vadd.f32 %v3790, %v4013
        %v4151 = vadd.f32 %v3791, %v4017
        %v4152 = vadd.f32 %v3792, %v4019
        %v4153 = vadd.f32 %v3793, %v4021
        %v4154 = vadd.f32 %v3794, %v4023
        %v4155 = vadd.f32 %v3795, %v4027
        %v4156 = vadd.f32 %v3796, %v4029
        %v4157 = vadd.f32 %v3797, %v4031
        %v4158 = vadd.f32 %v3798, %v4033
        %v4159 = vadd.f32 %v3799, %v4037
        %v4160 = vadd.f32 %v3800, %v4039
        %v4161 = vadd.f32 %v3801, %v4041
        %v4162 = vadd.f32 %v3802, %v4043
        %v4163 = vadd.f32 %v3803, %v4047
        %v4164 = vadd.f32 %v3804, %v4049
        %v4165 = vadd.f32 %v3805, %v4051
        %v4166 = vadd.f32 %v3806, %v4053
        %v4167 = vadd.f32 %v3807, %v4057
        %v4168 = vadd.f32 %v3808, %v4059
        %v4169 = vadd.f32 %v3809, %v4061
        %v4170 = vadd.f32 %v3810, %v4063
        %v4171 = vadd.f32 %v3811, %v4067
        %v4172 = vadd.f32 %v3812, %v4069
        %v4173 = vadd.f32 %v3813, %v4071
        %v4174 = vadd.f32 %v3814, %v4073
        %v4175 = vadd.f32 %v3815, %v4077
        %v4176 = vadd.f32 %v3816, %v4079
        %v4177 = vadd.f32 %v3817, %v4081
        %v4178 = vadd.f32 %v3818, %v4083
        %v4179 = vadd.f32 %v3819, %v4087
        %v4180 = vadd.f32 %v3820, %v4089
        %v4181 = vadd.f32 %v3821, %v4091
        %v4182 = vadd.f32 %v3822, %v4093
        %v4183 = vadd.f32 %v3823, %v4097
        %v4184 = vadd.f32 %v3824, %v4099
        %v4185 = vadd.f32 %v3825, %v4101
        %v4186 = vadd.f32 %v3826, %v4103
        %v4187 = vadd.f32 %v3827, %v4107
        %v4188 = vadd.f32 %v3828, %v4109
        %v4189 = vadd.f32 %v3829, %v4111
        %v4190 = vadd.f32 %v3830, %v4113
        %v4191 = vadd.f32 %v3831, %v4117
        %v4192 = vadd.f32 %v3832, %v4119
        %v4193 = vadd.f32 %v3833, %v4121
        %v4194 = vadd.f32 %v3834, %v4123
        %v4195 = vadd.f32 %v3835, %v4127
        %v4196 = vadd.f32 %v3836, %v4129
        %v4197 = vadd.f32 %v3837, %v4131
        %v4198 = vadd.f32 %v3838, %v4133
        %v4200 = vshrl.u32 %v1053, 16
        %v4202 = vrot.slane %v4200, 4
        %v4203 = vshll.u32 %v1053, 16
        %v4205 = vrot.slane %v4203, 5
        %v4206 = vor.u32 %v4202, %v4205
        %v4207 = vrot.slane %v4206, 4
        %v4209 = vshll.u32 %v1054, 16
        %v4211 = vrot.slane %v4209, 5
        %v4212 = vsel %vm1074, %v4207, %v4211
        %v4213 = vshrl.u32 %v1054, 16
        %v4215 = vrot.slane %v4213, 4
        %v4216 = vor.u32 %v4215, %v4211
        %v4217 = vrot.slane %v4216, 4
        %v4219 = vshll.u32 %v1055, 16
        %v4221 = vrot.slane %v4219, 5
        %v4222 = vsel %vm1074, %v4217, %v4221
        %s4223 = scalar_lea.vmem [#allocation7], 896
        %v4224 = vld [vmem:[%s4223] sm:$0xff]
        %v4225 = vld [vmem:[%s4223 + $0x8] sm:$0xff]
        %v4226 = vld [vmem:[%s4223 + $0x10] sm:$0xff]
        %v4227 = vld [vmem:[%s4223 + $0x18] sm:$0xff]
        %v4228 = vld [vmem:[%s4223 + $0x20] sm:$0xff]
        %v4229 = vld [vmem:[%s4223 + $0x28] sm:$0xff]
        %v4230 = vld [vmem:[%s4223 + $0x30] sm:$0xff]
        %v4231 = vld [vmem:[%s4223 + $0x38] sm:$0xff]
        %v4232 = vld [vmem:[%s4223 + $0x40] sm:$0xff]
        %v4233 = vld [vmem:[%s4223 + $0x48] sm:$0xff]
        %v4234 = vld [vmem:[%s4223 + $0x50] sm:$0xff]
        %v4235 = vld [vmem:[%s4223 + $0x58] sm:$0xff]
        %v4236 = vld [vmem:[%s4223 + $0x60] sm:$0xff]
        %v4237 = vld [vmem:[%s4223 + $0x68] sm:$0xff]
        %v4238 = vld [vmem:[%s4223 + $0x70] sm:$0xff]
        %v4239 = vld [vmem:[%s4223 + $0x78] sm:$0xff]
        %v4240 = vunpack.c.l.b16 %v4212
        %v4241 = vunpack.c.l.b16 %v4222
        %v4242 = vpack.c.b16 %v4241, %v4240
        %v4260 = vunpack.c.l.b16 %v4224
        %v4261 = vunpack.c.h.b16 %v4224
        %v4262 = vunpack.c.l.b16 %v4225
        %v4263 = vunpack.c.h.b16 %v4225
        %v4264 = vunpack.c.l.b16 %v4226
        %v4265 = vunpack.c.h.b16 %v4226
        %v4266 = vunpack.c.l.b16 %v4227
        %v4267 = vunpack.c.h.b16 %v4227
        %v4268 = vunpack.c.l.b16 %v4228
        %v4269 = vunpack.c.h.b16 %v4228
        %v4270 = vunpack.c.l.b16 %v4229
        %v4271 = vunpack.c.h.b16 %v4229
        %v4272 = vunpack.c.l.b16 %v4230
        %v4273 = vunpack.c.h.b16 %v4230
        %v4274 = vunpack.c.l.b16 %v4231
        %v4275 = vunpack.c.h.b16 %v4231
        %v4276 = vunpack.c.l.b16 %v4232
        %v4277 = vunpack.c.h.b16 %v4232
        %v4278 = vunpack.c.l.b16 %v4233
        %v4279 = vunpack.c.h.b16 %v4233
        %v4280 = vunpack.c.l.b16 %v4234
        %v4281 = vunpack.c.h.b16 %v4234
        %v4282 = vunpack.c.l.b16 %v4235
        %v4283 = vunpack.c.h.b16 %v4235
        %v4284 = vunpack.c.l.b16 %v4236
        %v4285 = vunpack.c.h.b16 %v4236
        %v4286 = vunpack.c.l.b16 %v4237
        %v4287 = vunpack.c.h.b16 %v4237
        %v4288 = vunpack.c.l.b16 %v4238
        %v4289 = vunpack.c.h.b16 %v4238
        %v4290 = vunpack.c.l.b16 %v4239
        %v4291 = vunpack.c.h.b16 %v4239
        %v4292 = vpack.c.b16 %v4262, %v4260
        %v4293 = vpack.c.b16 %v4263, %v4261
        %v4294 = vpack.c.b16 %v4266, %v4264
        %v4295 = vpack.c.b16 %v4267, %v4265
        %v4296 = vpack.c.b16 %v4270, %v4268
        %v4297 = vpack.c.b16 %v4271, %v4269
        %v4298 = vpack.c.b16 %v4274, %v4272
        %v4299 = vpack.c.b16 %v4275, %v4273
        %v4300 = vpack.c.b16 %v4278, %v4276
        %v4301 = vpack.c.b16 %v4279, %v4277
        %v4302 = vpack.c.b16 %v4282, %v4280
        %v4303 = vpack.c.b16 %v4283, %v4281
        %v4304 = vpack.c.b16 %v4286, %v4284
        %v4305 = vpack.c.b16 %v4287, %v4285
        %v4306 = vpack.c.b16 %v4290, %v4288
        %v4307 = vpack.c.b16 %v4291, %v4289
        %4324 = vmatprep.subr.bf16.mxu0 %v4293
        %4325 = vmatpush1.bf16.msra.mxu0 %v4292
        %4326 = vmatprep.subr.bf16.mxu0 %v4295
        %4327 = vmatpush1.bf16.msra.mxu0 %v4294
        %4328 = vmatprep.subr.bf16.mxu0 %v4297
        %4329 = vmatpush1.bf16.msra.mxu0 %v4296
        %4330 = vmatprep.subr.bf16.mxu0 %v4299
        %4331 = vmatpush1.bf16.msra.mxu0 %v4298
        %4332 = vmatprep.subr.bf16.mxu0 %v4301
        %4333 = vmatpush1.bf16.msra.mxu0 %v4300
        %4334 = vmatprep.subr.bf16.mxu0 %v4303
        %4335 = vmatpush1.bf16.msra.mxu0 %v4302
        %4336 = vmatprep.subr.bf16.mxu0 %v4305
        %4337 = vmatpush1.bf16.msra.mxu0 %v4304
        %4338 = vmatprep.subr.bf16.mxu0 %v4307
        %4339 = vmatpush1.bf16.msra.mxu0 %v4306
        %4340 = vmatprep.subr.bf16.mxu0 0
        %4341 = vmatpush1.bf16.msra.mxu0 0
        %4342 = vmatprep.subr.bf16.mxu0 0
        %4343 = vmatpush1.bf16.msra.mxu0 0
        %4344 = vmatprep.subr.bf16.mxu0 0
        %4345 = vmatpush1.bf16.msra.mxu0 0
        %4346 = vmatprep.subr.bf16.mxu0 0
        %4347 = vmatpush1.bf16.msra.mxu0 0
        %4348 = vmatprep.subr.bf16.mxu0 0
        %4349 = vmatpush1.bf16.msra.mxu0 0
        %4350 = vmatprep.subr.bf16.mxu0 0
        %4351 = vmatpush1.bf16.msra.mxu0 0
        %4352 = vmatprep.subr.bf16.mxu0 0
        %4353 = vmatpush1.bf16.msra.mxu0 0
        %4354 = vmatprep.subr.bf16.mxu0 0
        %4355 = vmatpush1.bf16.msra.mxu0 0
        %4356 = vmatprep.mubr.bf16.mxu0 0
        %4357 = vmatmul.mubr.bf16.gmra.mrb[0].mxu0 %v1510
        %v4358 = vpop.f32.mrb[0].mxu0
        %v4359 = vadd.f32 0.0, %v4358
        %v4360 = vpop.f32.mrb[0].mxu0
        %v4361 = vadd.f32 0.0, %v4360
        %v4362 = vpop.f32.mrb[0].mxu0
        %v4363 = vadd.f32 0.0, %v4362
        %v4364 = vpop.f32.mrb[0].mxu0
        %v4365 = vadd.f32 0.0, %v4364
        %4366 = vmatprep.mubr.bf16.mxu0 0
        %4367 = vmatmul.mubr.bf16.gmra.mrb[0].mxu0 %v1511
        %v4368 = vpop.f32.mrb[0].mxu0
        %v4369 = vadd.f32 0.0, %v4368
        %v4370 = vpop.f32.mrb[0].mxu0
        %v4371 = vadd.f32 0.0, %v4370
        %v4372 = vpop.f32.mrb[0].mxu0
        %v4373 = vadd.f32 0.0, %v4372
        %v4374 = vpop.f32.mrb[0].mxu0
        %v4375 = vadd.f32 0.0, %v4374
        %4376 = vmatprep.mubr.bf16.mxu0 0
        %4377 = vmatmul.mubr.bf16.gmra.mrb[0].mxu0 %v1512
        %v4378 = vpop.f32.mrb[0].mxu0
        %v4379 = vadd.f32 0.0, %v4378
        %v4380 = vpop.f32.mrb[0].mxu0
        %v4381 = vadd.f32 0.0, %v4380
        %v4382 = vpop.f32.mrb[0].mxu0
        %v4383 = vadd.f32 0.0, %v4382
        %v4384 = vpop.f32.mrb[0].mxu0
        %v4385 = vadd.f32 0.0, %v4384
        %4386 = vmatprep.mubr.bf16.mxu0 0
        %4387 = vmatmul.mubr.bf16.gmra.mrb[0].mxu0 %v1513
        %v4388 = vpop.f32.mrb[0].mxu0
        %v4389 = vadd.f32 0.0, %v4388
        %v4390 = vpop.f32.mrb[0].mxu0
        %v4391 = vadd.f32 0.0, %v4390
        %v4392 = vpop.f32.mrb[0].mxu0
        %v4393 = vadd.f32 0.0, %v4392
        %v4394 = vpop.f32.mrb[0].mxu0
        %v4395 = vadd.f32 0.0, %v4394
        %4396 = vmatprep.mubr.bf16.mxu0 0
        %4397 = vmatmul.mubr.bf16.gmra.mrb[0].mxu0 %v1514
        %v4398 = vpop.f32.mrb[0].mxu0
        %v4399 = vadd.f32 0.0, %v4398
        %v4400 = vpop.f32.mrb[0].mxu0
        %v4401 = vadd.f32 0.0, %v4400
        %v4402 = vpop.f32.mrb[0].mxu0
        %v4403 = vadd.f32 0.0, %v4402
        %v4404 = vpop.f32.mrb[0].mxu0
        %v4405 = vadd.f32 0.0, %v4404
        %4406 = vmatprep.mubr.bf16.mxu0 0
        %4407 = vmatmul.mubr.bf16.gmra.mrb[0].mxu0 %v1515
        %v4408 = vpop.f32.mrb[0].mxu0
        %v4409 = vadd.f32 0.0, %v4408
        %v4410 = vpop.f32.mrb[0].mxu0
        %v4411 = vadd.f32 0.0, %v4410
        %v4412 = vpop.f32.mrb[0].mxu0
        %v4413 = vadd.f32 0.0, %v4412
        %v4414 = vpop.f32.mrb[0].mxu0
        %v4415 = vadd.f32 0.0, %v4414
        %4416 = vmatprep.mubr.bf16.mxu0 0
        %4417 = vmatmul.mubr.bf16.gmra.mrb[0].mxu0 %v1516
        %v4418 = vpop.f32.mrb[0].mxu0
        %v4419 = vadd.f32 0.0, %v4418
        %v4420 = vpop.f32.mrb[0].mxu0
        %v4421 = vadd.f32 0.0, %v4420
        %v4422 = vpop.f32.mrb[0].mxu0
        %v4423 = vadd.f32 0.0, %v4422
        %v4424 = vpop.f32.mrb[0].mxu0
        %v4425 = vadd.f32 0.0, %v4424
        %4426 = vmatprep.mubr.bf16.mxu0 0
        %4427 = vmatmul.mubr.bf16.gmra.mrb[0].mxu0 %v1517
        %v4428 = vpop.f32.mrb[0].mxu0
        %v4429 = vadd.f32 0.0, %v4428
        %v4430 = vpop.f32.mrb[0].mxu0
        %v4431 = vadd.f32 0.0, %v4430
        %v4432 = vpop.f32.mrb[0].mxu0
        %v4433 = vadd.f32 0.0, %v4432
        %v4434 = vpop.f32.mrb[0].mxu0
        %v4435 = vadd.f32 0.0, %v4434
        %4436 = vmatprep.mubr.bf16.mxu0 0
        %4437 = vmatmul.mubr.bf16.gmra.mrb[0].mxu0 %v1518
        %v4438 = vpop.f32.mrb[0].mxu0
        %v4439 = vadd.f32 0.0, %v4438
        %v4440 = vpop.f32.mrb[0].mxu0
        %v4441 = vadd.f32 0.0, %v4440
        %v4442 = vpop.f32.mrb[0].mxu0
        %v4443 = vadd.f32 0.0, %v4442
        %v4444 = vpop.f32.mrb[0].mxu0
        %v4445 = vadd.f32 0.0, %v4444
        %4446 = vmatprep.mubr.bf16.mxu0 0
        %4447 = vmatmul.mubr.bf16.gmra.mrb[0].mxu0 %v1519
        %v4448 = vpop.f32.mrb[0].mxu0
        %v4449 = vadd.f32 0.0, %v4448
        %v4450 = vpop.f32.mrb[0].mxu0
        %v4451 = vadd.f32 0.0, %v4450
        %v4452 = vpop.f32.mrb[0].mxu0
        %v4453 = vadd.f32 0.0, %v4452
        %v4454 = vpop.f32.mrb[0].mxu0
        %v4455 = vadd.f32 0.0, %v4454
        %4456 = vmatprep.mubr.bf16.mxu0 0
        %4457 = vmatmul.mubr.bf16.gmra.mrb[0].mxu0 %v1520
        %v4458 = vpop.f32.mrb[0].mxu0
        %v4459 = vadd.f32 0.0, %v4458
        %v4460 = vpop.f32.mrb[0].mxu0
        %v4461 = vadd.f32 0.0, %v4460
        %v4462 = vpop.f32.mrb[0].mxu0
        %v4463 = vadd.f32 0.0, %v4462
        %v4464 = vpop.f32.mrb[0].mxu0
        %v4465 = vadd.f32 0.0, %v4464
        %4466 = vmatprep.mubr.bf16.mxu0 0
        %4467 = vmatmul.mubr.bf16.gmra.mrb[0].mxu0 %v1521
        %v4468 = vpop.f32.mrb[0].mxu0
        %v4469 = vadd.f32 0.0, %v4468
        %v4470 = vpop.f32.mrb[0].mxu0
        %v4471 = vadd.f32 0.0, %v4470
        %v4472 = vpop.f32.mrb[0].mxu0
        %v4473 = vadd.f32 0.0, %v4472
        %v4474 = vpop.f32.mrb[0].mxu0
        %v4475 = vadd.f32 0.0, %v4474
        %4476 = vmatprep.mubr.bf16.mxu0 0
        %4477 = vmatmul.mubr.bf16.gmra.mrb[0].mxu0 %v1522
        %v4478 = vpop.f32.mrb[0].mxu0
        %v4479 = vadd.f32 0.0, %v4478
        %v4480 = vpop.f32.mrb[0].mxu0
        %v4481 = vadd.f32 0.0, %v4480
        %v4482 = vpop.f32.mrb[0].mxu0
        %v4483 = vadd.f32 0.0, %v4482
        %v4484 = vpop.f32.mrb[0].mxu0
        %v4485 = vadd.f32 0.0, %v4484
        %4486 = vmatprep.mubr.bf16.mxu0 0
        %4487 = vmatmul.mubr.bf16.gmra.mrb[0].mxu0 %v1523
        %v4488 = vpop.f32.mrb[0].mxu0
        %v4489 = vadd.f32 0.0, %v4488
        %v4490 = vpop.f32.mrb[0].mxu0
        %v4491 = vadd.f32 0.0, %v4490
        %v4492 = vpop.f32.mrb[0].mxu0
        %v4493 = vadd.f32 0.0, %v4492
        %v4494 = vpop.f32.mrb[0].mxu0
        %v4495 = vadd.f32 0.0, %v4494
        %4496 = vmatprep.mubr.bf16.mxu0 0
        %4497 = vmatmul.mubr.bf16.gmra.mrb[0].mxu0 %v3134
        %v4498 = vpop.f32.mrb[0].mxu0
        %v4499 = vadd.f32 0.0, %v4498
        %v4500 = vpop.f32.mrb[0].mxu0
        %v4501 = vadd.f32 0.0, %v4500
        %v4502 = vpop.f32.mrb[0].mxu0
        %v4503 = vadd.f32 0.0, %v4502
        %v4504 = vpop.f32.mrb[0].mxu0
        %v4505 = vadd.f32 0.0, %v4504
        %4506 = vmatprep.mubr.bf16.mxu0 0
        %4507 = vmatmul.mubr.bf16.gmra.mrb[0].mxu0 %v4242
        %v4508 = vpop.f32.mrb[0].mxu0
        %v4509 = vadd.f32 0.0, %v4508
        %v4510 = vpop.f32.mrb[0].mxu0
        %v4511 = vadd.f32 0.0, %v4510
        %v4512 = vpop.f32.mrb[0].mxu0
        %v4513 = vadd.f32 0.0, %v4512
        %v4514 = vpop.f32.mrb[0].mxu0
        %v4515 = vadd.f32 0.0, %v4514
        %4516 = vdwg.mxu0
        %v4517 = vadd.f32 %v4135, %v4359
        %v4518 = vadd.f32 %v4136, %v4361
        %v4519 = vadd.f32 %v4137, %v4363
        %v4520 = vadd.f32 %v4138, %v4365
        %v4521 = vadd.f32 %v4139, %v4369
        %v4522 = vadd.f32 %v4140, %v4371
        %v4523 = vadd.f32 %v4141, %v4373
        %v4524 = vadd.f32 %v4142, %v4375
        %v4525 = vadd.f32 %v4143, %v4379
        %v4526 = vadd.f32 %v4144, %v4381
        %v4527 = vadd.f32 %v4145, %v4383
        %v4528 = vadd.f32 %v4146, %v4385
        %v4529 = vadd.f32 %v4147, %v4389
        %v4530 = vadd.f32 %v4148, %v4391
        %v4531 = vadd.f32 %v4149, %v4393
        %v4532 = vadd.f32 %v4150, %v4395
        %v4533 = vadd.f32 %v4151, %v4399
        %v4534 = vadd.f32 %v4152, %v4401
        %v4535 = vadd.f32 %v4153, %v4403
        %v4536 = vadd.f32 %v4154, %v4405
        %v4537 = vadd.f32 %v4155, %v4409
        %v4538 = vadd.f32 %v4156, %v4411
        %v4539 = vadd.f32 %v4157, %v4413
        %v4540 = vadd.f32 %v4158, %v4415
        %v4541 = vadd.f32 %v4159, %v4419
        %v4542 = vadd.f32 %v4160, %v4421
        %v4543 = vadd.f32 %v4161, %v4423
        %v4544 = vadd.f32 %v4162, %v4425
        %v4545 = vadd.f32 %v4163, %v4429
        %v4546 = vadd.f32 %v4164, %v4431
        %v4547 = vadd.f32 %v4165, %v4433
        %v4548 = vadd.f32 %v4166, %v4435
        %v4549 = vadd.f32 %v4167, %v4439
        %v4550 = vadd.f32 %v4168, %v4441
        %v4551 = vadd.f32 %v4169, %v4443
        %v4552 = vadd.f32 %v4170, %v4445
        %v4553 = vadd.f32 %v4171, %v4449
        %v4554 = vadd.f32 %v4172, %v4451
        %v4555 = vadd.f32 %v4173, %v4453
        %v4556 = vadd.f32 %v4174, %v4455
        %v4557 = vadd.f32 %v4175, %v4459
        %v4558 = vadd.f32 %v4176, %v4461
        %v4559 = vadd.f32 %v4177, %v4463
        %v4560 = vadd.f32 %v4178, %v4465
        %v4561 = vadd.f32 %v4179, %v4469
        %v4562 = vadd.f32 %v4180, %v4471
        %v4563 = vadd.f32 %v4181, %v4473
        %v4564 = vadd.f32 %v4182, %v4475
        %v4565 = vadd.f32 %v4183, %v4479
        %v4566 = vadd.f32 %v4184, %v4481
        %v4567 = vadd.f32 %v4185, %v4483
        %v4568 = vadd.f32 %v4186, %v4485
        %v4569 = vadd.f32 %v4187, %v4489
        %v4570 = vadd.f32 %v4188, %v4491
        %v4571 = vadd.f32 %v4189, %v4493
        %v4572 = vadd.f32 %v4190, %v4495
        %v4573 = vadd.f32 %v4191, %v4499
        %v4574 = vadd.f32 %v4192, %v4501
        %v4575 = vadd.f32 %v4193, %v4503
        %v4576 = vadd.f32 %v4194, %v4505
        %v4577 = vadd.f32 %v4195, %v4509
        %v4578 = vadd.f32 %v4196, %v4511
        %v4579 = vadd.f32 %v4197, %v4513
        %v4580 = vadd.f32 %v4198, %v4515
        %v4582 = vrot.slane %v1053, 5
        %v4583 = vrot.slane %v4582, 4
        %v4584 = vrot.slane %v1054, 5
        %v4585 = vsel %vm2200, %v4583, %v4584
        %v4586 = vrot.slane %v4584, 4
        %v4587 = vrot.slane %v1055, 5
        %v4588 = vsel %vm2200, %v4586, %v4587
        %s4589 = scalar_lea.vmem [#allocation7], 1024
        %v4590 = vld [vmem:[%s4589] sm:$0xff]
        %v4591 = vld [vmem:[%s4589 + $0x8] sm:$0xff]
        %v4592 = vld [vmem:[%s4589 + $0x10] sm:$0xff]
        %v4593 = vld [vmem:[%s4589 + $0x18] sm:$0xff]
        %v4594 = vld [vmem:[%s4589 + $0x20] sm:$0xff]
        %v4595 = vld [vmem:[%s4589 + $0x28] sm:$0xff]
        %v4596 = vld [vmem:[%s4589 + $0x30] sm:$0xff]
        %v4597 = vld [vmem:[%s4589 + $0x38] sm:$0xff]
        %v4598 = vld [vmem:[%s4589 + $0x40] sm:$0xff]
        %v4599 = vld [vmem:[%s4589 + $0x48] sm:$0xff]
        %v4600 = vld [vmem:[%s4589 + $0x50] sm:$0xff]
        %v4601 = vld [vmem:[%s4589 + $0x58] sm:$0xff]
        %v4602 = vld [vmem:[%s4589 + $0x60] sm:$0xff]
        %v4603 = vld [vmem:[%s4589 + $0x68] sm:$0xff]
        %v4604 = vld [vmem:[%s4589 + $0x70] sm:$0xff]
        %v4605 = vld [vmem:[%s4589 + $0x78] sm:$0xff]
        %v4606 = vunpack.c.l.b16 %v4585
        %v4607 = vunpack.c.l.b16 %v4588
        %v4608 = vpack.c.b16 %v4607, %v4606
        %v4626 = vunpack.c.l.b16 %v4590
        %v4627 = vunpack.c.h.b16 %v4590
        %v4628 = vunpack.c.l.b16 %v4591
        %v4629 = vunpack.c.h.b16 %v4591
        %v4630 = vunpack.c.l.b16 %v4592
        %v4631 = vunpack.c.h.b16 %v4592
        %v4632 = vunpack.c.l.b16 %v4593
        %v4633 = vunpack.c.h.b16 %v4593
        %v4634 = vunpack.c.l.b16 %v4594
        %v4635 = vunpack.c.h.b16 %v4594
        %v4636 = vunpack.c.l.b16 %v4595
        %v4637 = vunpack.c.h.b16 %v4595
        %v4638 = vunpack.c.l.b16 %v4596
        %v4639 = vunpack.c.h.b16 %v4596
        %v4640 = vunpack.c.l.b16 %v4597
        %v4641 = vunpack.c.h.b16 %v4597
        %v4642 = vunpack.c.l.b16 %v4598
        %v4643 = vunpack.c.h.b16 %v4598
        %v4644 = vunpack.c.l.b16 %v4599
        %v4645 = vunpack.c.h.b16 %v4599
        %v4646 = vunpack.c.l.b16 %v4600
        %v4647 = vunpack.c.h.b16 %v4600
        %v4648 = vunpack.c.l.b16 %v4601
        %v4649 = vunpack.c.h.b16 %v4601
        %v4650 = vunpack.c.l.b16 %v4602
        %v4651 = vunpack.c.h.b16 %v4602
        %v4652 = vunpack.c.l.b16 %v4603
        %v4653 = vunpack.c.h.b16 %v4603
        %v4654 = vunpack.c.l.b16 %v4604
        %v4655 = vunpack.c.h.b16 %v4604
        %v4656 = vunpack.c.l.b16 %v4605
        %v4657 = vunpack.c.h.b16 %v4605
        %v4658 = vpack.c.b16 %v4628, %v4626
        %v4659 = vpack.c.b16 %v4629, %v4627
        %v4660 = vpack.c.b16 %v4632, %v4630
        %v4661 = vpack.c.b16 %v4633, %v4631
        %v4662 = vpack.c.b16 %v4636, %v4634
        %v4663 = vpack.c.b16 %v4637, %v4635
        %v4664 = vpack.c.b16 %v4640, %v4638
        %v4665 = vpack.c.b16 %v4641, %v4639
        %v4666 = vpack.c.b16 %v4644, %v4642
        %v4667 = vpack.c.b16 %v4645, %v4643
        %v4668 = vpack.c.b16 %v4648, %v4646
        %v4669 = vpack.c.b16 %v4649, %v4647
        %v4670 = vpack.c.b16 %v4652, %v4650
        %v4671 = vpack.c.b16 %v4653, %v4651
        %v4672 = vpack.c.b16 %v4656, %v4654
        %v4673 = vpack.c.b16 %v4657, %v4655
        %4690 = vmatprep.subr.bf16.mxu0 %v4659
        %4691 = vmatpush1.bf16.msra.mxu0 %v4658
        %4692 = vmatprep.subr.bf16.mxu0 %v4661
        %4693 = vmatpush1.bf16.msra.mxu0 %v4660
        %4694 = vmatprep.subr.bf16.mxu0 %v4663
        %4695 = vmatpush1.bf16.msra.mxu0 %v4662
        %4696 = vmatprep.subr.bf16.mxu0 %v4665
        %4697 = vmatpush1.bf16.msra.mxu0 %v4664
        %4698 = vmatprep.subr.bf16.mxu0 %v4667
        %4699 = vmatpush1.bf16.msra.mxu0 %v4666
        %4700 = vmatprep.subr.bf16.mxu0 %v4669
        %4701 = vmatpush1.bf16.msra.mxu0 %v4668
        %4702 = vmatprep.subr.bf16.mxu0 %v4671
        %4703 = vmatpush1.bf16.msra.mxu0 %v4670
        %4704 = vmatprep.subr.bf16.mxu0 %v4673
        %4705 = vmatpush1.bf16.msra.mxu0 %v4672
        %4706 = vmatprep.subr.bf16.mxu0 0
        %4707 = vmatpush1.bf16.msra.mxu0 0
        %4708 = vmatprep.subr.bf16.mxu0 0
        %4709 = vmatpush1.bf16.msra.mxu0 0
        %4710 = vmatprep.subr.bf16.mxu0 0
        %4711 = vmatpush1.bf16.msra.mxu0 0
        %4712 = vmatprep.subr.bf16.mxu0 0
        %4713 = vmatpush1.bf16.msra.mxu0 0
        %4714 = vmatprep.subr.bf16.mxu0 0
        %4715 = vmatpush1.bf16.msra.mxu0 0
        %4716 = vmatprep.subr.bf16.mxu0 0
        %4717 = vmatpush1.bf16.msra.mxu0 0
        %4718 = vmatprep.subr.bf16.mxu0 0
        %4719 = vmatpush1.bf16.msra.mxu0 0
        %4720 = vmatprep.subr.bf16.mxu0 0
        %4721 = vmatpush1.bf16.msra.mxu0 0
        %4722 = vmatprep.mubr.bf16.mxu0 0
        %4723 = vmatmul.mubr.bf16.gmra.mrb[0].mxu0 %v2364
        %v4724 = vpop.f32.mrb[0].mxu0
        %v4725 = vadd.f32 0.0, %v4724
        %v4726 = vpop.f32.mrb[0].mxu0
        %v4727 = vadd.f32 0.0, %v4726
        %v4728 = vpop.f32.mrb[0].mxu0
        %v4729 = vadd.f32 0.0, %v4728
        %v4730 = vpop.f32.mrb[0].mxu0
        %v4731 = vadd.f32 0.0, %v4730
        %4732 = vmatprep.mubr.bf16.mxu0 0
        %4733 = vmatmul.mubr.bf16.gmra.mrb[0].mxu0 %v2365
        %v4734 = vpop.f32.mrb[0].mxu0
        %v4735 = vadd.f32 0.0, %v4734
        %v4736 = vpop.f32.mrb[0].mxu0
        %v4737 = vadd.f32 0.0, %v4736
        %v4738 = vpop.f32.mrb[0].mxu0
        %v4739 = vadd.f32 0.0, %v4738
        %v4740 = vpop.f32.mrb[0].mxu0
        %v4741 = vadd.f32 0.0, %v4740
        %4742 = vmatprep.mubr.bf16.mxu0 0
        %4743 = vmatmul.mubr.bf16.gmra.mrb[0].mxu0 %v2366
        %v4744 = vpop.f32.mrb[0].mxu0
        %v4745 = vadd.f32 0.0, %v4744
        %v4746 = vpop.f32.mrb[0].mxu0
        %v4747 = vadd.f32 0.0, %v4746
        %v4748 = vpop.f32.mrb[0].mxu0
        %v4749 = vadd.f32 0.0, %v4748
        %v4750 = vpop.f32.mrb[0].mxu0
        %v4751 = vadd.f32 0.0, %v4750
        %4752 = vmatprep.mubr.bf16.mxu0 0
        %4753 = vmatmul.mubr.bf16.gmra.mrb[0].mxu0 %v2367
        %v4754 = vpop.f32.mrb[0].mxu0
        %v4755 = vadd.f32 0.0, %v4754
        %v4756 = vpop.f32.mrb[0].mxu0
        %v4757 = vadd.f32 0.0, %v4756
        %v4758 = vpop.f32.mrb[0].mxu0
        %v4759 = vadd.f32 0.0, %v4758
        %v4760 = vpop.f32.mrb[0].mxu0
        %v4761 = vadd.f32 0.0, %v4760
        %4762 = vmatprep.mubr.bf16.mxu0 0
        %4763 = vmatmul.mubr.bf16.gmra.mrb[0].mxu0 %v2368
        %v4764 = vpop.f32.mrb[0].mxu0
        %v4765 = vadd.f32 0.0, %v4764
        %v4766 = vpop.f32.mrb[0].mxu0
        %v4767 = vadd.f32 0.0, %v4766
        %v4768 = vpop.f32.mrb[0].mxu0
        %v4769 = vadd.f32 0.0, %v4768
        %v4770 = vpop.f32.mrb[0].mxu0
        %v4771 = vadd.f32 0.0, %v4770
        %4772 = vmatprep.mubr.bf16.mxu0 0
        %4773 = vmatmul.mubr.bf16.gmra.mrb[0].mxu0 %v2369
        %v4774 = vpop.f32.mrb[0].mxu0
        %v4775 = vadd.f32 0.0, %v4774
        %v4776 = vpop.f32.mrb[0].mxu0
        %v4777 = vadd.f32 0.0, %v4776
        %v4778 = vpop.f32.mrb[0].mxu0
        %v4779 = vadd.f32 0.0, %v4778
        %v4780 = vpop.f32.mrb[0].mxu0
        %v4781 = vadd.f32 0.0, %v4780
        %4782 = vmatprep.mubr.bf16.mxu0 0
        %4783 = vmatmul.mubr.bf16.gmra.mrb[0].mxu0 %v2370
        %v4784 = vpop.f32.mrb[0].mxu0
        %v4785 = vadd.f32 0.0, %v4784
        %v4786 = vpop.f32.mrb[0].mxu0
        %v4787 = vadd.f32 0.0, %v4786
        %v4788 = vpop.f32.mrb[0].mxu0
        %v4789 = vadd.f32 0.0, %v4788
        %v4790 = vpop.f32.mrb[0].mxu0
        %v4791 = vadd.f32 0.0, %v4790
        %4792 = vmatprep.mubr.bf16.mxu0 0
        %4793 = vmatmul.mubr.bf16.gmra.mrb[0].mxu0 %v2371
        %v4794 = vpop.f32.mrb[0].mxu0
        %v4795 = vadd.f32 0.0, %v4794
        %v4796 = vpop.f32.mrb[0].mxu0
        %v4797 = vadd.f32 0.0, %v4796
        %v4798 = vpop.f32.mrb[0].mxu0
        %v4799 = vadd.f32 0.0, %v4798
        %v4800 = vpop.f32.mrb[0].mxu0
        %v4801 = vadd.f32 0.0, %v4800
        %4802 = vmatprep.mubr.bf16.mxu0 0
        %4803 = vmatmul.mubr.bf16.gmra.mrb[0].mxu0 %v2372
        %v4804 = vpop.f32.mrb[0].mxu0
        %v4805 = vadd.f32 0.0, %v4804
        %v4806 = vpop.f32.mrb[0].mxu0
        %v4807 = vadd.f32 0.0, %v4806
        %v4808 = vpop.f32.mrb[0].mxu0
        %v4809 = vadd.f32 0.0, %v4808
        %v4810 = vpop.f32.mrb[0].mxu0
        %v4811 = vadd.f32 0.0, %v4810
        %4812 = vmatprep.mubr.bf16.mxu0 0
        %4813 = vmatmul.mubr.bf16.gmra.mrb[0].mxu0 %v2373
        %v4814 = vpop.f32.mrb[0].mxu0
        %v4815 = vadd.f32 0.0, %v4814
        %v4816 = vpop.f32.mrb[0].mxu0
        %v4817 = vadd.f32 0.0, %v4816
        %v4818 = vpop.f32.mrb[0].mxu0
        %v4819 = vadd.f32 0.0, %v4818
        %v4820 = vpop.f32.mrb[0].mxu0
        %v4821 = vadd.f32 0.0, %v4820
        %4822 = vmatprep.mubr.bf16.mxu0 0
        %4823 = vmatmul.mubr.bf16.gmra.mrb[0].mxu0 %v2374
        %v4824 = vpop.f32.mrb[0].mxu0
        %v4825 = vadd.f32 0.0, %v4824
        %v4826 = vpop.f32.mrb[0].mxu0
        %v4827 = vadd.f32 0.0, %v4826
        %v4828 = vpop.f32.mrb[0].mxu0
        %v4829 = vadd.f32 0.0, %v4828
        %v4830 = vpop.f32.mrb[0].mxu0
        %v4831 = vadd.f32 0.0, %v4830
        %4832 = vmatprep.mubr.bf16.mxu0 0
        %4833 = vmatmul.mubr.bf16.gmra.mrb[0].mxu0 %v2375
        %v4834 = vpop.f32.mrb[0].mxu0
        %v4835 = vadd.f32 0.0, %v4834
        %v4836 = vpop.f32.mrb[0].mxu0
        %v4837 = vadd.f32 0.0, %v4836
        %v4838 = vpop.f32.mrb[0].mxu0
        %v4839 = vadd.f32 0.0, %v4838
        %v4840 = vpop.f32.mrb[0].mxu0
        %v4841 = vadd.f32 0.0, %v4840
        %4842 = vmatprep.mubr.bf16.mxu0 0
        %4843 = vmatmul.mubr.bf16.gmra.mrb[0].mxu0 %v2376
        %v4844 = vpop.f32.mrb[0].mxu0
        %v4845 = vadd.f32 0.0, %v4844
        %v4846 = vpop.f32.mrb[0].mxu0
        %v4847 = vadd.f32 0.0, %v4846
        %v4848 = vpop.f32.mrb[0].mxu0
        %v4849 = vadd.f32 0.0, %v4848
        %v4850 = vpop.f32.mrb[0].mxu0
        %v4851 = vadd.f32 0.0, %v4850
        %4852 = vmatprep.mubr.bf16.mxu0 0
        %4853 = vmatmul.mubr.bf16.gmra.mrb[0].mxu0 %v2377
        %v4854 = vpop.f32.mrb[0].mxu0
        %v4855 = vadd.f32 0.0, %v4854
        %v4856 = vpop.f32.mrb[0].mxu0
        %v4857 = vadd.f32 0.0, %v4856
        %v4858 = vpop.f32.mrb[0].mxu0
        %v4859 = vadd.f32 0.0, %v4858
        %v4860 = vpop.f32.mrb[0].mxu0
        %v4861 = vadd.f32 0.0, %v4860
        %4862 = vmatprep.mubr.bf16.mxu0 0
        %4863 = vmatmul.mubr.bf16.gmra.mrb[0].mxu0 %v3500
        %v4864 = vpop.f32.mrb[0].mxu0
        %v4865 = vadd.f32 0.0, %v4864
        %v4866 = vpop.f32.mrb[0].mxu0
        %v4867 = vadd.f32 0.0, %v4866
        %v4868 = vpop.f32.mrb[0].mxu0
        %v4869 = vadd.f32 0.0, %v4868
        %v4870 = vpop.f32.mrb[0].mxu0
        %v4871 = vadd.f32 0.0, %v4870
        %4872 = vmatprep.mubr.bf16.mxu0 0
        %4873 = vmatmul.mubr.bf16.gmra.mrb[0].mxu0 %v4608
        %v4874 = vpop.f32.mrb[0].mxu0
        %v4875 = vadd.f32 0.0, %v4874
        %v4876 = vpop.f32.mrb[0].mxu0
        %v4877 = vadd.f32 0.0, %v4876
        %v4878 = vpop.f32.mrb[0].mxu0
        %v4879 = vadd.f32 0.0, %v4878
        %v4880 = vpop.f32.mrb[0].mxu0
        %v4881 = vadd.f32 0.0, %v4880
        %4882 = vdwg.mxu0
        %v4883 = vadd.f32 %v4517, %v4725
        %v4884 = vadd.f32 %v4518, %v4727
        %v4885 = vadd.f32 %v4519, %v4729
        %v4886 = vadd.f32 %v4520, %v4731
        %v4887 = vadd.f32 %v4521, %v4735
        %v4888 = vadd.f32 %v4522, %v4737
        %v4889 = vadd.f32 %v4523, %v4739
        %v4890 = vadd.f32 %v4524, %v4741
        %v4891 = vadd.f32 %v4525, %v4745
        %v4892 = vadd.f32 %v4526, %v4747
        %v4893 = vadd.f32 %v4527, %v4749
        %v4894 = vadd.f32 %v4528, %v4751
        %v4895 = vadd.f32 %v4529, %v4755
        %v4896 = vadd.f32 %v4530, %v4757
        %v4897 = vadd.f32 %v4531, %v4759
        %v4898 = vadd.f32 %v4532, %v4761
        %v4899 = vadd.f32 %v4533, %v4765
        %v4900 = vadd.f32 %v4534, %v4767
        %v4901 = vadd.f32 %v4535, %v4769
        %v4902 = vadd.f32 %v4536, %v4771
        %v4903 = vadd.f32 %v4537, %v4775
        %v4904 = vadd.f32 %v4538, %v4777
        %v4905 = vadd.f32 %v4539, %v4779
        %v4906 = vadd.f32 %v4540, %v4781
        %v4907 = vadd.f32 %v4541, %v4785
        %v4908 = vadd.f32 %v4542, %v4787
        %v4909 = vadd.f32 %v4543, %v4789
        %v4910 = vadd.f32 %v4544, %v4791
        %v4911 = vadd.f32 %v4545, %v4795
        %v4912 = vadd.f32 %v4546, %v4797
        %v4913 = vadd.f32 %v4547, %v4799
        %v4914 = vadd.f32 %v4548, %v4801
        %v4915 = vadd.f32 %v4549, %v4805
        %v4916 = vadd.f32 %v4550, %v4807
        %v4917 = vadd.f32 %v4551, %v4809
        %v4918 = vadd.f32 %v4552, %v4811
        %v4919 = vadd.f32 %v4553, %v4815
        %v4920 = vadd.f32 %v4554, %v4817
        %v4921 = vadd.f32 %v4555, %v4819
        %v4922 = vadd.f32 %v4556, %v4821
        %v4923 = vadd.f32 %v4557, %v4825
        %v4924 = vadd.f32 %v4558, %v4827
        %v4925 = vadd.f32 %v4559, %v4829
        %v4926 = vadd.f32 %v4560, %v4831
        %v4927 = vadd.f32 %v4561, %v4835
        %v4928 = vadd.f32 %v4562, %v4837
        %v4929 = vadd.f32 %v4563, %v4839
        %v4930 = vadd.f32 %v4564, %v4841
        %v4931 = vadd.f32 %v4565, %v4845
        %v4932 = vadd.f32 %v4566, %v4847
        %v4933 = vadd.f32 %v4567, %v4849
        %v4934 = vadd.f32 %v4568, %v4851
        %v4935 = vadd.f32 %v4569, %v4855
        %v4936 = vadd.f32 %v4570, %v4857
        %v4937 = vadd.f32 %v4571, %v4859
        %v4938 = vadd.f32 %v4572, %v4861
        %v4939 = vadd.f32 %v4573, %v4865
        %v4940 = vadd.f32 %v4574, %v4867
        %v4941 = vadd.f32 %v4575, %v4869
        %v4942 = vadd.f32 %v4576, %v4871
        %v4943 = vadd.f32 %v4577, %v4875
        %v4944 = vadd.f32 %v4578, %v4877
        %v4945 = vadd.f32 %v4579, %v4879
        %v4946 = vadd.f32 %v4580, %v4881
        %v4947 = vld [vmem:[#allocation9] sm:$0x3]
        %v4949 = vlaneseq
        %v4950 = vshrl.u32 %v4949, 7
        %v4951 = vsub.s32 0, %v4950
        %v4952 = vrot.slane %v4947, %v4951
        %v4953 = vlaneseq
        %v4954 = vshrl.u32 %v4953, 7
        %v4955 = vsub.s32 1, %v4954
        %v4956 = vrot.slane %v4947, %v4955
        %v4959 = vadd.f32 %v4883, %v4952
        %v4960 = vadd.f32 %v4884, %v4956
        %v4961 = vadd.f32 %v4885, %v4952
        %v4962 = vadd.f32 %v4886, %v4956
        %v4963 = vadd.f32 %v4887, %v4952
        %v4964 = vadd.f32 %v4888, %v4956
        %v4965 = vadd.f32 %v4889, %v4952
        %v4966 = vadd.f32 %v4890, %v4956
        %v4967 = vadd.f32 %v4891, %v4952
        %v4968 = vadd.f32 %v4892, %v4956
        %v4969 = vadd.f32 %v4893, %v4952
        %v4970 = vadd.f32 %v4894, %v4956
        %v4971 = vadd.f32 %v4895, %v4952
        %v4972 = vadd.f32 %v4896, %v4956
        %v4973 = vadd.f32 %v4897, %v4952
        %v4974 = vadd.f32 %v4898, %v4956
        %v4975 = vadd.f32 %v4899, %v4952
        %v4976 = vadd.f32 %v4900, %v4956
        %v4977 = vadd.f32 %v4901, %v4952
        %v4978 = vadd.f32 %v4902, %v4956
        %v4979 = vadd.f32 %v4903, %v4952
        %v4980 = vadd.f32 %v4904, %v4956
        %v4981 = vadd.f32 %v4905, %v4952
        %v4982 = vadd.f32 %v4906, %v4956
        %v4983 = vadd.f32 %v4907, %v4952
        %v4984 = vadd.f32 %v4908, %v4956
        %v4985 = vadd.f32 %v4909, %v4952
        %v4986 = vadd.f32 %v4910, %v4956
        %v4987 = vadd.f32 %v4911, %v4952
        %v4988 = vadd.f32 %v4912, %v4956
        %v4989 = vadd.f32 %v4913, %v4952
        %v4990 = vadd.f32 %v4914, %v4956
        %v4991 = vadd.f32 %v4915, %v4952
        %v4992 = vadd.f32 %v4916, %v4956
        %v4993 = vadd.f32 %v4917, %v4952
        %v4994 = vadd.f32 %v4918, %v4956
        %v4995 = vadd.f32 %v4919, %v4952
        %v4996 = vadd.f32 %v4920, %v4956
        %v4997 = vadd.f32 %v4921, %v4952
        %v4998 = vadd.f32 %v4922, %v4956
        %v4999 = vadd.f32 %v4923, %v4952
        %v5000 = vadd.f32 %v4924, %v4956
        %v5001 = vadd.f32 %v4925, %v4952
        %v5002 = vadd.f32 %v4926, %v4956
        %v5003 = vadd.f32 %v4927, %v4952
        %v5004 = vadd.f32 %v4928, %v4956
        %v5005 = vadd.f32 %v4929, %v4952
        %v5006 = vadd.f32 %v4930, %v4956
        %v5007 = vadd.f32 %v4931, %v4952
        %v5008 = vadd.f32 %v4932, %v4956
        %v5009 = vadd.f32 %v4933, %v4952
        %v5010 = vadd.f32 %v4934, %v4956
        %v5011 = vadd.f32 %v4935, %v4952
        %v5012 = vadd.f32 %v4936, %v4956
        %v5013 = vadd.f32 %v4937, %v4952
        %v5014 = vadd.f32 %v4938, %v4956
        %v5015 = vadd.f32 %v4939, %v4952
        %v5016 = vadd.f32 %v4940, %v4956
        %v5017 = vadd.f32 %v4941, %v4952
        %v5018 = vadd.f32 %v4942, %v4956
        %v5019 = vadd.f32 %v4943, %v4952
        %v5020 = vadd.f32 %v4944, %v4956
        %v5021 = vadd.f32 %v4945, %v4952
        %v5022 = vadd.f32 %v4946, %v4956
        %v5023 = vmax.f32 %v4959, 0.0
        %v5024 = vmax.f32 %v4960, 0.0
        %v5025 = vmax.f32 %v4961, 0.0
        %v5026 = vmax.f32 %v4962, 0.0
        %v5027 = vmax.f32 %v4963, 0.0
        %v5028 = vmax.f32 %v4964, 0.0
        %v5029 = vmax.f32 %v4965, 0.0
        %v5030 = vmax.f32 %v4966, 0.0
        %v5031 = vmax.f32 %v4967, 0.0
        %v5032 = vmax.f32 %v4968, 0.0
        %v5033 = vmax.f32 %v4969, 0.0
        %v5034 = vmax.f32 %v4970, 0.0
        %v5035 = vmax.f32 %v4971, 0.0
        %v5036 = vmax.f32 %v4972, 0.0
        %v5037 = vmax.f32 %v4973, 0.0
        %v5038 = vmax.f32 %v4974, 0.0
        %v5039 = vmax.f32 %v4975, 0.0
        %v5040 = vmax.f32 %v4976, 0.0
        %v5041 = vmax.f32 %v4977, 0.0
        %v5042 = vmax.f32 %v4978, 0.0
        %v5043 = vmax.f32 %v4979, 0.0
        %v5044 = vmax.f32 %v4980, 0.0
        %v5045 = vmax.f32 %v4981, 0.0
        %v5046 = vmax.f32 %v4982, 0.0
        %v5047 = vmax.f32 %v4983, 0.0
        %v5048 = vmax.f32 %v4984, 0.0
        %v5049 = vmax.f32 %v4985, 0.0
        %v5050 = vmax.f32 %v4986, 0.0
        %v5051 = vmax.f32 %v4987, 0.0
        %v5052 = vmax.f32 %v4988, 0.0
        %v5053 = vmax.f32 %v4989, 0.0
        %v5054 = vmax.f32 %v4990, 0.0
        %v5055 = vmax.f32 %v4991, 0.0
        %v5056 = vmax.f32 %v4992, 0.0
        %v5057 = vmax.f32 %v4993, 0.0
        %v5058 = vmax.f32 %v4994, 0.0
        %v5059 = vmax.f32 %v4995, 0.0
        %v5060 = vmax.f32 %v4996, 0.0
        %v5061 = vmax.f32 %v4997, 0.0
        %v5062 = vmax.f32 %v4998, 0.0
        %v5063 = vmax.f32 %v4999, 0.0
        %v5064 = vmax.f32 %v5000, 0.0
        %v5065 = vmax.f32 %v5001, 0.0
        %v5066 = vmax.f32 %v5002, 0.0
        %v5067 = vmax.f32 %v5003, 0.0
        %v5068 = vmax.f32 %v5004, 0.0
        %v5069 = vmax.f32 %v5005, 0.0
        %v5070 = vmax.f32 %v5006, 0.0
        %v5071 = vmax.f32 %v5007, 0.0
        %v5072 = vmax.f32 %v5008, 0.0
        %v5073 = vmax.f32 %v5009, 0.0
        %v5074 = vmax.f32 %v5010, 0.0
        %v5075 = vmax.f32 %v5011, 0.0
        %v5076 = vmax.f32 %v5012, 0.0
        %v5077 = vmax.f32 %v5013, 0.0
        %v5078 = vmax.f32 %v5014, 0.0
        %v5079 = vmax.f32 %v5015, 0.0
        %v5080 = vmax.f32 %v5016, 0.0
        %v5081 = vmax.f32 %v5017, 0.0
        %v5082 = vmax.f32 %v5018, 0.0
        %v5083 = vmax.f32 %v5019, 0.0
        %v5084 = vmax.f32 %v5020, 0.0
        %v5085 = vmax.f32 %v5021, 0.0
        %v5086 = vmax.f32 %v5022, 0.0
        %v5087 = vpack.c.bf16 %v5025, %v5023
        %v5088 = vpack.c.bf16 %v5029, %v5027
        %v5089 = vpack.c.bf16 %v5033, %v5031
        %v5090 = vpack.c.bf16 %v5037, %v5035
        %v5091 = vpack.c.bf16 %v5041, %v5039
        %v5092 = vpack.c.bf16 %v5045, %v5043
        %v5093 = vpack.c.bf16 %v5049, %v5047
        %v5094 = vpack.c.bf16 %v5053, %v5051
        %v5095 = vpack.c.bf16 %v5057, %v5055
        %v5096 = vpack.c.bf16 %v5061, %v5059
        %v5097 = vpack.c.bf16 %v5065, %v5063
        %v5098 = vpack.c.bf16 %v5069, %v5067
        %v5099 = vpack.c.bf16 %v5073, %v5071
        %v5100 = vpack.c.bf16 %v5077, %v5075
        %v5101 = vpack.c.bf16 %v5081, %v5079
        %v5102 = vpack.c.bf16 %v5085, %v5083
        %v5119 = vunpack.c.l.b16 %v5087
        %v5120 = vunpack.c.h.b16 %v5087
        %v5121 = vunpack.c.l.b16 %v5088
        %v5122 = vunpack.c.h.b16 %v5088
        %v5123 = vunpack.c.l.b16 %v5089
        %v5124 = vunpack.c.h.b16 %v5089
        %v5125 = vunpack.c.l.b16 %v5090
        %v5126 = vunpack.c.h.b16 %v5090
        %v5127 = vunpack.c.l.b16 %v5091
        %v5128 = vunpack.c.h.b16 %v5091
        %v5129 = vunpack.c.l.b16 %v5092
        %v5130 = vunpack.c.h.b16 %v5092
        %v5131 = vunpack.c.l.b16 %v5093
        %v5132 = vunpack.c.h.b16 %v5093
        %v5133 = vunpack.c.l.b16 %v5094
        %v5134 = vunpack.c.h.b16 %v5094
        %v5135 = vunpack.c.l.b16 %v5095
        %v5136 = vunpack.c.h.b16 %v5095
        %v5137 = vunpack.c.l.b16 %v5096
        %v5138 = vunpack.c.h.b16 %v5096
        %v5139 = vunpack.c.l.b16 %v5097
        %v5140 = vunpack.c.h.b16 %v5097
        %v5141 = vunpack.c.l.b16 %v5098
        %v5142 = vunpack.c.h.b16 %v5098
        %v5143 = vunpack.c.l.b16 %v5099
        %v5144 = vunpack.c.h.b16 %v5099
        %v5145 = vunpack.c.l.b16 %v5100
        %v5146 = vunpack.c.h.b16 %v5100
        %v5147 = vunpack.c.l.b16 %v5101
        %v5148 = vunpack.c.h.b16 %v5101
        %v5149 = vunpack.c.l.b16 %v5102
        %v5150 = vunpack.c.h.b16 %v5102
        %v5151 = vpack.c.b16 %v5119, %v5119
        %v5152 = vpack.c.b16 %v5120, %v5120
        %v5153 = vpack.c.b16 %v5121, %v5121
        %v5154 = vpack.c.b16 %v5122, %v5122
        %v5155 = vpack.c.b16 %v5123, %v5123
        %v5156 = vpack.c.b16 %v5124, %v5124
        %v5157 = vpack.c.b16 %v5125, %v5125
        %v5158 = vpack.c.b16 %v5126, %v5126
        %v5159 = vpack.c.b16 %v5127, %v5127
        %v5160 = vpack.c.b16 %v5128, %v5128
        %v5161 = vpack.c.b16 %v5129, %v5129
        %v5162 = vpack.c.b16 %v5130, %v5130
        %v5163 = vpack.c.b16 %v5131, %v5131
        %v5164 = vpack.c.b16 %v5132, %v5132
        %v5165 = vpack.c.b16 %v5133, %v5133
        %v5166 = vpack.c.b16 %v5134, %v5134
        %v5167 = vpack.c.b16 %v5135, %v5135
        %v5168 = vpack.c.b16 %v5136, %v5136
        %v5169 = vpack.c.b16 %v5137, %v5137
        %v5170 = vpack.c.b16 %v5138, %v5138
        %v5171 = vpack.c.b16 %v5139, %v5139
        %v5172 = vpack.c.b16 %v5140, %v5140
        %v5173 = vpack.c.b16 %v5141, %v5141
        %v5174 = vpack.c.b16 %v5142, %v5142
        %v5175 = vpack.c.b16 %v5143, %v5143
        %v5176 = vpack.c.b16 %v5144, %v5144
        %v5177 = vpack.c.b16 %v5145, %v5145
        %v5178 = vpack.c.b16 %v5146, %v5146
        %v5179 = vpack.c.b16 %v5147, %v5147
        %v5180 = vpack.c.b16 %v5148, %v5148
        %v5181 = vpack.c.b16 %v5149, %v5149
        %v5182 = vpack.c.b16 %v5150, %v5150
        %v5184 = vshrl.u32 %v5151, 16
        %v5186 = vrot.slane %v5184, 7
        %v5187 = vshll.u32 %v5151, 16
        %v5189 = vor.u32 %v5186, %v5187
        %v5190 = vrot.slane %v5186, 4
        %v5192 = vshrl.u32 %v5152, 16
        %v5194 = vrot.slane %v5192, 7
        %v5195 = vshll.u32 %v5152, 16
        %v5197 = vor.u32 %v5194, %v5195
        %v5198 = vsel %vm566, %v5190, %v5197
        %v5199 = vrot.slane %v5194, 4
        %v5201 = vshrl.u32 %v5153, 16
        %v5203 = vrot.slane %v5201, 7
        %v5204 = vshll.u32 %v5153, 16
        %v5206 = vor.u32 %v5203, %v5204
        %v5207 = vrot.slane %v5203, 4
        %v5209 = vshrl.u32 %v5154, 16
        %v5211 = vrot.slane %v5209, 7
        %v5212 = vshll.u32 %v5154, 16
        %v5214 = vor.u32 %v5211, %v5212
        %v5215 = vsel %vm566, %v5207, %v5214
        %v5216 = vrot.slane %v5211, 4
        %v5218 = vshrl.u32 %v5155, 16
        %v5220 = vrot.slane %v5218, 7
        %v5221 = vshll.u32 %v5155, 16
        %v5223 = vor.u32 %v5220, %v5221
        %v5224 = vrot.slane %v5220, 4
        %v5226 = vshrl.u32 %v5156, 16
        %v5228 = vrot.slane %v5226, 7
        %v5229 = vshll.u32 %v5156, 16
        %v5231 = vor.u32 %v5228, %v5229
        %v5232 = vsel %vm566, %v5224, %v5231
        %v5233 = vrot.slane %v5228, 4
        %v5235 = vshrl.u32 %v5157, 16
        %v5237 = vrot.slane %v5235, 7
        %v5238 = vshll.u32 %v5157, 16
        %v5240 = vor.u32 %v5237, %v5238
        %v5241 = vrot.slane %v5237, 4
        %v5243 = vshrl.u32 %v5158, 16
        %v5245 = vrot.slane %v5243, 7
        %v5246 = vshll.u32 %v5158, 16
        %v5248 = vor.u32 %v5245, %v5246
        %v5249 = vsel %vm566, %v5241, %v5248
        %v5250 = vrot.slane %v5245, 4
        %v5252 = vshrl.u32 %v5159, 16
        %v5254 = vrot.slane %v5252, 7
        %v5255 = vshll.u32 %v5159, 16
        %v5257 = vor.u32 %v5254, %v5255
        %v5258 = vrot.slane %v5254, 4
        %v5260 = vshrl.u32 %v5160, 16
        %v5262 = vrot.slane %v5260, 7
        %v5263 = vshll.u32 %v5160, 16
        %v5265 = vor.u32 %v5262, %v5263
        %v5266 = vsel %vm566, %v5258, %v5265
        %v5267 = vrot.slane %v5262, 4
        %v5269 = vshrl.u32 %v5161, 16
        %v5271 = vrot.slane %v5269, 7
        %v5272 = vshll.u32 %v5161, 16
        %v5274 = vor.u32 %v5271, %v5272
        %v5275 = vrot.slane %v5271, 4
        %v5277 = vshrl.u32 %v5162, 16
        %v5279 = vrot.slane %v5277, 7
        %v5280 = vshll.u32 %v5162, 16
        %v5282 = vor.u32 %v5279, %v5280
        %v5283 = vsel %vm566, %v5275, %v5282
        %v5284 = vrot.slane %v5279, 4
        %v5286 = vshrl.u32 %v5163, 16
        %v5288 = vrot.slane %v5286, 7
        %v5289 = vshll.u32 %v5163, 16
        %v5291 = vor.u32 %v5288, %v5289
        %v5292 = vrot.slane %v5288, 4
        %v5294 = vshrl.u32 %v5164, 16
        %v5296 = vrot.slane %v5294, 7
        %v5297 = vshll.u32 %v5164, 16
        %v5299 = vor.u32 %v5296, %v5297
        %v5300 = vsel %vm566, %v5292, %v5299
        %v5301 = vrot.slane %v5296, 4
        %v5303 = vshrl.u32 %v5165, 16
        %v5305 = vrot.slane %v5303, 7
        %v5306 = vshll.u32 %v5165, 16
        %v5308 = vor.u32 %v5305, %v5306
        %v5309 = vrot.slane %v5305, 4
        %v5311 = vshrl.u32 %v5166, 16
        %v5313 = vrot.slane %v5311, 7
        %v5314 = vshll.u32 %v5166, 16
        %v5316 = vor.u32 %v5313, %v5314
        %v5317 = vsel %vm566, %v5309, %v5316
        %v5318 = vrot.slane %v5313, 4
        %v5320 = vshrl.u32 %v5167, 16
        %v5322 = vrot.slane %v5320, 7
        %v5323 = vshll.u32 %v5167, 16
        %v5325 = vor.u32 %v5322, %v5323
        %v5326 = vrot.slane %v5322, 4
        %v5328 = vshrl.u32 %v5168, 16
        %v5330 = vrot.slane %v5328, 7
        %v5331 = vshll.u32 %v5168, 16
        %v5333 = vor.u32 %v5330, %v5331
        %v5334 = vsel %vm566, %v5326, %v5333
        %v5335 = vrot.slane %v5330, 4
        %v5337 = vshrl.u32 %v5169, 16
        %v5339 = vrot.slane %v5337, 7
        %v5340 = vshll.u32 %v5169, 16
        %v5342 = vor.u32 %v5339, %v5340
        %v5343 = vrot.slane %v5339, 4
        %v5345 = vshrl.u32 %v5170, 16
        %v5347 = vrot.slane %v5345, 7
        %v5348 = vshll.u32 %v5170, 16
        %v5350 = vor.u32 %v5347, %v5348
        %v5351 = vsel %vm566, %v5343, %v5350
        %v5352 = vrot.slane %v5347, 4
        %v5354 = vshrl.u32 %v5171, 16
        %v5356 = vrot.slane %v5354, 7
        %v5357 = vshll.u32 %v5171, 16
        %v5359 = vor.u32 %v5356, %v5357
        %v5360 = vrot.slane %v5356, 4
        %v5362 = vshrl.u32 %v5172, 16
        %v5364 = vrot.slane %v5362, 7
        %v5365 = vshll.u32 %v5172, 16
        %v5367 = vor.u32 %v5364, %v5365
        %v5368 = vsel %vm566, %v5360, %v5367
        %v5369 = vrot.slane %v5364, 4
        %v5371 = vshrl.u32 %v5173, 16
        %v5373 = vrot.slane %v5371, 7
        %v5374 = vshll.u32 %v5173, 16
        %v5376 = vor.u32 %v5373, %v5374
        %v5377 = vrot.slane %v5373, 4
        %v5379 = vshrl.u32 %v5174, 16
        %v5381 = vrot.slane %v5379, 7
        %v5382 = vshll.u32 %v5174, 16
        %v5384 = vor.u32 %v5381, %v5382
        %v5385 = vsel %vm566, %v5377, %v5384
        %v5386 = vrot.slane %v5381, 4
        %v5388 = vshrl.u32 %v5175, 16
        %v5390 = vrot.slane %v5388, 7
        %v5391 = vshll.u32 %v5175, 16
        %v5393 = vor.u32 %v5390, %v5391
        %v5394 = vrot.slane %v5390, 4
        %v5396 = vshrl.u32 %v5176, 16
        %v5398 = vrot.slane %v5396, 7
        %v5399 = vshll.u32 %v5176, 16
        %v5401 = vor.u32 %v5398, %v5399
        %v5402 = vsel %vm566, %v5394, %v5401
        %v5403 = vrot.slane %v5398, 4
        %v5405 = vshrl.u32 %v5177, 16
        %v5407 = vrot.slane %v5405, 7
        %v5408 = vshll.u32 %v5177, 16
        %v5410 = vor.u32 %v5407, %v5408
        %v5411 = vrot.slane %v5407, 4
        %v5413 = vshrl.u32 %v5178, 16
        %v5415 = vrot.slane %v5413, 7
        %v5416 = vshll.u32 %v5178, 16
        %v5418 = vor.u32 %v5415, %v5416
        %v5419 = vsel %vm566, %v5411, %v5418
        %v5420 = vrot.slane %v5415, 4
        %v5422 = vshrl.u32 %v5179, 16
        %v5424 = vrot.slane %v5422, 7
        %v5425 = vshll.u32 %v5179, 16
        %v5427 = vor.u32 %v5424, %v5425
        %v5428 = vrot.slane %v5424, 4
        %v5430 = vshrl.u32 %v5180, 16
        %v5432 = vrot.slane %v5430, 7
        %v5433 = vshll.u32 %v5180, 16
        %v5435 = vor.u32 %v5432, %v5433
        %v5436 = vsel %vm566, %v5428, %v5435
        %v5437 = vrot.slane %v5432, 4
        %v5439 = vshrl.u32 %v5181, 16
        %v5441 = vrot.slane %v5439, 7
        %v5442 = vshll.u32 %v5181, 16
        %v5444 = vor.u32 %v5441, %v5442
        %v5445 = vrot.slane %v5441, 4
        %v5447 = vshrl.u32 %v5182, 16
        %v5449 = vrot.slane %v5447, 7
        %v5450 = vshll.u32 %v5182, 16
        %v5452 = vor.u32 %v5449, %v5450
        %v5453 = vsel %vm566, %v5445, %v5452
        %v5454 = vrot.slane %v5449, 4
        %s5503 = scalar_lea.vmem [#allocation3], 12
        %v5504 = vld [vmem:[%s5503] sm:$0xf]
        %v5505 = vsel %vm889, %v5189, %v5504
        %5506 = vst [vmem:[%s5503] sm:$0xf] %v5505
        %5507 = vst [vmem:[%s5503 + $0x4] sm:$0xf] %v5198
        %v5508 = vld [vmem:[%s5503 + $0x8] sm:$0x1]
        %v5509 = vsel %vm307, %v5199, %v5508
        %5510 = vst [vmem:[%s5503 + $0x8] sm:$0x1] %v5509
        %v5511 = vld [vmem:[%s5503 + $0xc] sm:$0xf]
        %v5512 = vsel %vm889, %v5206, %v5511
        %5513 = vst [vmem:[%s5503 + $0xc] sm:$0xf] %v5512
        %5514 = vst [vmem:[%s5503 + $0x10] sm:$0xf] %v5215
        %v5515 = vld [vmem:[%s5503 + $0x14] sm:$0x1]
        %v5516 = vsel %vm307, %v5216, %v5515
        %5517 = vst [vmem:[%s5503 + $0x14] sm:$0x1] %v5516
        %v5518 = vld [vmem:[%s5503 + $0x18] sm:$0xf]
        %v5519 = vsel %vm889, %v5223, %v5518
        %5520 = vst [vmem:[%s5503 + $0x18] sm:$0xf] %v5519
        %5521 = vst [vmem:[%s5503 + $0x1c] sm:$0xf] %v5232
        %v5522 = vld [vmem:[%s5503 + $0x20] sm:$0x1]
        %v5523 = vsel %vm307, %v5233, %v5522
        %5524 = vst [vmem:[%s5503 + $0x20] sm:$0x1] %v5523
        %v5525 = vld [vmem:[%s5503 + $0x24] sm:$0xf]
        %v5526 = vsel %vm889, %v5240, %v5525
        %5527 = vst [vmem:[%s5503 + $0x24] sm:$0xf] %v5526
        %5528 = vst [vmem:[%s5503 + $0x28] sm:$0xf] %v5249
        %v5529 = vld [vmem:[%s5503 + $0x2c] sm:$0x1]
        %v5530 = vsel %vm307, %v5250, %v5529
        %5531 = vst [vmem:[%s5503 + $0x2c] sm:$0x1] %v5530
        %v5532 = vld [vmem:[%s5503 + $0x30] sm:$0xf]
        %v5533 = vsel %vm889, %v5257, %v5532
        %5534 = vst [vmem:[%s5503 + $0x30] sm:$0xf] %v5533
        %5535 = vst [vmem:[%s5503 + $0x34] sm:$0xf] %v5266
        %v5536 = vld [vmem:[%s5503 + $0x38] sm:$0x1]
        %v5537 = vsel %vm307, %v5267, %v5536
        %5538 = vst [vmem:[%s5503 + $0x38] sm:$0x1] %v5537
        %v5539 = vld [vmem:[%s5503 + $0x3c] sm:$0xf]
        %v5540 = vsel %vm889, %v5274, %v5539
        %5541 = vst [vmem:[%s5503 + $0x3c] sm:$0xf] %v5540
        %5542 = vst [vmem:[%s5503 + $0x40] sm:$0xf] %v5283
        %v5543 = vld [vmem:[%s5503 + $0x44] sm:$0x1]
        %v5544 = vsel %vm307, %v5284, %v5543
        %5545 = vst [vmem:[%s5503 + $0x44] sm:$0x1] %v5544
        %v5546 = vld [vmem:[%s5503 + $0x48] sm:$0xf]
        %v5547 = vsel %vm889, %v5291, %v5546
        %5548 = vst [vmem:[%s5503 + $0x48] sm:$0xf] %v5547
        %5549 = vst [vmem:[%s5503 + $0x4c] sm:$0xf] %v5300
        %v5550 = vld [vmem:[%s5503 + $0x50] sm:$0x1]
        %v5551 = vsel %vm307, %v5301, %v5550
        %5552 = vst [vmem:[%s5503 + $0x50] sm:$0x1] %v5551
        %v5553 = vld [vmem:[%s5503 + $0x54] sm:$0xf]
        %v5554 = vsel %vm889, %v5308, %v5553
        %5555 = vst [vmem:[%s5503 + $0x54] sm:$0xf] %v5554
        %5556 = vst [vmem:[%s5503 + $0x58] sm:$0xf] %v5317
        %v5557 = vld [vmem:[%s5503 + $0x5c] sm:$0x1]
        %v5558 = vsel %vm307, %v5318, %v5557
        %5559 = vst [vmem:[%s5503 + $0x5c] sm:$0x1] %v5558
        %v5560 = vld [vmem:[%s5503 + $0x60] sm:$0xf]
        %v5561 = vsel %vm889, %v5325, %v5560
        %5562 = vst [vmem:[%s5503 + $0x60] sm:$0xf] %v5561
        %5563 = vst [vmem:[%s5503 + $0x64] sm:$0xf] %v5334
        %v5564 = vld [vmem:[%s5503 + $0x68] sm:$0x1]
        %v5565 = vsel %vm307, %v5335, %v5564
        %5566 = vst [vmem:[%s5503 + $0x68] sm:$0x1] %v5565
        %v5567 = vld [vmem:[%s5503 + $0x6c] sm:$0xf]
        %v5568 = vsel %vm889, %v5342, %v5567
        %5569 = vst [vmem:[%s5503 + $0x6c] sm:$0xf] %v5568
        %5570 = vst [vmem:[%s5503 + $0x70] sm:$0xf] %v5351
        %v5571 = vld [vmem:[%s5503 + $0x74] sm:$0x1]
        %v5572 = vsel %vm307, %v5352, %v5571
        %5573 = vst [vmem:[%s5503 + $0x74] sm:$0x1] %v5572
        %v5574 = vld [vmem:[%s5503 + $0x78] sm:$0xf]
        %v5575 = vsel %vm889, %v5359, %v5574
        %5576 = vst [vmem:[%s5503 + $0x78] sm:$0xf] %v5575
        %5577 = vst [vmem:[%s5503 + $0x7c] sm:$0xf] %v5368
        %v5578 = vld [vmem:[%s5503 + $0x80] sm:$0x1]
        %v5579 = vsel %vm307, %v5369, %v5578
        %5580 = vst [vmem:[%s5503 + $0x80] sm:$0x1] %v5579
        %v5581 = vld [vmem:[%s5503 + $0x84] sm:$0xf]
        %v5582 = vsel %vm889, %v5376, %v5581
        %5583 = vst [vmem:[%s5503 + $0x84] sm:$0xf] %v5582
        %5584 = vst [vmem:[%s5503 + $0x88] sm:$0xf] %v5385
        %v5585 = vld [vmem:[%s5503 + $0x8c] sm:$0x1]
        %v5586 = vsel %vm307, %v5386, %v5585
        %5587 = vst [vmem:[%s5503 + $0x8c] sm:$0x1] %v5586
        %v5588 = vld [vmem:[%s5503 + $0x90] sm:$0xf]
        %v5589 = vsel %vm889, %v5393, %v5588
        %5590 = vst [vmem:[%s5503 + $0x90] sm:$0xf] %v5589
        %5591 = vst [vmem:[%s5503 + $0x94] sm:$0xf] %v5402
        %v5592 = vld [vmem:[%s5503 + $0x98] sm:$0x1]
        %v5593 = vsel %vm307, %v5403, %v5592
        %5594 = vst [vmem:[%s5503 + $0x98] sm:$0x1] %v5593
        %v5595 = vld [vmem:[%s5503 + $0x9c] sm:$0xf]
        %v5596 = vsel %vm889, %v5410, %v5595
        %5597 = vst [vmem:[%s5503 + $0x9c] sm:$0xf] %v5596
        %5598 = vst [vmem:[%s5503 + $0xa0] sm:$0xf] %v5419
        %v5599 = vld [vmem:[%s5503 + $0xa4] sm:$0x1]
        %v5600 = vsel %vm307, %v5420, %v5599
        %5601 = vst [vmem:[%s5503 + $0xa4] sm:$0x1] %v5600
        %v5602 = vld [vmem:[%s5503 + $0xa8] sm:$0xf]
        %v5603 = vsel %vm889, %v5427, %v5602
        %5604 = vst [vmem:[%s5503 + $0xa8] sm:$0xf] %v5603
        %5605 = vst [vmem:[%s5503 + $0xac] sm:$0xf] %v5436
        %v5606 = vld [vmem:[%s5503 + $0xb0] sm:$0x1]
        %v5607 = vsel %vm307, %v5437, %v5606
        %5608 = vst [vmem:[%s5503 + $0xb0] sm:$0x1] %v5607
        %v5609 = vld [vmem:[%s5503 + $0xb4] sm:$0xf]
        %v5610 = vsel %vm889, %v5444, %v5609
        %5611 = vst [vmem:[%s5503 + $0xb4] sm:$0xf] %v5610
        %5612 = vst [vmem:[%s5503 + $0xb8] sm:$0xf] %v5453
        %v5613 = vld [vmem:[%s5503 + $0xbc] sm:$0x1]
        %v5614 = vsel %vm307, %v5454, %v5613
        %5615 = vst [vmem:[%s5503 + $0xbc] sm:$0x1] %v5614
        %v5616 = vld [vmem:[#allocation3] sm:$0xf]
        %v5617 = vld [vmem:[#allocation3 + $0x4] sm:$0xf]
        %v5618 = vld [vmem:[#allocation3 + $0x8] sm:$0x1]
        %v5619 = vld [vmem:[#allocation3 + $0xc] sm:$0xf]
        %v5620 = vld [vmem:[#allocation3 + $0x10] sm:$0xf]
        %v5621 = vld [vmem:[#allocation3 + $0x14] sm:$0x1]
        %v5622 = vld [vmem:[#allocation3 + $0x18] sm:$0xf]
        %v5623 = vld [vmem:[#allocation3 + $0x1c] sm:$0xf]
        %v5624 = vld [vmem:[#allocation3 + $0x20] sm:$0x1]
        %v5625 = vld [vmem:[#allocation3 + $0x24] sm:$0xf]
        %v5626 = vld [vmem:[#allocation3 + $0x28] sm:$0xf]
        %v5627 = vld [vmem:[#allocation3 + $0x2c] sm:$0x1]
        %v5628 = vld [vmem:[#allocation3 + $0x30] sm:$0xf]
        %v5629 = vld [vmem:[#allocation3 + $0x34] sm:$0xf]
        %v5630 = vld [vmem:[#allocation3 + $0x38] sm:$0x1]
        %v5631 = vld [vmem:[#allocation3 + $0x3c] sm:$0xf]
        %v5632 = vld [vmem:[#allocation3 + $0x40] sm:$0xf]
        %v5633 = vld [vmem:[#allocation3 + $0x44] sm:$0x1]
        %v5634 = vld [vmem:[#allocation3 + $0x48] sm:$0xf]
        %v5635 = vld [vmem:[#allocation3 + $0x4c] sm:$0xf]
        %v5636 = vld [vmem:[#allocation3 + $0x50] sm:$0x1]
        %v5637 = vld [vmem:[#allocation3 + $0x54] sm:$0xf]
        %v5638 = vld [vmem:[#allocation3 + $0x58] sm:$0xf]
        %v5639 = vld [vmem:[#allocation3 + $0x5c] sm:$0x1]
        %v5640 = vld [vmem:[#allocation3 + $0x60] sm:$0xf]
        %v5641 = vld [vmem:[#allocation3 + $0x64] sm:$0xf]
        %v5642 = vld [vmem:[#allocation3 + $0x68] sm:$0x1]
        %v5643 = vld [vmem:[#allocation3 + $0x6c] sm:$0xf]
        %v5644 = vld [vmem:[#allocation3 + $0x70] sm:$0xf]
        %v5645 = vld [vmem:[#allocation3 + $0x74] sm:$0x1]
        %v5646 = vld [vmem:[#allocation3 + $0x78] sm:$0xf]
        %v5647 = vld [vmem:[#allocation3 + $0x7c] sm:$0xf]
        %v5648 = vld [vmem:[#allocation3 + $0x80] sm:$0x1]
        %v5649 = vld [vmem:[#allocation3 + $0x84] sm:$0xf]
        %v5650 = vld [vmem:[#allocation3 + $0x88] sm:$0xf]
        %v5651 = vld [vmem:[#allocation3 + $0x8c] sm:$0x1]
        %v5652 = vld [vmem:[#allocation3 + $0x90] sm:$0xf]
        %v5653 = vld [vmem:[#allocation3 + $0x94] sm:$0xf]
        %v5654 = vld [vmem:[#allocation3 + $0x98] sm:$0x1]
        %v5655 = vld [vmem:[#allocation3 + $0x9c] sm:$0xf]
        %v5656 = vld [vmem:[#allocation3 + $0xa0] sm:$0xf]
        %v5657 = vld [vmem:[#allocation3 + $0xa4] sm:$0x1]
        %v5658 = vld [vmem:[#allocation3 + $0xa8] sm:$0xf]
        %v5659 = vld [vmem:[#allocation3 + $0xac] sm:$0xf]
        %v5660 = vld [vmem:[#allocation3 + $0xb0] sm:$0x1]
        %v5661 = vld [vmem:[#allocation3 + $0xb4] sm:$0xf]
        %v5662 = vld [vmem:[#allocation3 + $0xb8] sm:$0xf]
        %v5663 = vld [vmem:[#allocation3 + $0xbc] sm:$0x1]
        %v5664 = vld [vmem:[#allocation3 + $0xc0] sm:$0xf]
        %v5665 = vld [vmem:[#allocation3 + $0xc4] sm:$0xf]
        %v5666 = vld [vmem:[#allocation3 + $0xc8] sm:$0x1]
        %v5667 = vld [vmem:[#allocation3 + $0xcc] sm:$0xf]
        %v5668 = vld [vmem:[#allocation3 + $0xd0] sm:$0xf]
        %v5669 = vld [vmem:[#allocation3 + $0xd4] sm:$0x1]
        %v5670 = vld [vmem:[#allocation10] sm:$0xf]
        %v5671 = vld [vmem:[#allocation10 + $0x4] sm:$0xf]
        %v5672 = vld [vmem:[#allocation10 + $0x8] sm:$0xf]
        %v5673 = vld [vmem:[#allocation10 + $0xc] sm:$0xf]
        %v5674 = vld [vmem:[#allocation10 + $0x10] sm:$0xf]
        %v5675 = vld [vmem:[#allocation10 + $0x14] sm:$0xf]
        %v5676 = vld [vmem:[#allocation10 + $0x18] sm:$0xf]
        %v5677 = vld [vmem:[#allocation10 + $0x1c] sm:$0xf]
        %v5678 = vld [vmem:[#allocation10 + $0x20] sm:$0xf]
        %v5679 = vld [vmem:[#allocation10 + $0x24] sm:$0xf]
        %v5680 = vld [vmem:[#allocation10 + $0x28] sm:$0xf]
        %v5681 = vld [vmem:[#allocation10 + $0x2c] sm:$0xf]
        %v5682 = vld [vmem:[#allocation10 + $0x30] sm:$0xf]
        %v5683 = vld [vmem:[#allocation10 + $0x34] sm:$0xf]
        %v5684 = vld [vmem:[#allocation10 + $0x38] sm:$0xf]
        %v5685 = vld [vmem:[#allocation10 + $0x3c] sm:$0xf]
        %v5687 = vshrl.u32 %v5616, 16
        %v5689 = vrot.slane %v5687, 4
        %v5690 = vshll.u32 %v5616, 16
        %v5692 = vrot.slane %v5690, 5
        %v5693 = vor.u32 %v5689, %v5692
        %v5694 = vrot.slane %v5693, 4
        %v5696 = vshll.u32 %v5617, 16
        %v5698 = vrot.slane %v5696, 5
        %v5699 = vsel %vm1074, %v5694, %v5698
        %v5700 = vshrl.u32 %v5617, 16
        %v5702 = vrot.slane %v5700, 4
        %v5703 = vor.u32 %v5702, %v5698
        %v5704 = vrot.slane %v5703, 4
        %v5706 = vshll.u32 %v5618, 16
        %v5708 = vrot.slane %v5706, 5
        %v5709 = vsel %vm1074, %v5704, %v5708
        %v5711 = vshrl.u32 %v5619, 16
        %v5713 = vrot.slane %v5711, 4
        %v5714 = vshll.u32 %v5619, 16
        %v5716 = vrot.slane %v5714, 5
        %v5717 = vor.u32 %v5713, %v5716
        %v5718 = vrot.slane %v5717, 4
        %v5720 = vshll.u32 %v5620, 16
        %v5722 = vrot.slane %v5720, 5
        %v5723 = vsel %vm1074, %v5718, %v5722
        %v5724 = vshrl.u32 %v5620, 16
        %v5726 = vrot.slane %v5724, 4
        %v5727 = vor.u32 %v5726, %v5722
        %v5728 = vrot.slane %v5727, 4
        %v5730 = vshll.u32 %v5621, 16
        %v5732 = vrot.slane %v5730, 5
        %v5733 = vsel %vm1074, %v5728, %v5732
        %v5735 = vshrl.u32 %v5622, 16
        %v5737 = vrot.slane %v5735, 4
        %v5738 = vshll.u32 %v5622, 16
        %v5740 = vrot.slane %v5738, 5
        %v5741 = vor.u32 %v5737, %v5740
        %v5742 = vrot.slane %v5741, 4
        %v5744 = vshll.u32 %v5623, 16
        %v5746 = vrot.slane %v5744, 5
        %v5747 = vsel %vm1074, %v5742, %v5746
        %v5748 = vshrl.u32 %v5623, 16
        %v5750 = vrot.slane %v5748, 4
        %v5751 = vor.u32 %v5750, %v5746
        %v5752 = vrot.slane %v5751, 4
        %v5754 = vshll.u32 %v5624, 16
        %v5756 = vrot.slane %v5754, 5
        %v5757 = vsel %vm1074, %v5752, %v5756
        %v5759 = vshrl.u32 %v5625, 16
        %v5761 = vrot.slane %v5759, 4
        %v5762 = vshll.u32 %v5625, 16
        %v5764 = vrot.slane %v5762, 5
        %v5765 = vor.u32 %v5761, %v5764
        %v5766 = vrot.slane %v5765, 4
        %v5768 = vshll.u32 %v5626, 16
        %v5770 = vrot.slane %v5768, 5
        %v5771 = vsel %vm1074, %v5766, %v5770
        %v5772 = vshrl.u32 %v5626, 16
        %v5774 = vrot.slane %v5772, 4
        %v5775 = vor.u32 %v5774, %v5770
        %v5776 = vrot.slane %v5775, 4
        %v5778 = vshll.u32 %v5627, 16
        %v5780 = vrot.slane %v5778, 5
        %v5781 = vsel %vm1074, %v5776, %v5780
        %v5783 = vshrl.u32 %v5628, 16
        %v5785 = vrot.slane %v5783, 4
        %v5786 = vshll.u32 %v5628, 16
        %v5788 = vrot.slane %v5786, 5
        %v5789 = vor.u32 %v5785, %v5788
        %v5790 = vrot.slane %v5789, 4
        %v5792 = vshll.u32 %v5629, 16
        %v5794 = vrot.slane %v5792, 5
        %v5795 = vsel %vm1074, %v5790, %v5794
        %v5796 = vshrl.u32 %v5629, 16
        %v5798 = vrot.slane %v5796, 4
        %v5799 = vor.u32 %v5798, %v5794
        %v5800 = vrot.slane %v5799, 4
        %v5802 = vshll.u32 %v5630, 16
        %v5804 = vrot.slane %v5802, 5
        %v5805 = vsel %vm1074, %v5800, %v5804
        %v5807 = vshrl.u32 %v5631, 16
        %v5809 = vrot.slane %v5807, 4
        %v5810 = vshll.u32 %v5631, 16
        %v5812 = vrot.slane %v5810, 5
        %v5813 = vor.u32 %v5809, %v5812
        %v5814 = vrot.slane %v5813, 4
        %v5816 = vshll.u32 %v5632, 16
        %v5818 = vrot.slane %v5816, 5
        %v5819 = vsel %vm1074, %v5814, %v5818
        %v5820 = vshrl.u32 %v5632, 16
        %v5822 = vrot.slane %v5820, 4
        %v5823 = vor.u32 %v5822, %v5818
        %v5824 = vrot.slane %v5823, 4
        %v5826 = vshll.u32 %v5633, 16
        %v5828 = vrot.slane %v5826, 5
        %v5829 = vsel %vm1074, %v5824, %v5828
        %v5831 = vshrl.u32 %v5634, 16
        %v5833 = vrot.slane %v5831, 4
        %v5834 = vshll.u32 %v5634, 16
        %v5836 = vrot.slane %v5834, 5
        %v5837 = vor.u32 %v5833, %v5836
        %v5838 = vrot.slane %v5837, 4
        %v5840 = vshll.u32 %v5635, 16
        %v5842 = vrot.slane %v5840, 5
        %v5843 = vsel %vm1074, %v5838, %v5842
        %v5844 = vshrl.u32 %v5635, 16
        %v5846 = vrot.slane %v5844, 4
        %v5847 = vor.u32 %v5846, %v5842
        %v5848 = vrot.slane %v5847, 4
        %v5850 = vshll.u32 %v5636, 16
        %v5852 = vrot.slane %v5850, 5
        %v5853 = vsel %vm1074, %v5848, %v5852
        %v5855 = vshrl.u32 %v5637, 16
        %v5857 = vrot.slane %v5855, 4
        %v5858 = vshll.u32 %v5637, 16
        %v5860 = vrot.slane %v5858, 5
        %v5861 = vor.u32 %v5857, %v5860
        %v5862 = vrot.slane %v5861, 4
        %v5864 = vshll.u32 %v5638, 16
        %v5866 = vrot.slane %v5864, 5
        %v5867 = vsel %vm1074, %v5862, %v5866
        %v5868 = vshrl.u32 %v5638, 16
        %v5870 = vrot.slane %v5868, 4
        %v5871 = vor.u32 %v5870, %v5866
        %v5872 = vrot.slane %v5871, 4
        %v5874 = vshll.u32 %v5639, 16
        %v5876 = vrot.slane %v5874, 5
        %v5877 = vsel %vm1074, %v5872, %v5876
        %v5879 = vshrl.u32 %v5640, 16
        %v5881 = vrot.slane %v5879, 4
        %v5882 = vshll.u32 %v5640, 16
        %v5884 = vrot.slane %v5882, 5
        %v5885 = vor.u32 %v5881, %v5884
        %v5886 = vrot.slane %v5885, 4
        %v5888 = vshll.u32 %v5641, 16
        %v5890 = vrot.slane %v5888, 5
        %v5891 = vsel %vm1074, %v5886, %v5890
        %v5892 = vshrl.u32 %v5641, 16
        %v5894 = vrot.slane %v5892, 4
        %v5895 = vor.u32 %v5894, %v5890
        %v5896 = vrot.slane %v5895, 4
        %v5898 = vshll.u32 %v5642, 16
        %v5900 = vrot.slane %v5898, 5
        %v5901 = vsel %vm1074, %v5896, %v5900
        %v5903 = vshrl.u32 %v5643, 16
        %v5905 = vrot.slane %v5903, 4
        %v5906 = vshll.u32 %v5643, 16
        %v5908 = vrot.slane %v5906, 5
        %v5909 = vor.u32 %v5905, %v5908
        %v5910 = vrot.slane %v5909, 4
        %v5912 = vshll.u32 %v5644, 16
        %v5914 = vrot.slane %v5912, 5
        %v5915 = vsel %vm1074, %v5910, %v5914
        %v5916 = vshrl.u32 %v5644, 16
        %v5918 = vrot.slane %v5916, 4
        %v5919 = vor.u32 %v5918, %v5914
        %v5920 = vrot.slane %v5919, 4
        %v5922 = vshll.u32 %v5645, 16
        %v5924 = vrot.slane %v5922, 5
        %v5925 = vsel %vm1074, %v5920, %v5924
        %v5927 = vshrl.u32 %v5646, 16
        %v5929 = vrot.slane %v5927, 4
        %v5930 = vshll.u32 %v5646, 16
        %v5932 = vrot.slane %v5930, 5
        %v5933 = vor.u32 %v5929, %v5932
        %v5934 = vrot.slane %v5933, 4
        %v5936 = vshll.u32 %v5647, 16
        %v5938 = vrot.slane %v5936, 5
        %v5939 = vsel %vm1074, %v5934, %v5938
        %v5940 = vshrl.u32 %v5647, 16
        %v5942 = vrot.slane %v5940, 4
        %v5943 = vor.u32 %v5942, %v5938
        %v5944 = vrot.slane %v5943, 4
        %v5946 = vshll.u32 %v5648, 16
        %v5948 = vrot.slane %v5946, 5
        %v5949 = vsel %vm1074, %v5944, %v5948
        %v5951 = vshrl.u32 %v5649, 16
        %v5953 = vrot.slane %v5951, 4
        %v5954 = vshll.u32 %v5649, 16
        %v5956 = vrot.slane %v5954, 5
        %v5957 = vor.u32 %v5953, %v5956
        %v5958 = vrot.slane %v5957, 4
        %v5960 = vshll.u32 %v5650, 16
        %v5962 = vrot.slane %v5960, 5
        %v5963 = vsel %vm1074, %v5958, %v5962
        %v5964 = vshrl.u32 %v5650, 16
        %v5966 = vrot.slane %v5964, 4
        %v5967 = vor.u32 %v5966, %v5962
        %v5968 = vrot.slane %v5967, 4
        %v5970 = vshll.u32 %v5651, 16
        %v5972 = vrot.slane %v5970, 5
        %v5973 = vsel %vm1074, %v5968, %v5972
        %v5975 = vshrl.u32 %v5652, 16
        %v5977 = vrot.slane %v5975, 4
        %v5978 = vshll.u32 %v5652, 16
        %v5980 = vrot.slane %v5978, 5
        %v5981 = vor.u32 %v5977, %v5980
        %v5982 = vrot.slane %v5981, 4
        %v5984 = vshll.u32 %v5653, 16
        %v5986 = vrot.slane %v5984, 5
        %v5987 = vsel %vm1074, %v5982, %v5986
        %v5988 = vshrl.u32 %v5653, 16
        %v5990 = vrot.slane %v5988, 4
        %v5991 = vor.u32 %v5990, %v5986
        %v5992 = vrot.slane %v5991, 4
        %v5994 = vshll.u32 %v5654, 16
        %v5996 = vrot.slane %v5994, 5
        %v5997 = vsel %vm1074, %v5992, %v5996
        %v5999 = vshrl.u32 %v5655, 16
        %v6001 = vrot.slane %v5999, 4
        %v6002 = vshll.u32 %v5655, 16
        %v6004 = vrot.slane %v6002, 5
        %v6005 = vor.u32 %v6001, %v6004
        %v6006 = vrot.slane %v6005, 4
        %v6008 = vshll.u32 %v5656, 16
        %v6010 = vrot.slane %v6008, 5
        %v6011 = vsel %vm1074, %v6006, %v6010
        %v6012 = vshrl.u32 %v5656, 16
        %v6014 = vrot.slane %v6012, 4
        %v6015 = vor.u32 %v6014, %v6010
        %v6016 = vrot.slane %v6015, 4
        %v6018 = vshll.u32 %v5657, 16
        %v6020 = vrot.slane %v6018, 5
        %v6021 = vsel %vm1074, %v6016, %v6020
        %v6023 = vshrl.u32 %v5658, 16
        %v6025 = vrot.slane %v6023, 4
        %v6026 = vshll.u32 %v5658, 16
        %v6028 = vrot.slane %v6026, 5
        %v6029 = vor.u32 %v6025, %v6028
        %v6030 = vrot.slane %v6029, 4
        %v6032 = vshll.u32 %v5659, 16
        %v6034 = vrot.slane %v6032, 5
        %v6035 = vsel %vm1074, %v6030, %v6034
        %v6036 = vshrl.u32 %v5659, 16
        %v6038 = vrot.slane %v6036, 4
        %v6039 = vor.u32 %v6038, %v6034
        %v6040 = vrot.slane %v6039, 4
        %v6042 = vshll.u32 %v5660, 16
        %v6044 = vrot.slane %v6042, 5
        %v6045 = vsel %vm1074, %v6040, %v6044
        %v6047 = vshrl.u32 %v5661, 16
        %v6049 = vrot.slane %v6047, 4
        %v6050 = vshll.u32 %v5661, 16
        %v6052 = vrot.slane %v6050, 5
        %v6053 = vor.u32 %v6049, %v6052
        %v6054 = vrot.slane %v6053, 4
        %v6056 = vshll.u32 %v5662, 16
        %v6058 = vrot.slane %v6056, 5
        %v6059 = vsel %vm1074, %v6054, %v6058
        %v6060 = vshrl.u32 %v5662, 16
        %v6062 = vrot.slane %v6060, 4
        %v6063 = vor.u32 %v6062, %v6058
        %v6064 = vrot.slane %v6063, 4
        %v6066 = vshll.u32 %v5663, 16
        %v6068 = vrot.slane %v6066, 5
        %v6069 = vsel %vm1074, %v6064, %v6068
        %s6070 = scalar_lea.vmem [#allocation10], 64
        %v6071 = vld [vmem:[%s6070] sm:$0xf]
        %v6072 = vld [vmem:[%s6070 + $0x4] sm:$0xf]
        %v6073 = vld [vmem:[%s6070 + $0x8] sm:$0xf]
        %v6074 = vld [vmem:[%s6070 + $0xc] sm:$0xf]
        %v6075 = vld [vmem:[%s6070 + $0x10] sm:$0xf]
        %v6076 = vld [vmem:[%s6070 + $0x14] sm:$0xf]
        %v6077 = vld [vmem:[%s6070 + $0x18] sm:$0xf]
        %v6078 = vld [vmem:[%s6070 + $0x1c] sm:$0xf]
        %v6079 = vld [vmem:[%s6070 + $0x20] sm:$0xf]
        %v6080 = vld [vmem:[%s6070 + $0x24] sm:$0xf]
        %v6081 = vld [vmem:[%s6070 + $0x28] sm:$0xf]
        %v6082 = vld [vmem:[%s6070 + $0x2c] sm:$0xf]
        %v6083 = vld [vmem:[%s6070 + $0x30] sm:$0xf]
        %v6084 = vld [vmem:[%s6070 + $0x34] sm:$0xf]
        %v6085 = vld [vmem:[%s6070 + $0x38] sm:$0xf]
        %v6086 = vld [vmem:[%s6070 + $0x3c] sm:$0xf]
        %v6087 = vunpack.c.l.b16 %v5699
        %v6088 = vunpack.c.l.b16 %v5709
        %v6089 = vunpack.c.l.b16 %v5723
        %v6090 = vunpack.c.l.b16 %v5733
        %v6091 = vunpack.c.l.b16 %v5747
        %v6092 = vunpack.c.l.b16 %v5757
        %v6093 = vunpack.c.l.b16 %v5771
        %v6094 = vunpack.c.l.b16 %v5781
        %v6095 = vunpack.c.l.b16 %v5795
        %v6096 = vunpack.c.l.b16 %v5805
        %v6097 = vunpack.c.l.b16 %v5819
        %v6098 = vunpack.c.l.b16 %v5829
        %v6099 = vunpack.c.l.b16 %v5843
        %v6100 = vunpack.c.l.b16 %v5853
        %v6101 = vunpack.c.l.b16 %v5867
        %v6102 = vunpack.c.l.b16 %v5877
        %v6103 = vunpack.c.l.b16 %v5891
        %v6104 = vunpack.c.l.b16 %v5901
        %v6105 = vunpack.c.l.b16 %v5915
        %v6106 = vunpack.c.l.b16 %v5925
        %v6107 = vunpack.c.l.b16 %v5939
        %v6108 = vunpack.c.l.b16 %v5949
        %v6109 = vunpack.c.l.b16 %v5963
        %v6110 = vunpack.c.l.b16 %v5973
        %v6111 = vunpack.c.l.b16 %v5987
        %v6112 = vunpack.c.l.b16 %v5997
        %v6113 = vunpack.c.l.b16 %v6011
        %v6114 = vunpack.c.l.b16 %v6021
        %v6115 = vunpack.c.l.b16 %v6035
        %v6116 = vunpack.c.l.b16 %v6045
        %v6117 = vunpack.c.l.b16 %v6059
        %v6118 = vunpack.c.l.b16 %v6069
        %v6119 = vpack.c.b16 %v6088, %v6087
        %v6120 = vpack.c.b16 %v6090, %v6089
        %v6121 = vpack.c.b16 %v6092, %v6091
        %v6122 = vpack.c.b16 %v6094, %v6093
        %v6123 = vpack.c.b16 %v6096, %v6095
        %v6124 = vpack.c.b16 %v6098, %v6097
        %v6125 = vpack.c.b16 %v6100, %v6099
        %v6126 = vpack.c.b16 %v6102, %v6101
        %v6127 = vpack.c.b16 %v6104, %v6103
        %v6128 = vpack.c.b16 %v6106, %v6105
        %v6129 = vpack.c.b16 %v6108, %v6107
        %v6130 = vpack.c.b16 %v6110, %v6109
        %v6131 = vpack.c.b16 %v6112, %v6111
        %v6132 = vpack.c.b16 %v6114, %v6113
        %v6133 = vpack.c.b16 %v6116, %v6115
        %v6134 = vpack.c.b16 %v6118, %v6117
        %v6167 = vunpack.c.l.b16 %v6071
        %v6168 = vunpack.c.l.b16 %v6072
        %v6169 = vunpack.c.l.b16 %v6073
        %v6170 = vunpack.c.l.b16 %v6074
        %v6171 = vunpack.c.l.b16 %v6075
        %v6172 = vunpack.c.l.b16 %v6076
        %v6173 = vunpack.c.l.b16 %v6077
        %v6174 = vunpack.c.l.b16 %v6078
        %v6175 = vunpack.c.l.b16 %v6079
        %v6176 = vunpack.c.l.b16 %v6080
        %v6177 = vunpack.c.l.b16 %v6081
        %v6178 = vunpack.c.l.b16 %v6082
        %v6179 = vunpack.c.l.b16 %v6083
        %v6180 = vunpack.c.l.b16 %v6084
        %v6181 = vunpack.c.l.b16 %v6085
        %v6182 = vunpack.c.l.b16 %v6086
        %v6183 = vpack.c.b16 %v6168, %v6167
        %v6184 = vpack.c.b16 %v6170, %v6169
        %v6185 = vpack.c.b16 %v6172, %v6171
        %v6186 = vpack.c.b16 %v6174, %v6173
        %v6187 = vpack.c.b16 %v6176, %v6175
        %v6188 = vpack.c.b16 %v6178, %v6177
        %v6189 = vpack.c.b16 %v6180, %v6179
        %v6190 = vpack.c.b16 %v6182, %v6181
        %6199 = vmatprep.subr.bf16.mxu0 0
        %6200 = vmatpush1.bf16.msra.mxu0 %v6183
        %6201 = vmatprep.subr.bf16.mxu0 0
        %6202 = vmatpush1.bf16.msra.mxu0 %v6184
        %6203 = vmatprep.subr.bf16.mxu0 0
        %6204 = vmatpush1.bf16.msra.mxu0 %v6185
        %6205 = vmatprep.subr.bf16.mxu0 0
        %6206 = vmatpush1.bf16.msra.mxu0 %v6186
        %6207 = vmatprep.subr.bf16.mxu0 0
        %6208 = vmatpush1.bf16.msra.mxu0 %v6187
        %6209 = vmatprep.subr.bf16.mxu0 0
        %6210 = vmatpush1.bf16.msra.mxu0 %v6188
        %6211 = vmatprep.subr.bf16.mxu0 0
        %6212 = vmatpush1.bf16.msra.mxu0 %v6189
        %6213 = vmatprep.subr.bf16.mxu0 0
        %6214 = vmatpush1.bf16.msra.mxu0 %v6190
        %6215 = vmatprep.subr.bf16.mxu0 0
        %6216 = vmatpush1.bf16.msra.mxu0 0
        %6217 = vmatprep.subr.bf16.mxu0 0
        %6218 = vmatpush1.bf16.msra.mxu0 0
        %6219 = vmatprep.subr.bf16.mxu0 0
        %6220 = vmatpush1.bf16.msra.mxu0 0
        %6221 = vmatprep.subr.bf16.mxu0 0
        %6222 = vmatpush1.bf16.msra.mxu0 0
        %6223 = vmatprep.subr.bf16.mxu0 0
        %6224 = vmatpush1.bf16.msra.mxu0 0
        %6225 = vmatprep.subr.bf16.mxu0 0
        %6226 = vmatpush1.bf16.msra.mxu0 0
        %6227 = vmatprep.subr.bf16.mxu0 0
        %6228 = vmatpush1.bf16.msra.mxu0 0
        %6229 = vmatprep.subr.bf16.mxu0 0
        %6230 = vmatpush1.bf16.msra.mxu0 0
        %6231 = vmatprep.mubr.bf16.mxu0 0
        %6232 = vmatmul.mubr.bf16.gmra.mrb[0].mxu0 %v6119
        %v6233 = vpop.f32.mrb[0].mxu0
        %v6234 = vadd.f32 0.0, %v6233
        %v6235 = vpop.f32.mrb[0].mxu0
        %v6236 = vpop.f32.mrb[0].mxu0
        %v6237 = vadd.f32 0.0, %v6236
        %v6238 = vpop.f32.mrb[0].mxu0
        %6239 = vmatprep.mubr.bf16.mxu0 0
        %6240 = vmatmul.mubr.bf16.gmra.mrb[0].mxu0 %v6120
        %v6241 = vpop.f32.mrb[0].mxu0
        %v6242 = vadd.f32 0.0, %v6241
        %v6243 = vpop.f32.mrb[0].mxu0
        %v6244 = vpop.f32.mrb[0].mxu0
        %v6245 = vadd.f32 0.0, %v6244
        %v6246 = vpop.f32.mrb[0].mxu0
        %6247 = vmatprep.mubr.bf16.mxu0 0
        %6248 = vmatmul.mubr.bf16.gmra.mrb[0].mxu0 %v6121
        %v6249 = vpop.f32.mrb[0].mxu0
        %v6250 = vadd.f32 0.0, %v6249
        %v6251 = vpop.f32.mrb[0].mxu0
        %v6252 = vpop.f32.mrb[0].mxu0
        %v6253 = vadd.f32 0.0, %v6252
        %v6254 = vpop.f32.mrb[0].mxu0
        %6255 = vmatprep.mubr.bf16.mxu0 0
        %6256 = vmatmul.mubr.bf16.gmra.mrb[0].mxu0 %v6122
        %v6257 = vpop.f32.mrb[0].mxu0
        %v6258 = vadd.f32 0.0, %v6257
        %v6259 = vpop.f32.mrb[0].mxu0
        %v6260 = vpop.f32.mrb[0].mxu0
        %v6261 = vadd.f32 0.0, %v6260
        %v6262 = vpop.f32.mrb[0].mxu0
        %6263 = vmatprep.mubr.bf16.mxu0 0
        %6264 = vmatmul.mubr.bf16.gmra.mrb[0].mxu0 %v6123
        %v6265 = vpop.f32.mrb[0].mxu0
        %v6266 = vadd.f32 0.0, %v6265
        %v6267 = vpop.f32.mrb[0].mxu0
        %v6268 = vpop.f32.mrb[0].mxu0
        %v6269 = vadd.f32 0.0, %v6268
        %v6270 = vpop.f32.mrb[0].mxu0
        %6271 = vmatprep.mubr.bf16.mxu0 0
        %6272 = vmatmul.mubr.bf16.gmra.mrb[0].mxu0 %v6124
        %v6273 = vpop.f32.mrb[0].mxu0
        %v6274 = vadd.f32 0.0, %v6273
        %v6275 = vpop.f32.mrb[0].mxu0
        %v6276 = vpop.f32.mrb[0].mxu0
        %v6277 = vadd.f32 0.0, %v6276
        %v6278 = vpop.f32.mrb[0].mxu0
        %6279 = vmatprep.mubr.bf16.mxu0 0
        %6280 = vmatmul.mubr.bf16.gmra.mrb[0].mxu0 %v6125
        %v6281 = vpop.f32.mrb[0].mxu0
        %v6282 = vadd.f32 0.0, %v6281
        %v6283 = vpop.f32.mrb[0].mxu0
        %v6284 = vpop.f32.mrb[0].mxu0
        %v6285 = vadd.f32 0.0, %v6284
        %v6286 = vpop.f32.mrb[0].mxu0
        %6287 = vmatprep.mubr.bf16.mxu0 0
        %6288 = vmatmul.mubr.bf16.gmra.mrb[0].mxu0 %v6126
        %v6289 = vpop.f32.mrb[0].mxu0
        %v6290 = vadd.f32 0.0, %v6289
        %v6291 = vpop.f32.mrb[0].mxu0
        %v6292 = vpop.f32.mrb[0].mxu0
        %v6293 = vadd.f32 0.0, %v6292
        %v6294 = vpop.f32.mrb[0].mxu0
        %6295 = vmatprep.mubr.bf16.mxu0 0
        %6296 = vmatmul.mubr.bf16.gmra.mrb[0].mxu0 %v6127
        %v6297 = vpop.f32.mrb[0].mxu0
        %v6298 = vadd.f32 0.0, %v6297
        %v6299 = vpop.f32.mrb[0].mxu0
        %v6300 = vpop.f32.mrb[0].mxu0
        %v6301 = vadd.f32 0.0, %v6300
        %v6302 = vpop.f32.mrb[0].mxu0
        %6303 = vmatprep.mubr.bf16.mxu0 0
        %6304 = vmatmul.mubr.bf16.gmra.mrb[0].mxu0 %v6128
        %v6305 = vpop.f32.mrb[0].mxu0
        %v6306 = vadd.f32 0.0, %v6305
        %v6307 = vpop.f32.mrb[0].mxu0
        %v6308 = vpop.f32.mrb[0].mxu0
        %v6309 = vadd.f32 0.0, %v6308
        %v6310 = vpop.f32.mrb[0].mxu0
        %6311 = vmatprep.mubr.bf16.mxu0 0
        %6312 = vmatmul.mubr.bf16.gmra.mrb[0].mxu0 %v6129
        %v6313 = vpop.f32.mrb[0].mxu0
        %v6314 = vadd.f32 0.0, %v6313
        %v6315 = vpop.f32.mrb[0].mxu0
        %v6316 = vpop.f32.mrb[0].mxu0
        %v6317 = vadd.f32 0.0, %v6316
        %v6318 = vpop.f32.mrb[0].mxu0
        %6319 = vmatprep.mubr.bf16.mxu0 0
        %6320 = vmatmul.mubr.bf16.gmra.mrb[0].mxu0 %v6130
        %v6321 = vpop.f32.mrb[0].mxu0
        %v6322 = vadd.f32 0.0, %v6321
        %v6323 = vpop.f32.mrb[0].mxu0
        %v6324 = vpop.f32.mrb[0].mxu0
        %v6325 = vadd.f32 0.0, %v6324
        %v6326 = vpop.f32.mrb[0].mxu0
        %6327 = vmatprep.mubr.bf16.mxu0 0
        %6328 = vmatmul.mubr.bf16.gmra.mrb[0].mxu0 %v6131
        %v6329 = vpop.f32.mrb[0].mxu0
        %v6330 = vadd.f32 0.0, %v6329
        %v6331 = vpop.f32.mrb[0].mxu0
        %v6332 = vpop.f32.mrb[0].mxu0
        %v6333 = vadd.f32 0.0, %v6332
        %v6334 = vpop.f32.mrb[0].mxu0
        %6335 = vmatprep.mubr.bf16.mxu0 0
        %6336 = vmatmul.mubr.bf16.gmra.mrb[0].mxu0 %v6132
        %v6337 = vpop.f32.mrb[0].mxu0
        %v6338 = vadd.f32 0.0, %v6337
        %v6339 = vpop.f32.mrb[0].mxu0
        %v6340 = vpop.f32.mrb[0].mxu0
        %v6341 = vadd.f32 0.0, %v6340
        %v6342 = vpop.f32.mrb[0].mxu0
        %6343 = vmatprep.mubr.bf16.mxu0 0
        %6344 = vmatmul.mubr.bf16.gmra.mrb[0].mxu0 %v6133
        %v6345 = vpop.f32.mrb[0].mxu0
        %v6346 = vadd.f32 0.0, %v6345
        %v6347 = vpop.f32.mrb[0].mxu0
        %v6348 = vpop.f32.mrb[0].mxu0
        %v6349 = vadd.f32 0.0, %v6348
        %v6350 = vpop.f32.mrb[0].mxu0
        %6351 = vmatprep.mubr.bf16.mxu0 0
        %6352 = vmatmul.mubr.bf16.gmra.mrb[0].mxu0 %v6134
        %v6353 = vpop.f32.mrb[0].mxu0
        %v6354 = vadd.f32 0.0, %v6353
        %v6355 = vpop.f32.mrb[0].mxu0
        %v6356 = vpop.f32.mrb[0].mxu0
        %v6357 = vadd.f32 0.0, %v6356
        %v6358 = vpop.f32.mrb[0].mxu0
        %6359 = vdwg.mxu0
        %v6392 = vunpack.c.l.b16 %v5616
        %v6393 = vunpack.c.l.b16 %v5617
        %v6394 = vunpack.c.l.b16 %v5619
        %v6395 = vunpack.c.l.b16 %v5620
        %v6396 = vunpack.c.l.b16 %v5622
        %v6397 = vunpack.c.l.b16 %v5623
        %v6398 = vunpack.c.l.b16 %v5625
        %v6399 = vunpack.c.l.b16 %v5626
        %v6400 = vunpack.c.l.b16 %v5628
        %v6401 = vunpack.c.l.b16 %v5629
        %v6402 = vunpack.c.l.b16 %v5631
        %v6403 = vunpack.c.l.b16 %v5632
        %v6404 = vunpack.c.l.b16 %v5634
        %v6405 = vunpack.c.l.b16 %v5635
        %v6406 = vunpack.c.l.b16 %v5637
        %v6407 = vunpack.c.l.b16 %v5638
        %v6408 = vunpack.c.l.b16 %v5640
        %v6409 = vunpack.c.l.b16 %v5641
        %v6410 = vunpack.c.l.b16 %v5643
        %v6411 = vunpack.c.l.b16 %v5644
        %v6412 = vunpack.c.l.b16 %v5646
        %v6413 = vunpack.c.l.b16 %v5647
        %v6414 = vunpack.c.l.b16 %v5649
        %v6415 = vunpack.c.l.b16 %v5650
        %v6416 = vunpack.c.l.b16 %v5652
        %v6417 = vunpack.c.l.b16 %v5653
        %v6418 = vunpack.c.l.b16 %v5655
        %v6419 = vunpack.c.l.b16 %v5656
        %v6420 = vunpack.c.l.b16 %v5658
        %v6421 = vunpack.c.l.b16 %v5659
        %v6422 = vunpack.c.l.b16 %v5661
        %v6423 = vunpack.c.l.b16 %v5662
        %v6424 = vpack.c.b16 %v6393, %v6392
        %v6425 = vpack.c.b16 %v6395, %v6394
        %v6426 = vpack.c.b16 %v6397, %v6396
        %v6427 = vpack.c.b16 %v6399, %v6398
        %v6428 = vpack.c.b16 %v6401, %v6400
        %v6429 = vpack.c.b16 %v6403, %v6402
        %v6430 = vpack.c.b16 %v6405, %v6404
        %v6431 = vpack.c.b16 %v6407, %v6406
        %v6432 = vpack.c.b16 %v6409, %v6408
        %v6433 = vpack.c.b16 %v6411, %v6410
        %v6434 = vpack.c.b16 %v6413, %v6412
        %v6435 = vpack.c.b16 %v6415, %v6414
        %v6436 = vpack.c.b16 %v6417, %v6416
        %v6437 = vpack.c.b16 %v6419, %v6418
        %v6438 = vpack.c.b16 %v6421, %v6420
        %v6439 = vpack.c.b16 %v6423, %v6422
        %v6472 = vunpack.c.l.b16 %v5670
        %v6473 = vunpack.c.l.b16 %v5671
        %v6474 = vunpack.c.l.b16 %v5672
        %v6475 = vunpack.c.l.b16 %v5673
        %v6476 = vunpack.c.l.b16 %v5674
        %v6477 = vunpack.c.l.b16 %v5675
        %v6478 = vunpack.c.l.b16 %v5676
        %v6479 = vunpack.c.l.b16 %v5677
        %v6480 = vunpack.c.l.b16 %v5678
        %v6481 = vunpack.c.l.b16 %v5679
        %v6482 = vunpack.c.l.b16 %v5680
        %v6483 = vunpack.c.l.b16 %v5681
        %v6484 = vunpack.c.l.b16 %v5682
        %v6485 = vunpack.c.l.b16 %v5683
        %v6486 = vunpack.c.l.b16 %v5684
        %v6487 = vunpack.c.l.b16 %v5685
        %v6488 = vpack.c.b16 %v6473, %v6472
        %v6489 = vpack.c.b16 %v6475, %v6474
        %v6490 = vpack.c.b16 %v6477, %v6476
        %v6491 = vpack.c.b16 %v6479, %v6478
        %v6492 = vpack.c.b16 %v6481, %v6480
        %v6493 = vpack.c.b16 %v6483, %v6482
        %v6494 = vpack.c.b16 %v6485, %v6484
        %v6495 = vpack.c.b16 %v6487, %v6486
        %6504 = vmatprep.subr.bf16.mxu0 0
        %6505 = vmatpush1.bf16.msra.mxu0 %v6488
        %6506 = vmatprep.subr.bf16.mxu0 0
        %6507 = vmatpush1.bf16.msra.mxu0 %v6489
        %6508 = vmatprep.subr.bf16.mxu0 0
        %6509 = vmatpush1.bf16.msra.mxu0 %v6490
        %6510 = vmatprep.subr.bf16.mxu0 0
        %6511 = vmatpush1.bf16.msra.mxu0 %v6491
        %6512 = vmatprep.subr.bf16.mxu0 0
        %6513 = vmatpush1.bf16.msra.mxu0 %v6492
        %6514 = vmatprep.subr.bf16.mxu0 0
        %6515 = vmatpush1.bf16.msra.mxu0 %v6493
        %6516 = vmatprep.subr.bf16.mxu0 0
        %6517 = vmatpush1.bf16.msra.mxu0 %v6494
        %6518 = vmatprep.subr.bf16.mxu0 0
        %6519 = vmatpush1.bf16.msra.mxu0 %v6495
        %6520 = vmatprep.subr.bf16.mxu0 0
        %6521 = vmatpush1.bf16.msra.mxu0 0
        %6522 = vmatprep.subr.bf16.mxu0 0
        %6523 = vmatpush1.bf16.msra.mxu0 0
        %6524 = vmatprep.subr.bf16.mxu0 0
        %6525 = vmatpush1.bf16.msra.mxu0 0
        %6526 = vmatprep.subr.bf16.mxu0 0
        %6527 = vmatpush1.bf16.msra.mxu0 0
        %6528 = vmatprep.subr.bf16.mxu0 0
        %6529 = vmatpush1.bf16.msra.mxu0 0
        %6530 = vmatprep.subr.bf16.mxu0 0
        %6531 = vmatpush1.bf16.msra.mxu0 0
        %6532 = vmatprep.subr.bf16.mxu0 0
        %6533 = vmatpush1.bf16.msra.mxu0 0
        %6534 = vmatprep.subr.bf16.mxu0 0
        %6535 = vmatpush1.bf16.msra.mxu0 0
        %6536 = vmatprep.mubr.bf16.mxu0 0
        %6537 = vmatmul.mubr.bf16.gmra.mrb[0].mxu0 %v6424
        %v6538 = vpop.f32.mrb[0].mxu0
        %v6539 = vadd.f32 %v6234, %v6538
        %v6540 = vpop.f32.mrb[0].mxu0
        %v6541 = vpop.f32.mrb[0].mxu0
        %v6542 = vadd.f32 %v6237, %v6541
        %v6543 = vpop.f32.mrb[0].mxu0
        %6544 = vmatprep.mubr.bf16.mxu0 0
        %6545 = vmatmul.mubr.bf16.gmra.mrb[0].mxu0 %v6425
        %v6546 = vpop.f32.mrb[0].mxu0
        %v6547 = vadd.f32 %v6242, %v6546
        %v6548 = vpop.f32.mrb[0].mxu0
        %v6549 = vpop.f32.mrb[0].mxu0
        %v6550 = vadd.f32 %v6245, %v6549
        %v6551 = vpop.f32.mrb[0].mxu0
        %6552 = vmatprep.mubr.bf16.mxu0 0
        %6553 = vmatmul.mubr.bf16.gmra.mrb[0].mxu0 %v6426
        %v6554 = vpop.f32.mrb[0].mxu0
        %v6555 = vadd.f32 %v6250, %v6554
        %v6556 = vpop.f32.mrb[0].mxu0
        %v6557 = vpop.f32.mrb[0].mxu0
        %v6558 = vadd.f32 %v6253, %v6557
        %v6559 = vpop.f32.mrb[0].mxu0
        %6560 = vmatprep.mubr.bf16.mxu0 0
        %6561 = vmatmul.mubr.bf16.gmra.mrb[0].mxu0 %v6427
        %v6562 = vpop.f32.mrb[0].mxu0
        %v6563 = vadd.f32 %v6258, %v6562
        %v6564 = vpop.f32.mrb[0].mxu0
        %v6565 = vpop.f32.mrb[0].mxu0
        %v6566 = vadd.f32 %v6261, %v6565
        %v6567 = vpop.f32.mrb[0].mxu0
        %6568 = vmatprep.mubr.bf16.mxu0 0
        %6569 = vmatmul.mubr.bf16.gmra.mrb[0].mxu0 %v6428
        %v6570 = vpop.f32.mrb[0].mxu0
        %v6571 = vadd.f32 %v6266, %v6570
        %v6572 = vpop.f32.mrb[0].mxu0
        %v6573 = vpop.f32.mrb[0].mxu0
        %v6574 = vadd.f32 %v6269, %v6573
        %v6575 = vpop.f32.mrb[0].mxu0
        %6576 = vmatprep.mubr.bf16.mxu0 0
        %6577 = vmatmul.mubr.bf16.gmra.mrb[0].mxu0 %v6429
        %v6578 = vpop.f32.mrb[0].mxu0
        %v6579 = vadd.f32 %v6274, %v6578
        %v6580 = vpop.f32.mrb[0].mxu0
        %v6581 = vpop.f32.mrb[0].mxu0
        %v6582 = vadd.f32 %v6277, %v6581
        %v6583 = vpop.f32.mrb[0].mxu0
        %6584 = vmatprep.mubr.bf16.mxu0 0
        %6585 = vmatmul.mubr.bf16.gmra.mrb[0].mxu0 %v6430
        %v6586 = vpop.f32.mrb[0].mxu0
        %v6587 = vadd.f32 %v6282, %v6586
        %v6588 = vpop.f32.mrb[0].mxu0
        %v6589 = vpop.f32.mrb[0].mxu0
        %v6590 = vadd.f32 %v6285, %v6589
        %v6591 = vpop.f32.mrb[0].mxu0
        %6592 = vmatprep.mubr.bf16.mxu0 0
        %6593 = vmatmul.mubr.bf16.gmra.mrb[0].mxu0 %v6431
        %v6594 = vpop.f32.mrb[0].mxu0
        %v6595 = vadd.f32 %v6290, %v6594
        %v6596 = vpop.f32.mrb[0].mxu0
        %v6597 = vpop.f32.mrb[0].mxu0
        %v6598 = vadd.f32 %v6293, %v6597
        %v6599 = vpop.f32.mrb[0].mxu0
        %6600 = vmatprep.mubr.bf16.mxu0 0
        %6601 = vmatmul.mubr.bf16.gmra.mrb[0].mxu0 %v6432
        %v6602 = vpop.f32.mrb[0].mxu0
        %v6603 = vadd.f32 %v6298, %v6602
        %v6604 = vpop.f32.mrb[0].mxu0
        %v6605 = vpop.f32.mrb[0].mxu0
        %v6606 = vadd.f32 %v6301, %v6605
        %v6607 = vpop.f32.mrb[0].mxu0
        %6608 = vmatprep.mubr.bf16.mxu0 0
        %6609 = vmatmul.mubr.bf16.gmra.mrb[0].mxu0 %v6433
        %v6610 = vpop.f32.mrb[0].mxu0
        %v6611 = vadd.f32 %v6306, %v6610
        %v6612 = vpop.f32.mrb[0].mxu0
        %v6613 = vpop.f32.mrb[0].mxu0
        %v6614 = vadd.f32 %v6309, %v6613
        %v6615 = vpop.f32.mrb[0].mxu0
        %6616 = vmatprep.mubr.bf16.mxu0 0
        %6617 = vmatmul.mubr.bf16.gmra.mrb[0].mxu0 %v6434
        %v6618 = vpop.f32.mrb[0].mxu0
        %v6619 = vadd.f32 %v6314, %v6618
        %v6620 = vpop.f32.mrb[0].mxu0
        %v6621 = vpop.f32.mrb[0].mxu0
        %v6622 = vadd.f32 %v6317, %v6621
        %v6623 = vpop.f32.mrb[0].mxu0
        %6624 = vmatprep.mubr.bf16.mxu0 0
        %6625 = vmatmul.mubr.bf16.gmra.mrb[0].mxu0 %v6435
        %v6626 = vpop.f32.mrb[0].mxu0
        %v6627 = vadd.f32 %v6322, %v6626
        %v6628 = vpop.f32.mrb[0].mxu0
        %v6629 = vpop.f32.mrb[0].mxu0
        %v6630 = vadd.f32 %v6325, %v6629
        %v6631 = vpop.f32.mrb[0].mxu0
        %6632 = vmatprep.mubr.bf16.mxu0 0
        %6633 = vmatmul.mubr.bf16.gmra.mrb[0].mxu0 %v6436
        %v6634 = vpop.f32.mrb[0].mxu0
        %v6635 = vadd.f32 %v6330, %v6634
        %v6636 = vpop.f32.mrb[0].mxu0
        %v6637 = vpop.f32.mrb[0].mxu0
        %v6638 = vadd.f32 %v6333, %v6637
        %v6639 = vpop.f32.mrb[0].mxu0
        %6640 = vmatprep.mubr.bf16.mxu0 0
        %6641 = vmatmul.mubr.bf16.gmra.mrb[0].mxu0 %v6437
        %v6642 = vpop.f32.mrb[0].mxu0
        %v6643 = vadd.f32 %v6338, %v6642
        %v6644 = vpop.f32.mrb[0].mxu0
        %v6645 = vpop.f32.mrb[0].mxu0
        %v6646 = vadd.f32 %v6341, %v6645
        %v6647 = vpop.f32.mrb[0].mxu0
        %6648 = vmatprep.mubr.bf16.mxu0 0
        %6649 = vmatmul.mubr.bf16.gmra.mrb[0].mxu0 %v6438
        %v6650 = vpop.f32.mrb[0].mxu0
        %v6651 = vadd.f32 %v6346, %v6650
        %v6652 = vpop.f32.mrb[0].mxu0
        %v6653 = vpop.f32.mrb[0].mxu0
        %v6654 = vadd.f32 %v6349, %v6653
        %v6655 = vpop.f32.mrb[0].mxu0
        %6656 = vmatprep.mubr.bf16.mxu0 0
        %6657 = vmatmul.mubr.bf16.gmra.mrb[0].mxu0 %v6439
        %v6658 = vpop.f32.mrb[0].mxu0
        %v6659 = vadd.f32 %v6354, %v6658
        %v6660 = vpop.f32.mrb[0].mxu0
        %v6661 = vpop.f32.mrb[0].mxu0
        %v6662 = vadd.f32 %v6357, %v6661
        %v6663 = vpop.f32.mrb[0].mxu0
        %6664 = vdwg.mxu0
        %v6681 = vrot.slane %v5616, 5
        %v6682 = vrot.slane %v6681, 4
        %v6683 = vrot.slane %v5617, 5
        %v6684 = vsel %vm2200, %v6682, %v6683
        %v6685 = vrot.slane %v6683, 4
        %v6686 = vrot.slane %v5618, 5
        %v6687 = vsel %vm2200, %v6685, %v6686
        %v6688 = vrot.slane %v5619, 5
        %v6689 = vrot.slane %v6688, 4
        %v6690 = vrot.slane %v5620, 5
        %v6691 = vsel %vm2200, %v6689, %v6690
        %v6692 = vrot.slane %v6690, 4
        %v6693 = vrot.slane %v5621, 5
        %v6694 = vsel %vm2200, %v6692, %v6693
        %v6695 = vrot.slane %v5622, 5
        %v6696 = vrot.slane %v6695, 4
        %v6697 = vrot.slane %v5623, 5
        %v6698 = vsel %vm2200, %v6696, %v6697
        %v6699 = vrot.slane %v6697, 4
        %v6700 = vrot.slane %v5624, 5
        %v6701 = vsel %vm2200, %v6699, %v6700
        %v6702 = vrot.slane %v5625, 5
        %v6703 = vrot.slane %v6702, 4
        %v6704 = vrot.slane %v5626, 5
        %v6705 = vsel %vm2200, %v6703, %v6704
        %v6706 = vrot.slane %v6704, 4
        %v6707 = vrot.slane %v5627, 5
        %v6708 = vsel %vm2200, %v6706, %v6707
        %v6709 = vrot.slane %v5628, 5
        %v6710 = vrot.slane %v6709, 4
        %v6711 = vrot.slane %v5629, 5
        %v6712 = vsel %vm2200, %v6710, %v6711
        %v6713 = vrot.slane %v6711, 4
        %v6714 = vrot.slane %v5630, 5
        %v6715 = vsel %vm2200, %v6713, %v6714
        %v6716 = vrot.slane %v5631, 5
        %v6717 = vrot.slane %v6716, 4
        %v6718 = vrot.slane %v5632, 5
        %v6719 = vsel %vm2200, %v6717, %v6718
        %v6720 = vrot.slane %v6718, 4
        %v6721 = vrot.slane %v5633, 5
        %v6722 = vsel %vm2200, %v6720, %v6721
        %v6723 = vrot.slane %v5634, 5
        %v6724 = vrot.slane %v6723, 4
        %v6725 = vrot.slane %v5635, 5
        %v6726 = vsel %vm2200, %v6724, %v6725
        %v6727 = vrot.slane %v6725, 4
        %v6728 = vrot.slane %v5636, 5
        %v6729 = vsel %vm2200, %v6727, %v6728
        %v6730 = vrot.slane %v5637, 5
        %v6731 = vrot.slane %v6730, 4
        %v6732 = vrot.slane %v5638, 5
        %v6733 = vsel %vm2200, %v6731, %v6732
        %v6734 = vrot.slane %v6732, 4
        %v6735 = vrot.slane %v5639, 5
        %v6736 = vsel %vm2200, %v6734, %v6735
        %v6737 = vrot.slane %v5640, 5
        %v6738 = vrot.slane %v6737, 4
        %v6739 = vrot.slane %v5641, 5
        %v6740 = vsel %vm2200, %v6738, %v6739
        %v6741 = vrot.slane %v6739, 4
        %v6742 = vrot.slane %v5642, 5
        %v6743 = vsel %vm2200, %v6741, %v6742
        %v6744 = vrot.slane %v5643, 5
        %v6745 = vrot.slane %v6744, 4
        %v6746 = vrot.slane %v5644, 5
        %v6747 = vsel %vm2200, %v6745, %v6746
        %v6748 = vrot.slane %v6746, 4
        %v6749 = vrot.slane %v5645, 5
        %v6750 = vsel %vm2200, %v6748, %v6749
        %v6751 = vrot.slane %v5646, 5
        %v6752 = vrot.slane %v6751, 4
        %v6753 = vrot.slane %v5647, 5
        %v6754 = vsel %vm2200, %v6752, %v6753
        %v6755 = vrot.slane %v6753, 4
        %v6756 = vrot.slane %v5648, 5
        %v6757 = vsel %vm2200, %v6755, %v6756
        %v6758 = vrot.slane %v5649, 5
        %v6759 = vrot.slane %v6758, 4
        %v6760 = vrot.slane %v5650, 5
        %v6761 = vsel %vm2200, %v6759, %v6760
        %v6762 = vrot.slane %v6760, 4
        %v6763 = vrot.slane %v5651, 5
        %v6764 = vsel %vm2200, %v6762, %v6763
        %v6765 = vrot.slane %v5652, 5
        %v6766 = vrot.slane %v6765, 4
        %v6767 = vrot.slane %v5653, 5
        %v6768 = vsel %vm2200, %v6766, %v6767
        %v6769 = vrot.slane %v6767, 4
        %v6770 = vrot.slane %v5654, 5
        %v6771 = vsel %vm2200, %v6769, %v6770
        %v6772 = vrot.slane %v5655, 5
        %v6773 = vrot.slane %v6772, 4
        %v6774 = vrot.slane %v5656, 5
        %v6775 = vsel %vm2200, %v6773, %v6774
        %v6776 = vrot.slane %v6774, 4
        %v6777 = vrot.slane %v5657, 5
        %v6778 = vsel %vm2200, %v6776, %v6777
        %v6779 = vrot.slane %v5658, 5
        %v6780 = vrot.slane %v6779, 4
        %v6781 = vrot.slane %v5659, 5
        %v6782 = vsel %vm2200, %v6780, %v6781
        %v6783 = vrot.slane %v6781, 4
        %v6784 = vrot.slane %v5660, 5
        %v6785 = vsel %vm2200, %v6783, %v6784
        %v6786 = vrot.slane %v5661, 5
        %v6787 = vrot.slane %v6786, 4
        %v6788 = vrot.slane %v5662, 5
        %v6789 = vsel %vm2200, %v6787, %v6788
        %v6790 = vrot.slane %v6788, 4
        %v6791 = vrot.slane %v5663, 5
        %v6792 = vsel %vm2200, %v6790, %v6791
        %s6793 = scalar_lea.vmem [#allocation10], 128
        %v6794 = vld [vmem:[%s6793] sm:$0xf]
        %v6795 = vld [vmem:[%s6793 + $0x4] sm:$0xf]
        %v6796 = vld [vmem:[%s6793 + $0x8] sm:$0xf]
        %v6797 = vld [vmem:[%s6793 + $0xc] sm:$0xf]
        %v6798 = vld [vmem:[%s6793 + $0x10] sm:$0xf]
        %v6799 = vld [vmem:[%s6793 + $0x14] sm:$0xf]
        %v6800 = vld [vmem:[%s6793 + $0x18] sm:$0xf]
        %v6801 = vld [vmem:[%s6793 + $0x1c] sm:$0xf]
        %v6802 = vld [vmem:[%s6793 + $0x20] sm:$0xf]
        %v6803 = vld [vmem:[%s6793 + $0x24] sm:$0xf]
        %v6804 = vld [vmem:[%s6793 + $0x28] sm:$0xf]
        %v6805 = vld [vmem:[%s6793 + $0x2c] sm:$0xf]
        %v6806 = vld [vmem:[%s6793 + $0x30] sm:$0xf]
        %v6807 = vld [vmem:[%s6793 + $0x34] sm:$0xf]
        %v6808 = vld [vmem:[%s6793 + $0x38] sm:$0xf]
        %v6809 = vld [vmem:[%s6793 + $0x3c] sm:$0xf]
        %v6810 = vunpack.c.l.b16 %v6684
        %v6811 = vunpack.c.l.b16 %v6687
        %v6812 = vunpack.c.l.b16 %v6691
        %v6813 = vunpack.c.l.b16 %v6694
        %v6814 = vunpack.c.l.b16 %v6698
        %v6815 = vunpack.c.l.b16 %v6701
        %v6816 = vunpack.c.l.b16 %v6705
        %v6817 = vunpack.c.l.b16 %v6708
        %v6818 = vunpack.c.l.b16 %v6712
        %v6819 = vunpack.c.l.b16 %v6715
        %v6820 = vunpack.c.l.b16 %v6719
        %v6821 = vunpack.c.l.b16 %v6722
        %v6822 = vunpack.c.l.b16 %v6726
        %v6823 = vunpack.c.l.b16 %v6729
        %v6824 = vunpack.c.l.b16 %v6733
        %v6825 = vunpack.c.l.b16 %v6736
        %v6826 = vunpack.c.l.b16 %v6740
        %v6827 = vunpack.c.l.b16 %v6743
        %v6828 = vunpack.c.l.b16 %v6747
        %v6829 = vunpack.c.l.b16 %v6750
        %v6830 = vunpack.c.l.b16 %v6754
        %v6831 = vunpack.c.l.b16 %v6757
        %v6832 = vunpack.c.l.b16 %v6761
        %v6833 = vunpack.c.l.b16 %v6764
        %v6834 = vunpack.c.l.b16 %v6768
        %v6835 = vunpack.c.l.b16 %v6771
        %v6836 = vunpack.c.l.b16 %v6775
        %v6837 = vunpack.c.l.b16 %v6778
        %v6838 = vunpack.c.l.b16 %v6782
        %v6839 = vunpack.c.l.b16 %v6785
        %v6840 = vunpack.c.l.b16 %v6789
        %v6841 = vunpack.c.l.b16 %v6792
        %v6842 = vpack.c.b16 %v6811, %v6810
        %v6843 = vpack.c.b16 %v6813, %v6812
        %v6844 = vpack.c.b16 %v6815, %v6814
        %v6845 = vpack.c.b16 %v6817, %v6816
        %v6846 = vpack.c.b16 %v6819, %v6818
        %v6847 = vpack.c.b16 %v6821, %v6820
        %v6848 = vpack.c.b16 %v6823, %v6822
        %v6849 = vpack.c.b16 %v6825, %v6824
        %v6850 = vpack.c.b16 %v6827, %v6826
        %v6851 = vpack.c.b16 %v6829, %v6828
        %v6852 = vpack.c.b16 %v6831, %v6830
        %v6853 = vpack.c.b16 %v6833, %v6832
        %v6854 = vpack.c.b16 %v6835, %v6834
        %v6855 = vpack.c.b16 %v6837, %v6836
        %v6856 = vpack.c.b16 %v6839, %v6838
        %v6857 = vpack.c.b16 %v6841, %v6840
        %v6890 = vunpack.c.l.b16 %v6794
        %v6891 = vunpack.c.l.b16 %v6795
        %v6892 = vunpack.c.l.b16 %v6796
        %v6893 = vunpack.c.l.b16 %v6797
        %v6894 = vunpack.c.l.b16 %v6798
        %v6895 = vunpack.c.l.b16 %v6799
        %v6896 = vunpack.c.l.b16 %v6800
        %v6897 = vunpack.c.l.b16 %v6801
        %v6898 = vunpack.c.l.b16 %v6802
        %v6899 = vunpack.c.l.b16 %v6803
        %v6900 = vunpack.c.l.b16 %v6804
        %v6901 = vunpack.c.l.b16 %v6805
        %v6902 = vunpack.c.l.b16 %v6806
        %v6903 = vunpack.c.l.b16 %v6807
        %v6904 = vunpack.c.l.b16 %v6808
        %v6905 = vunpack.c.l.b16 %v6809
        %v6906 = vpack.c.b16 %v6891, %v6890
        %v6907 = vpack.c.b16 %v6893, %v6892
        %v6908 = vpack.c.b16 %v6895, %v6894
        %v6909 = vpack.c.b16 %v6897, %v6896
        %v6910 = vpack.c.b16 %v6899, %v6898
        %v6911 = vpack.c.b16 %v6901, %v6900
        %v6912 = vpack.c.b16 %v6903, %v6902
        %v6913 = vpack.c.b16 %v6905, %v6904
        %6922 = vmatprep.subr.bf16.mxu0 0
        %6923 = vmatpush1.bf16.msra.mxu0 %v6906
        %6924 = vmatprep.subr.bf16.mxu0 0
        %6925 = vmatpush1.bf16.msra.mxu0 %v6907
        %6926 = vmatprep.subr.bf16.mxu0 0
        %6927 = vmatpush1.bf16.msra.mxu0 %v6908
        %6928 = vmatprep.subr.bf16.mxu0 0
        %6929 = vmatpush1.bf16.msra.mxu0 %v6909
        %6930 = vmatprep.subr.bf16.mxu0 0
        %6931 = vmatpush1.bf16.msra.mxu0 %v6910
        %6932 = vmatprep.subr.bf16.mxu0 0
        %6933 = vmatpush1.bf16.msra.mxu0 %v6911
        %6934 = vmatprep.subr.bf16.mxu0 0
        %6935 = vmatpush1.bf16.msra.mxu0 %v6912
        %6936 = vmatprep.subr.bf16.mxu0 0
        %6937 = vmatpush1.bf16.msra.mxu0 %v6913
        %6938 = vmatprep.subr.bf16.mxu0 0
        %6939 = vmatpush1.bf16.msra.mxu0 0
        %6940 = vmatprep.subr.bf16.mxu0 0
        %6941 = vmatpush1.bf16.msra.mxu0 0
        %6942 = vmatprep.subr.bf16.mxu0 0
        %6943 = vmatpush1.bf16.msra.mxu0 0
        %6944 = vmatprep.subr.bf16.mxu0 0
        %6945 = vmatpush1.bf16.msra.mxu0 0
        %6946 = vmatprep.subr.bf16.mxu0 0
        %6947 = vmatpush1.bf16.msra.mxu0 0
        %6948 = vmatprep.subr.bf16.mxu0 0
        %6949 = vmatpush1.bf16.msra.mxu0 0
        %6950 = vmatprep.subr.bf16.mxu0 0
        %6951 = vmatpush1.bf16.msra.mxu0 0
        %6952 = vmatprep.subr.bf16.mxu0 0
        %6953 = vmatpush1.bf16.msra.mxu0 0
        %6954 = vmatprep.mubr.bf16.mxu0 0
        %6955 = vmatmul.mubr.bf16.gmra.mrb[0].mxu0 %v6842
        %v6956 = vpop.f32.mrb[0].mxu0
        %v6957 = vadd.f32 0.0, %v6956
        %v6958 = vpop.f32.mrb[0].mxu0
        %v6959 = vpop.f32.mrb[0].mxu0
        %v6960 = vadd.f32 0.0, %v6959
        %v6961 = vpop.f32.mrb[0].mxu0
        %6962 = vmatprep.mubr.bf16.mxu0 0
        %6963 = vmatmul.mubr.bf16.gmra.mrb[0].mxu0 %v6843
        %v6964 = vpop.f32.mrb[0].mxu0
        %v6965 = vadd.f32 0.0, %v6964
        %v6966 = vpop.f32.mrb[0].mxu0
        %v6967 = vpop.f32.mrb[0].mxu0
        %v6968 = vadd.f32 0.0, %v6967
        %v6969 = vpop.f32.mrb[0].mxu0
        %6970 = vmatprep.mubr.bf16.mxu0 0
        %6971 = vmatmul.mubr.bf16.gmra.mrb[0].mxu0 %v6844
        %v6972 = vpop.f32.mrb[0].mxu0
        %v6973 = vadd.f32 0.0, %v6972
        %v6974 = vpop.f32.mrb[0].mxu0
        %v6975 = vpop.f32.mrb[0].mxu0
        %v6976 = vadd.f32 0.0, %v6975
        %v6977 = vpop.f32.mrb[0].mxu0
        %6978 = vmatprep.mubr.bf16.mxu0 0
        %6979 = vmatmul.mubr.bf16.gmra.mrb[0].mxu0 %v6845
        %v6980 = vpop.f32.mrb[0].mxu0
        %v6981 = vadd.f32 0.0, %v6980
        %v6982 = vpop.f32.mrb[0].mxu0
        %v6983 = vpop.f32.mrb[0].mxu0
        %v6984 = vadd.f32 0.0, %v6983
        %v6985 = vpop.f32.mrb[0].mxu0
        %6986 = vmatprep.mubr.bf16.mxu0 0
        %6987 = vmatmul.mubr.bf16.gmra.mrb[0].mxu0 %v6846
        %v6988 = vpop.f32.mrb[0].mxu0
        %v6989 = vadd.f32 0.0, %v6988
        %v6990 = vpop.f32.mrb[0].mxu0
        %v6991 = vpop.f32.mrb[0].mxu0
        %v6992 = vadd.f32 0.0, %v6991
        %v6993 = vpop.f32.mrb[0].mxu0
        %6994 = vmatprep.mubr.bf16.mxu0 0
        %6995 = vmatmul.mubr.bf16.gmra.mrb[0].mxu0 %v6847
        %v6996 = vpop.f32.mrb[0].mxu0
        %v6997 = vadd.f32 0.0, %v6996
        %v6998 = vpop.f32.mrb[0].mxu0
        %v6999 = vpop.f32.mrb[0].mxu0
        %v7000 = vadd.f32 0.0, %v6999
        %v7001 = vpop.f32.mrb[0].mxu0
        %7002 = vmatprep.mubr.bf16.mxu0 0
        %7003 = vmatmul.mubr.bf16.gmra.mrb[0].mxu0 %v6848
        %v7004 = vpop.f32.mrb[0].mxu0
        %v7005 = vadd.f32 0.0, %v7004
        %v7006 = vpop.f32.mrb[0].mxu0
        %v7007 = vpop.f32.mrb[0].mxu0
        %v7008 = vadd.f32 0.0, %v7007
        %v7009 = vpop.f32.mrb[0].mxu0
        %7010 = vmatprep.mubr.bf16.mxu0 0
        %7011 = vmatmul.mubr.bf16.gmra.mrb[0].mxu0 %v6849
        %v7012 = vpop.f32.mrb[0].mxu0
        %v7013 = vadd.f32 0.0, %v7012
        %v7014 = vpop.f32.mrb[0].mxu0
        %v7015 = vpop.f32.mrb[0].mxu0
        %v7016 = vadd.f32 0.0, %v7015
        %v7017 = vpop.f32.mrb[0].mxu0
        %7018 = vmatprep.mubr.bf16.mxu0 0
        %7019 = vmatmul.mubr.bf16.gmra.mrb[0].mxu0 %v6850
        %v7020 = vpop.f32.mrb[0].mxu0
        %v7021 = vadd.f32 0.0, %v7020
        %v7022 = vpop.f32.mrb[0].mxu0
        %v7023 = vpop.f32.mrb[0].mxu0
        %v7024 = vadd.f32 0.0, %v7023
        %v7025 = vpop.f32.mrb[0].mxu0
        %7026 = vmatprep.mubr.bf16.mxu0 0
        %7027 = vmatmul.mubr.bf16.gmra.mrb[0].mxu0 %v6851
        %v7028 = vpop.f32.mrb[0].mxu0
        %v7029 = vadd.f32 0.0, %v7028
        %v7030 = vpop.f32.mrb[0].mxu0
        %v7031 = vpop.f32.mrb[0].mxu0
        %v7032 = vadd.f32 0.0, %v7031
        %v7033 = vpop.f32.mrb[0].mxu0
        %7034 = vmatprep.mubr.bf16.mxu0 0
        %7035 = vmatmul.mubr.bf16.gmra.mrb[0].mxu0 %v6852
        %v7036 = vpop.f32.mrb[0].mxu0
        %v7037 = vadd.f32 0.0, %v7036
        %v7038 = vpop.f32.mrb[0].mxu0
        %v7039 = vpop.f32.mrb[0].mxu0
        %v7040 = vadd.f32 0.0, %v7039
        %v7041 = vpop.f32.mrb[0].mxu0
        %7042 = vmatprep.mubr.bf16.mxu0 0
        %7043 = vmatmul.mubr.bf16.gmra.mrb[0].mxu0 %v6853
        %v7044 = vpop.f32.mrb[0].mxu0
        %v7045 = vadd.f32 0.0, %v7044
        %v7046 = vpop.f32.mrb[0].mxu0
        %v7047 = vpop.f32.mrb[0].mxu0
        %v7048 = vadd.f32 0.0, %v7047
        %v7049 = vpop.f32.mrb[0].mxu0
        %7050 = vmatprep.mubr.bf16.mxu0 0
        %7051 = vmatmul.mubr.bf16.gmra.mrb[0].mxu0 %v6854
        %v7052 = vpop.f32.mrb[0].mxu0
        %v7053 = vadd.f32 0.0, %v7052
        %v7054 = vpop.f32.mrb[0].mxu0
        %v7055 = vpop.f32.mrb[0].mxu0
        %v7056 = vadd.f32 0.0, %v7055
        %v7057 = vpop.f32.mrb[0].mxu0
        %7058 = vmatprep.mubr.bf16.mxu0 0
        %7059 = vmatmul.mubr.bf16.gmra.mrb[0].mxu0 %v6855
        %v7060 = vpop.f32.mrb[0].mxu0
        %v7061 = vadd.f32 0.0, %v7060
        %v7062 = vpop.f32.mrb[0].mxu0
        %v7063 = vpop.f32.mrb[0].mxu0
        %v7064 = vadd.f32 0.0, %v7063
        %v7065 = vpop.f32.mrb[0].mxu0
        %7066 = vmatprep.mubr.bf16.mxu0 0
        %7067 = vmatmul.mubr.bf16.gmra.mrb[0].mxu0 %v6856
        %v7068 = vpop.f32.mrb[0].mxu0
        %v7069 = vadd.f32 0.0, %v7068
        %v7070 = vpop.f32.mrb[0].mxu0
        %v7071 = vpop.f32.mrb[0].mxu0
        %v7072 = vadd.f32 0.0, %v7071
        %v7073 = vpop.f32.mrb[0].mxu0
        %7074 = vmatprep.mubr.bf16.mxu0 0
        %7075 = vmatmul.mubr.bf16.gmra.mrb[0].mxu0 %v6857
        %v7076 = vpop.f32.mrb[0].mxu0
        %v7077 = vadd.f32 0.0, %v7076
        %v7078 = vpop.f32.mrb[0].mxu0
        %v7079 = vpop.f32.mrb[0].mxu0
        %v7080 = vadd.f32 0.0, %v7079
        %v7081 = vpop.f32.mrb[0].mxu0
        %7082 = vdwg.mxu0
        %v7083 = vadd.f32 %v6539, %v6957
        %v7084 = vadd.f32 %v6542, %v6960
        %v7085 = vadd.f32 %v6547, %v6965
        %v7086 = vadd.f32 %v6550, %v6968
        %v7087 = vadd.f32 %v6555, %v6973
        %v7088 = vadd.f32 %v6558, %v6976
        %v7089 = vadd.f32 %v6563, %v6981
        %v7090 = vadd.f32 %v6566, %v6984
        %v7091 = vadd.f32 %v6571, %v6989
        %v7092 = vadd.f32 %v6574, %v6992
        %v7093 = vadd.f32 %v6579, %v6997
        %v7094 = vadd.f32 %v6582, %v7000
        %v7095 = vadd.f32 %v6587, %v7005
        %v7096 = vadd.f32 %v6590, %v7008
        %v7097 = vadd.f32 %v6595, %v7013
        %v7098 = vadd.f32 %v6598, %v7016
        %v7099 = vadd.f32 %v6603, %v7021
        %v7100 = vadd.f32 %v6606, %v7024
        %v7101 = vadd.f32 %v6611, %v7029
        %v7102 = vadd.f32 %v6614, %v7032
        %v7103 = vadd.f32 %v6619, %v7037
        %v7104 = vadd.f32 %v6622, %v7040
        %v7105 = vadd.f32 %v6627, %v7045
        %v7106 = vadd.f32 %v6630, %v7048
        %v7107 = vadd.f32 %v6635, %v7053
        %v7108 = vadd.f32 %v6638, %v7056
        %v7109 = vadd.f32 %v6643, %v7061
        %v7110 = vadd.f32 %v6646, %v7064
        %v7111 = vadd.f32 %v6651, %v7069
        %v7112 = vadd.f32 %v6654, %v7072
        %v7113 = vadd.f32 %v6659, %v7077
        %v7114 = vadd.f32 %v6662, %v7080
        %s7115 = scalar_lea.vmem [#allocation10], 192
        %v7116 = vld [vmem:[%s7115] sm:$0xf]
        %v7117 = vld [vmem:[%s7115 + $0x4] sm:$0xf]
        %v7118 = vld [vmem:[%s7115 + $0x8] sm:$0xf]
        %v7119 = vld [vmem:[%s7115 + $0xc] sm:$0xf]
        %v7120 = vld [vmem:[%s7115 + $0x10] sm:$0xf]
        %v7121 = vld [vmem:[%s7115 + $0x14] sm:$0xf]
        %v7122 = vld [vmem:[%s7115 + $0x18] sm:$0xf]
        %v7123 = vld [vmem:[%s7115 + $0x1c] sm:$0xf]
        %v7124 = vld [vmem:[%s7115 + $0x20] sm:$0xf]
        %v7125 = vld [vmem:[%s7115 + $0x24] sm:$0xf]
        %v7126 = vld [vmem:[%s7115 + $0x28] sm:$0xf]
        %v7127 = vld [vmem:[%s7115 + $0x2c] sm:$0xf]
        %v7128 = vld [vmem:[%s7115 + $0x30] sm:$0xf]
        %v7129 = vld [vmem:[%s7115 + $0x34] sm:$0xf]
        %v7130 = vld [vmem:[%s7115 + $0x38] sm:$0xf]
        %v7131 = vld [vmem:[%s7115 + $0x3c] sm:$0xf]
        %v7134 = vunpack.c.l.b16 %v5664
        %v7135 = vunpack.c.l.b16 %v5665
        %v7136 = vpack.c.b16 %v7135, %v7134
        %v7154 = vunpack.c.l.b16 %v7116
        %v7155 = vunpack.c.l.b16 %v7117
        %v7156 = vunpack.c.l.b16 %v7118
        %v7157 = vunpack.c.l.b16 %v7119
        %v7158 = vunpack.c.l.b16 %v7120
        %v7159 = vunpack.c.l.b16 %v7121
        %v7160 = vunpack.c.l.b16 %v7122
        %v7161 = vunpack.c.l.b16 %v7123
        %v7162 = vunpack.c.l.b16 %v7124
        %v7163 = vunpack.c.l.b16 %v7125
        %v7164 = vunpack.c.l.b16 %v7126
        %v7165 = vunpack.c.l.b16 %v7127
        %v7166 = vunpack.c.l.b16 %v7128
        %v7167 = vunpack.c.l.b16 %v7129
        %v7168 = vunpack.c.l.b16 %v7130
        %v7169 = vunpack.c.l.b16 %v7131
        %v7170 = vpack.c.b16 %v7155, %v7154
        %v7171 = vpack.c.b16 %v7157, %v7156
        %v7172 = vpack.c.b16 %v7159, %v7158
        %v7173 = vpack.c.b16 %v7161, %v7160
        %v7174 = vpack.c.b16 %v7163, %v7162
        %v7175 = vpack.c.b16 %v7165, %v7164
        %v7176 = vpack.c.b16 %v7167, %v7166
        %v7177 = vpack.c.b16 %v7169, %v7168
        %7186 = vmatprep.subr.bf16.mxu0 0
        %7187 = vmatpush1.bf16.msra.mxu0 %v7170
        %7188 = vmatprep.subr.bf16.mxu0 0
        %7189 = vmatpush1.bf16.msra.mxu0 %v7171
        %7190 = vmatprep.subr.bf16.mxu0 0
        %7191 = vmatpush1.bf16.msra.mxu0 %v7172
        %7192 = vmatprep.subr.bf16.mxu0 0
        %7193 = vmatpush1.bf16.msra.mxu0 %v7173
        %7194 = vmatprep.subr.bf16.mxu0 0
        %7195 = vmatpush1.bf16.msra.mxu0 %v7174
        %7196 = vmatprep.subr.bf16.mxu0 0
        %7197 = vmatpush1.bf16.msra.mxu0 %v7175
        %7198 = vmatprep.subr.bf16.mxu0 0
        %7199 = vmatpush1.bf16.msra.mxu0 %v7176
        %7200 = vmatprep.subr.bf16.mxu0 0
        %7201 = vmatpush1.bf16.msra.mxu0 %v7177
        %7202 = vmatprep.subr.bf16.mxu0 0
        %7203 = vmatpush1.bf16.msra.mxu0 0
        %7204 = vmatprep.subr.bf16.mxu0 0
        %7205 = vmatpush1.bf16.msra.mxu0 0
        %7206 = vmatprep.subr.bf16.mxu0 0
        %7207 = vmatpush1.bf16.msra.mxu0 0
        %7208 = vmatprep.subr.bf16.mxu0 0
        %7209 = vmatpush1.bf16.msra.mxu0 0
        %7210 = vmatprep.subr.bf16.mxu0 0
        %7211 = vmatpush1.bf16.msra.mxu0 0
        %7212 = vmatprep.subr.bf16.mxu0 0
        %7213 = vmatpush1.bf16.msra.mxu0 0
        %7214 = vmatprep.subr.bf16.mxu0 0
        %7215 = vmatpush1.bf16.msra.mxu0 0
        %7216 = vmatprep.subr.bf16.mxu0 0
        %7217 = vmatpush1.bf16.msra.mxu0 0
        %7218 = vmatprep.mubr.bf16.mxu0 0
        %7219 = vmatmul.mubr.bf16.gmra.mrb[0].mxu0 %v6425
        %v7220 = vpop.f32.mrb[0].mxu0
        %v7221 = vadd.f32 0.0, %v7220
        %v7222 = vpop.f32.mrb[0].mxu0
        %v7223 = vpop.f32.mrb[0].mxu0
        %v7224 = vadd.f32 0.0, %v7223
        %v7225 = vpop.f32.mrb[0].mxu0
        %7226 = vmatprep.mubr.bf16.mxu0 0
        %7227 = vmatmul.mubr.bf16.gmra.mrb[0].mxu0 %v6426
        %v7228 = vpop.f32.mrb[0].mxu0
        %v7229 = vadd.f32 0.0, %v7228
        %v7230 = vpop.f32.mrb[0].mxu0
        %v7231 = vpop.f32.mrb[0].mxu0
        %v7232 = vadd.f32 0.0, %v7231
        %v7233 = vpop.f32.mrb[0].mxu0
        %7234 = vmatprep.mubr.bf16.mxu0 0
        %7235 = vmatmul.mubr.bf16.gmra.mrb[0].mxu0 %v6427
        %v7236 = vpop.f32.mrb[0].mxu0
        %v7237 = vadd.f32 0.0, %v7236
        %v7238 = vpop.f32.mrb[0].mxu0
        %v7239 = vpop.f32.mrb[0].mxu0
        %v7240 = vadd.f32 0.0, %v7239
        %v7241 = vpop.f32.mrb[0].mxu0
        %7242 = vmatprep.mubr.bf16.mxu0 0
        %7243 = vmatmul.mubr.bf16.gmra.mrb[0].mxu0 %v6428
        %v7244 = vpop.f32.mrb[0].mxu0
        %v7245 = vadd.f32 0.0, %v7244
        %v7246 = vpop.f32.mrb[0].mxu0
        %v7247 = vpop.f32.mrb[0].mxu0
        %v7248 = vadd.f32 0.0, %v7247
        %v7249 = vpop.f32.mrb[0].mxu0
        %7250 = vmatprep.mubr.bf16.mxu0 0
        %7251 = vmatmul.mubr.bf16.gmra.mrb[0].mxu0 %v6429
        %v7252 = vpop.f32.mrb[0].mxu0
        %v7253 = vadd.f32 0.0, %v7252
        %v7254 = vpop.f32.mrb[0].mxu0
        %v7255 = vpop.f32.mrb[0].mxu0
        %v7256 = vadd.f32 0.0, %v7255
        %v7257 = vpop.f32.mrb[0].mxu0
        %7258 = vmatprep.mubr.bf16.mxu0 0
        %7259 = vmatmul.mubr.bf16.gmra.mrb[0].mxu0 %v6430
        %v7260 = vpop.f32.mrb[0].mxu0
        %v7261 = vadd.f32 0.0, %v7260
        %v7262 = vpop.f32.mrb[0].mxu0
        %v7263 = vpop.f32.mrb[0].mxu0
        %v7264 = vadd.f32 0.0, %v7263
        %v7265 = vpop.f32.mrb[0].mxu0
        %7266 = vmatprep.mubr.bf16.mxu0 0
        %7267 = vmatmul.mubr.bf16.gmra.mrb[0].mxu0 %v6431
        %v7268 = vpop.f32.mrb[0].mxu0
        %v7269 = vadd.f32 0.0, %v7268
        %v7270 = vpop.f32.mrb[0].mxu0
        %v7271 = vpop.f32.mrb[0].mxu0
        %v7272 = vadd.f32 0.0, %v7271
        %v7273 = vpop.f32.mrb[0].mxu0
        %7274 = vmatprep.mubr.bf16.mxu0 0
        %7275 = vmatmul.mubr.bf16.gmra.mrb[0].mxu0 %v6432
        %v7276 = vpop.f32.mrb[0].mxu0
        %v7277 = vadd.f32 0.0, %v7276
        %v7278 = vpop.f32.mrb[0].mxu0
        %v7279 = vpop.f32.mrb[0].mxu0
        %v7280 = vadd.f32 0.0, %v7279
        %v7281 = vpop.f32.mrb[0].mxu0
        %7282 = vmatprep.mubr.bf16.mxu0 0
        %7283 = vmatmul.mubr.bf16.gmra.mrb[0].mxu0 %v6433
        %v7284 = vpop.f32.mrb[0].mxu0
        %v7285 = vadd.f32 0.0, %v7284
        %v7286 = vpop.f32.mrb[0].mxu0
        %v7287 = vpop.f32.mrb[0].mxu0
        %v7288 = vadd.f32 0.0, %v7287
        %v7289 = vpop.f32.mrb[0].mxu0
        %7290 = vmatprep.mubr.bf16.mxu0 0
        %7291 = vmatmul.mubr.bf16.gmra.mrb[0].mxu0 %v6434
        %v7292 = vpop.f32.mrb[0].mxu0
        %v7293 = vadd.f32 0.0, %v7292
        %v7294 = vpop.f32.mrb[0].mxu0
        %v7295 = vpop.f32.mrb[0].mxu0
        %v7296 = vadd.f32 0.0, %v7295
        %v7297 = vpop.f32.mrb[0].mxu0
        %7298 = vmatprep.mubr.bf16.mxu0 0
        %7299 = vmatmul.mubr.bf16.gmra.mrb[0].mxu0 %v6435
        %v7300 = vpop.f32.mrb[0].mxu0
        %v7301 = vadd.f32 0.0, %v7300
        %v7302 = vpop.f32.mrb[0].mxu0
        %v7303 = vpop.f32.mrb[0].mxu0
        %v7304 = vadd.f32 0.0, %v7303
        %v7305 = vpop.f32.mrb[0].mxu0
        %7306 = vmatprep.mubr.bf16.mxu0 0
        %7307 = vmatmul.mubr.bf16.gmra.mrb[0].mxu0 %v6436
        %v7308 = vpop.f32.mrb[0].mxu0
        %v7309 = vadd.f32 0.0, %v7308
        %v7310 = vpop.f32.mrb[0].mxu0
        %v7311 = vpop.f32.mrb[0].mxu0
        %v7312 = vadd.f32 0.0, %v7311
        %v7313 = vpop.f32.mrb[0].mxu0
        %7314 = vmatprep.mubr.bf16.mxu0 0
        %7315 = vmatmul.mubr.bf16.gmra.mrb[0].mxu0 %v6437
        %v7316 = vpop.f32.mrb[0].mxu0
        %v7317 = vadd.f32 0.0, %v7316
        %v7318 = vpop.f32.mrb[0].mxu0
        %v7319 = vpop.f32.mrb[0].mxu0
        %v7320 = vadd.f32 0.0, %v7319
        %v7321 = vpop.f32.mrb[0].mxu0
        %7322 = vmatprep.mubr.bf16.mxu0 0
        %7323 = vmatmul.mubr.bf16.gmra.mrb[0].mxu0 %v6438
        %v7324 = vpop.f32.mrb[0].mxu0
        %v7325 = vadd.f32 0.0, %v7324
        %v7326 = vpop.f32.mrb[0].mxu0
        %v7327 = vpop.f32.mrb[0].mxu0
        %v7328 = vadd.f32 0.0, %v7327
        %v7329 = vpop.f32.mrb[0].mxu0
        %7330 = vmatprep.mubr.bf16.mxu0 0
        %7331 = vmatmul.mubr.bf16.gmra.mrb[0].mxu0 %v6439
        %v7332 = vpop.f32.mrb[0].mxu0
        %v7333 = vadd.f32 0.0, %v7332
        %v7334 = vpop.f32.mrb[0].mxu0
        %v7335 = vpop.f32.mrb[0].mxu0
        %v7336 = vadd.f32 0.0, %v7335
        %v7337 = vpop.f32.mrb[0].mxu0
        %7338 = vmatprep.mubr.bf16.mxu0 0
        %7339 = vmatmul.mubr.bf16.gmra.mrb[0].mxu0 %v7136
        %v7340 = vpop.f32.mrb[0].mxu0
        %v7341 = vadd.f32 0.0, %v7340
        %v7342 = vpop.f32.mrb[0].mxu0
        %v7343 = vpop.f32.mrb[0].mxu0
        %v7344 = vadd.f32 0.0, %v7343
        %v7345 = vpop.f32.mrb[0].mxu0
        %7346 = vdwg.mxu0
        %v7347 = vadd.f32 %v7083, %v7221
        %v7348 = vadd.f32 %v7084, %v7224
        %v7349 = vadd.f32 %v7085, %v7229
        %v7350 = vadd.f32 %v7086, %v7232
        %v7351 = vadd.f32 %v7087, %v7237
        %v7352 = vadd.f32 %v7088, %v7240
        %v7353 = vadd.f32 %v7089, %v7245
        %v7354 = vadd.f32 %v7090, %v7248
        %v7355 = vadd.f32 %v7091, %v7253
        %v7356 = vadd.f32 %v7092, %v7256
        %v7357 = vadd.f32 %v7093, %v7261
        %v7358 = vadd.f32 %v7094, %v7264
        %v7359 = vadd.f32 %v7095, %v7269
        %v7360 = vadd.f32 %v7096, %v7272
        %v7361 = vadd.f32 %v7097, %v7277
        %v7362 = vadd.f32 %v7098, %v7280
        %v7363 = vadd.f32 %v7099, %v7285
        %v7364 = vadd.f32 %v7100, %v7288
        %v7365 = vadd.f32 %v7101, %v7293
        %v7366 = vadd.f32 %v7102, %v7296
        %v7367 = vadd.f32 %v7103, %v7301
        %v7368 = vadd.f32 %v7104, %v7304
        %v7369 = vadd.f32 %v7105, %v7309
        %v7370 = vadd.f32 %v7106, %v7312
        %v7371 = vadd.f32 %v7107, %v7317
        %v7372 = vadd.f32 %v7108, %v7320
        %v7373 = vadd.f32 %v7109, %v7325
        %v7374 = vadd.f32 %v7110, %v7328
        %v7375 = vadd.f32 %v7111, %v7333
        %v7376 = vadd.f32 %v7112, %v7336
        %v7377 = vadd.f32 %v7113, %v7341
        %v7378 = vadd.f32 %v7114, %v7344
        %v7380 = vshrl.u32 %v5664, 16
        %v7382 = vrot.slane %v7380, 4
        %v7383 = vshll.u32 %v5664, 16
        %v7385 = vrot.slane %v7383, 5
        %v7386 = vor.u32 %v7382, %v7385
        %v7387 = vrot.slane %v7386, 4
        %v7389 = vshll.u32 %v5665, 16
        %v7391 = vrot.slane %v7389, 5
        %v7392 = vsel %vm1074, %v7387, %v7391
        %v7393 = vshrl.u32 %v5665, 16
        %v7395 = vrot.slane %v7393, 4
        %v7396 = vor.u32 %v7395, %v7391
        %v7397 = vrot.slane %v7396, 4
        %v7399 = vshll.u32 %v5666, 16
        %v7401 = vrot.slane %v7399, 5
        %v7402 = vsel %vm1074, %v7397, %v7401
        %s7403 = scalar_lea.vmem [#allocation10], 256
        %v7404 = vld [vmem:[%s7403] sm:$0xf]
        %v7405 = vld [vmem:[%s7403 + $0x4] sm:$0xf]
        %v7406 = vld [vmem:[%s7403 + $0x8] sm:$0xf]
        %v7407 = vld [vmem:[%s7403 + $0xc] sm:$0xf]
        %v7408 = vld [vmem:[%s7403 + $0x10] sm:$0xf]
        %v7409 = vld [vmem:[%s7403 + $0x14] sm:$0xf]
        %v7410 = vld [vmem:[%s7403 + $0x18] sm:$0xf]
        %v7411 = vld [vmem:[%s7403 + $0x1c] sm:$0xf]
        %v7412 = vld [vmem:[%s7403 + $0x20] sm:$0xf]
        %v7413 = vld [vmem:[%s7403 + $0x24] sm:$0xf]
        %v7414 = vld [vmem:[%s7403 + $0x28] sm:$0xf]
        %v7415 = vld [vmem:[%s7403 + $0x2c] sm:$0xf]
        %v7416 = vld [vmem:[%s7403 + $0x30] sm:$0xf]
        %v7417 = vld [vmem:[%s7403 + $0x34] sm:$0xf]
        %v7418 = vld [vmem:[%s7403 + $0x38] sm:$0xf]
        %v7419 = vld [vmem:[%s7403 + $0x3c] sm:$0xf]
        %v7420 = vunpack.c.l.b16 %v7392
        %v7421 = vunpack.c.l.b16 %v7402
        %v7422 = vpack.c.b16 %v7421, %v7420
        %v7440 = vunpack.c.l.b16 %v7404
        %v7441 = vunpack.c.l.b16 %v7405
        %v7442 = vunpack.c.l.b16 %v7406
        %v7443 = vunpack.c.l.b16 %v7407
        %v7444 = vunpack.c.l.b16 %v7408
        %v7445 = vunpack.c.l.b16 %v7409
        %v7446 = vunpack.c.l.b16 %v7410
        %v7447 = vunpack.c.l.b16 %v7411
        %v7448 = vunpack.c.l.b16 %v7412
        %v7449 = vunpack.c.l.b16 %v7413
        %v7450 = vunpack.c.l.b16 %v7414
        %v7451 = vunpack.c.l.b16 %v7415
        %v7452 = vunpack.c.l.b16 %v7416
        %v7453 = vunpack.c.l.b16 %v7417
        %v7454 = vunpack.c.l.b16 %v7418
        %v7455 = vunpack.c.l.b16 %v7419
        %v7456 = vpack.c.b16 %v7441, %v7440
        %v7457 = vpack.c.b16 %v7443, %v7442
        %v7458 = vpack.c.b16 %v7445, %v7444
        %v7459 = vpack.c.b16 %v7447, %v7446
        %v7460 = vpack.c.b16 %v7449, %v7448
        %v7461 = vpack.c.b16 %v7451, %v7450
        %v7462 = vpack.c.b16 %v7453, %v7452
        %v7463 = vpack.c.b16 %v7455, %v7454
        %7472 = vmatprep.subr.bf16.mxu0 0
        %7473 = vmatpush1.bf16.msra.mxu0 %v7456
        %7474 = vmatprep.subr.bf16.mxu0 0
        %7475 = vmatpush1.bf16.msra.mxu0 %v7457
        %7476 = vmatprep.subr.bf16.mxu0 0
        %7477 = vmatpush1.bf16.msra.mxu0 %v7458
        %7478 = vmatprep.subr.bf16.mxu0 0
        %7479 = vmatpush1.bf16.msra.mxu0 %v7459
        %7480 = vmatprep.subr.bf16.mxu0 0
        %7481 = vmatpush1.bf16.msra.mxu0 %v7460
        %7482 = vmatprep.subr.bf16.mxu0 0
        %7483 = vmatpush1.bf16.msra.mxu0 %v7461
        %7484 = vmatprep.subr.bf16.mxu0 0
        %7485 = vmatpush1.bf16.msra.mxu0 %v7462
        %7486 = vmatprep.subr.bf16.mxu0 0
        %7487 = vmatpush1.bf16.msra.mxu0 %v7463
        %7488 = vmatprep.subr.bf16.mxu0 0
        %7489 = vmatpush1.bf16.msra.mxu0 0
        %7490 = vmatprep.subr.bf16.mxu0 0
        %7491 = vmatpush1.bf16.msra.mxu0 0
        %7492 = vmatprep.subr.bf16.mxu0 0
        %7493 = vmatpush1.bf16.msra.mxu0 0
        %7494 = vmatprep.subr.bf16.mxu0 0
        %7495 = vmatpush1.bf16.msra.mxu0 0
        %7496 = vmatprep.subr.bf16.mxu0 0
        %7497 = vmatpush1.bf16.msra.mxu0 0
        %7498 = vmatprep.subr.bf16.mxu0 0
        %7499 = vmatpush1.bf16.msra.mxu0 0
        %7500 = vmatprep.subr.bf16.mxu0 0
        %7501 = vmatpush1.bf16.msra.mxu0 0
        %7502 = vmatprep.subr.bf16.mxu0 0
        %7503 = vmatpush1.bf16.msra.mxu0 0
        %7504 = vmatprep.mubr.bf16.mxu0 0
        %7505 = vmatmul.mubr.bf16.gmra.mrb[0].mxu0 %v6120
        %v7506 = vpop.f32.mrb[0].mxu0
        %v7507 = vadd.f32 0.0, %v7506
        %v7508 = vpop.f32.mrb[0].mxu0
        %v7509 = vpop.f32.mrb[0].mxu0
        %v7510 = vadd.f32 0.0, %v7509
        %v7511 = vpop.f32.mrb[0].mxu0
        %7512 = vmatprep.mubr.bf16.mxu0 0
        %7513 = vmatmul.mubr.bf16.gmra.mrb[0].mxu0 %v6121
        %v7514 = vpop.f32.mrb[0].mxu0
        %v7515 = vadd.f32 0.0, %v7514
        %v7516 = vpop.f32.mrb[0].mxu0
        %v7517 = vpop.f32.mrb[0].mxu0
        %v7518 = vadd.f32 0.0, %v7517
        %v7519 = vpop.f32.mrb[0].mxu0
        %7520 = vmatprep.mubr.bf16.mxu0 0
        %7521 = vmatmul.mubr.bf16.gmra.mrb[0].mxu0 %v6122
        %v7522 = vpop.f32.mrb[0].mxu0
        %v7523 = vadd.f32 0.0, %v7522
        %v7524 = vpop.f32.mrb[0].mxu0
        %v7525 = vpop.f32.mrb[0].mxu0
        %v7526 = vadd.f32 0.0, %v7525
        %v7527 = vpop.f32.mrb[0].mxu0
        %7528 = vmatprep.mubr.bf16.mxu0 0
        %7529 = vmatmul.mubr.bf16.gmra.mrb[0].mxu0 %v6123
        %v7530 = vpop.f32.mrb[0].mxu0
        %v7531 = vadd.f32 0.0, %v7530
        %v7532 = vpop.f32.mrb[0].mxu0
        %v7533 = vpop.f32.mrb[0].mxu0
        %v7534 = vadd.f32 0.0, %v7533
        %v7535 = vpop.f32.mrb[0].mxu0
        %7536 = vmatprep.mubr.bf16.mxu0 0
        %7537 = vmatmul.mubr.bf16.gmra.mrb[0].mxu0 %v6124
        %v7538 = vpop.f32.mrb[0].mxu0
        %v7539 = vadd.f32 0.0, %v7538
        %v7540 = vpop.f32.mrb[0].mxu0
        %v7541 = vpop.f32.mrb[0].mxu0
        %v7542 = vadd.f32 0.0, %v7541
        %v7543 = vpop.f32.mrb[0].mxu0
        %7544 = vmatprep.mubr.bf16.mxu0 0
        %7545 = vmatmul.mubr.bf16.gmra.mrb[0].mxu0 %v6125
        %v7546 = vpop.f32.mrb[0].mxu0
        %v7547 = vadd.f32 0.0, %v7546
        %v7548 = vpop.f32.mrb[0].mxu0
        %v7549 = vpop.f32.mrb[0].mxu0
        %v7550 = vadd.f32 0.0, %v7549
        %v7551 = vpop.f32.mrb[0].mxu0
        %7552 = vmatprep.mubr.bf16.mxu0 0
        %7553 = vmatmul.mubr.bf16.gmra.mrb[0].mxu0 %v6126
        %v7554 = vpop.f32.mrb[0].mxu0
        %v7555 = vadd.f32 0.0, %v7554
        %v7556 = vpop.f32.mrb[0].mxu0
        %v7557 = vpop.f32.mrb[0].mxu0
        %v7558 = vadd.f32 0.0, %v7557
        %v7559 = vpop.f32.mrb[0].mxu0
        %7560 = vmatprep.mubr.bf16.mxu0 0
        %7561 = vmatmul.mubr.bf16.gmra.mrb[0].mxu0 %v6127
        %v7562 = vpop.f32.mrb[0].mxu0
        %v7563 = vadd.f32 0.0, %v7562
        %v7564 = vpop.f32.mrb[0].mxu0
        %v7565 = vpop.f32.mrb[0].mxu0
        %v7566 = vadd.f32 0.0, %v7565
        %v7567 = vpop.f32.mrb[0].mxu0
        %7568 = vmatprep.mubr.bf16.mxu0 0
        %7569 = vmatmul.mubr.bf16.gmra.mrb[0].mxu0 %v6128
        %v7570 = vpop.f32.mrb[0].mxu0
        %v7571 = vadd.f32 0.0, %v7570
        %v7572 = vpop.f32.mrb[0].mxu0
        %v7573 = vpop.f32.mrb[0].mxu0
        %v7574 = vadd.f32 0.0, %v7573
        %v7575 = vpop.f32.mrb[0].mxu0
        %7576 = vmatprep.mubr.bf16.mxu0 0
        %7577 = vmatmul.mubr.bf16.gmra.mrb[0].mxu0 %v6129
        %v7578 = vpop.f32.mrb[0].mxu0
        %v7579 = vadd.f32 0.0, %v7578
        %v7580 = vpop.f32.mrb[0].mxu0
        %v7581 = vpop.f32.mrb[0].mxu0
        %v7582 = vadd.f32 0.0, %v7581
        %v7583 = vpop.f32.mrb[0].mxu0
        %7584 = vmatprep.mubr.bf16.mxu0 0
        %7585 = vmatmul.mubr.bf16.gmra.mrb[0].mxu0 %v6130
        %v7586 = vpop.f32.mrb[0].mxu0
        %v7587 = vadd.f32 0.0, %v7586
        %v7588 = vpop.f32.mrb[0].mxu0
        %v7589 = vpop.f32.mrb[0].mxu0
        %v7590 = vadd.f32 0.0, %v7589
        %v7591 = vpop.f32.mrb[0].mxu0
        %7592 = vmatprep.mubr.bf16.mxu0 0
        %7593 = vmatmul.mubr.bf16.gmra.mrb[0].mxu0 %v6131
        %v7594 = vpop.f32.mrb[0].mxu0
        %v7595 = vadd.f32 0.0, %v7594
        %v7596 = vpop.f32.mrb[0].mxu0
        %v7597 = vpop.f32.mrb[0].mxu0
        %v7598 = vadd.f32 0.0, %v7597
        %v7599 = vpop.f32.mrb[0].mxu0
        %7600 = vmatprep.mubr.bf16.mxu0 0
        %7601 = vmatmul.mubr.bf16.gmra.mrb[0].mxu0 %v6132
        %v7602 = vpop.f32.mrb[0].mxu0
        %v7603 = vadd.f32 0.0, %v7602
        %v7604 = vpop.f32.mrb[0].mxu0
        %v7605 = vpop.f32.mrb[0].mxu0
        %v7606 = vadd.f32 0.0, %v7605
        %v7607 = vpop.f32.mrb[0].mxu0
        %7608 = vmatprep.mubr.bf16.mxu0 0
        %7609 = vmatmul.mubr.bf16.gmra.mrb[0].mxu0 %v6133
        %v7610 = vpop.f32.mrb[0].mxu0
        %v7611 = vadd.f32 0.0, %v7610
        %v7612 = vpop.f32.mrb[0].mxu0
        %v7613 = vpop.f32.mrb[0].mxu0
        %v7614 = vadd.f32 0.0, %v7613
        %v7615 = vpop.f32.mrb[0].mxu0
        %7616 = vmatprep.mubr.bf16.mxu0 0
        %7617 = vmatmul.mubr.bf16.gmra.mrb[0].mxu0 %v6134
        %v7618 = vpop.f32.mrb[0].mxu0
        %v7619 = vadd.f32 0.0, %v7618
        %v7620 = vpop.f32.mrb[0].mxu0
        %v7621 = vpop.f32.mrb[0].mxu0
        %v7622 = vadd.f32 0.0, %v7621
        %v7623 = vpop.f32.mrb[0].mxu0
        %7624 = vmatprep.mubr.bf16.mxu0 0
        %7625 = vmatmul.mubr.bf16.gmra.mrb[0].mxu0 %v7422
        %v7626 = vpop.f32.mrb[0].mxu0
        %v7627 = vadd.f32 0.0, %v7626
        %v7628 = vpop.f32.mrb[0].mxu0
        %v7629 = vpop.f32.mrb[0].mxu0
        %v7630 = vadd.f32 0.0, %v7629
        %v7631 = vpop.f32.mrb[0].mxu0
        %7632 = vdwg.mxu0
        %v7633 = vadd.f32 %v7347, %v7507
        %v7634 = vadd.f32 %v7348, %v7510
        %v7635 = vadd.f32 %v7349, %v7515
        %v7636 = vadd.f32 %v7350, %v7518
        %v7637 = vadd.f32 %v7351, %v7523
        %v7638 = vadd.f32 %v7352, %v7526
        %v7639 = vadd.f32 %v7353, %v7531
        %v7640 = vadd.f32 %v7354, %v7534
        %v7641 = vadd.f32 %v7355, %v7539
        %v7642 = vadd.f32 %v7356, %v7542
        %v7643 = vadd.f32 %v7357, %v7547
        %v7644 = vadd.f32 %v7358, %v7550
        %v7645 = vadd.f32 %v7359, %v7555
        %v7646 = vadd.f32 %v7360, %v7558
        %v7647 = vadd.f32 %v7361, %v7563
        %v7648 = vadd.f32 %v7362, %v7566
        %v7649 = vadd.f32 %v7363, %v7571
        %v7650 = vadd.f32 %v7364, %v7574
        %v7651 = vadd.f32 %v7365, %v7579
        %v7652 = vadd.f32 %v7366, %v7582
        %v7653 = vadd.f32 %v7367, %v7587
        %v7654 = vadd.f32 %v7368, %v7590
        %v7655 = vadd.f32 %v7369, %v7595
        %v7656 = vadd.f32 %v7370, %v7598
        %v7657 = vadd.f32 %v7371, %v7603
        %v7658 = vadd.f32 %v7372, %v7606
        %v7659 = vadd.f32 %v7373, %v7611
        %v7660 = vadd.f32 %v7374, %v7614
        %v7661 = vadd.f32 %v7375, %v7619
        %v7662 = vadd.f32 %v7376, %v7622
        %v7663 = vadd.f32 %v7377, %v7627
        %v7664 = vadd.f32 %v7378, %v7630
        %v7666 = vrot.slane %v5664, 5
        %v7667 = vrot.slane %v7666, 4
        %v7668 = vrot.slane %v5665, 5
        %v7669 = vsel %vm2200, %v7667, %v7668
        %v7670 = vrot.slane %v7668, 4
        %v7671 = vrot.slane %v5666, 5
        %v7672 = vsel %vm2200, %v7670, %v7671
        %s7673 = scalar_lea.vmem [#allocation10], 320
        %v7674 = vld [vmem:[%s7673] sm:$0xf]
        %v7675 = vld [vmem:[%s7673 + $0x4] sm:$0xf]
        %v7676 = vld [vmem:[%s7673 + $0x8] sm:$0xf]
        %v7677 = vld [vmem:[%s7673 + $0xc] sm:$0xf]
        %v7678 = vld [vmem:[%s7673 + $0x10] sm:$0xf]
        %v7679 = vld [vmem:[%s7673 + $0x14] sm:$0xf]
        %v7680 = vld [vmem:[%s7673 + $0x18] sm:$0xf]
        %v7681 = vld [vmem:[%s7673 + $0x1c] sm:$0xf]
        %v7682 = vld [vmem:[%s7673 + $0x20] sm:$0xf]
        %v7683 = vld [vmem:[%s7673 + $0x24] sm:$0xf]
        %v7684 = vld [vmem:[%s7673 + $0x28] sm:$0xf]
        %v7685 = vld [vmem:[%s7673 + $0x2c] sm:$0xf]
        %v7686 = vld [vmem:[%s7673 + $0x30] sm:$0xf]
        %v7687 = vld [vmem:[%s7673 + $0x34] sm:$0xf]
        %v7688 = vld [vmem:[%s7673 + $0x38] sm:$0xf]
        %v7689 = vld [vmem:[%s7673 + $0x3c] sm:$0xf]
        %v7690 = vunpack.c.l.b16 %v7669
        %v7691 = vunpack.c.l.b16 %v7672
        %v7692 = vpack.c.b16 %v7691, %v7690
        %v7710 = vunpack.c.l.b16 %v7674
        %v7711 = vunpack.c.l.b16 %v7675
        %v7712 = vunpack.c.l.b16 %v7676
        %v7713 = vunpack.c.l.b16 %v7677
        %v7714 = vunpack.c.l.b16 %v7678
        %v7715 = vunpack.c.l.b16 %v7679
        %v7716 = vunpack.c.l.b16 %v7680
        %v7717 = vunpack.c.l.b16 %v7681
        %v7718 = vunpack.c.l.b16 %v7682
        %v7719 = vunpack.c.l.b16 %v7683
        %v7720 = vunpack.c.l.b16 %v7684
        %v7721 = vunpack.c.l.b16 %v7685
        %v7722 = vunpack.c.l.b16 %v7686
        %v7723 = vunpack.c.l.b16 %v7687
        %v7724 = vunpack.c.l.b16 %v7688
        %v7725 = vunpack.c.l.b16 %v7689
        %v7726 = vpack.c.b16 %v7711, %v7710
        %v7727 = vpack.c.b16 %v7713, %v7712
        %v7728 = vpack.c.b16 %v7715, %v7714
        %v7729 = vpack.c.b16 %v7717, %v7716
        %v7730 = vpack.c.b16 %v7719, %v7718
        %v7731 = vpack.c.b16 %v7721, %v7720
        %v7732 = vpack.c.b16 %v7723, %v7722
        %v7733 = vpack.c.b16 %v7725, %v7724
        %7742 = vmatprep.subr.bf16.mxu0 0
        %7743 = vmatpush1.bf16.msra.mxu0 %v7726
        %7744 = vmatprep.subr.bf16.mxu0 0
        %7745 = vmatpush1.bf16.msra.mxu0 %v7727
        %7746 = vmatprep.subr.bf16.mxu0 0
        %7747 = vmatpush1.bf16.msra.mxu0 %v7728
        %7748 = vmatprep.subr.bf16.mxu0 0
        %7749 = vmatpush1.bf16.msra.mxu0 %v7729
        %7750 = vmatprep.subr.bf16.mxu0 0
        %7751 = vmatpush1.bf16.msra.mxu0 %v7730
        %7752 = vmatprep.subr.bf16.mxu0 0
        %7753 = vmatpush1.bf16.msra.mxu0 %v7731
        %7754 = vmatprep.subr.bf16.mxu0 0
        %7755 = vmatpush1.bf16.msra.mxu0 %v7732
        %7756 = vmatprep.subr.bf16.mxu0 0
        %7757 = vmatpush1.bf16.msra.mxu0 %v7733
        %7758 = vmatprep.subr.bf16.mxu0 0
        %7759 = vmatpush1.bf16.msra.mxu0 0
        %7760 = vmatprep.subr.bf16.mxu0 0
        %7761 = vmatpush1.bf16.msra.mxu0 0
        %7762 = vmatprep.subr.bf16.mxu0 0
        %7763 = vmatpush1.bf16.msra.mxu0 0
        %7764 = vmatprep.subr.bf16.mxu0 0
        %7765 = vmatpush1.bf16.msra.mxu0 0
        %7766 = vmatprep.subr.bf16.mxu0 0
        %7767 = vmatpush1.bf16.msra.mxu0 0
        %7768 = vmatprep.subr.bf16.mxu0 0
        %7769 = vmatpush1.bf16.msra.mxu0 0
        %7770 = vmatprep.subr.bf16.mxu0 0
        %7771 = vmatpush1.bf16.msra.mxu0 0
        %7772 = vmatprep.subr.bf16.mxu0 0
        %7773 = vmatpush1.bf16.msra.mxu0 0
        %7774 = vmatprep.mubr.bf16.mxu0 0
        %7775 = vmatmul.mubr.bf16.gmra.mrb[0].mxu0 %v6843
        %v7776 = vpop.f32.mrb[0].mxu0
        %v7777 = vadd.f32 0.0, %v7776
        %v7778 = vpop.f32.mrb[0].mxu0
        %v7779 = vpop.f32.mrb[0].mxu0
        %v7780 = vadd.f32 0.0, %v7779
        %v7781 = vpop.f32.mrb[0].mxu0
        %7782 = vmatprep.mubr.bf16.mxu0 0
        %7783 = vmatmul.mubr.bf16.gmra.mrb[0].mxu0 %v6844
        %v7784 = vpop.f32.mrb[0].mxu0
        %v7785 = vadd.f32 0.0, %v7784
        %v7786 = vpop.f32.mrb[0].mxu0
        %v7787 = vpop.f32.mrb[0].mxu0
        %v7788 = vadd.f32 0.0, %v7787
        %v7789 = vpop.f32.mrb[0].mxu0
        %7790 = vmatprep.mubr.bf16.mxu0 0
        %7791 = vmatmul.mubr.bf16.gmra.mrb[0].mxu0 %v6845
        %v7792 = vpop.f32.mrb[0].mxu0
        %v7793 = vadd.f32 0.0, %v7792
        %v7794 = vpop.f32.mrb[0].mxu0
        %v7795 = vpop.f32.mrb[0].mxu0
        %v7796 = vadd.f32 0.0, %v7795
        %v7797 = vpop.f32.mrb[0].mxu0
        %7798 = vmatprep.mubr.bf16.mxu0 0
        %7799 = vmatmul.mubr.bf16.gmra.mrb[0].mxu0 %v6846
        %v7800 = vpop.f32.mrb[0].mxu0
        %v7801 = vadd.f32 0.0, %v7800
        %v7802 = vpop.f32.mrb[0].mxu0
        %v7803 = vpop.f32.mrb[0].mxu0
        %v7804 = vadd.f32 0.0, %v7803
        %v7805 = vpop.f32.mrb[0].mxu0
        %7806 = vmatprep.mubr.bf16.mxu0 0
        %7807 = vmatmul.mubr.bf16.gmra.mrb[0].mxu0 %v6847
        %v7808 = vpop.f32.mrb[0].mxu0
        %v7809 = vadd.f32 0.0, %v7808
        %v7810 = vpop.f32.mrb[0].mxu0
        %v7811 = vpop.f32.mrb[0].mxu0
        %v7812 = vadd.f32 0.0, %v7811
        %v7813 = vpop.f32.mrb[0].mxu0
        %7814 = vmatprep.mubr.bf16.mxu0 0
        %7815 = vmatmul.mubr.bf16.gmra.mrb[0].mxu0 %v6848
        %v7816 = vpop.f32.mrb[0].mxu0
        %v7817 = vadd.f32 0.0, %v7816
        %v7818 = vpop.f32.mrb[0].mxu0
        %v7819 = vpop.f32.mrb[0].mxu0
        %v7820 = vadd.f32 0.0, %v7819
        %v7821 = vpop.f32.mrb[0].mxu0
        %7822 = vmatprep.mubr.bf16.mxu0 0
        %7823 = vmatmul.mubr.bf16.gmra.mrb[0].mxu0 %v6849
        %v7824 = vpop.f32.mrb[0].mxu0
        %v7825 = vadd.f32 0.0, %v7824
        %v7826 = vpop.f32.mrb[0].mxu0
        %v7827 = vpop.f32.mrb[0].mxu0
        %v7828 = vadd.f32 0.0, %v7827
        %v7829 = vpop.f32.mrb[0].mxu0
        %7830 = vmatprep.mubr.bf16.mxu0 0
        %7831 = vmatmul.mubr.bf16.gmra.mrb[0].mxu0 %v6850
        %v7832 = vpop.f32.mrb[0].mxu0
        %v7833 = vadd.f32 0.0, %v7832
        %v7834 = vpop.f32.mrb[0].mxu0
        %v7835 = vpop.f32.mrb[0].mxu0
        %v7836 = vadd.f32 0.0, %v7835
        %v7837 = vpop.f32.mrb[0].mxu0
        %7838 = vmatprep.mubr.bf16.mxu0 0
        %7839 = vmatmul.mubr.bf16.gmra.mrb[0].mxu0 %v6851
        %v7840 = vpop.f32.mrb[0].mxu0
        %v7841 = vadd.f32 0.0, %v7840
        %v7842 = vpop.f32.mrb[0].mxu0
        %v7843 = vpop.f32.mrb[0].mxu0
        %v7844 = vadd.f32 0.0, %v7843
        %v7845 = vpop.f32.mrb[0].mxu0
        %7846 = vmatprep.mubr.bf16.mxu0 0
        %7847 = vmatmul.mubr.bf16.gmra.mrb[0].mxu0 %v6852
        %v7848 = vpop.f32.mrb[0].mxu0
        %v7849 = vadd.f32 0.0, %v7848
        %v7850 = vpop.f32.mrb[0].mxu0
        %v7851 = vpop.f32.mrb[0].mxu0
        %v7852 = vadd.f32 0.0, %v7851
        %v7853 = vpop.f32.mrb[0].mxu0
        %7854 = vmatprep.mubr.bf16.mxu0 0
        %7855 = vmatmul.mubr.bf16.gmra.mrb[0].mxu0 %v6853
        %v7856 = vpop.f32.mrb[0].mxu0
        %v7857 = vadd.f32 0.0, %v7856
        %v7858 = vpop.f32.mrb[0].mxu0
        %v7859 = vpop.f32.mrb[0].mxu0
        %v7860 = vadd.f32 0.0, %v7859
        %v7861 = vpop.f32.mrb[0].mxu0
        %7862 = vmatprep.mubr.bf16.mxu0 0
        %7863 = vmatmul.mubr.bf16.gmra.mrb[0].mxu0 %v6854
        %v7864 = vpop.f32.mrb[0].mxu0
        %v7865 = vadd.f32 0.0, %v7864
        %v7866 = vpop.f32.mrb[0].mxu0
        %v7867 = vpop.f32.mrb[0].mxu0
        %v7868 = vadd.f32 0.0, %v7867
        %v7869 = vpop.f32.mrb[0].mxu0
        %7870 = vmatprep.mubr.bf16.mxu0 0
        %7871 = vmatmul.mubr.bf16.gmra.mrb[0].mxu0 %v6855
        %v7872 = vpop.f32.mrb[0].mxu0
        %v7873 = vadd.f32 0.0, %v7872
        %v7874 = vpop.f32.mrb[0].mxu0
        %v7875 = vpop.f32.mrb[0].mxu0
        %v7876 = vadd.f32 0.0, %v7875
        %v7877 = vpop.f32.mrb[0].mxu0
        %7878 = vmatprep.mubr.bf16.mxu0 0
        %7879 = vmatmul.mubr.bf16.gmra.mrb[0].mxu0 %v6856
        %v7880 = vpop.f32.mrb[0].mxu0
        %v7881 = vadd.f32 0.0, %v7880
        %v7882 = vpop.f32.mrb[0].mxu0
        %v7883 = vpop.f32.mrb[0].mxu0
        %v7884 = vadd.f32 0.0, %v7883
        %v7885 = vpop.f32.mrb[0].mxu0
        %7886 = vmatprep.mubr.bf16.mxu0 0
        %7887 = vmatmul.mubr.bf16.gmra.mrb[0].mxu0 %v6857
        %v7888 = vpop.f32.mrb[0].mxu0
        %v7889 = vadd.f32 0.0, %v7888
        %v7890 = vpop.f32.mrb[0].mxu0
        %v7891 = vpop.f32.mrb[0].mxu0
        %v7892 = vadd.f32 0.0, %v7891
        %v7893 = vpop.f32.mrb[0].mxu0
        %7894 = vmatprep.mubr.bf16.mxu0 0
        %7895 = vmatmul.mubr.bf16.gmra.mrb[0].mxu0 %v7692
        %v7896 = vpop.f32.mrb[0].mxu0
        %v7897 = vadd.f32 0.0, %v7896
        %v7898 = vpop.f32.mrb[0].mxu0
        %v7899 = vpop.f32.mrb[0].mxu0
        %v7900 = vadd.f32 0.0, %v7899
        %v7901 = vpop.f32.mrb[0].mxu0
        %7902 = vdwg.mxu0
        %v7903 = vadd.f32 %v7633, %v7777
        %v7904 = vadd.f32 %v7634, %v7780
        %v7905 = vadd.f32 %v7635, %v7785
        %v7906 = vadd.f32 %v7636, %v7788
        %v7907 = vadd.f32 %v7637, %v7793
        %v7908 = vadd.f32 %v7638, %v7796
        %v7909 = vadd.f32 %v7639, %v7801
        %v7910 = vadd.f32 %v7640, %v7804
        %v7911 = vadd.f32 %v7641, %v7809
        %v7912 = vadd.f32 %v7642, %v7812
        %v7913 = vadd.f32 %v7643, %v7817
        %v7914 = vadd.f32 %v7644, %v7820
        %v7915 = vadd.f32 %v7645, %v7825
        %v7916 = vadd.f32 %v7646, %v7828
        %v7917 = vadd.f32 %v7647, %v7833
        %v7918 = vadd.f32 %v7648, %v7836
        %v7919 = vadd.f32 %v7649, %v7841
        %v7920 = vadd.f32 %v7650, %v7844
        %v7921 = vadd.f32 %v7651, %v7849
        %v7922 = vadd.f32 %v7652, %v7852
        %v7923 = vadd.f32 %v7653, %v7857
        %v7924 = vadd.f32 %v7654, %v7860
        %v7925 = vadd.f32 %v7655, %v7865
        %v7926 = vadd.f32 %v7656, %v7868
        %v7927 = vadd.f32 %v7657, %v7873
        %v7928 = vadd.f32 %v7658, %v7876
        %v7929 = vadd.f32 %v7659, %v7881
        %v7930 = vadd.f32 %v7660, %v7884
        %v7931 = vadd.f32 %v7661, %v7889
        %v7932 = vadd.f32 %v7662, %v7892
        %v7933 = vadd.f32 %v7663, %v7897
        %v7934 = vadd.f32 %v7664, %v7900
        %s7935 = scalar_lea.vmem [#allocation10], 384
        %v7936 = vld [vmem:[%s7935] sm:$0xf]
        %v7937 = vld [vmem:[%s7935 + $0x4] sm:$0xf]
        %v7938 = vld [vmem:[%s7935 + $0x8] sm:$0xf]
        %v7939 = vld [vmem:[%s7935 + $0xc] sm:$0xf]
        %v7940 = vld [vmem:[%s7935 + $0x10] sm:$0xf]
        %v7941 = vld [vmem:[%s7935 + $0x14] sm:$0xf]
        %v7942 = vld [vmem:[%s7935 + $0x18] sm:$0xf]
        %v7943 = vld [vmem:[%s7935 + $0x1c] sm:$0xf]
        %v7944 = vld [vmem:[%s7935 + $0x20] sm:$0xf]
        %v7945 = vld [vmem:[%s7935 + $0x24] sm:$0xf]
        %v7946 = vld [vmem:[%s7935 + $0x28] sm:$0xf]
        %v7947 = vld [vmem:[%s7935 + $0x2c] sm:$0xf]
        %v7948 = vld [vmem:[%s7935 + $0x30] sm:$0xf]
        %v7949 = vld [vmem:[%s7935 + $0x34] sm:$0xf]
        %v7950 = vld [vmem:[%s7935 + $0x38] sm:$0xf]
        %v7951 = vld [vmem:[%s7935 + $0x3c] sm:$0xf]
        %v7954 = vunpack.c.l.b16 %v5667
        %v7955 = vunpack.c.l.b16 %v5668
        %v7956 = vpack.c.b16 %v7955, %v7954
        %v7974 = vunpack.c.l.b16 %v7936
        %v7975 = vunpack.c.l.b16 %v7937
        %v7976 = vunpack.c.l.b16 %v7938
        %v7977 = vunpack.c.l.b16 %v7939
        %v7978 = vunpack.c.l.b16 %v7940
        %v7979 = vunpack.c.l.b16 %v7941
        %v7980 = vunpack.c.l.b16 %v7942
        %v7981 = vunpack.c.l.b16 %v7943
        %v7982 = vunpack.c.l.b16 %v7944
        %v7983 = vunpack.c.l.b16 %v7945
        %v7984 = vunpack.c.l.b16 %v7946
        %v7985 = vunpack.c.l.b16 %v7947
        %v7986 = vunpack.c.l.b16 %v7948
        %v7987 = vunpack.c.l.b16 %v7949
        %v7988 = vunpack.c.l.b16 %v7950
        %v7989 = vunpack.c.l.b16 %v7951
        %v7990 = vpack.c.b16 %v7975, %v7974
        %v7991 = vpack.c.b16 %v7977, %v7976
        %v7992 = vpack.c.b16 %v7979, %v7978
        %v7993 = vpack.c.b16 %v7981, %v7980
        %v7994 = vpack.c.b16 %v7983, %v7982
        %v7995 = vpack.c.b16 %v7985, %v7984
        %v7996 = vpack.c.b16 %v7987, %v7986
        %v7997 = vpack.c.b16 %v7989, %v7988
        %8006 = vmatprep.subr.bf16.mxu0 0
        %8007 = vmatpush1.bf16.msra.mxu0 %v7990
        %8008 = vmatprep.subr.bf16.mxu0 0
        %8009 = vmatpush1.bf16.msra.mxu0 %v7991
        %8010 = vmatprep.subr.bf16.mxu0 0
        %8011 = vmatpush1.bf16.msra.mxu0 %v7992
        %8012 = vmatprep.subr.bf16.mxu0 0
        %8013 = vmatpush1.bf16.msra.mxu0 %v7993
        %8014 = vmatprep.subr.bf16.mxu0 0
        %8015 = vmatpush1.bf16.msra.mxu0 %v7994
        %8016 = vmatprep.subr.bf16.mxu0 0
        %8017 = vmatpush1.bf16.msra.mxu0 %v7995
        %8018 = vmatprep.subr.bf16.mxu0 0
        %8019 = vmatpush1.bf16.msra.mxu0 %v7996
        %8020 = vmatprep.subr.bf16.mxu0 0
        %8021 = vmatpush1.bf16.msra.mxu0 %v7997
        %8022 = vmatprep.subr.bf16.mxu0 0
        %8023 = vmatpush1.bf16.msra.mxu0 0
        %8024 = vmatprep.subr.bf16.mxu0 0
        %8025 = vmatpush1.bf16.msra.mxu0 0
        %8026 = vmatprep.subr.bf16.mxu0 0
        %8027 = vmatpush1.bf16.msra.mxu0 0
        %8028 = vmatprep.subr.bf16.mxu0 0
        %8029 = vmatpush1.bf16.msra.mxu0 0
        %8030 = vmatprep.subr.bf16.mxu0 0
        %8031 = vmatpush1.bf16.msra.mxu0 0
        %8032 = vmatprep.subr.bf16.mxu0 0
        %8033 = vmatpush1.bf16.msra.mxu0 0
        %8034 = vmatprep.subr.bf16.mxu0 0
        %8035 = vmatpush1.bf16.msra.mxu0 0
        %8036 = vmatprep.subr.bf16.mxu0 0
        %8037 = vmatpush1.bf16.msra.mxu0 0
        %8038 = vmatprep.mubr.bf16.mxu0 0
        %8039 = vmatmul.mubr.bf16.gmra.mrb[0].mxu0 %v6426
        %v8040 = vpop.f32.mrb[0].mxu0
        %v8041 = vadd.f32 0.0, %v8040
        %v8042 = vpop.f32.mrb[0].mxu0
        %v8043 = vpop.f32.mrb[0].mxu0
        %v8044 = vadd.f32 0.0, %v8043
        %v8045 = vpop.f32.mrb[0].mxu0
        %8046 = vmatprep.mubr.bf16.mxu0 0
        %8047 = vmatmul.mubr.bf16.gmra.mrb[0].mxu0 %v6427
        %v8048 = vpop.f32.mrb[0].mxu0
        %v8049 = vadd.f32 0.0, %v8048
        %v8050 = vpop.f32.mrb[0].mxu0
        %v8051 = vpop.f32.mrb[0].mxu0
        %v8052 = vadd.f32 0.0, %v8051
        %v8053 = vpop.f32.mrb[0].mxu0
        %8054 = vmatprep.mubr.bf16.mxu0 0
        %8055 = vmatmul.mubr.bf16.gmra.mrb[0].mxu0 %v6428
        %v8056 = vpop.f32.mrb[0].mxu0
        %v8057 = vadd.f32 0.0, %v8056
        %v8058 = vpop.f32.mrb[0].mxu0
        %v8059 = vpop.f32.mrb[0].mxu0
        %v8060 = vadd.f32 0.0, %v8059
        %v8061 = vpop.f32.mrb[0].mxu0
        %8062 = vmatprep.mubr.bf16.mxu0 0
        %8063 = vmatmul.mubr.bf16.gmra.mrb[0].mxu0 %v6429
        %v8064 = vpop.f32.mrb[0].mxu0
        %v8065 = vadd.f32 0.0, %v8064
        %v8066 = vpop.f32.mrb[0].mxu0
        %v8067 = vpop.f32.mrb[0].mxu0
        %v8068 = vadd.f32 0.0, %v8067
        %v8069 = vpop.f32.mrb[0].mxu0
        %8070 = vmatprep.mubr.bf16.mxu0 0
        %8071 = vmatmul.mubr.bf16.gmra.mrb[0].mxu0 %v6430
        %v8072 = vpop.f32.mrb[0].mxu0
        %v8073 = vadd.f32 0.0, %v8072
        %v8074 = vpop.f32.mrb[0].mxu0
        %v8075 = vpop.f32.mrb[0].mxu0
        %v8076 = vadd.f32 0.0, %v8075
        %v8077 = vpop.f32.mrb[0].mxu0
        %8078 = vmatprep.mubr.bf16.mxu0 0
        %8079 = vmatmul.mubr.bf16.gmra.mrb[0].mxu0 %v6431
        %v8080 = vpop.f32.mrb[0].mxu0
        %v8081 = vadd.f32 0.0, %v8080
        %v8082 = vpop.f32.mrb[0].mxu0
        %v8083 = vpop.f32.mrb[0].mxu0
        %v8084 = vadd.f32 0.0, %v8083
        %v8085 = vpop.f32.mrb[0].mxu0
        %8086 = vmatprep.mubr.bf16.mxu0 0
        %8087 = vmatmul.mubr.bf16.gmra.mrb[0].mxu0 %v6432
        %v8088 = vpop.f32.mrb[0].mxu0
        %v8089 = vadd.f32 0.0, %v8088
        %v8090 = vpop.f32.mrb[0].mxu0
        %v8091 = vpop.f32.mrb[0].mxu0
        %v8092 = vadd.f32 0.0, %v8091
        %v8093 = vpop.f32.mrb[0].mxu0
        %8094 = vmatprep.mubr.bf16.mxu0 0
        %8095 = vmatmul.mubr.bf16.gmra.mrb[0].mxu0 %v6433
        %v8096 = vpop.f32.mrb[0].mxu0
        %v8097 = vadd.f32 0.0, %v8096
        %v8098 = vpop.f32.mrb[0].mxu0
        %v8099 = vpop.f32.mrb[0].mxu0
        %v8100 = vadd.f32 0.0, %v8099
        %v8101 = vpop.f32.mrb[0].mxu0
        %8102 = vmatprep.mubr.bf16.mxu0 0
        %8103 = vmatmul.mubr.bf16.gmra.mrb[0].mxu0 %v6434
        %v8104 = vpop.f32.mrb[0].mxu0
        %v8105 = vadd.f32 0.0, %v8104
        %v8106 = vpop.f32.mrb[0].mxu0
        %v8107 = vpop.f32.mrb[0].mxu0
        %v8108 = vadd.f32 0.0, %v8107
        %v8109 = vpop.f32.mrb[0].mxu0
        %8110 = vmatprep.mubr.bf16.mxu0 0
        %8111 = vmatmul.mubr.bf16.gmra.mrb[0].mxu0 %v6435
        %v8112 = vpop.f32.mrb[0].mxu0
        %v8113 = vadd.f32 0.0, %v8112
        %v8114 = vpop.f32.mrb[0].mxu0
        %v8115 = vpop.f32.mrb[0].mxu0
        %v8116 = vadd.f32 0.0, %v8115
        %v8117 = vpop.f32.mrb[0].mxu0
        %8118 = vmatprep.mubr.bf16.mxu0 0
        %8119 = vmatmul.mubr.bf16.gmra.mrb[0].mxu0 %v6436
        %v8120 = vpop.f32.mrb[0].mxu0
        %v8121 = vadd.f32 0.0, %v8120
        %v8122 = vpop.f32.mrb[0].mxu0
        %v8123 = vpop.f32.mrb[0].mxu0
        %v8124 = vadd.f32 0.0, %v8123
        %v8125 = vpop.f32.mrb[0].mxu0
        %8126 = vmatprep.mubr.bf16.mxu0 0
        %8127 = vmatmul.mubr.bf16.gmra.mrb[0].mxu0 %v6437
        %v8128 = vpop.f32.mrb[0].mxu0
        %v8129 = vadd.f32 0.0, %v8128
        %v8130 = vpop.f32.mrb[0].mxu0
        %v8131 = vpop.f32.mrb[0].mxu0
        %v8132 = vadd.f32 0.0, %v8131
        %v8133 = vpop.f32.mrb[0].mxu0
        %8134 = vmatprep.mubr.bf16.mxu0 0
        %8135 = vmatmul.mubr.bf16.gmra.mrb[0].mxu0 %v6438
        %v8136 = vpop.f32.mrb[0].mxu0
        %v8137 = vadd.f32 0.0, %v8136
        %v8138 = vpop.f32.mrb[0].mxu0
        %v8139 = vpop.f32.mrb[0].mxu0
        %v8140 = vadd.f32 0.0, %v8139
        %v8141 = vpop.f32.mrb[0].mxu0
        %8142 = vmatprep.mubr.bf16.mxu0 0
        %8143 = vmatmul.mubr.bf16.gmra.mrb[0].mxu0 %v6439
        %v8144 = vpop.f32.mrb[0].mxu0
        %v8145 = vadd.f32 0.0, %v8144
        %v8146 = vpop.f32.mrb[0].mxu0
        %v8147 = vpop.f32.mrb[0].mxu0
        %v8148 = vadd.f32 0.0, %v8147
        %v8149 = vpop.f32.mrb[0].mxu0
        %8150 = vmatprep.mubr.bf16.mxu0 0
        %8151 = vmatmul.mubr.bf16.gmra.mrb[0].mxu0 %v7136
        %v8152 = vpop.f32.mrb[0].mxu0
        %v8153 = vadd.f32 0.0, %v8152
        %v8154 = vpop.f32.mrb[0].mxu0
        %v8155 = vpop.f32.mrb[0].mxu0
        %v8156 = vadd.f32 0.0, %v8155
        %v8157 = vpop.f32.mrb[0].mxu0
        %8158 = vmatprep.mubr.bf16.mxu0 0
        %8159 = vmatmul.mubr.bf16.gmra.mrb[0].mxu0 %v7956
        %v8160 = vpop.f32.mrb[0].mxu0
        %v8161 = vadd.f32 0.0, %v8160
        %v8162 = vpop.f32.mrb[0].mxu0
        %v8163 = vpop.f32.mrb[0].mxu0
        %v8164 = vadd.f32 0.0, %v8163
        %v8165 = vpop.f32.mrb[0].mxu0
        %8166 = vdwg.mxu0
        %v8167 = vadd.f32 %v7903, %v8041
        %v8168 = vadd.f32 %v7904, %v8044
        %v8169 = vadd.f32 %v7905, %v8049
        %v8170 = vadd.f32 %v7906, %v8052
        %v8171 = vadd.f32 %v7907, %v8057
        %v8172 = vadd.f32 %v7908, %v8060
        %v8173 = vadd.f32 %v7909, %v8065
        %v8174 = vadd.f32 %v7910, %v8068
        %v8175 = vadd.f32 %v7911, %v8073
        %v8176 = vadd.f32 %v7912, %v8076
        %v8177 = vadd.f32 %v7913, %v8081
        %v8178 = vadd.f32 %v7914, %v8084
        %v8179 = vadd.f32 %v7915, %v8089
        %v8180 = vadd.f32 %v7916, %v8092
        %v8181 = vadd.f32 %v7917, %v8097
        %v8182 = vadd.f32 %v7918, %v8100
        %v8183 = vadd.f32 %v7919, %v8105
        %v8184 = vadd.f32 %v7920, %v8108
        %v8185 = vadd.f32 %v7921, %v8113
        %v8186 = vadd.f32 %v7922, %v8116
        %v8187 = vadd.f32 %v7923, %v8121
        %v8188 = vadd.f32 %v7924, %v8124
        %v8189 = vadd.f32 %v7925, %v8129
        %v8190 = vadd.f32 %v7926, %v8132
        %v8191 = vadd.f32 %v7927, %v8137
        %v8192 = vadd.f32 %v7928, %v8140
        %v8193 = vadd.f32 %v7929, %v8145
        %v8194 = vadd.f32 %v7930, %v8148
        %v8195 = vadd.f32 %v7931, %v8153
        %v8196 = vadd.f32 %v7932, %v8156
        %v8197 = vadd.f32 %v7933, %v8161
        %v8198 = vadd.f32 %v7934, %v8164
        %v8200 = vshrl.u32 %v5667, 16
        %v8202 = vrot.slane %v8200, 4
        %v8203 = vshll.u32 %v5667, 16
        %v8205 = vrot.slane %v8203, 5
        %v8206 = vor.u32 %v8202, %v8205
        %v8207 = vrot.slane %v8206, 4
        %v8209 = vshll.u32 %v5668, 16
        %v8211 = vrot.slane %v8209, 5
        %v8212 = vsel %vm1074, %v8207, %v8211
        %v8213 = vshrl.u32 %v5668, 16
        %v8215 = vrot.slane %v8213, 4
        %v8216 = vor.u32 %v8215, %v8211
        %v8217 = vrot.slane %v8216, 4
        %v8219 = vshll.u32 %v5669, 16
        %v8221 = vrot.slane %v8219, 5
        %v8222 = vsel %vm1074, %v8217, %v8221
        %s8223 = scalar_lea.vmem [#allocation10], 448
        %v8224 = vld [vmem:[%s8223] sm:$0xf]
        %v8225 = vld [vmem:[%s8223 + $0x4] sm:$0xf]
        %v8226 = vld [vmem:[%s8223 + $0x8] sm:$0xf]
        %v8227 = vld [vmem:[%s8223 + $0xc] sm:$0xf]
        %v8228 = vld [vmem:[%s8223 + $0x10] sm:$0xf]
        %v8229 = vld [vmem:[%s8223 + $0x14] sm:$0xf]
        %v8230 = vld [vmem:[%s8223 + $0x18] sm:$0xf]
        %v8231 = vld [vmem:[%s8223 + $0x1c] sm:$0xf]
        %v8232 = vld [vmem:[%s8223 + $0x20] sm:$0xf]
        %v8233 = vld [vmem:[%s8223 + $0x24] sm:$0xf]
        %v8234 = vld [vmem:[%s8223 + $0x28] sm:$0xf]
        %v8235 = vld [vmem:[%s8223 + $0x2c] sm:$0xf]
        %v8236 = vld [vmem:[%s8223 + $0x30] sm:$0xf]
        %v8237 = vld [vmem:[%s8223 + $0x34] sm:$0xf]
        %v8238 = vld [vmem:[%s8223 + $0x38] sm:$0xf]
        %v8239 = vld [vmem:[%s8223 + $0x3c] sm:$0xf]
        %v8240 = vunpack.c.l.b16 %v8212
        %v8241 = vunpack.c.l.b16 %v8222
        %v8242 = vpack.c.b16 %v8241, %v8240
        %v8260 = vunpack.c.l.b16 %v8224
        %v8261 = vunpack.c.l.b16 %v8225
        %v8262 = vunpack.c.l.b16 %v8226
        %v8263 = vunpack.c.l.b16 %v8227
        %v8264 = vunpack.c.l.b16 %v8228
        %v8265 = vunpack.c.l.b16 %v8229
        %v8266 = vunpack.c.l.b16 %v8230
        %v8267 = vunpack.c.l.b16 %v8231
        %v8268 = vunpack.c.l.b16 %v8232
        %v8269 = vunpack.c.l.b16 %v8233
        %v8270 = vunpack.c.l.b16 %v8234
        %v8271 = vunpack.c.l.b16 %v8235
        %v8272 = vunpack.c.l.b16 %v8236
        %v8273 = vunpack.c.l.b16 %v8237
        %v8274 = vunpack.c.l.b16 %v8238
        %v8275 = vunpack.c.l.b16 %v8239
        %v8276 = vpack.c.b16 %v8261, %v8260
        %v8277 = vpack.c.b16 %v8263, %v8262
        %v8278 = vpack.c.b16 %v8265, %v8264
        %v8279 = vpack.c.b16 %v8267, %v8266
        %v8280 = vpack.c.b16 %v8269, %v8268
        %v8281 = vpack.c.b16 %v8271, %v8270
        %v8282 = vpack.c.b16 %v8273, %v8272
        %v8283 = vpack.c.b16 %v8275, %v8274
        %8292 = vmatprep.subr.bf16.mxu0 0
        %8293 = vmatpush1.bf16.msra.mxu0 %v8276
        %8294 = vmatprep.subr.bf16.mxu0 0
        %8295 = vmatpush1.bf16.msra.mxu0 %v8277
        %8296 = vmatprep.subr.bf16.mxu0 0
        %8297 = vmatpush1.bf16.msra.mxu0 %v8278
        %8298 = vmatprep.subr.bf16.mxu0 0
        %8299 = vmatpush1.bf16.msra.mxu0 %v8279
        %8300 = vmatprep.subr.bf16.mxu0 0
        %8301 = vmatpush1.bf16.msra.mxu0 %v8280
        %8302 = vmatprep.subr.bf16.mxu0 0
        %8303 = vmatpush1.bf16.msra.mxu0 %v8281
        %8304 = vmatprep.subr.bf16.mxu0 0
        %8305 = vmatpush1.bf16.msra.mxu0 %v8282
        %8306 = vmatprep.subr.bf16.mxu0 0
        %8307 = vmatpush1.bf16.msra.mxu0 %v8283
        %8308 = vmatprep.subr.bf16.mxu0 0
        %8309 = vmatpush1.bf16.msra.mxu0 0
        %8310 = vmatprep.subr.bf16.mxu0 0
        %8311 = vmatpush1.bf16.msra.mxu0 0
        %8312 = vmatprep.subr.bf16.mxu0 0
        %8313 = vmatpush1.bf16.msra.mxu0 0
        %8314 = vmatprep.subr.bf16.mxu0 0
        %8315 = vmatpush1.bf16.msra.mxu0 0
        %8316 = vmatprep.subr.bf16.mxu0 0
        %8317 = vmatpush1.bf16.msra.mxu0 0
        %8318 = vmatprep.subr.bf16.mxu0 0
        %8319 = vmatpush1.bf16.msra.mxu0 0
        %8320 = vmatprep.subr.bf16.mxu0 0
        %8321 = vmatpush1.bf16.msra.mxu0 0
        %8322 = vmatprep.subr.bf16.mxu0 0
        %8323 = vmatpush1.bf16.msra.mxu0 0
        %8324 = vmatprep.mubr.bf16.mxu0 0
        %8325 = vmatmul.mubr.bf16.gmra.mrb[0].mxu0 %v6121
        %v8326 = vpop.f32.mrb[0].mxu0
        %v8327 = vadd.f32 0.0, %v8326
        %v8328 = vpop.f32.mrb[0].mxu0
        %v8329 = vpop.f32.mrb[0].mxu0
        %v8330 = vadd.f32 0.0, %v8329
        %v8331 = vpop.f32.mrb[0].mxu0
        %8332 = vmatprep.mubr.bf16.mxu0 0
        %8333 = vmatmul.mubr.bf16.gmra.mrb[0].mxu0 %v6122
        %v8334 = vpop.f32.mrb[0].mxu0
        %v8335 = vadd.f32 0.0, %v8334
        %v8336 = vpop.f32.mrb[0].mxu0
        %v8337 = vpop.f32.mrb[0].mxu0
        %v8338 = vadd.f32 0.0, %v8337
        %v8339 = vpop.f32.mrb[0].mxu0
        %8340 = vmatprep.mubr.bf16.mxu0 0
        %8341 = vmatmul.mubr.bf16.gmra.mrb[0].mxu0 %v6123
        %v8342 = vpop.f32.mrb[0].mxu0
        %v8343 = vadd.f32 0.0, %v8342
        %v8344 = vpop.f32.mrb[0].mxu0
        %v8345 = vpop.f32.mrb[0].mxu0
        %v8346 = vadd.f32 0.0, %v8345
        %v8347 = vpop.f32.mrb[0].mxu0
        %8348 = vmatprep.mubr.bf16.mxu0 0
        %8349 = vmatmul.mubr.bf16.gmra.mrb[0].mxu0 %v6124
        %v8350 = vpop.f32.mrb[0].mxu0
        %v8351 = vadd.f32 0.0, %v8350
        %v8352 = vpop.f32.mrb[0].mxu0
        %v8353 = vpop.f32.mrb[0].mxu0
        %v8354 = vadd.f32 0.0, %v8353
        %v8355 = vpop.f32.mrb[0].mxu0
        %8356 = vmatprep.mubr.bf16.mxu0 0
        %8357 = vmatmul.mubr.bf16.gmra.mrb[0].mxu0 %v6125
        %v8358 = vpop.f32.mrb[0].mxu0
        %v8359 = vadd.f32 0.0, %v8358
        %v8360 = vpop.f32.mrb[0].mxu0
        %v8361 = vpop.f32.mrb[0].mxu0
        %v8362 = vadd.f32 0.0, %v8361
        %v8363 = vpop.f32.mrb[0].mxu0
        %8364 = vmatprep.mubr.bf16.mxu0 0
        %8365 = vmatmul.mubr.bf16.gmra.mrb[0].mxu0 %v6126
        %v8366 = vpop.f32.mrb[0].mxu0
        %v8367 = vadd.f32 0.0, %v8366
        %v8368 = vpop.f32.mrb[0].mxu0
        %v8369 = vpop.f32.mrb[0].mxu0
        %v8370 = vadd.f32 0.0, %v8369
        %v8371 = vpop.f32.mrb[0].mxu0
        %8372 = vmatprep.mubr.bf16.mxu0 0
        %8373 = vmatmul.mubr.bf16.gmra.mrb[0].mxu0 %v6127
        %v8374 = vpop.f32.mrb[0].mxu0
        %v8375 = vadd.f32 0.0, %v8374
        %v8376 = vpop.f32.mrb[0].mxu0
        %v8377 = vpop.f32.mrb[0].mxu0
        %v8378 = vadd.f32 0.0, %v8377
        %v8379 = vpop.f32.mrb[0].mxu0
        %8380 = vmatprep.mubr.bf16.mxu0 0
        %8381 = vmatmul.mubr.bf16.gmra.mrb[0].mxu0 %v6128
        %v8382 = vpop.f32.mrb[0].mxu0
        %v8383 = vadd.f32 0.0, %v8382
        %v8384 = vpop.f32.mrb[0].mxu0
        %v8385 = vpop.f32.mrb[0].mxu0
        %v8386 = vadd.f32 0.0, %v8385
        %v8387 = vpop.f32.mrb[0].mxu0
        %8388 = vmatprep.mubr.bf16.mxu0 0
        %8389 = vmatmul.mubr.bf16.gmra.mrb[0].mxu0 %v6129
        %v8390 = vpop.f32.mrb[0].mxu0
        %v8391 = vadd.f32 0.0, %v8390
        %v8392 = vpop.f32.mrb[0].mxu0
        %v8393 = vpop.f32.mrb[0].mxu0
        %v8394 = vadd.f32 0.0, %v8393
        %v8395 = vpop.f32.mrb[0].mxu0
        %8396 = vmatprep.mubr.bf16.mxu0 0
        %8397 = vmatmul.mubr.bf16.gmra.mrb[0].mxu0 %v6130
        %v8398 = vpop.f32.mrb[0].mxu0
        %v8399 = vadd.f32 0.0, %v8398
        %v8400 = vpop.f32.mrb[0].mxu0
        %v8401 = vpop.f32.mrb[0].mxu0
        %v8402 = vadd.f32 0.0, %v8401
        %v8403 = vpop.f32.mrb[0].mxu0
        %8404 = vmatprep.mubr.bf16.mxu0 0
        %8405 = vmatmul.mubr.bf16.gmra.mrb[0].mxu0 %v6131
        %v8406 = vpop.f32.mrb[0].mxu0
        %v8407 = vadd.f32 0.0, %v8406
        %v8408 = vpop.f32.mrb[0].mxu0
        %v8409 = vpop.f32.mrb[0].mxu0
        %v8410 = vadd.f32 0.0, %v8409
        %v8411 = vpop.f32.mrb[0].mxu0
        %8412 = vmatprep.mubr.bf16.mxu0 0
        %8413 = vmatmul.mubr.bf16.gmra.mrb[0].mxu0 %v6132
        %v8414 = vpop.f32.mrb[0].mxu0
        %v8415 = vadd.f32 0.0, %v8414
        %v8416 = vpop.f32.mrb[0].mxu0
        %v8417 = vpop.f32.mrb[0].mxu0
        %v8418 = vadd.f32 0.0, %v8417
        %v8419 = vpop.f32.mrb[0].mxu0
        %8420 = vmatprep.mubr.bf16.mxu0 0
        %8421 = vmatmul.mubr.bf16.gmra.mrb[0].mxu0 %v6133
        %v8422 = vpop.f32.mrb[0].mxu0
        %v8423 = vadd.f32 0.0, %v8422
        %v8424 = vpop.f32.mrb[0].mxu0
        %v8425 = vpop.f32.mrb[0].mxu0
        %v8426 = vadd.f32 0.0, %v8425
        %v8427 = vpop.f32.mrb[0].mxu0
        %8428 = vmatprep.mubr.bf16.mxu0 0
        %8429 = vmatmul.mubr.bf16.gmra.mrb[0].mxu0 %v6134
        %v8430 = vpop.f32.mrb[0].mxu0
        %v8431 = vadd.f32 0.0, %v8430
        %v8432 = vpop.f32.mrb[0].mxu0
        %v8433 = vpop.f32.mrb[0].mxu0
        %v8434 = vadd.f32 0.0, %v8433
        %v8435 = vpop.f32.mrb[0].mxu0
        %8436 = vmatprep.mubr.bf16.mxu0 0
        %8437 = vmatmul.mubr.bf16.gmra.mrb[0].mxu0 %v7422
        %v8438 = vpop.f32.mrb[0].mxu0
        %v8439 = vadd.f32 0.0, %v8438
        %v8440 = vpop.f32.mrb[0].mxu0
        %v8441 = vpop.f32.mrb[0].mxu0
        %v8442 = vadd.f32 0.0, %v8441
        %v8443 = vpop.f32.mrb[0].mxu0
        %8444 = vmatprep.mubr.bf16.mxu0 0
        %8445 = vmatmul.mubr.bf16.gmra.mrb[0].mxu0 %v8242
        %v8446 = vpop.f32.mrb[0].mxu0
        %v8447 = vadd.f32 0.0, %v8446
        %v8448 = vpop.f32.mrb[0].mxu0
        %v8449 = vpop.f32.mrb[0].mxu0
        %v8450 = vadd.f32 0.0, %v8449
        %v8451 = vpop.f32.mrb[0].mxu0
        %8452 = vdwg.mxu0
        %v8453 = vadd.f32 %v8167, %v8327
        %v8454 = vadd.f32 %v8168, %v8330
        %v8455 = vadd.f32 %v8169, %v8335
        %v8456 = vadd.f32 %v8170, %v8338
        %v8457 = vadd.f32 %v8171, %v8343
        %v8458 = vadd.f32 %v8172, %v8346
        %v8459 = vadd.f32 %v8173, %v8351
        %v8460 = vadd.f32 %v8174, %v8354
        %v8461 = vadd.f32 %v8175, %v8359
        %v8462 = vadd.f32 %v8176, %v8362
        %v8463 = vadd.f32 %v8177, %v8367
        %v8464 = vadd.f32 %v8178, %v8370
        %v8465 = vadd.f32 %v8179, %v8375
        %v8466 = vadd.f32 %v8180, %v8378
        %v8467 = vadd.f32 %v8181, %v8383
        %v8468 = vadd.f32 %v8182, %v8386
        %v8469 = vadd.f32 %v8183, %v8391
        %v8470 = vadd.f32 %v8184, %v8394
        %v8471 = vadd.f32 %v8185, %v8399
        %v8472 = vadd.f32 %v8186, %v8402
        %v8473 = vadd.f32 %v8187, %v8407
        %v8474 = vadd.f32 %v8188, %v8410
        %v8475 = vadd.f32 %v8189, %v8415
        %v8476 = vadd.f32 %v8190, %v8418
        %v8477 = vadd.f32 %v8191, %v8423
        %v8478 = vadd.f32 %v8192, %v8426
        %v8479 = vadd.f32 %v8193, %v8431
        %v8480 = vadd.f32 %v8194, %v8434
        %v8481 = vadd.f32 %v8195, %v8439
        %v8482 = vadd.f32 %v8196, %v8442
        %v8483 = vadd.f32 %v8197, %v8447
        %v8484 = vadd.f32 %v8198, %v8450
        %v8486 = vrot.slane %v5667, 5
        %v8487 = vrot.slane %v8486, 4
        %v8488 = vrot.slane %v5668, 5
        %v8489 = vsel %vm2200, %v8487, %v8488
        %v8490 = vrot.slane %v8488, 4
        %v8491 = vrot.slane %v5669, 5
        %v8492 = vsel %vm2200, %v8490, %v8491
        %s8493 = scalar_lea.vmem [#allocation10], 512
        %v8494 = vld [vmem:[%s8493] sm:$0xf]
        %v8495 = vld [vmem:[%s8493 + $0x4] sm:$0xf]
        %v8496 = vld [vmem:[%s8493 + $0x8] sm:$0xf]
        %v8497 = vld [vmem:[%s8493 + $0xc] sm:$0xf]
        %v8498 = vld [vmem:[%s8493 + $0x10] sm:$0xf]
        %v8499 = vld [vmem:[%s8493 + $0x14] sm:$0xf]
        %v8500 = vld [vmem:[%s8493 + $0x18] sm:$0xf]
        %v8501 = vld [vmem:[%s8493 + $0x1c] sm:$0xf]
        %v8502 = vld [vmem:[%s8493 + $0x20] sm:$0xf]
        %v8503 = vld [vmem:[%s8493 + $0x24] sm:$0xf]
        %v8504 = vld [vmem:[%s8493 + $0x28] sm:$0xf]
        %v8505 = vld [vmem:[%s8493 + $0x2c] sm:$0xf]
        %v8506 = vld [vmem:[%s8493 + $0x30] sm:$0xf]
        %v8507 = vld [vmem:[%s8493 + $0x34] sm:$0xf]
        %v8508 = vld [vmem:[%s8493 + $0x38] sm:$0xf]
        %v8509 = vld [vmem:[%s8493 + $0x3c] sm:$0xf]
        %v8510 = vunpack.c.l.b16 %v8489
        %v8511 = vunpack.c.l.b16 %v8492
        %v8512 = vpack.c.b16 %v8511, %v8510
        %v8530 = vunpack.c.l.b16 %v8494
        %v8531 = vunpack.c.l.b16 %v8495
        %v8532 = vunpack.c.l.b16 %v8496
        %v8533 = vunpack.c.l.b16 %v8497
        %v8534 = vunpack.c.l.b16 %v8498
        %v8535 = vunpack.c.l.b16 %v8499
        %v8536 = vunpack.c.l.b16 %v8500
        %v8537 = vunpack.c.l.b16 %v8501
        %v8538 = vunpack.c.l.b16 %v8502
        %v8539 = vunpack.c.l.b16 %v8503
        %v8540 = vunpack.c.l.b16 %v8504
        %v8541 = vunpack.c.l.b16 %v8505
        %v8542 = vunpack.c.l.b16 %v8506
        %v8543 = vunpack.c.l.b16 %v8507
        %v8544 = vunpack.c.l.b16 %v8508
        %v8545 = vunpack.c.l.b16 %v8509
        %v8546 = vpack.c.b16 %v8531, %v8530
        %v8547 = vpack.c.b16 %v8533, %v8532
        %v8548 = vpack.c.b16 %v8535, %v8534
        %v8549 = vpack.c.b16 %v8537, %v8536
        %v8550 = vpack.c.b16 %v8539, %v8538
        %v8551 = vpack.c.b16 %v8541, %v8540
        %v8552 = vpack.c.b16 %v8543, %v8542
        %v8553 = vpack.c.b16 %v8545, %v8544
        %8562 = vmatprep.subr.bf16.mxu0 0
        %8563 = vmatpush1.bf16.msra.mxu0 %v8546
        %8564 = vmatprep.subr.bf16.mxu0 0
        %8565 = vmatpush1.bf16.msra.mxu0 %v8547
        %8566 = vmatprep.subr.bf16.mxu0 0
        %8567 = vmatpush1.bf16.msra.mxu0 %v8548
        %8568 = vmatprep.subr.bf16.mxu0 0
        %8569 = vmatpush1.bf16.msra.mxu0 %v8549
        %8570 = vmatprep.subr.bf16.mxu0 0
        %8571 = vmatpush1.bf16.msra.mxu0 %v8550
        %8572 = vmatprep.subr.bf16.mxu0 0
        %8573 = vmatpush1.bf16.msra.mxu0 %v8551
        %8574 = vmatprep.subr.bf16.mxu0 0
        %8575 = vmatpush1.bf16.msra.mxu0 %v8552
        %8576 = vmatprep.subr.bf16.mxu0 0
        %8577 = vmatpush1.bf16.msra.mxu0 %v8553
        %8578 = vmatprep.subr.bf16.mxu0 0
        %8579 = vmatpush1.bf16.msra.mxu0 0
        %8580 = vmatprep.subr.bf16.mxu0 0
        %8581 = vmatpush1.bf16.msra.mxu0 0
        %8582 = vmatprep.subr.bf16.mxu0 0
        %8583 = vmatpush1.bf16.msra.mxu0 0
        %8584 = vmatprep.subr.bf16.mxu0 0
        %8585 = vmatpush1.bf16.msra.mxu0 0
        %8586 = vmatprep.subr.bf16.mxu0 0
        %8587 = vmatpush1.bf16.msra.mxu0 0
        %8588 = vmatprep.subr.bf16.mxu0 0
        %8589 = vmatpush1.bf16.msra.mxu0 0
        %8590 = vmatprep.subr.bf16.mxu0 0
        %8591 = vmatpush1.bf16.msra.mxu0 0
        %8592 = vmatprep.subr.bf16.mxu0 0
        %8593 = vmatpush1.bf16.msra.mxu0 0
        %8594 = vmatprep.mubr.bf16.mxu0 0
        %8595 = vmatmul.mubr.bf16.gmra.mrb[0].mxu0 %v6844
        %v8596 = vpop.f32.mrb[0].mxu0
        %v8597 = vadd.f32 0.0, %v8596
        %v8598 = vpop.f32.mrb[0].mxu0
        %v8599 = vpop.f32.mrb[0].mxu0
        %v8600 = vadd.f32 0.0, %v8599
        %v8601 = vpop.f32.mrb[0].mxu0
        %8602 = vmatprep.mubr.bf16.mxu0 0
        %8603 = vmatmul.mubr.bf16.gmra.mrb[0].mxu0 %v6845
        %v8604 = vpop.f32.mrb[0].mxu0
        %v8605 = vadd.f32 0.0, %v8604
        %v8606 = vpop.f32.mrb[0].mxu0
        %v8607 = vpop.f32.mrb[0].mxu0
        %v8608 = vadd.f32 0.0, %v8607
        %v8609 = vpop.f32.mrb[0].mxu0
        %8610 = vmatprep.mubr.bf16.mxu0 0
        %8611 = vmatmul.mubr.bf16.gmra.mrb[0].mxu0 %v6846
        %v8612 = vpop.f32.mrb[0].mxu0
        %v8613 = vadd.f32 0.0, %v8612
        %v8614 = vpop.f32.mrb[0].mxu0
        %v8615 = vpop.f32.mrb[0].mxu0
        %v8616 = vadd.f32 0.0, %v8615
        %v8617 = vpop.f32.mrb[0].mxu0
        %8618 = vmatprep.mubr.bf16.mxu0 0
        %8619 = vmatmul.mubr.bf16.gmra.mrb[0].mxu0 %v6847
        %v8620 = vpop.f32.mrb[0].mxu0
        %v8621 = vadd.f32 0.0, %v8620
        %v8622 = vpop.f32.mrb[0].mxu0
        %v8623 = vpop.f32.mrb[0].mxu0
        %v8624 = vadd.f32 0.0, %v8623
        %v8625 = vpop.f32.mrb[0].mxu0
        %8626 = vmatprep.mubr.bf16.mxu0 0
        %8627 = vmatmul.mubr.bf16.gmra.mrb[0].mxu0 %v6848
        %v8628 = vpop.f32.mrb[0].mxu0
        %v8629 = vadd.f32 0.0, %v8628
        %v8630 = vpop.f32.mrb[0].mxu0
        %v8631 = vpop.f32.mrb[0].mxu0
        %v8632 = vadd.f32 0.0, %v8631
        %v8633 = vpop.f32.mrb[0].mxu0
        %8634 = vmatprep.mubr.bf16.mxu0 0
        %8635 = vmatmul.mubr.bf16.gmra.mrb[0].mxu0 %v6849
        %v8636 = vpop.f32.mrb[0].mxu0
        %v8637 = vadd.f32 0.0, %v8636
        %v8638 = vpop.f32.mrb[0].mxu0
        %v8639 = vpop.f32.mrb[0].mxu0
        %v8640 = vadd.f32 0.0, %v8639
        %v8641 = vpop.f32.mrb[0].mxu0
        %8642 = vmatprep.mubr.bf16.mxu0 0
        %8643 = vmatmul.mubr.bf16.gmra.mrb[0].mxu0 %v6850
        %v8644 = vpop.f32.mrb[0].mxu0
        %v8645 = vadd.f32 0.0, %v8644
        %v8646 = vpop.f32.mrb[0].mxu0
        %v8647 = vpop.f32.mrb[0].mxu0
        %v8648 = vadd.f32 0.0, %v8647
        %v8649 = vpop.f32.mrb[0].mxu0
        %8650 = vmatprep.mubr.bf16.mxu0 0
        %8651 = vmatmul.mubr.bf16.gmra.mrb[0].mxu0 %v6851
        %v8652 = vpop.f32.mrb[0].mxu0
        %v8653 = vadd.f32 0.0, %v8652
        %v8654 = vpop.f32.mrb[0].mxu0
        %v8655 = vpop.f32.mrb[0].mxu0
        %v8656 = vadd.f32 0.0, %v8655
        %v8657 = vpop.f32.mrb[0].mxu0
        %8658 = vmatprep.mubr.bf16.mxu0 0
        %8659 = vmatmul.mubr.bf16.gmra.mrb[0].mxu0 %v6852
        %v8660 = vpop.f32.mrb[0].mxu0
        %v8661 = vadd.f32 0.0, %v8660
        %v8662 = vpop.f32.mrb[0].mxu0
        %v8663 = vpop.f32.mrb[0].mxu0
        %v8664 = vadd.f32 0.0, %v8663
        %v8665 = vpop.f32.mrb[0].mxu0
        %8666 = vmatprep.mubr.bf16.mxu0 0
        %8667 = vmatmul.mubr.bf16.gmra.mrb[0].mxu0 %v6853
        %v8668 = vpop.f32.mrb[0].mxu0
        %v8669 = vadd.f32 0.0, %v8668
        %v8670 = vpop.f32.mrb[0].mxu0
        %v8671 = vpop.f32.mrb[0].mxu0
        %v8672 = vadd.f32 0.0, %v8671
        %v8673 = vpop.f32.mrb[0].mxu0
        %8674 = vmatprep.mubr.bf16.mxu0 0
        %8675 = vmatmul.mubr.bf16.gmra.mrb[0].mxu0 %v6854
        %v8676 = vpop.f32.mrb[0].mxu0
        %v8677 = vadd.f32 0.0, %v8676
        %v8678 = vpop.f32.mrb[0].mxu0
        %v8679 = vpop.f32.mrb[0].mxu0
        %v8680 = vadd.f32 0.0, %v8679
        %v8681 = vpop.f32.mrb[0].mxu0
        %8682 = vmatprep.mubr.bf16.mxu0 0
        %8683 = vmatmul.mubr.bf16.gmra.mrb[0].mxu0 %v6855
        %v8684 = vpop.f32.mrb[0].mxu0
        %v8685 = vadd.f32 0.0, %v8684
        %v8686 = vpop.f32.mrb[0].mxu0
        %v8687 = vpop.f32.mrb[0].mxu0
        %v8688 = vadd.f32 0.0, %v8687
        %v8689 = vpop.f32.mrb[0].mxu0
        %8690 = vmatprep.mubr.bf16.mxu0 0
        %8691 = vmatmul.mubr.bf16.gmra.mrb[0].mxu0 %v6856
        %v8692 = vpop.f32.mrb[0].mxu0
        %v8693 = vadd.f32 0.0, %v8692
        %v8694 = vpop.f32.mrb[0].mxu0
        %v8695 = vpop.f32.mrb[0].mxu0
        %v8696 = vadd.f32 0.0, %v8695
        %v8697 = vpop.f32.mrb[0].mxu0
        %8698 = vmatprep.mubr.bf16.mxu0 0
        %8699 = vmatmul.mubr.bf16.gmra.mrb[0].mxu0 %v6857
        %v8700 = vpop.f32.mrb[0].mxu0
        %v8701 = vadd.f32 0.0, %v8700
        %v8702 = vpop.f32.mrb[0].mxu0
        %v8703 = vpop.f32.mrb[0].mxu0
        %v8704 = vadd.f32 0.0, %v8703
        %v8705 = vpop.f32.mrb[0].mxu0
        %8706 = vmatprep.mubr.bf16.mxu0 0
        %8707 = vmatmul.mubr.bf16.gmra.mrb[0].mxu0 %v7692
        %v8708 = vpop.f32.mrb[0].mxu0
        %v8709 = vadd.f32 0.0, %v8708
        %v8710 = vpop.f32.mrb[0].mxu0
        %v8711 = vpop.f32.mrb[0].mxu0
        %v8712 = vadd.f32 0.0, %v8711
        %v8713 = vpop.f32.mrb[0].mxu0
        %8714 = vmatprep.mubr.bf16.mxu0 0
        %8715 = vmatmul.mubr.bf16.gmra.mrb[0].mxu0 %v8512
        %v8716 = vpop.f32.mrb[0].mxu0
        %v8717 = vadd.f32 0.0, %v8716
        %v8718 = vpop.f32.mrb[0].mxu0
        %v8719 = vpop.f32.mrb[0].mxu0
        %v8720 = vadd.f32 0.0, %v8719
        %v8721 = vpop.f32.mrb[0].mxu0
        %8722 = vdwg.mxu0
        %v8723 = vadd.f32 %v8453, %v8597
        %v8724 = vadd.f32 %v8454, %v8600
        %v8725 = vadd.f32 %v8455, %v8605
        %v8726 = vadd.f32 %v8456, %v8608
        %v8727 = vadd.f32 %v8457, %v8613
        %v8728 = vadd.f32 %v8458, %v8616
        %v8729 = vadd.f32 %v8459, %v8621
        %v8730 = vadd.f32 %v8460, %v8624
        %v8731 = vadd.f32 %v8461, %v8629
        %v8732 = vadd.f32 %v8462, %v8632
        %v8733 = vadd.f32 %v8463, %v8637
        %v8734 = vadd.f32 %v8464, %v8640
        %v8735 = vadd.f32 %v8465, %v8645
        %v8736 = vadd.f32 %v8466, %v8648
        %v8737 = vadd.f32 %v8467, %v8653
        %v8738 = vadd.f32 %v8468, %v8656
        %v8739 = vadd.f32 %v8469, %v8661
        %v8740 = vadd.f32 %v8470, %v8664
        %v8741 = vadd.f32 %v8471, %v8669
        %v8742 = vadd.f32 %v8472, %v8672
        %v8743 = vadd.f32 %v8473, %v8677
        %v8744 = vadd.f32 %v8474, %v8680
        %v8745 = vadd.f32 %v8475, %v8685
        %v8746 = vadd.f32 %v8476, %v8688
        %v8747 = vadd.f32 %v8477, %v8693
        %v8748 = vadd.f32 %v8478, %v8696
        %v8749 = vadd.f32 %v8479, %v8701
        %v8750 = vadd.f32 %v8480, %v8704
        %v8751 = vadd.f32 %v8481, %v8709
        %v8752 = vadd.f32 %v8482, %v8712
        %v8753 = vadd.f32 %v8483, %v8717
        %v8754 = vadd.f32 %v8484, %v8720
        %v8755 = vld [vmem:[#allocation12] sm:$0x1]
        %v8757 = vlaneseq
        %v8758 = vshrl.u32 %v8757, 7
        %v8759 = vsub.s32 0, %v8758
        %v8760 = vrot.slane %v8755, %v8759
        %v8762 = vadd.f32 %v8723, %v8760
        %v8763 = vadd.f32 %v8724, %v8760
        %v8764 = vadd.f32 %v8725, %v8760
        %v8765 = vadd.f32 %v8726, %v8760
        %v8766 = vadd.f32 %v8727, %v8760
        %v8767 = vadd.f32 %v8728, %v8760
        %v8768 = vadd.f32 %v8729, %v8760
        %v8769 = vadd.f32 %v8730, %v8760
        %v8770 = vadd.f32 %v8731, %v8760
        %v8771 = vadd.f32 %v8732, %v8760
        %v8772 = vadd.f32 %v8733, %v8760
        %v8773 = vadd.f32 %v8734, %v8760
        %v8774 = vadd.f32 %v8735, %v8760
        %v8775 = vadd.f32 %v8736, %v8760
        %v8776 = vadd.f32 %v8737, %v8760
        %v8777 = vadd.f32 %v8738, %v8760
        %v8778 = vadd.f32 %v8739, %v8760
        %v8779 = vadd.f32 %v8740, %v8760
        %v8780 = vadd.f32 %v8741, %v8760
        %v8781 = vadd.f32 %v8742, %v8760
        %v8782 = vadd.f32 %v8743, %v8760
        %v8783 = vadd.f32 %v8744, %v8760
        %v8784 = vadd.f32 %v8745, %v8760
        %v8785 = vadd.f32 %v8746, %v8760
        %v8786 = vadd.f32 %v8747, %v8760
        %v8787 = vadd.f32 %v8748, %v8760
        %v8788 = vadd.f32 %v8749, %v8760
        %v8789 = vadd.f32 %v8750, %v8760
        %v8790 = vadd.f32 %v8751, %v8760
        %v8791 = vadd.f32 %v8752, %v8760
        %v8792 = vadd.f32 %v8753, %v8760
        %v8793 = vadd.f32 %v8754, %v8760
        %v8794 = vadd.f32 %v8762, %v5024
        %v8795 = vadd.f32 %v8763, %v5026
        %v8796 = vadd.f32 %v8764, %v5028
        %v8797 = vadd.f32 %v8765, %v5030
        %v8798 = vadd.f32 %v8766, %v5032
        %v8799 = vadd.f32 %v8767, %v5034
        %v8800 = vadd.f32 %v8768, %v5036
        %v8801 = vadd.f32 %v8769, %v5038
        %v8802 = vadd.f32 %v8770, %v5040
        %v8803 = vadd.f32 %v8771, %v5042
        %v8804 = vadd.f32 %v8772, %v5044
        %v8805 = vadd.f32 %v8773, %v5046
        %v8806 = vadd.f32 %v8774, %v5048
        %v8807 = vadd.f32 %v8775, %v5050
        %v8808 = vadd.f32 %v8776, %v5052
        %v8809 = vadd.f32 %v8777, %v5054
        %v8810 = vadd.f32 %v8778, %v5056
        %v8811 = vadd.f32 %v8779, %v5058
        %v8812 = vadd.f32 %v8780, %v5060
        %v8813 = vadd.f32 %v8781, %v5062
        %v8814 = vadd.f32 %v8782, %v5064
        %v8815 = vadd.f32 %v8783, %v5066
        %v8816 = vadd.f32 %v8784, %v5068
        %v8817 = vadd.f32 %v8785, %v5070
        %v8818 = vadd.f32 %v8786, %v5072
        %v8819 = vadd.f32 %v8787, %v5074
        %v8820 = vadd.f32 %v8788, %v5076
        %v8821 = vadd.f32 %v8789, %v5078
        %v8822 = vadd.f32 %v8790, %v5080
        %v8823 = vadd.f32 %v8791, %v5082
        %v8824 = vadd.f32 %v8792, %v5084
        %v8825 = vadd.f32 %v8793, %v5086
        %v8826 = vmax.f32 %v8794, 0.0
        %v8827 = vmax.f32 %v8795, 0.0
        %v8828 = vmax.f32 %v8796, 0.0
        %v8829 = vmax.f32 %v8797, 0.0
        %v8830 = vmax.f32 %v8798, 0.0
        %v8831 = vmax.f32 %v8799, 0.0
        %v8832 = vmax.f32 %v8800, 0.0
        %v8833 = vmax.f32 %v8801, 0.0
        %v8834 = vmax.f32 %v8802, 0.0
        %v8835 = vmax.f32 %v8803, 0.0
        %v8836 = vmax.f32 %v8804, 0.0
        %v8837 = vmax.f32 %v8805, 0.0
        %v8838 = vmax.f32 %v8806, 0.0
        %v8839 = vmax.f32 %v8807, 0.0
        %v8840 = vmax.f32 %v8808, 0.0
        %v8841 = vmax.f32 %v8809, 0.0
        %v8842 = vmax.f32 %v8810, 0.0
        %v8843 = vmax.f32 %v8811, 0.0
        %v8844 = vmax.f32 %v8812, 0.0
        %v8845 = vmax.f32 %v8813, 0.0
        %v8846 = vmax.f32 %v8814, 0.0
        %v8847 = vmax.f32 %v8815, 0.0
        %v8848 = vmax.f32 %v8816, 0.0
        %v8849 = vmax.f32 %v8817, 0.0
        %v8850 = vmax.f32 %v8818, 0.0
        %v8851 = vmax.f32 %v8819, 0.0
        %v8852 = vmax.f32 %v8820, 0.0
        %v8853 = vmax.f32 %v8821, 0.0
        %v8854 = vmax.f32 %v8822, 0.0
        %v8855 = vmax.f32 %v8823, 0.0
        %v8856 = vmax.f32 %v8824, 0.0
        %v8857 = vmax.f32 %v8825, 0.0
        %v8858 = vpack.c.bf16 %v8827, %v8826
        %v8859 = vpack.c.bf16 %v8829, %v8828
        %v8860 = vpack.c.bf16 %v8831, %v8830
        %v8861 = vpack.c.bf16 %v8833, %v8832
        %v8862 = vpack.c.bf16 %v8835, %v8834
        %v8863 = vpack.c.bf16 %v8837, %v8836
        %v8864 = vpack.c.bf16 %v8839, %v8838
        %v8865 = vpack.c.bf16 %v8841, %v8840
        %v8866 = vpack.c.bf16 %v8843, %v8842
        %v8867 = vpack.c.bf16 %v8845, %v8844
        %v8868 = vpack.c.bf16 %v8847, %v8846
        %v8869 = vpack.c.bf16 %v8849, %v8848
        %v8870 = vpack.c.bf16 %v8851, %v8850
        %v8871 = vpack.c.bf16 %v8853, %v8852
        %v8872 = vpack.c.bf16 %v8855, %v8854
        %v8873 = vpack.c.bf16 %v8857, %v8856
        %v8890 = vunpack.c.l.b16 %v8858
        %v8891 = vunpack.c.h.b16 %v8858
        %v8892 = vunpack.c.l.b16 %v8859
        %v8893 = vunpack.c.h.b16 %v8859
        %v8894 = vunpack.c.l.b16 %v8860
        %v8895 = vunpack.c.h.b16 %v8860
        %v8896 = vunpack.c.l.b16 %v8861
        %v8897 = vunpack.c.h.b16 %v8861
        %v8898 = vunpack.c.l.b16 %v8862
        %v8899 = vunpack.c.h.b16 %v8862
        %v8900 = vunpack.c.l.b16 %v8863
        %v8901 = vunpack.c.h.b16 %v8863
        %v8902 = vunpack.c.l.b16 %v8864
        %v8903 = vunpack.c.h.b16 %v8864
        %v8904 = vunpack.c.l.b16 %v8865
        %v8905 = vunpack.c.h.b16 %v8865
        %v8906 = vunpack.c.l.b16 %v8866
        %v8907 = vunpack.c.h.b16 %v8866
        %v8908 = vunpack.c.l.b16 %v8867
        %v8909 = vunpack.c.h.b16 %v8867
        %v8910 = vunpack.c.l.b16 %v8868
        %v8911 = vunpack.c.h.b16 %v8868
        %v8912 = vunpack.c.l.b16 %v8869
        %v8913 = vunpack.c.h.b16 %v8869
        %v8914 = vunpack.c.l.b16 %v8870
        %v8915 = vunpack.c.h.b16 %v8870
        %v8916 = vunpack.c.l.b16 %v8871
        %v8917 = vunpack.c.h.b16 %v8871
        %v8918 = vunpack.c.l.b16 %v8872
        %v8919 = vunpack.c.h.b16 %v8872
        %v8920 = vunpack.c.l.b16 %v8873
        %v8921 = vunpack.c.h.b16 %v8873
        %v8922 = vpack.c.b16 %v8890, %v8890
        %v8923 = vpack.c.b16 %v8891, %v8891
        %v8924 = vpack.c.b16 %v8892, %v8892
        %v8925 = vpack.c.b16 %v8893, %v8893
        %v8926 = vpack.c.b16 %v8894, %v8894
        %v8927 = vpack.c.b16 %v8895, %v8895
        %v8928 = vpack.c.b16 %v8896, %v8896
        %v8929 = vpack.c.b16 %v8897, %v8897
        %v8930 = vpack.c.b16 %v8898, %v8898
        %v8931 = vpack.c.b16 %v8899, %v8899
        %v8932 = vpack.c.b16 %v8900, %v8900
        %v8933 = vpack.c.b16 %v8901, %v8901
        %v8934 = vpack.c.b16 %v8902, %v8902
        %v8935 = vpack.c.b16 %v8903, %v8903
        %v8936 = vpack.c.b16 %v8904, %v8904
        %v8937 = vpack.c.b16 %v8905, %v8905
        %v8938 = vpack.c.b16 %v8906, %v8906
        %v8939 = vpack.c.b16 %v8907, %v8907
        %v8940 = vpack.c.b16 %v8908, %v8908
        %v8941 = vpack.c.b16 %v8909, %v8909
        %v8942 = vpack.c.b16 %v8910, %v8910
        %v8943 = vpack.c.b16 %v8911, %v8911
        %v8944 = vpack.c.b16 %v8912, %v8912
        %v8945 = vpack.c.b16 %v8913, %v8913
        %v8946 = vpack.c.b16 %v8914, %v8914
        %v8947 = vpack.c.b16 %v8915, %v8915
        %v8948 = vpack.c.b16 %v8916, %v8916
        %v8949 = vpack.c.b16 %v8917, %v8917
        %v8950 = vpack.c.b16 %v8918, %v8918
        %v8951 = vpack.c.b16 %v8919, %v8919
        %v8952 = vpack.c.b16 %v8920, %v8920
        %v8953 = vpack.c.b16 %v8921, %v8921
        %8986 = vst [vmem:[%s296] sm:$0xf] %v8922
        %8987 = vst [vmem:[%s296 + $0x4] sm:$0xf] %v8923
        %8988 = vst [vmem:[%s296 + $0x8] sm:$0xf] %v8924
        %8989 = vst [vmem:[%s296 + $0xc] sm:$0xf] %v8925
        %8990 = vst [vmem:[%s296 + $0x10] sm:$0xf] %v8926
        %8991 = vst [vmem:[%s296 + $0x14] sm:$0xf] %v8927
        %8992 = vst [vmem:[%s296 + $0x18] sm:$0xf] %v8928
        %8993 = vst [vmem:[%s296 + $0x1c] sm:$0xf] %v8929
        %8994 = vst [vmem:[%s296 + $0x20] sm:$0xf] %v8930
        %8995 = vst [vmem:[%s296 + $0x24] sm:$0xf] %v8931
        %8996 = vst [vmem:[%s296 + $0x28] sm:$0xf] %v8932
        %8997 = vst [vmem:[%s296 + $0x2c] sm:$0xf] %v8933
        %8998 = vst [vmem:[%s296 + $0x30] sm:$0xf] %v8934
        %8999 = vst [vmem:[%s296 + $0x34] sm:$0xf] %v8935
        %9000 = vst [vmem:[%s296 + $0x38] sm:$0xf] %v8936
        %9001 = vst [vmem:[%s296 + $0x3c] sm:$0xf] %v8937
        %9002 = vst [vmem:[%s296 + $0x40] sm:$0xf] %v8938
        %9003 = vst [vmem:[%s296 + $0x44] sm:$0xf] %v8939
        %9004 = vst [vmem:[%s296 + $0x48] sm:$0xf] %v8940
        %9005 = vst [vmem:[%s296 + $0x4c] sm:$0xf] %v8941
        %9006 = vst [vmem:[%s296 + $0x50] sm:$0xf] %v8942
        %9007 = vst [vmem:[%s296 + $0x54] sm:$0xf] %v8943
        %9008 = vst [vmem:[%s296 + $0x58] sm:$0xf] %v8944
        %9009 = vst [vmem:[%s296 + $0x5c] sm:$0xf] %v8945
        %9010 = vst [vmem:[%s296 + $0x60] sm:$0xf] %v8946
        %9011 = vst [vmem:[%s296 + $0x64] sm:$0xf] %v8947
        %9012 = vst [vmem:[%s296 + $0x68] sm:$0xf] %v8948
        %9013 = vst [vmem:[%s296 + $0x6c] sm:$0xf] %v8949
        %9014 = vst [vmem:[%s296 + $0x70] sm:$0xf] %v8950
        %9015 = vst [vmem:[%s296 + $0x74] sm:$0xf] %v8951
        %9016 = vst [vmem:[%s296 + $0x78] sm:$0xf] %v8952
        %9017 = vst [vmem:[%s296 + $0x7c] sm:$0xf] %v8953
        %s9018 = sand.u32 %s142, 1
        %s9019 = scalar_lea.sflag [#allocation6], %s9018
        %s9020 = sand.u32 %s142, 1
        %s9021 = smul.addr %s9020, 128
        %s9022 = scalar_lea.vmem [#allocation13], %s9021
        // Predicated region
        $region61: #{building_block_forward.1} parent=39 // pred_check
          %p9023 = pneg %p152
        $region62: #{building_block_forward.1} parent=39 // pred_check_branch
          %9025 = sbr.rel (%p9023) target = $region64
        $region63: #{building_block_forward.1} parent=39 // pred_region
          %s9027 = ssub.s32 2048, 2048
          %9028 = vsyncadd %s9019, %s9027
          %s9029 = smul.addr %s24, 32
          %s9030 = smul.addr %s9029, 64
          %s9031 = scalar_lea.hbm %s5, %s9030
          %s9032 = sshll.u32 %s9022, 4
          %s9033 = int_to_ptr.vmem [resolvable:$true] %s9032
          %9038 = dma.vmem_to_hbm [thread:$0]  %s9033, 2048, %s9031, %s9019, 64, 64, 4
        $region64: #{building_block_forward.1} parent=39 // pred_fallthru
          _
      $region40: #{building_block_forward.1} parent=5 // pred_fallthru
        _
      %p9039 = scmp.le.s32.totalorder 2, %s19
      // Predicated region
      $region65: #{building_block_forward.1} parent=5 // pred_check
        %p9040 = pneg %p9039
      $region66: #{building_block_forward.1} parent=5 // pred_check_branch
        %9042 = sbr.rel (%p9040) target = $region68
      $region67: #{building_block_forward.1} parent=5 // pred_region
        %s9043 = ssub.s32 %s19, 2
        // Predicated region
        $region69: #{building_block_forward.1} parent=67 // pred_check
          %p9044 = pneg %p158
        $region70: #{building_block_forward.1} parent=67 // pred_check_branch
          %9046 = sbr.rel (%p9044) target = $region72
        $region71: #{building_block_forward.1} parent=67 // pred_region
          %s9047 = sand.u32 %s143, 1
          %s9048 = scalar_lea.sflag [#allocation6], %s9047
          %s9049 = sand.u32 %s143, 1
          %s9050 = smul.addr %s9049, 128
          %s9051 = scalar_lea.vmem [#allocation13], %s9050
          %9052 = dma.done %s9048, 2048
        $region72: #{building_block_forward.1} parent=67 // pred_fallthru
          _
      $region68: #{building_block_forward.1} parent=5 // pred_fallthru
        _
    $region6: #{building_block_forward.1} parent=1 // loop_footer
      %s23 = sadd.s32 1, %s19
    $region7: #{building_block_forward.1} parent=1 // loop_footer_branch
      %18 = sbr.rel target = $region3
    $region8: #{building_block_forward.1} parent=1 // loop_exit
      _
    %9053 = vsyncpa [#allocation5], 1
    %s9054 = scalar_lea.sflag [#allocation5], 1
    %9055 = vsyncpa %s9054, 1
    %9056 = vsyncpa [#allocation8], 1
    %9057 = vsyncpa [#allocation11], 1
    %9058 = vsyncpa [#allocation6], 1
    %s9059 = scalar_lea.sflag [#allocation6], 1
    %9060 = vsyncpa %s9059, 1

</llo_original>
